<compile_context>
chip_gen: v7x
topology: tpu7x:2x2x1
jax: 0.10.0
libtpu: 0.0.40
codegen_flags: <defaults>
</compile_context>

<pallas_src>
import jax
import jax.numpy as jnp
from jax import lax
from jax.experimental import pallas as pl
from jax.experimental.pallas import tpu as pltpu

# ---- scaled-down config, structure mirrors the PyTorch module ----
VOCAB_SIZE = 65
EMBEDDING_DIM = 128
HEADS = 4
HEAD_DIM = EMBEDDING_DIM // HEADS
LAYERS = 2
NUM_EXPERTS = 4
TOP_K_EXPERTS = 2
CONTEXT_WINDOW = 32
LN_EPS = 1e-5
FFN_DIM = 4 * EMBEDDING_DIM
EXP_FFN = NUM_EXPERTS * FFN_DIM

LANE = 128
VOCAB_PAD = ((VOCAB_SIZE + LANE - 1) // LANE) * LANE   # 128, lane-dense lm head
GATE_PAD = LANE                                        # 128, lane-dense gate
NEG_INF = -1e30                                        # large finite (NaN-safe mask)


def _const_spec(shape):
    n = len(shape)
    return pl.BlockSpec(shape, lambda s, _n=n: (0,) * _n)


def _layer_norm(x, g, b):
    mu = jnp.mean(x, axis=-1, keepdims=True)
    var = jnp.mean(jnp.square(x - mu), axis=-1, keepdims=True)
    return (x - mu) * lax.rsqrt(var + LN_EPS) * g + b


# ------------------- single fully-fused forward kernel -------------------

def _make_forward_kernel(t, b_step):
    m = t * b_step                      # rows handled per grid step
    C = EMBEDDING_DIM
    scale = HEAD_DIM ** -0.5

    def kernel(idx_ref, tok_ref, pos_ref, ln1_g_ref, ln1_b_ref, wqkv_ref,
               wo_ref, bo_ref, ln2_g_ref, ln2_b_ref, wg_ref, w1_ref, b1_ref,
               w2_ref, b2_ref, lnf_g_ref, lnf_b_ref, wlm_ref, blm_ref, o_ref):
        f32, bf16 = jnp.float32, jnp.bfloat16

        # ---- token embedding: exact one-hot MXU gather + position add ----
        idx_col = idx_ref[...]                                    # (m, 1) int32
        vcol = lax.broadcasted_iota(jnp.int32, (m, VOCAB_PAD), 1)
        onehot = jnp.where(vcol == idx_col, 1.0, 0.0).astype(bf16)
        x = jnp.dot(onehot, tok_ref[...], preferred_element_type=f32)   # (m, C)
        pos = pos_ref[0:t, :]
        if b_step > 1:
            pos = jnp.concatenate([pos] * b_step, axis=0)
        x = x + pos                                               # f32 residual

        # ---- block-diagonal causal mask (whole batches flattened to rows) ----
        row = lax.broadcasted_iota(jnp.int32, (m, m), 0)
        col = lax.broadcasted_iota(jnp.int32, (m, m), 1)
        causal = col <= row
        if b_step > 1:
            causal = jnp.logical_and(causal, (row // t) == (col // t))

        ecol = lax.broadcasted_iota(jnp.int32, (m, GATE_PAD), 1)

        for l in range(LAYERS):
            # ---- LN1 -> fused QKV (one wide MXU matmul, single bf16 cast) ----
            h = _layer_norm(x, ln1_g_ref[l], ln1_b_ref[l]).astype(bf16)
            qkv = jnp.dot(h, wqkv_ref[l],
                          preferred_element_type=f32).astype(bf16)      # (m, 3C)

            # ---- per-head causal attention (static lane slices) ----
            heads = []
            for hh in range(HEADS):
                q_h = qkv[:, hh * HEAD_DIM:(hh + 1) * HEAD_DIM]
                k_h = qkv[:, C + hh * HEAD_DIM:C + (hh + 1) * HEAD_DIM]
                v_h = qkv[:, 2 * C + hh * HEAD_DIM:2 * C + (hh + 1) * HEAD_DIM]
                s = lax.dot_general(q_h, k_h, (((1,), (1,)), ((), ())),
                                    preferred_element_type=f32) * scale  # (m, m)
                s = jnp.where(causal, s, NEG_INF)
                p = jnp.exp(s - jnp.max(s, axis=-1, keepdims=True))
                p = p * pl.reciprocal(jnp.sum(p, axis=-1, keepdims=True),
                                      approx=False)
                heads.append(jnp.dot(p.astype(bf16), v_h,
                                     preferred_element_type=f32))        # (m, D)
            attn = jnp.concatenate(heads, axis=-1)                       # (m, C)

            attn = jnp.dot(attn.astype(bf16), wo_ref[l],
                           preferred_element_type=f32) + bo_ref[l]
            x = x + attn

            # ---- LN2 -> gate softmax / top-k routing (f32) ----
            h2 = _layer_norm(x, ln2_g_ref[l], ln2_b_ref[l])
            h2_bf = h2.astype(bf16)

            gl = jnp.dot(h2_bf, wg_ref[l], preferred_element_type=f32)   # (m, 128)
            gl = jnp.where(ecol < NUM_EXPERTS, gl, NEG_INF)
            ge = jnp.exp(gl - jnp.max(gl, axis=-1, keepdims=True))
            gw = ge * pl.reciprocal(jnp.sum(ge, axis=-1, keepdims=True),
                                    approx=False)

            sel = jnp.zeros_like(gw, dtype=jnp.bool_)
            remaining = gw
            for _ in range(TOP_K_EXPERTS):
                mk = jnp.max(remaining, axis=-1, keepdims=True)
                ik = jnp.min(jnp.where(remaining == mk, ecol, GATE_PAD),
                             axis=-1, keepdims=True)
                pick = ecol == ik
                sel = jnp.logical_or(sel, pick)
                remaining = jnp.where(pick, -1.0, remaining)
            wsel = jnp.where(sel, gw, 0.0)
            denom = jnp.maximum(jnp.sum(wsel, axis=-1, keepdims=True), 1e-20)
            dense_w = wsel * pl.reciprocal(denom, approx=False)          # (m, 128)

            # ---- MoE: two wide matmuls over stacked expert weights ----
            hid = jnp.dot(h2_bf, w1_ref[l],
                          preferred_element_type=f32) + b1_ref[l]        # (m, E*FFN)
            hid = jnp.maximum(hid, 0.0)
            route = jnp.concatenate(
                [jnp.broadcast_to(dense_w[:, e:e + 1], (m, FFN_DIM))
                 for e in range(NUM_EXPERTS)], axis=-1)                  # (m, E*FFN)
            hid = (hid * route).astype(bf16)
            moe = jnp.dot(hid, w2_ref[l], preferred_element_type=f32)    # (m, C)
            moe = moe + jnp.dot(dense_w, b2_ref[l],
                                preferred_element_type=f32)              # weighted b2
            x = x + moe

        # ---- final LayerNorm + LM head (lane-dense padded vocab) ----
        hf = _layer_norm(x, lnf_g_ref[...], lnf_b_ref[...]).astype(bf16)
        logits = jnp.dot(hf, wlm_ref[...],
                         preferred_element_type=f32) + blm_ref[...]
        o_ref[...] = logits

    return kernel


# ------------------------- params & forward -------------------------

def init_params(key):
    std = 0.02 / (LAYERS ** 0.5)
    f32, bf16 = jnp.float32, jnp.bfloat16
    keys = iter(jax.random.split(key, 256))

    def nrm(shape, sd, dtype):
        return (jax.random.normal(next(keys), shape, f32) * sd).astype(dtype)

    tok = jnp.zeros((VOCAB_PAD, EMBEDDING_DIM), bf16)
    tok = tok.at[:VOCAB_SIZE].set(nrm((VOCAB_SIZE, EMBEDDING_DIM), 0.02, bf16))
    w_lm = jnp.zeros((EMBEDDING_DIM, VOCAB_PAD), bf16)
    w_lm = w_lm.at[:, :VOCAB_SIZE].set(nrm((EMBEDDING_DIM, VOCAB_SIZE), std, bf16))

    def one_layer():
        w_qkv = jnp.concatenate(
            [nrm((EMBEDDING_DIM, EMBEDDING_DIM), std, bf16) for _ in range(3)],
            axis=1)                                        # fused (C, 3C)
        w_gate = jnp.zeros((EMBEDDING_DIM, GATE_PAD), bf16)
        w_gate = w_gate.at[:, :NUM_EXPERTS].set(
            nrm((EMBEDDING_DIM, NUM_EXPERTS), std, bf16))
        w1 = jnp.concatenate(
            [nrm((EMBEDDING_DIM, FFN_DIM), std, bf16) for _ in range(NUM_EXPERTS)],
            axis=1)                                        # stacked (C, E*FFN)
        w2 = jnp.concatenate(
            [nrm((FFN_DIM, EMBEDDING_DIM), std, bf16) for _ in range(NUM_EXPERTS)],
            axis=0)                                        # stacked (E*FFN, C)
        return {
            "ln1_g": jnp.ones((1, EMBEDDING_DIM), f32),
            "ln1_b": jnp.zeros((1, EMBEDDING_DIM), f32),
            "ln2_g": jnp.ones((1, EMBEDDING_DIM), f32),
            "ln2_b": jnp.zeros((1, EMBEDDING_DIM), f32),
            "w_qkv": w_qkv,
            "wo": nrm((EMBEDDING_DIM, EMBEDDING_DIM), std, bf16),
            "bo": jnp.zeros((1, EMBEDDING_DIM), f32),
            "w_gate": w_gate,
            "w1": w1,
            "b1": jnp.zeros((1, EXP_FFN), f32),
            "w2": w2,
            "b2": jnp.zeros((GATE_PAD, EMBEDDING_DIM), f32),   # rows >= E are zero
        }

    layers = [one_layer() for _ in range(LAYERS)]
    params = {
        "tok_emb": tok,                                    # padded 65 -> 128 rows
        "pos_emb": nrm((CONTEXT_WINDOW, EMBEDDING_DIM), 0.02, f32),
        "lnf_g": jnp.ones((1, EMBEDDING_DIM), f32),
        "lnf_b": jnp.zeros((1, EMBEDDING_DIM), f32),
        "w_lm": w_lm,                                      # padded 65 -> 128 lanes
        "b_lm": jnp.zeros((1, VOCAB_PAD), f32),
    }
    for name in layers[0]:
        params[name] = jnp.stack([ly[name] for ly in layers], axis=0)
    return params


def forward(params, idx):
    B, T = idx.shape
    assert T <= CONTEXT_WINDOW
    M = B * T
    # 2-way "parallel" split over the batch: feeds both TensorCores on v7x;
    # costs one extra ~0.35us grid step on single-TC v5e/v6e.  Weights use
    # constant index maps -> DMA'd exactly once (no re-fetch between steps).
    splits = 2 if (B % 2 == 0 and B >= 2) else 1
    b_step = B // splits
    m_step = b_step * T

    kernel = _make_forward_kernel(T, b_step)
    idx_flat = idx.reshape(M, 1).astype(jnp.int32)
    p = params

    in_specs = [
        pl.BlockSpec((m_step, 1), lambda s: (s, 0)),       # idx rows for this step
        _const_spec(p["tok_emb"].shape),
        _const_spec(p["pos_emb"].shape),
        _const_spec(p["ln1_g"].shape),
        _const_spec(p["ln1_b"].shape),
        _const_spec(p["w_qkv"].shape),
        _const_spec(p["wo"].shape),
        _const_spec(p["bo"].shape),
        _const_spec(p["ln2_g"].shape),
        _const_spec(p["ln2_b"].shape),
        _const_spec(p["w_gate"].shape),
        _const_spec(p["w1"].shape),
        _const_spec(p["b1"].shape),
        _const_spec(p["w2"].shape),
        _const_spec(p["b2"].shape),
        _const_spec(p["lnf_g"].shape),
        _const_spec(p["lnf_b"].shape),
        _const_spec(p["w_lm"].shape),
        _const_spec(p["b_lm"].shape),
    ]

    logits_pad = pl.pallas_call(
        kernel,
        out_shape=jax.ShapeDtypeStruct((M, VOCAB_PAD), jnp.float32),
        grid=(splits,),
        in_specs=in_specs,
        out_specs=pl.BlockSpec((m_step, VOCAB_PAD), lambda s: (s, 0)),
        compiler_params=pltpu.CompilerParams(
            dimension_semantics=("parallel",)),
    )(idx_flat, p["tok_emb"], p["pos_emb"], p["ln1_g"], p["ln1_b"], p["w_qkv"],
      p["wo"], p["bo"], p["ln2_g"], p["ln2_b"], p["w_gate"], p["w1"], p["b1"],
      p["w2"], p["b2"], p["lnf_g"], p["lnf_b"], p["w_lm"], p["b_lm"])

    return logits_pad[:, :VOCAB_SIZE].reshape(B, T, VOCAB_SIZE)
    # TODO(synk): kv-cache incremental decode, cross-entropy loss, and the
    # multinomial sampling loop of generate() are not part of this kernel path.


if __name__ == "__main__":
    key = jax.random.PRNGKey(0)
    pkey, dkey = jax.random.split(key)
    params = init_params(pkey)
    B, T = 2, 16
    idx = jax.random.randint(dkey, (B, T), 0, VOCAB_SIZE, dtype=jnp.int32)
    logits = jax.jit(forward)(params, idx)
    jax.block_until_ready(logits)
    assert logits.shape == (B, T, VOCAB_SIZE)
    assert bool(jnp.all(jnp.isfinite(logits)))
    print("KERNEL_OK")
</pallas_src>

<mosaic_0001>
module attributes {stable_mosaic.version = 11 : i64} {
  func.func @kernel(%arg0: i32, %arg1: memref<16x1xi32, #tpu.memory_space<vmem>>, %arg2: memref<128x128xbf16, #tpu.memory_space<vmem>>, %arg3: memref<32x128xf32, #tpu.memory_space<vmem>>, %arg4: memref<2x1x128xf32, #tpu.memory_space<vmem>>, %arg5: memref<2x1x128xf32, #tpu.memory_space<vmem>>, %arg6: memref<2x128x384xbf16, #tpu.memory_space<vmem>>, %arg7: memref<2x128x128xbf16, #tpu.memory_space<vmem>>, %arg8: memref<2x1x128xf32, #tpu.memory_space<vmem>>, %arg9: memref<2x1x128xf32, #tpu.memory_space<vmem>>, %arg10: memref<2x1x128xf32, #tpu.memory_space<vmem>>, %arg11: memref<2x128x128xbf16, #tpu.memory_space<vmem>>, %arg12: memref<2x128x2048xbf16, #tpu.memory_space<vmem>>, %arg13: memref<2x1x2048xf32, #tpu.memory_space<vmem>>, %arg14: memref<2x2048x128xbf16, #tpu.memory_space<vmem>>, %arg15: memref<2x128x128xf32, #tpu.memory_space<vmem>>, %arg16: memref<1x128xf32, #tpu.memory_space<vmem>>, %arg17: memref<1x128xf32, #tpu.memory_space<vmem>>, %arg18: memref<128x128xbf16, #tpu.memory_space<vmem>>, %arg19: memref<1x128xf32, #tpu.memory_space<vmem>>, %arg20: memref<16x128xf32, #tpu.memory_space<vmem>>) attributes {dimension_semantics = [#tpu.dimension_semantics<parallel>], iteration_bounds = array<i64: 2>, scalar_prefetch = 0 : i64, scratch_operands = 0 : i64, tpu.core_type = #tpu.core_type<tc>, window_params = [{transform_indices = @transform_0, window_bounds = array<i64: 16, 1>}, {pipeline_mode = #tpu.pipeline_mode<synchronous>, transform_indices = @transform_1, window_bounds = array<i64: 128, 128>}, {pipeline_mode = #tpu.pipeline_mode<synchronous>, transform_indices = @transform_2, window_bounds = array<i64: 32, 128>}, {pipeline_mode = #tpu.pipeline_mode<synchronous>, transform_indices = @transform_3, window_bounds = array<i64: 2, 1, 128>}, {pipeline_mode = #tpu.pipeline_mode<synchronous>, transform_indices = @transform_4, window_bounds = array<i64: 2, 1, 128>}, {pipeline_mode = #tpu.pipeline_mode<synchronous>, transform_indices = @transform_5, window_bounds = array<i64: 2, 128, 384>}, {pipeline_mode = #tpu.pipeline_mode<synchronous>, transform_indices = @transform_6, window_bounds = array<i64: 2, 128, 128>}, {pipeline_mode = #tpu.pipeline_mode<synchronous>, transform_indices = @transform_7, window_bounds = array<i64: 2, 1, 128>}, {pipeline_mode = #tpu.pipeline_mode<synchronous>, transform_indices = @transform_8, window_bounds = array<i64: 2, 1, 128>}, {pipeline_mode = #tpu.pipeline_mode<synchronous>, transform_indices = @transform_9, window_bounds = array<i64: 2, 1, 128>}, {pipeline_mode = #tpu.pipeline_mode<synchronous>, transform_indices = @transform_10, window_bounds = array<i64: 2, 128, 128>}, {pipeline_mode = #tpu.pipeline_mode<synchronous>, transform_indices = @transform_11, window_bounds = array<i64: 2, 128, 2048>}, {pipeline_mode = #tpu.pipeline_mode<synchronous>, transform_indices = @transform_12, window_bounds = array<i64: 2, 1, 2048>}, {pipeline_mode = #tpu.pipeline_mode<synchronous>, transform_indices = @transform_13, window_bounds = array<i64: 2, 2048, 128>}, {pipeline_mode = #tpu.pipeline_mode<synchronous>, transform_indices = @transform_14, window_bounds = array<i64: 2, 128, 128>}, {pipeline_mode = #tpu.pipeline_mode<synchronous>, transform_indices = @transform_15, window_bounds = array<i64: 1, 128>}, {pipeline_mode = #tpu.pipeline_mode<synchronous>, transform_indices = @transform_16, window_bounds = array<i64: 1, 128>}, {pipeline_mode = #tpu.pipeline_mode<synchronous>, transform_indices = @transform_17, window_bounds = array<i64: 128, 128>}, {pipeline_mode = #tpu.pipeline_mode<synchronous>, transform_indices = @transform_18, window_bounds = array<i64: 1, 128>}, {transform_indices = @transform_19, window_bounds = array<i64: 16, 128>}]} {
    %c0 = arith.constant 0 : index
    %c0_0 = arith.constant 0 : index
    %0 = vector.load %arg1[%c0, %c0_0] : memref<16x1xi32, #tpu.memory_space<vmem>>, vector<16x1xi32>
    %1 = tpu.iota {dimensions = array<i32: 1>} : vector<16x128xi32>
    %2 = vector.broadcast %0 : vector<16x1xi32> to vector<16x128xi32>
    %3 = arith.cmpi eq, %1, %2 : vector<16x128xi32>
    %cst = arith.constant 1.000000e+00 : f32
    %cst_1 = arith.constant 0.000000e+00 : f32
    %4 = vector.broadcast %cst : f32 to vector<16x128xf32>
    %5 = vector.broadcast %cst_1 : f32 to vector<16x128xf32>
    %6 = arith.select %3, %4, %5 : vector<16x128xi1>, vector<16x128xf32>
    %7 = arith.truncf %6 : vector<16x128xf32> to vector<16x128xbf16>
    %c0_2 = arith.constant 0 : index
    %c0_3 = arith.constant 0 : index
    %8 = vector.load %arg2[%c0_2, %c0_3] : memref<128x128xbf16, #tpu.memory_space<vmem>>, vector<128x128xbf16>
    %cst_4 = arith.constant dense<0.000000e+00> : vector<16x128xf32>
    %9 = tpu.matmul %7, %8, %cst_4 {dimension_numbers = #tpu.dot_dimension_numbers<[1], [0], [0], [1], [0, 0, 1, 1], [], []>} : vector<16x128xbf16>, vector<128x128xbf16>, vector<16x128xf32> -> vector<16x128xf32>
    %c0_5 = arith.constant 0 : index
    %c0_6 = arith.constant 0 : index
    %10 = vector.load %arg3[%c0_5, %c0_6] : memref<32x128xf32, #tpu.memory_space<vmem>>, vector<16x128xf32>
    %11 = arith.addf %9, %10 : vector<16x128xf32>
    %12 = tpu.iota {dimensions = array<i32: 0>} : vector<16x16xi32>
    %13 = tpu.iota {dimensions = array<i32: 1>} : vector<16x16xi32>
    %14 = arith.cmpi sle, %13, %12 : vector<16x16xi32>
    %15 = tpu.iota {dimensions = array<i32: 1>} : vector<16x128xi32>
    %c0_7 = arith.constant 0 : index
    %c0_8 = arith.constant 0 : index
    %c0_9 = arith.constant 0 : index
    %16 = vector.load %arg4[%c0_7, %c0_8, %c0_9] : memref<2x1x128xf32, #tpu.memory_space<vmem>>, vector<1x1x128xf32>
    %17 = vector.shape_cast %16 : vector<1x1x128xf32> to vector<1x128xf32>
    %c0_10 = arith.constant 0 : index
    %c0_11 = arith.constant 0 : index
    %c0_12 = arith.constant 0 : index
    %18 = vector.load %arg5[%c0_10, %c0_11, %c0_12] : memref<2x1x128xf32, #tpu.memory_space<vmem>>, vector<1x1x128xf32>
    %19 = vector.shape_cast %18 : vector<1x1x128xf32> to vector<1x128xf32>
    %cst_13 = arith.constant dense<0.000000e+00> : vector<16xf32>
    %20 = vector.multi_reduction <add>, %11, %cst_13 [1] : vector<16x128xf32> to vector<16xf32>
    %21 = vector.shape_cast %20 : vector<16xf32> to vector<16x1xf32>
    %cst_14 = arith.constant 1.280000e+02 : f32
    %22 = vector.broadcast %cst_14 : f32 to vector<16x1xf32>
    %23 = arith.divf %21, %22 : vector<16x1xf32>
    %24 = vector.broadcast %23 : vector<16x1xf32> to vector<16x128xf32>
    %25 = arith.subf %11, %24 : vector<16x128xf32>
    %26 = arith.mulf %25, %25 : vector<16x128xf32>
    %cst_15 = arith.constant dense<0.000000e+00> : vector<16xf32>
    %27 = vector.multi_reduction <add>, %26, %cst_15 [1] : vector<16x128xf32> to vector<16xf32>
    %28 = vector.shape_cast %27 : vector<16xf32> to vector<16x1xf32>
    %cst_16 = arith.constant 1.280000e+02 : f32
    %29 = vector.broadcast %cst_16 : f32 to vector<16x1xf32>
    %30 = arith.divf %28, %29 : vector<16x1xf32>
    %31 = vector.broadcast %23 : vector<16x1xf32> to vector<16x128xf32>
    %32 = arith.subf %11, %31 : vector<16x128xf32>
    %cst_17 = arith.constant 9.99999974E-6 : f32
    %33 = vector.broadcast %cst_17 : f32 to vector<16x1xf32>
    %34 = arith.addf %30, %33 : vector<16x1xf32>
    %35 = math.rsqrt %34 : vector<16x1xf32>
    %36 = vector.broadcast %35 : vector<16x1xf32> to vector<16x128xf32>
    %37 = arith.mulf %32, %36 : vector<16x128xf32>
    %38 = vector.broadcast %17 : vector<1x128xf32> to vector<16x128xf32>
    %39 = arith.mulf %37, %38 : vector<16x128xf32>
    %40 = vector.broadcast %19 : vector<1x128xf32> to vector<16x128xf32>
    %41 = arith.addf %39, %40 : vector<16x128xf32>
    %42 = arith.truncf %41 : vector<16x128xf32> to vector<16x128xbf16>
    %c0_18 = arith.constant 0 : index
    %c0_19 = arith.constant 0 : index
    %c0_20 = arith.constant 0 : index
    %43 = vector.load %arg6[%c0_18, %c0_19, %c0_20] : memref<2x128x384xbf16, #tpu.memory_space<vmem>>, vector<1x128x384xbf16>
    %44 = vector.shape_cast %43 : vector<1x128x384xbf16> to vector<128x384xbf16>
    %cst_21 = arith.constant dense<0.000000e+00> : vector<16x384xf32>
    %45 = tpu.matmul %42, %44, %cst_21 {dimension_numbers = #tpu.dot_dimension_numbers<[1], [0], [0], [1], [0, 0, 1, 1], [], []>} : vector<16x128xbf16>, vector<128x384xbf16>, vector<16x384xf32> -> vector<16x384xf32>
    %46 = arith.truncf %45 : vector<16x384xf32> to vector<16x384xbf16>
    %47 = vector.extract_strided_slice %46 {offsets = [0, 0], sizes = [16, 32], strides = [1, 1]} : vector<16x384xbf16> to vector<16x32xbf16>
    %48 = vector.extract_strided_slice %46 {offsets = [0, 128], sizes = [16, 32], strides = [1, 1]} : vector<16x384xbf16> to vector<16x32xbf16>
    %49 = vector.extract_strided_slice %46 {offsets = [0, 256], sizes = [16, 32], strides = [1, 1]} : vector<16x384xbf16> to vector<16x32xbf16>
    %cst_22 = arith.constant dense<0.000000e+00> : vector<16x16xf32>
    %50 = tpu.matmul %47, %48, %cst_22 {dimension_numbers = #tpu.dot_dimension_numbers<[1], [1], [0], [0], [0, 0, 1, 0], [], []>} : vector<16x32xbf16>, vector<16x32xbf16>, vector<16x16xf32> -> vector<16x16xf32>
    %cst_23 = arith.constant 0.176776692 : f32
    %51 = vector.broadcast %cst_23 : f32 to vector<16x16xf32>
    %52 = arith.mulf %50, %51 : vector<16x16xf32>
    %cst_24 = arith.constant -1.000000e+30 : f32
    %53 = vector.broadcast %cst_24 : f32 to vector<16x16xf32>
    %54 = arith.select %14, %52, %53 : vector<16x16xi1>, vector<16x16xf32>
    %cst_25 = arith.constant dense<0xFF800000> : vector<16xf32>
    %55 = vector.multi_reduction <maximumf>, %54, %cst_25 [1] : vector<16x16xf32> to vector<16xf32>
    %56 = vector.shape_cast %55 : vector<16xf32> to vector<16x1xf32>
    %57 = vector.broadcast %56 : vector<16x1xf32> to vector<16x16xf32>
    %58 = arith.subf %54, %57 : vector<16x16xf32>
    %59 = math.exp %58 : vector<16x16xf32>
    %cst_26 = arith.constant dense<0.000000e+00> : vector<16xf32>
    %60 = vector.multi_reduction <add>, %59, %cst_26 [1] : vector<16x16xf32> to vector<16xf32>
    %61 = vector.shape_cast %60 : vector<16xf32> to vector<16x1xf32>
    %62 = tpu.reciprocal %61 : vector<16x1xf32> -> vector<16x1xf32>
    %63 = vector.broadcast %62 : vector<16x1xf32> to vector<16x16xf32>
    %64 = arith.mulf %59, %63 : vector<16x16xf32>
    %65 = arith.truncf %64 : vector<16x16xf32> to vector<16x16xbf16>
    %cst_27 = arith.constant dense<0.000000e+00> : vector<16x32xf32>
    %66 = tpu.matmul %65, %49, %cst_27 {dimension_numbers = #tpu.dot_dimension_numbers<[1], [0], [0], [1], [0, 0, 1, 1], [], []>} : vector<16x16xbf16>, vector<16x32xbf16>, vector<16x32xf32> -> vector<16x32xf32>
    %67 = vector.extract_strided_slice %46 {offsets = [0, 32], sizes = [16, 32], strides = [1, 1]} : vector<16x384xbf16> to vector<16x32xbf16>
    %68 = vector.extract_strided_slice %46 {offsets = [0, 160], sizes = [16, 32], strides = [1, 1]} : vector<16x384xbf16> to vector<16x32xbf16>
    %69 = vector.extract_strided_slice %46 {offsets = [0, 288], sizes = [16, 32], strides = [1, 1]} : vector<16x384xbf16> to vector<16x32xbf16>
    %cst_28 = arith.constant dense<0.000000e+00> : vector<16x16xf32>
    %70 = tpu.matmul %67, %68, %cst_28 {dimension_numbers = #tpu.dot_dimension_numbers<[1], [1], [0], [0], [0, 0, 1, 0], [], []>} : vector<16x32xbf16>, vector<16x32xbf16>, vector<16x16xf32> -> vector<16x16xf32>
    %cst_29 = arith.constant 0.176776692 : f32
    %71 = vector.broadcast %cst_29 : f32 to vector<16x16xf32>
    %72 = arith.mulf %70, %71 : vector<16x16xf32>
    %cst_30 = arith.constant -1.000000e+30 : f32
    %73 = vector.broadcast %cst_30 : f32 to vector<16x16xf32>
    %74 = arith.select %14, %72, %73 : vector<16x16xi1>, vector<16x16xf32>
    %cst_31 = arith.constant dense<0xFF800000> : vector<16xf32>
    %75 = vector.multi_reduction <maximumf>, %74, %cst_31 [1] : vector<16x16xf32> to vector<16xf32>
    %76 = vector.shape_cast %75 : vector<16xf32> to vector<16x1xf32>
    %77 = vector.broadcast %76 : vector<16x1xf32> to vector<16x16xf32>
    %78 = arith.subf %74, %77 : vector<16x16xf32>
    %79 = math.exp %78 : vector<16x16xf32>
    %cst_32 = arith.constant dense<0.000000e+00> : vector<16xf32>
    %80 = vector.multi_reduction <add>, %79, %cst_32 [1] : vector<16x16xf32> to vector<16xf32>
    %81 = vector.shape_cast %80 : vector<16xf32> to vector<16x1xf32>
    %82 = tpu.reciprocal %81 : vector<16x1xf32> -> vector<16x1xf32>
    %83 = vector.broadcast %82 : vector<16x1xf32> to vector<16x16xf32>
    %84 = arith.mulf %79, %83 : vector<16x16xf32>
    %85 = arith.truncf %84 : vector<16x16xf32> to vector<16x16xbf16>
    %cst_33 = arith.constant dense<0.000000e+00> : vector<16x32xf32>
    %86 = tpu.matmul %85, %69, %cst_33 {dimension_numbers = #tpu.dot_dimension_numbers<[1], [0], [0], [1], [0, 0, 1, 1], [], []>} : vector<16x16xbf16>, vector<16x32xbf16>, vector<16x32xf32> -> vector<16x32xf32>
    %87 = vector.extract_strided_slice %46 {offsets = [0, 64], sizes = [16, 32], strides = [1, 1]} : vector<16x384xbf16> to vector<16x32xbf16>
    %88 = vector.extract_strided_slice %46 {offsets = [0, 192], sizes = [16, 32], strides = [1, 1]} : vector<16x384xbf16> to vector<16x32xbf16>
    %89 = vector.extract_strided_slice %46 {offsets = [0, 320], sizes = [16, 32], strides = [1, 1]} : vector<16x384xbf16> to vector<16x32xbf16>
    %cst_34 = arith.constant dense<0.000000e+00> : vector<16x16xf32>
    %90 = tpu.matmul %87, %88, %cst_34 {dimension_numbers = #tpu.dot_dimension_numbers<[1], [1], [0], [0], [0, 0, 1, 0], [], []>} : vector<16x32xbf16>, vector<16x32xbf16>, vector<16x16xf32> -> vector<16x16xf32>
    %cst_35 = arith.constant 0.176776692 : f32
    %91 = vector.broadcast %cst_35 : f32 to vector<16x16xf32>
    %92 = arith.mulf %90, %91 : vector<16x16xf32>
    %cst_36 = arith.constant -1.000000e+30 : f32
    %93 = vector.broadcast %cst_36 : f32 to vector<16x16xf32>
    %94 = arith.select %14, %92, %93 : vector<16x16xi1>, vector<16x16xf32>
    %cst_37 = arith.constant dense<0xFF800000> : vector<16xf32>
    %95 = vector.multi_reduction <maximumf>, %94, %cst_37 [1] : vector<16x16xf32> to vector<16xf32>
    %96 = vector.shape_cast %95 : vector<16xf32> to vector<16x1xf32>
    %97 = vector.broadcast %96 : vector<16x1xf32> to vector<16x16xf32>
    %98 = arith.subf %94, %97 : vector<16x16xf32>
    %99 = math.exp %98 : vector<16x16xf32>
    %cst_38 = arith.constant dense<0.000000e+00> : vector<16xf32>
    %100 = vector.multi_reduction <add>, %99, %cst_38 [1] : vector<16x16xf32> to vector<16xf32>
    %101 = vector.shape_cast %100 : vector<16xf32> to vector<16x1xf32>
    %102 = tpu.reciprocal %101 : vector<16x1xf32> -> vector<16x1xf32>
    %103 = vector.broadcast %102 : vector<16x1xf32> to vector<16x16xf32>
    %104 = arith.mulf %99, %103 : vector<16x16xf32>
    %105 = arith.truncf %104 : vector<16x16xf32> to vector<16x16xbf16>
    %cst_39 = arith.constant dense<0.000000e+00> : vector<16x32xf32>
    %106 = tpu.matmul %105, %89, %cst_39 {dimension_numbers = #tpu.dot_dimension_numbers<[1], [0], [0], [1], [0, 0, 1, 1], [], []>} : vector<16x16xbf16>, vector<16x32xbf16>, vector<16x32xf32> -> vector<16x32xf32>
    %107 = vector.extract_strided_slice %46 {offsets = [0, 96], sizes = [16, 32], strides = [1, 1]} : vector<16x384xbf16> to vector<16x32xbf16>
    %108 = vector.extract_strided_slice %46 {offsets = [0, 224], sizes = [16, 32], strides = [1, 1]} : vector<16x384xbf16> to vector<16x32xbf16>
    %109 = vector.extract_strided_slice %46 {offsets = [0, 352], sizes = [16, 32], strides = [1, 1]} : vector<16x384xbf16> to vector<16x32xbf16>
    %cst_40 = arith.constant dense<0.000000e+00> : vector<16x16xf32>
    %110 = tpu.matmul %107, %108, %cst_40 {dimension_numbers = #tpu.dot_dimension_numbers<[1], [1], [0], [0], [0, 0, 1, 0], [], []>} : vector<16x32xbf16>, vector<16x32xbf16>, vector<16x16xf32> -> vector<16x16xf32>
    %cst_41 = arith.constant 0.176776692 : f32
    %111 = vector.broadcast %cst_41 : f32 to vector<16x16xf32>
    %112 = arith.mulf %110, %111 : vector<16x16xf32>
    %cst_42 = arith.constant -1.000000e+30 : f32
    %113 = vector.broadcast %cst_42 : f32 to vector<16x16xf32>
    %114 = arith.select %14, %112, %113 : vector<16x16xi1>, vector<16x16xf32>
    %cst_43 = arith.constant dense<0xFF800000> : vector<16xf32>
    %115 = vector.multi_reduction <maximumf>, %114, %cst_43 [1] : vector<16x16xf32> to vector<16xf32>
    %116 = vector.shape_cast %115 : vector<16xf32> to vector<16x1xf32>
    %117 = vector.broadcast %116 : vector<16x1xf32> to vector<16x16xf32>
    %118 = arith.subf %114, %117 : vector<16x16xf32>
    %119 = math.exp %118 : vector<16x16xf32>
    %cst_44 = arith.constant dense<0.000000e+00> : vector<16xf32>
    %120 = vector.multi_reduction <add>, %119, %cst_44 [1] : vector<16x16xf32> to vector<16xf32>
    %121 = vector.shape_cast %120 : vector<16xf32> to vector<16x1xf32>
    %122 = tpu.reciprocal %121 : vector<16x1xf32> -> vector<16x1xf32>
    %123 = vector.broadcast %122 : vector<16x1xf32> to vector<16x16xf32>
    %124 = arith.mulf %119, %123 : vector<16x16xf32>
    %125 = arith.truncf %124 : vector<16x16xf32> to vector<16x16xbf16>
    %cst_45 = arith.constant dense<0.000000e+00> : vector<16x32xf32>
    %126 = tpu.matmul %125, %109, %cst_45 {dimension_numbers = #tpu.dot_dimension_numbers<[1], [0], [0], [1], [0, 0, 1, 1], [], []>} : vector<16x16xbf16>, vector<16x32xbf16>, vector<16x32xf32> -> vector<16x32xf32>
    %127 = tpu.concatenate %66, %86, %106, %126 in 1 : vector<16x32xf32>, vector<16x32xf32>, vector<16x32xf32>, vector<16x32xf32> -> vector<16x128xf32>
    %128 = arith.truncf %127 : vector<16x128xf32> to vector<16x128xbf16>
    %c0_46 = arith.constant 0 : index
    %c0_47 = arith.constant 0 : index
    %c0_48 = arith.constant 0 : index
    %129 = vector.load %arg7[%c0_46, %c0_47, %c0_48] : memref<2x128x128xbf16, #tpu.memory_space<vmem>>, vector<1x128x128xbf16>
    %130 = vector.shape_cast %129 : vector<1x128x128xbf16> to vector<128x128xbf16>
    %cst_49 = arith.constant dense<0.000000e+00> : vector<16x128xf32>
    %131 = tpu.matmul %128, %130, %cst_49 {dimension_numbers = #tpu.dot_dimension_numbers<[1], [0], [0], [1], [0, 0, 1, 1], [], []>} : vector<16x128xbf16>, vector<128x128xbf16>, vector<16x128xf32> -> vector<16x128xf32>
    %c0_50 = arith.constant 0 : index
    %c0_51 = arith.constant 0 : index
    %c0_52 = arith.constant 0 : index
    %132 = vector.load %arg8[%c0_50, %c0_51, %c0_52] : memref<2x1x128xf32, #tpu.memory_space<vmem>>, vector<1x1x128xf32>
    %133 = vector.shape_cast %132 : vector<1x1x128xf32> to vector<1x128xf32>
    %134 = vector.broadcast %133 : vector<1x128xf32> to vector<16x128xf32>
    %135 = arith.addf %131, %134 : vector<16x128xf32>
    %136 = arith.addf %11, %135 : vector<16x128xf32>
    %c0_53 = arith.constant 0 : index
    %c0_54 = arith.constant 0 : index
    %c0_55 = arith.constant 0 : index
    %137 = vector.load %arg9[%c0_53, %c0_54, %c0_55] : memref<2x1x128xf32, #tpu.memory_space<vmem>>, vector<1x1x128xf32>
    %138 = vector.shape_cast %137 : vector<1x1x128xf32> to vector<1x128xf32>
    %c0_56 = arith.constant 0 : index
    %c0_57 = arith.constant 0 : index
    %c0_58 = arith.constant 0 : index
    %139 = vector.load %arg10[%c0_56, %c0_57, %c0_58] : memref<2x1x128xf32, #tpu.memory_space<vmem>>, vector<1x1x128xf32>
    %140 = vector.shape_cast %139 : vector<1x1x128xf32> to vector<1x128xf32>
    %cst_59 = arith.constant dense<0.000000e+00> : vector<16xf32>
    %141 = vector.multi_reduction <add>, %136, %cst_59 [1] : vector<16x128xf32> to vector<16xf32>
    %142 = vector.shape_cast %141 : vector<16xf32> to vector<16x1xf32>
    %cst_60 = arith.constant 1.280000e+02 : f32
    %143 = vector.broadcast %cst_60 : f32 to vector<16x1xf32>
    %144 = arith.divf %142, %143 : vector<16x1xf32>
    %145 = vector.broadcast %144 : vector<16x1xf32> to vector<16x128xf32>
    %146 = arith.subf %136, %145 : vector<16x128xf32>
    %147 = arith.mulf %146, %146 : vector<16x128xf32>
    %cst_61 = arith.constant dense<0.000000e+00> : vector<16xf32>
    %148 = vector.multi_reduction <add>, %147, %cst_61 [1] : vector<16x128xf32> to vector<16xf32>
    %149 = vector.shape_cast %148 : vector<16xf32> to vector<16x1xf32>
    %cst_62 = arith.constant 1.280000e+02 : f32
    %150 = vector.broadcast %cst_62 : f32 to vector<16x1xf32>
    %151 = arith.divf %149, %150 : vector<16x1xf32>
    %152 = vector.broadcast %144 : vector<16x1xf32> to vector<16x128xf32>
    %153 = arith.subf %136, %152 : vector<16x128xf32>
    %cst_63 = arith.constant 9.99999974E-6 : f32
    %154 = vector.broadcast %cst_63 : f32 to vector<16x1xf32>
    %155 = arith.addf %151, %154 : vector<16x1xf32>
    %156 = math.rsqrt %155 : vector<16x1xf32>
    %157 = vector.broadcast %156 : vector<16x1xf32> to vector<16x128xf32>
    %158 = arith.mulf %153, %157 : vector<16x128xf32>
    %159 = vector.broadcast %138 : vector<1x128xf32> to vector<16x128xf32>
    %160 = arith.mulf %158, %159 : vector<16x128xf32>
    %161 = vector.broadcast %140 : vector<1x128xf32> to vector<16x128xf32>
    %162 = arith.addf %160, %161 : vector<16x128xf32>
    %163 = arith.truncf %162 : vector<16x128xf32> to vector<16x128xbf16>
    %c0_64 = arith.constant 0 : index
    %c0_65 = arith.constant 0 : index
    %c0_66 = arith.constant 0 : index
    %164 = vector.load %arg11[%c0_64, %c0_65, %c0_66] : memref<2x128x128xbf16, #tpu.memory_space<vmem>>, vector<1x128x128xbf16>
    %165 = vector.shape_cast %164 : vector<1x128x128xbf16> to vector<128x128xbf16>
    %cst_67 = arith.constant dense<0.000000e+00> : vector<16x128xf32>
    %166 = tpu.matmul %163, %165, %cst_67 {dimension_numbers = #tpu.dot_dimension_numbers<[1], [0], [0], [1], [0, 0, 1, 1], [], []>} : vector<16x128xbf16>, vector<128x128xbf16>, vector<16x128xf32> -> vector<16x128xf32>
    %c4_i32 = arith.constant 4 : i32
    %167 = vector.broadcast %c4_i32 : i32 to vector<16x128xi32>
    %168 = arith.cmpi slt, %15, %167 : vector<16x128xi32>
    %cst_68 = arith.constant -1.000000e+30 : f32
    %169 = vector.broadcast %cst_68 : f32 to vector<16x128xf32>
    %170 = arith.select %168, %166, %169 : vector<16x128xi1>, vector<16x128xf32>
    %cst_69 = arith.constant dense<0xFF800000> : vector<16xf32>
    %171 = vector.multi_reduction <maximumf>, %170, %cst_69 [1] : vector<16x128xf32> to vector<16xf32>
    %172 = vector.shape_cast %171 : vector<16xf32> to vector<16x1xf32>
    %173 = vector.broadcast %172 : vector<16x1xf32> to vector<16x128xf32>
    %174 = arith.subf %170, %173 : vector<16x128xf32>
    %175 = math.exp %174 : vector<16x128xf32>
    %cst_70 = arith.constant dense<0.000000e+00> : vector<16xf32>
    %176 = vector.multi_reduction <add>, %175, %cst_70 [1] : vector<16x128xf32> to vector<16xf32>
    %177 = vector.shape_cast %176 : vector<16xf32> to vector<16x1xf32>
    %178 = tpu.reciprocal %177 : vector<16x1xf32> -> vector<16x1xf32>
    %179 = vector.broadcast %178 : vector<16x1xf32> to vector<16x128xf32>
    %180 = arith.mulf %175, %179 : vector<16x128xf32>
    %false = arith.constant false
    %181 = vector.broadcast %false : i1 to vector<16x128xi1>
    %cst_71 = arith.constant dense<0xFF800000> : vector<16xf32>
    %182 = vector.multi_reduction <maximumf>, %180, %cst_71 [1] : vector<16x128xf32> to vector<16xf32>
    %183 = vector.shape_cast %182 : vector<16xf32> to vector<16x1xf32>
    %184 = vector.broadcast %183 : vector<16x1xf32> to vector<16x128xf32>
    %185 = arith.cmpf oeq, %180, %184 : vector<16x128xf32>
    %c128_i32 = arith.constant 128 : i32
    %186 = vector.broadcast %c128_i32 : i32 to vector<16x128xi32>
    %187 = arith.select %185, %15, %186 : vector<16x128xi1>, vector<16x128xi32>
    %cst_72 = arith.constant dense<2147483647> : vector<16xi32>
    %188 = vector.multi_reduction <minsi>, %187, %cst_72 [1] : vector<16x128xi32> to vector<16xi32>
    %189 = vector.shape_cast %188 : vector<16xi32> to vector<16x1xi32>
    %190 = vector.broadcast %189 : vector<16x1xi32> to vector<16x128xi32>
    %191 = arith.cmpi eq, %15, %190 : vector<16x128xi32>
    %192 = arith.ori %181, %191 : vector<16x128xi1>
    %cst_73 = arith.constant -1.000000e+00 : f32
    %193 = vector.broadcast %cst_73 : f32 to vector<16x128xf32>
    %194 = arith.select %191, %193, %180 : vector<16x128xi1>, vector<16x128xf32>
    %cst_74 = arith.constant dense<0xFF800000> : vector<16xf32>
    %195 = vector.multi_reduction <maximumf>, %194, %cst_74 [1] : vector<16x128xf32> to vector<16xf32>
    %196 = vector.shape_cast %195 : vector<16xf32> to vector<16x1xf32>
    %197 = vector.broadcast %196 : vector<16x1xf32> to vector<16x128xf32>
    %198 = arith.cmpf oeq, %194, %197 : vector<16x128xf32>
    %c128_i32_75 = arith.constant 128 : i32
    %199 = vector.broadcast %c128_i32_75 : i32 to vector<16x128xi32>
    %200 = arith.select %198, %15, %199 : vector<16x128xi1>, vector<16x128xi32>
    %cst_76 = arith.constant dense<2147483647> : vector<16xi32>
    %201 = vector.multi_reduction <minsi>, %200, %cst_76 [1] : vector<16x128xi32> to vector<16xi32>
    %202 = vector.shape_cast %201 : vector<16xi32> to vector<16x1xi32>
    %203 = vector.broadcast %202 : vector<16x1xi32> to vector<16x128xi32>
    %204 = arith.cmpi eq, %15, %203 : vector<16x128xi32>
    %205 = arith.ori %192, %204 : vector<16x128xi1>
    %cst_77 = arith.constant 0.000000e+00 : f32
    %206 = vector.broadcast %cst_77 : f32 to vector<16x128xf32>
    %207 = arith.select %205, %180, %206 : vector<16x128xi1>, vector<16x128xf32>
    %cst_78 = arith.constant dense<0.000000e+00> : vector<16xf32>
    %208 = vector.multi_reduction <add>, %207, %cst_78 [1] : vector<16x128xf32> to vector<16xf32>
    %209 = vector.shape_cast %208 : vector<16xf32> to vector<16x1xf32>
    %cst_79 = arith.constant 9.99999968E-21 : f32
    %210 = vector.broadcast %cst_79 : f32 to vector<16x1xf32>
    %211 = arith.maximumf %209, %210 : vector<16x1xf32>
    %212 = tpu.reciprocal %211 : vector<16x1xf32> -> vector<16x1xf32>
    %213 = vector.broadcast %212 : vector<16x1xf32> to vector<16x128xf32>
    %214 = arith.mulf %207, %213 : vector<16x128xf32>
    %c0_80 = arith.constant 0 : index
    %c0_81 = arith.constant 0 : index
    %c0_82 = arith.constant 0 : index
    %215 = vector.load %arg12[%c0_80, %c0_81, %c0_82] : memref<2x128x2048xbf16, #tpu.memory_space<vmem>>, vector<1x128x2048xbf16>
    %216 = vector.shape_cast %215 : vector<1x128x2048xbf16> to vector<128x2048xbf16>
    %cst_83 = arith.constant dense<0.000000e+00> : vector<16x2048xf32>
    %217 = tpu.matmul %163, %216, %cst_83 {dimension_numbers = #tpu.dot_dimension_numbers<[1], [0], [0], [1], [0, 0, 1, 1], [], []>} : vector<16x128xbf16>, vector<128x2048xbf16>, vector<16x2048xf32> -> vector<16x2048xf32>
    %c0_84 = arith.constant 0 : index
    %c0_85 = arith.constant 0 : index
    %c0_86 = arith.constant 0 : index
    %218 = vector.load %arg13[%c0_84, %c0_85, %c0_86] : memref<2x1x2048xf32, #tpu.memory_space<vmem>>, vector<1x1x2048xf32>
    %219 = vector.shape_cast %218 : vector<1x1x2048xf32> to vector<1x2048xf32>
    %220 = vector.broadcast %219 : vector<1x2048xf32> to vector<16x2048xf32>
    %221 = arith.addf %217, %220 : vector<16x2048xf32>
    %cst_87 = arith.constant 0.000000e+00 : f32
    %222 = vector.broadcast %cst_87 : f32 to vector<16x2048xf32>
    %223 = arith.maximumf %221, %222 : vector<16x2048xf32>
    %224 = vector.extract_strided_slice %214 {offsets = [0, 0], sizes = [16, 1], strides = [1, 1]} : vector<16x128xf32> to vector<16x1xf32>
    %225 = vector.shape_cast %224 : vector<16x1xf32> to vector<16x1xf32>
    %226 = vector.broadcast %225 : vector<16x1xf32> to vector<16x512xf32>
    %227 = vector.extract_strided_slice %214 {offsets = [0, 1], sizes = [16, 1], strides = [1, 1]} : vector<16x128xf32> to vector<16x1xf32>
    %228 = vector.shape_cast %227 : vector<16x1xf32> to vector<16x1xf32>
    %229 = vector.broadcast %228 : vector<16x1xf32> to vector<16x512xf32>
    %230 = vector.extract_strided_slice %214 {offsets = [0, 2], sizes = [16, 1], strides = [1, 1]} : vector<16x128xf32> to vector<16x1xf32>
    %231 = vector.shape_cast %230 : vector<16x1xf32> to vector<16x1xf32>
    %232 = vector.broadcast %231 : vector<16x1xf32> to vector<16x512xf32>
    %233 = vector.extract_strided_slice %214 {offsets = [0, 3], sizes = [16, 1], strides = [1, 1]} : vector<16x128xf32> to vector<16x1xf32>
    %234 = vector.shape_cast %233 : vector<16x1xf32> to vector<16x1xf32>
    %235 = vector.broadcast %234 : vector<16x1xf32> to vector<16x512xf32>
    %236 = tpu.concatenate %226, %229, %232, %235 in 1 : vector<16x512xf32>, vector<16x512xf32>, vector<16x512xf32>, vector<16x512xf32> -> vector<16x2048xf32>
    %237 = arith.mulf %223, %236 : vector<16x2048xf32>
    %238 = arith.truncf %237 : vector<16x2048xf32> to vector<16x2048xbf16>
    %c0_88 = arith.constant 0 : index
    %c0_89 = arith.constant 0 : index
    %c0_90 = arith.constant 0 : index
    %239 = vector.load %arg14[%c0_88, %c0_89, %c0_90] : memref<2x2048x128xbf16, #tpu.memory_space<vmem>>, vector<1x2048x128xbf16>
    %240 = vector.shape_cast %239 : vector<1x2048x128xbf16> to vector<2048x128xbf16>
    %cst_91 = arith.constant dense<0.000000e+00> : vector<16x128xf32>
    %241 = tpu.matmul %238, %240, %cst_91 {dimension_numbers = #tpu.dot_dimension_numbers<[1], [0], [0], [1], [0, 0, 1, 1], [], []>} : vector<16x2048xbf16>, vector<2048x128xbf16>, vector<16x128xf32> -> vector<16x128xf32>
    %c0_92 = arith.constant 0 : index
    %c0_93 = arith.constant 0 : index
    %c0_94 = arith.constant 0 : index
    %242 = vector.load %arg15[%c0_92, %c0_93, %c0_94] : memref<2x128x128xf32, #tpu.memory_space<vmem>>, vector<1x128x128xf32>
    %243 = vector.shape_cast %242 : vector<1x128x128xf32> to vector<128x128xf32>
    %cst_95 = arith.constant dense<0.000000e+00> : vector<16x128xf32>
    %244 = tpu.matmul %214, %243, %cst_95 {dimension_numbers = #tpu.dot_dimension_numbers<[1], [0], [0], [1], [0, 0, 1, 1], [], []>} : vector<16x128xf32>, vector<128x128xf32>, vector<16x128xf32> -> vector<16x128xf32>
    %245 = arith.addf %241, %244 : vector<16x128xf32>
    %246 = arith.addf %136, %245 : vector<16x128xf32>
    %c1 = arith.constant 1 : index
    %c0_96 = arith.constant 0 : index
    %c0_97 = arith.constant 0 : index
    %247 = vector.load %arg4[%c1, %c0_96, %c0_97] : memref<2x1x128xf32, #tpu.memory_space<vmem>>, vector<1x1x128xf32>
    %248 = vector.shape_cast %247 : vector<1x1x128xf32> to vector<1x128xf32>
    %c1_98 = arith.constant 1 : index
    %c0_99 = arith.constant 0 : index
    %c0_100 = arith.constant 0 : index
    %249 = vector.load %arg5[%c1_98, %c0_99, %c0_100] : memref<2x1x128xf32, #tpu.memory_space<vmem>>, vector<1x1x128xf32>
    %250 = vector.shape_cast %249 : vector<1x1x128xf32> to vector<1x128xf32>
    %cst_101 = arith.constant dense<0.000000e+00> : vector<16xf32>
    %251 = vector.multi_reduction <add>, %246, %cst_101 [1] : vector<16x128xf32> to vector<16xf32>
    %252 = vector.shape_cast %251 : vector<16xf32> to vector<16x1xf32>
    %cst_102 = arith.constant 1.280000e+02 : f32
    %253 = vector.broadcast %cst_102 : f32 to vector<16x1xf32>
    %254 = arith.divf %252, %253 : vector<16x1xf32>
    %255 = vector.broadcast %254 : vector<16x1xf32> to vector<16x128xf32>
    %256 = arith.subf %246, %255 : vector<16x128xf32>
    %257 = arith.mulf %256, %256 : vector<16x128xf32>
    %cst_103 = arith.constant dense<0.000000e+00> : vector<16xf32>
    %258 = vector.multi_reduction <add>, %257, %cst_103 [1] : vector<16x128xf32> to vector<16xf32>
    %259 = vector.shape_cast %258 : vector<16xf32> to vector<16x1xf32>
    %cst_104 = arith.constant 1.280000e+02 : f32
    %260 = vector.broadcast %cst_104 : f32 to vector<16x1xf32>
    %261 = arith.divf %259, %260 : vector<16x1xf32>
    %262 = vector.broadcast %254 : vector<16x1xf32> to vector<16x128xf32>
    %263 = arith.subf %246, %262 : vector<16x128xf32>
    %cst_105 = arith.constant 9.99999974E-6 : f32
    %264 = vector.broadcast %cst_105 : f32 to vector<16x1xf32>
    %265 = arith.addf %261, %264 : vector<16x1xf32>
    %266 = math.rsqrt %265 : vector<16x1xf32>
    %267 = vector.broadcast %266 : vector<16x1xf32> to vector<16x128xf32>
    %268 = arith.mulf %263, %267 : vector<16x128xf32>
    %269 = vector.broadcast %248 : vector<1x128xf32> to vector<16x128xf32>
    %270 = arith.mulf %268, %269 : vector<16x128xf32>
    %271 = vector.broadcast %250 : vector<1x128xf32> to vector<16x128xf32>
    %272 = arith.addf %270, %271 : vector<16x128xf32>
    %273 = arith.truncf %272 : vector<16x128xf32> to vector<16x128xbf16>
    %c1_106 = arith.constant 1 : index
    %c0_107 = arith.constant 0 : index
    %c0_108 = arith.constant 0 : index
    %274 = vector.load %arg6[%c1_106, %c0_107, %c0_108] : memref<2x128x384xbf16, #tpu.memory_space<vmem>>, vector<1x128x384xbf16>
    %275 = vector.shape_cast %274 : vector<1x128x384xbf16> to vector<128x384xbf16>
    %cst_109 = arith.constant dense<0.000000e+00> : vector<16x384xf32>
    %276 = tpu.matmul %273, %275, %cst_109 {dimension_numbers = #tpu.dot_dimension_numbers<[1], [0], [0], [1], [0, 0, 1, 1], [], []>} : vector<16x128xbf16>, vector<128x384xbf16>, vector<16x384xf32> -> vector<16x384xf32>
    %277 = arith.truncf %276 : vector<16x384xf32> to vector<16x384xbf16>
    %278 = vector.extract_strided_slice %277 {offsets = [0, 0], sizes = [16, 32], strides = [1, 1]} : vector<16x384xbf16> to vector<16x32xbf16>
    %279 = vector.extract_strided_slice %277 {offsets = [0, 128], sizes = [16, 32], strides = [1, 1]} : vector<16x384xbf16> to vector<16x32xbf16>
    %280 = vector.extract_strided_slice %277 {offsets = [0, 256], sizes = [16, 32], strides = [1, 1]} : vector<16x384xbf16> to vector<16x32xbf16>
    %cst_110 = arith.constant dense<0.000000e+00> : vector<16x16xf32>
    %281 = tpu.matmul %278, %279, %cst_110 {dimension_numbers = #tpu.dot_dimension_numbers<[1], [1], [0], [0], [0, 0, 1, 0], [], []>} : vector<16x32xbf16>, vector<16x32xbf16>, vector<16x16xf32> -> vector<16x16xf32>
    %cst_111 = arith.constant 0.176776692 : f32
    %282 = vector.broadcast %cst_111 : f32 to vector<16x16xf32>
    %283 = arith.mulf %281, %282 : vector<16x16xf32>
    %cst_112 = arith.constant -1.000000e+30 : f32
    %284 = vector.broadcast %cst_112 : f32 to vector<16x16xf32>
    %285 = arith.select %14, %283, %284 : vector<16x16xi1>, vector<16x16xf32>
    %cst_113 = arith.constant dense<0xFF800000> : vector<16xf32>
    %286 = vector.multi_reduction <maximumf>, %285, %cst_113 [1] : vector<16x16xf32> to vector<16xf32>
    %287 = vector.shape_cast %286 : vector<16xf32> to vector<16x1xf32>
    %288 = vector.broadcast %287 : vector<16x1xf32> to vector<16x16xf32>
    %289 = arith.subf %285, %288 : vector<16x16xf32>
    %290 = math.exp %289 : vector<16x16xf32>
    %cst_114 = arith.constant dense<0.000000e+00> : vector<16xf32>
    %291 = vector.multi_reduction <add>, %290, %cst_114 [1] : vector<16x16xf32> to vector<16xf32>
    %292 = vector.shape_cast %291 : vector<16xf32> to vector<16x1xf32>
    %293 = tpu.reciprocal %292 : vector<16x1xf32> -> vector<16x1xf32>
    %294 = vector.broadcast %293 : vector<16x1xf32> to vector<16x16xf32>
    %295 = arith.mulf %290, %294 : vector<16x16xf32>
    %296 = arith.truncf %295 : vector<16x16xf32> to vector<16x16xbf16>
    %cst_115 = arith.constant dense<0.000000e+00> : vector<16x32xf32>
    %297 = tpu.matmul %296, %280, %cst_115 {dimension_numbers = #tpu.dot_dimension_numbers<[1], [0], [0], [1], [0, 0, 1, 1], [], []>} : vector<16x16xbf16>, vector<16x32xbf16>, vector<16x32xf32> -> vector<16x32xf32>
    %298 = vector.extract_strided_slice %277 {offsets = [0, 32], sizes = [16, 32], strides = [1, 1]} : vector<16x384xbf16> to vector<16x32xbf16>
    %299 = vector.extract_strided_slice %277 {offsets = [0, 160], sizes = [16, 32], strides = [1, 1]} : vector<16x384xbf16> to vector<16x32xbf16>
    %300 = vector.extract_strided_slice %277 {offsets = [0, 288], sizes = [16, 32], strides = [1, 1]} : vector<16x384xbf16> to vector<16x32xbf16>
    %cst_116 = arith.constant dense<0.000000e+00> : vector<16x16xf32>
    %301 = tpu.matmul %298, %299, %cst_116 {dimension_numbers = #tpu.dot_dimension_numbers<[1], [1], [0], [0], [0, 0, 1, 0], [], []>} : vector<16x32xbf16>, vector<16x32xbf16>, vector<16x16xf32> -> vector<16x16xf32>
    %cst_117 = arith.constant 0.176776692 : f32
    %302 = vector.broadcast %cst_117 : f32 to vector<16x16xf32>
    %303 = arith.mulf %301, %302 : vector<16x16xf32>
    %cst_118 = arith.constant -1.000000e+30 : f32
    %304 = vector.broadcast %cst_118 : f32 to vector<16x16xf32>
    %305 = arith.select %14, %303, %304 : vector<16x16xi1>, vector<16x16xf32>
    %cst_119 = arith.constant dense<0xFF800000> : vector<16xf32>
    %306 = vector.multi_reduction <maximumf>, %305, %cst_119 [1] : vector<16x16xf32> to vector<16xf32>
    %307 = vector.shape_cast %306 : vector<16xf32> to vector<16x1xf32>
    %308 = vector.broadcast %307 : vector<16x1xf32> to vector<16x16xf32>
    %309 = arith.subf %305, %308 : vector<16x16xf32>
    %310 = math.exp %309 : vector<16x16xf32>
    %cst_120 = arith.constant dense<0.000000e+00> : vector<16xf32>
    %311 = vector.multi_reduction <add>, %310, %cst_120 [1] : vector<16x16xf32> to vector<16xf32>
    %312 = vector.shape_cast %311 : vector<16xf32> to vector<16x1xf32>
    %313 = tpu.reciprocal %312 : vector<16x1xf32> -> vector<16x1xf32>
    %314 = vector.broadcast %313 : vector<16x1xf32> to vector<16x16xf32>
    %315 = arith.mulf %310, %314 : vector<16x16xf32>
    %316 = arith.truncf %315 : vector<16x16xf32> to vector<16x16xbf16>
    %cst_121 = arith.constant dense<0.000000e+00> : vector<16x32xf32>
    %317 = tpu.matmul %316, %300, %cst_121 {dimension_numbers = #tpu.dot_dimension_numbers<[1], [0], [0], [1], [0, 0, 1, 1], [], []>} : vector<16x16xbf16>, vector<16x32xbf16>, vector<16x32xf32> -> vector<16x32xf32>
    %318 = vector.extract_strided_slice %277 {offsets = [0, 64], sizes = [16, 32], strides = [1, 1]} : vector<16x384xbf16> to vector<16x32xbf16>
    %319 = vector.extract_strided_slice %277 {offsets = [0, 192], sizes = [16, 32], strides = [1, 1]} : vector<16x384xbf16> to vector<16x32xbf16>
    %320 = vector.extract_strided_slice %277 {offsets = [0, 320], sizes = [16, 32], strides = [1, 1]} : vector<16x384xbf16> to vector<16x32xbf16>
    %cst_122 = arith.constant dense<0.000000e+00> : vector<16x16xf32>
    %321 = tpu.matmul %318, %319, %cst_122 {dimension_numbers = #tpu.dot_dimension_numbers<[1], [1], [0], [0], [0, 0, 1, 0], [], []>} : vector<16x32xbf16>, vector<16x32xbf16>, vector<16x16xf32> -> vector<16x16xf32>
    %cst_123 = arith.constant 0.176776692 : f32
    %322 = vector.broadcast %cst_123 : f32 to vector<16x16xf32>
    %323 = arith.mulf %321, %322 : vector<16x16xf32>
    %cst_124 = arith.constant -1.000000e+30 : f32
    %324 = vector.broadcast %cst_124 : f32 to vector<16x16xf32>
    %325 = arith.select %14, %323, %324 : vector<16x16xi1>, vector<16x16xf32>
    %cst_125 = arith.constant dense<0xFF800000> : vector<16xf32>
    %326 = vector.multi_reduction <maximumf>, %325, %cst_125 [1] : vector<16x16xf32> to vector<16xf32>
    %327 = vector.shape_cast %326 : vector<16xf32> to vector<16x1xf32>
    %328 = vector.broadcast %327 : vector<16x1xf32> to vector<16x16xf32>
    %329 = arith.subf %325, %328 : vector<16x16xf32>
    %330 = math.exp %329 : vector<16x16xf32>
    %cst_126 = arith.constant dense<0.000000e+00> : vector<16xf32>
    %331 = vector.multi_reduction <add>, %330, %cst_126 [1] : vector<16x16xf32> to vector<16xf32>
    %332 = vector.shape_cast %331 : vector<16xf32> to vector<16x1xf32>
    %333 = tpu.reciprocal %332 : vector<16x1xf32> -> vector<16x1xf32>
    %334 = vector.broadcast %333 : vector<16x1xf32> to vector<16x16xf32>
    %335 = arith.mulf %330, %334 : vector<16x16xf32>
    %336 = arith.truncf %335 : vector<16x16xf32> to vector<16x16xbf16>
    %cst_127 = arith.constant dense<0.000000e+00> : vector<16x32xf32>
    %337 = tpu.matmul %336, %320, %cst_127 {dimension_numbers = #tpu.dot_dimension_numbers<[1], [0], [0], [1], [0, 0, 1, 1], [], []>} : vector<16x16xbf16>, vector<16x32xbf16>, vector<16x32xf32> -> vector<16x32xf32>
    %338 = vector.extract_strided_slice %277 {offsets = [0, 96], sizes = [16, 32], strides = [1, 1]} : vector<16x384xbf16> to vector<16x32xbf16>
    %339 = vector.extract_strided_slice %277 {offsets = [0, 224], sizes = [16, 32], strides = [1, 1]} : vector<16x384xbf16> to vector<16x32xbf16>
    %340 = vector.extract_strided_slice %277 {offsets = [0, 352], sizes = [16, 32], strides = [1, 1]} : vector<16x384xbf16> to vector<16x32xbf16>
    %cst_128 = arith.constant dense<0.000000e+00> : vector<16x16xf32>
    %341 = tpu.matmul %338, %339, %cst_128 {dimension_numbers = #tpu.dot_dimension_numbers<[1], [1], [0], [0], [0, 0, 1, 0], [], []>} : vector<16x32xbf16>, vector<16x32xbf16>, vector<16x16xf32> -> vector<16x16xf32>
    %cst_129 = arith.constant 0.176776692 : f32
    %342 = vector.broadcast %cst_129 : f32 to vector<16x16xf32>
    %343 = arith.mulf %341, %342 : vector<16x16xf32>
    %cst_130 = arith.constant -1.000000e+30 : f32
    %344 = vector.broadcast %cst_130 : f32 to vector<16x16xf32>
    %345 = arith.select %14, %343, %344 : vector<16x16xi1>, vector<16x16xf32>
    %cst_131 = arith.constant dense<0xFF800000> : vector<16xf32>
    %346 = vector.multi_reduction <maximumf>, %345, %cst_131 [1] : vector<16x16xf32> to vector<16xf32>
    %347 = vector.shape_cast %346 : vector<16xf32> to vector<16x1xf32>
    %348 = vector.broadcast %347 : vector<16x1xf32> to vector<16x16xf32>
    %349 = arith.subf %345, %348 : vector<16x16xf32>
    %350 = math.exp %349 : vector<16x16xf32>
    %cst_132 = arith.constant dense<0.000000e+00> : vector<16xf32>
    %351 = vector.multi_reduction <add>, %350, %cst_132 [1] : vector<16x16xf32> to vector<16xf32>
    %352 = vector.shape_cast %351 : vector<16xf32> to vector<16x1xf32>
    %353 = tpu.reciprocal %352 : vector<16x1xf32> -> vector<16x1xf32>
    %354 = vector.broadcast %353 : vector<16x1xf32> to vector<16x16xf32>
    %355 = arith.mulf %350, %354 : vector<16x16xf32>
    %356 = arith.truncf %355 : vector<16x16xf32> to vector<16x16xbf16>
    %cst_133 = arith.constant dense<0.000000e+00> : vector<16x32xf32>
    %357 = tpu.matmul %356, %340, %cst_133 {dimension_numbers = #tpu.dot_dimension_numbers<[1], [0], [0], [1], [0, 0, 1, 1], [], []>} : vector<16x16xbf16>, vector<16x32xbf16>, vector<16x32xf32> -> vector<16x32xf32>
    %358 = tpu.concatenate %297, %317, %337, %357 in 1 : vector<16x32xf32>, vector<16x32xf32>, vector<16x32xf32>, vector<16x32xf32> -> vector<16x128xf32>
    %359 = arith.truncf %358 : vector<16x128xf32> to vector<16x128xbf16>
    %c1_134 = arith.constant 1 : index
    %c0_135 = arith.constant 0 : index
    %c0_136 = arith.constant 0 : index
    %360 = vector.load %arg7[%c1_134, %c0_135, %c0_136] : memref<2x128x128xbf16, #tpu.memory_space<vmem>>, vector<1x128x128xbf16>
    %361 = vector.shape_cast %360 : vector<1x128x128xbf16> to vector<128x128xbf16>
    %cst_137 = arith.constant dense<0.000000e+00> : vector<16x128xf32>
    %362 = tpu.matmul %359, %361, %cst_137 {dimension_numbers = #tpu.dot_dimension_numbers<[1], [0], [0], [1], [0, 0, 1, 1], [], []>} : vector<16x128xbf16>, vector<128x128xbf16>, vector<16x128xf32> -> vector<16x128xf32>
    %c1_138 = arith.constant 1 : index
    %c0_139 = arith.constant 0 : index
    %c0_140 = arith.constant 0 : index
    %363 = vector.load %arg8[%c1_138, %c0_139, %c0_140] : memref<2x1x128xf32, #tpu.memory_space<vmem>>, vector<1x1x128xf32>
    %364 = vector.shape_cast %363 : vector<1x1x128xf32> to vector<1x128xf32>
    %365 = vector.broadcast %364 : vector<1x128xf32> to vector<16x128xf32>
    %366 = arith.addf %362, %365 : vector<16x128xf32>
    %367 = arith.addf %246, %366 : vector<16x128xf32>
    %c1_141 = arith.constant 1 : index
    %c0_142 = arith.constant 0 : index
    %c0_143 = arith.constant 0 : index
    %368 = vector.load %arg9[%c1_141, %c0_142, %c0_143] : memref<2x1x128xf32, #tpu.memory_space<vmem>>, vector<1x1x128xf32>
    %369 = vector.shape_cast %368 : vector<1x1x128xf32> to vector<1x128xf32>
    %c1_144 = arith.constant 1 : index
    %c0_145 = arith.constant 0 : index
    %c0_146 = arith.constant 0 : index
    %370 = vector.load %arg10[%c1_144, %c0_145, %c0_146] : memref<2x1x128xf32, #tpu.memory_space<vmem>>, vector<1x1x128xf32>
    %371 = vector.shape_cast %370 : vector<1x1x128xf32> to vector<1x128xf32>
    %cst_147 = arith.constant dense<0.000000e+00> : vector<16xf32>
    %372 = vector.multi_reduction <add>, %367, %cst_147 [1] : vector<16x128xf32> to vector<16xf32>
    %373 = vector.shape_cast %372 : vector<16xf32> to vector<16x1xf32>
    %cst_148 = arith.constant 1.280000e+02 : f32
    %374 = vector.broadcast %cst_148 : f32 to vector<16x1xf32>
    %375 = arith.divf %373, %374 : vector<16x1xf32>
    %376 = vector.broadcast %375 : vector<16x1xf32> to vector<16x128xf32>
    %377 = arith.subf %367, %376 : vector<16x128xf32>
    %378 = arith.mulf %377, %377 : vector<16x128xf32>
    %cst_149 = arith.constant dense<0.000000e+00> : vector<16xf32>
    %379 = vector.multi_reduction <add>, %378, %cst_149 [1] : vector<16x128xf32> to vector<16xf32>
    %380 = vector.shape_cast %379 : vector<16xf32> to vector<16x1xf32>
    %cst_150 = arith.constant 1.280000e+02 : f32
    %381 = vector.broadcast %cst_150 : f32 to vector<16x1xf32>
    %382 = arith.divf %380, %381 : vector<16x1xf32>
    %383 = vector.broadcast %375 : vector<16x1xf32> to vector<16x128xf32>
    %384 = arith.subf %367, %383 : vector<16x128xf32>
    %cst_151 = arith.constant 9.99999974E-6 : f32
    %385 = vector.broadcast %cst_151 : f32 to vector<16x1xf32>
    %386 = arith.addf %382, %385 : vector<16x1xf32>
    %387 = math.rsqrt %386 : vector<16x1xf32>
    %388 = vector.broadcast %387 : vector<16x1xf32> to vector<16x128xf32>
    %389 = arith.mulf %384, %388 : vector<16x128xf32>
    %390 = vector.broadcast %369 : vector<1x128xf32> to vector<16x128xf32>
    %391 = arith.mulf %389, %390 : vector<16x128xf32>
    %392 = vector.broadcast %371 : vector<1x128xf32> to vector<16x128xf32>
    %393 = arith.addf %391, %392 : vector<16x128xf32>
    %394 = arith.truncf %393 : vector<16x128xf32> to vector<16x128xbf16>
    %c1_152 = arith.constant 1 : index
    %c0_153 = arith.constant 0 : index
    %c0_154 = arith.constant 0 : index
    %395 = vector.load %arg11[%c1_152, %c0_153, %c0_154] : memref<2x128x128xbf16, #tpu.memory_space<vmem>>, vector<1x128x128xbf16>
    %396 = vector.shape_cast %395 : vector<1x128x128xbf16> to vector<128x128xbf16>
    %cst_155 = arith.constant dense<0.000000e+00> : vector<16x128xf32>
    %397 = tpu.matmul %394, %396, %cst_155 {dimension_numbers = #tpu.dot_dimension_numbers<[1], [0], [0], [1], [0, 0, 1, 1], [], []>} : vector<16x128xbf16>, vector<128x128xbf16>, vector<16x128xf32> -> vector<16x128xf32>
    %c4_i32_156 = arith.constant 4 : i32
    %398 = vector.broadcast %c4_i32_156 : i32 to vector<16x128xi32>
    %399 = arith.cmpi slt, %15, %398 : vector<16x128xi32>
    %cst_157 = arith.constant -1.000000e+30 : f32
    %400 = vector.broadcast %cst_157 : f32 to vector<16x128xf32>
    %401 = arith.select %399, %397, %400 : vector<16x128xi1>, vector<16x128xf32>
    %cst_158 = arith.constant dense<0xFF800000> : vector<16xf32>
    %402 = vector.multi_reduction <maximumf>, %401, %cst_158 [1] : vector<16x128xf32> to vector<16xf32>
    %403 = vector.shape_cast %402 : vector<16xf32> to vector<16x1xf32>
    %404 = vector.broadcast %403 : vector<16x1xf32> to vector<16x128xf32>
    %405 = arith.subf %401, %404 : vector<16x128xf32>
    %406 = math.exp %405 : vector<16x128xf32>
    %cst_159 = arith.constant dense<0.000000e+00> : vector<16xf32>
    %407 = vector.multi_reduction <add>, %406, %cst_159 [1] : vector<16x128xf32> to vector<16xf32>
    %408 = vector.shape_cast %407 : vector<16xf32> to vector<16x1xf32>
    %409 = tpu.reciprocal %408 : vector<16x1xf32> -> vector<16x1xf32>
    %410 = vector.broadcast %409 : vector<16x1xf32> to vector<16x128xf32>
    %411 = arith.mulf %406, %410 : vector<16x128xf32>
    %false_160 = arith.constant false
    %412 = vector.broadcast %false_160 : i1 to vector<16x128xi1>
    %cst_161 = arith.constant dense<0xFF800000> : vector<16xf32>
    %413 = vector.multi_reduction <maximumf>, %411, %cst_161 [1] : vector<16x128xf32> to vector<16xf32>
    %414 = vector.shape_cast %413 : vector<16xf32> to vector<16x1xf32>
    %415 = vector.broadcast %414 : vector<16x1xf32> to vector<16x128xf32>
    %416 = arith.cmpf oeq, %411, %415 : vector<16x128xf32>
    %c128_i32_162 = arith.constant 128 : i32
    %417 = vector.broadcast %c128_i32_162 : i32 to vector<16x128xi32>
    %418 = arith.select %416, %15, %417 : vector<16x128xi1>, vector<16x128xi32>
    %cst_163 = arith.constant dense<2147483647> : vector<16xi32>
    %419 = vector.multi_reduction <minsi>, %418, %cst_163 [1] : vector<16x128xi32> to vector<16xi32>
    %420 = vector.shape_cast %419 : vector<16xi32> to vector<16x1xi32>
    %421 = vector.broadcast %420 : vector<16x1xi32> to vector<16x128xi32>
    %422 = arith.cmpi eq, %15, %421 : vector<16x128xi32>
    %423 = arith.ori %412, %422 : vector<16x128xi1>
    %cst_164 = arith.constant -1.000000e+00 : f32
    %424 = vector.broadcast %cst_164 : f32 to vector<16x128xf32>
    %425 = arith.select %422, %424, %411 : vector<16x128xi1>, vector<16x128xf32>
    %cst_165 = arith.constant dense<0xFF800000> : vector<16xf32>
    %426 = vector.multi_reduction <maximumf>, %425, %cst_165 [1] : vector<16x128xf32> to vector<16xf32>
    %427 = vector.shape_cast %426 : vector<16xf32> to vector<16x1xf32>
    %428 = vector.broadcast %427 : vector<16x1xf32> to vector<16x128xf32>
    %429 = arith.cmpf oeq, %425, %428 : vector<16x128xf32>
    %c128_i32_166 = arith.constant 128 : i32
    %430 = vector.broadcast %c128_i32_166 : i32 to vector<16x128xi32>
    %431 = arith.select %429, %15, %430 : vector<16x128xi1>, vector<16x128xi32>
    %cst_167 = arith.constant dense<2147483647> : vector<16xi32>
    %432 = vector.multi_reduction <minsi>, %431, %cst_167 [1] : vector<16x128xi32> to vector<16xi32>
    %433 = vector.shape_cast %432 : vector<16xi32> to vector<16x1xi32>
    %434 = vector.broadcast %433 : vector<16x1xi32> to vector<16x128xi32>
    %435 = arith.cmpi eq, %15, %434 : vector<16x128xi32>
    %436 = arith.ori %423, %435 : vector<16x128xi1>
    %cst_168 = arith.constant 0.000000e+00 : f32
    %437 = vector.broadcast %cst_168 : f32 to vector<16x128xf32>
    %438 = arith.select %436, %411, %437 : vector<16x128xi1>, vector<16x128xf32>
    %cst_169 = arith.constant dense<0.000000e+00> : vector<16xf32>
    %439 = vector.multi_reduction <add>, %438, %cst_169 [1] : vector<16x128xf32> to vector<16xf32>
    %440 = vector.shape_cast %439 : vector<16xf32> to vector<16x1xf32>
    %cst_170 = arith.constant 9.99999968E-21 : f32
    %441 = vector.broadcast %cst_170 : f32 to vector<16x1xf32>
    %442 = arith.maximumf %440, %441 : vector<16x1xf32>
    %443 = tpu.reciprocal %442 : vector<16x1xf32> -> vector<16x1xf32>
    %444 = vector.broadcast %443 : vector<16x1xf32> to vector<16x128xf32>
    %445 = arith.mulf %438, %444 : vector<16x128xf32>
    %c1_171 = arith.constant 1 : index
    %c0_172 = arith.constant 0 : index
    %c0_173 = arith.constant 0 : index
    %446 = vector.load %arg12[%c1_171, %c0_172, %c0_173] : memref<2x128x2048xbf16, #tpu.memory_space<vmem>>, vector<1x128x2048xbf16>
    %447 = vector.shape_cast %446 : vector<1x128x2048xbf16> to vector<128x2048xbf16>
    %cst_174 = arith.constant dense<0.000000e+00> : vector<16x2048xf32>
    %448 = tpu.matmul %394, %447, %cst_174 {dimension_numbers = #tpu.dot_dimension_numbers<[1], [0], [0], [1], [0, 0, 1, 1], [], []>} : vector<16x128xbf16>, vector<128x2048xbf16>, vector<16x2048xf32> -> vector<16x2048xf32>
    %c1_175 = arith.constant 1 : index
    %c0_176 = arith.constant 0 : index
    %c0_177 = arith.constant 0 : index
    %449 = vector.load %arg13[%c1_175, %c0_176, %c0_177] : memref<2x1x2048xf32, #tpu.memory_space<vmem>>, vector<1x1x2048xf32>
    %450 = vector.shape_cast %449 : vector<1x1x2048xf32> to vector<1x2048xf32>
    %451 = vector.broadcast %450 : vector<1x2048xf32> to vector<16x2048xf32>
    %452 = arith.addf %448, %451 : vector<16x2048xf32>
    %cst_178 = arith.constant 0.000000e+00 : f32
    %453 = vector.broadcast %cst_178 : f32 to vector<16x2048xf32>
    %454 = arith.maximumf %452, %453 : vector<16x2048xf32>
    %455 = vector.extract_strided_slice %445 {offsets = [0, 0], sizes = [16, 1], strides = [1, 1]} : vector<16x128xf32> to vector<16x1xf32>
    %456 = vector.shape_cast %455 : vector<16x1xf32> to vector<16x1xf32>
    %457 = vector.broadcast %456 : vector<16x1xf32> to vector<16x512xf32>
    %458 = vector.extract_strided_slice %445 {offsets = [0, 1], sizes = [16, 1], strides = [1, 1]} : vector<16x128xf32> to vector<16x1xf32>
    %459 = vector.shape_cast %458 : vector<16x1xf32> to vector<16x1xf32>
    %460 = vector.broadcast %459 : vector<16x1xf32> to vector<16x512xf32>
    %461 = vector.extract_strided_slice %445 {offsets = [0, 2], sizes = [16, 1], strides = [1, 1]} : vector<16x128xf32> to vector<16x1xf32>
    %462 = vector.shape_cast %461 : vector<16x1xf32> to vector<16x1xf32>
    %463 = vector.broadcast %462 : vector<16x1xf32> to vector<16x512xf32>
    %464 = vector.extract_strided_slice %445 {offsets = [0, 3], sizes = [16, 1], strides = [1, 1]} : vector<16x128xf32> to vector<16x1xf32>
    %465 = vector.shape_cast %464 : vector<16x1xf32> to vector<16x1xf32>
    %466 = vector.broadcast %465 : vector<16x1xf32> to vector<16x512xf32>
    %467 = tpu.concatenate %457, %460, %463, %466 in 1 : vector<16x512xf32>, vector<16x512xf32>, vector<16x512xf32>, vector<16x512xf32> -> vector<16x2048xf32>
    %468 = arith.mulf %454, %467 : vector<16x2048xf32>
    %469 = arith.truncf %468 : vector<16x2048xf32> to vector<16x2048xbf16>
    %c1_179 = arith.constant 1 : index
    %c0_180 = arith.constant 0 : index
    %c0_181 = arith.constant 0 : index
    %470 = vector.load %arg14[%c1_179, %c0_180, %c0_181] : memref<2x2048x128xbf16, #tpu.memory_space<vmem>>, vector<1x2048x128xbf16>
    %471 = vector.shape_cast %470 : vector<1x2048x128xbf16> to vector<2048x128xbf16>
    %cst_182 = arith.constant dense<0.000000e+00> : vector<16x128xf32>
    %472 = tpu.matmul %469, %471, %cst_182 {dimension_numbers = #tpu.dot_dimension_numbers<[1], [0], [0], [1], [0, 0, 1, 1], [], []>} : vector<16x2048xbf16>, vector<2048x128xbf16>, vector<16x128xf32> -> vector<16x128xf32>
    %c1_183 = arith.constant 1 : index
    %c0_184 = arith.constant 0 : index
    %c0_185 = arith.constant 0 : index
    %473 = vector.load %arg15[%c1_183, %c0_184, %c0_185] : memref<2x128x128xf32, #tpu.memory_space<vmem>>, vector<1x128x128xf32>
    %474 = vector.shape_cast %473 : vector<1x128x128xf32> to vector<128x128xf32>
    %cst_186 = arith.constant dense<0.000000e+00> : vector<16x128xf32>
    %475 = tpu.matmul %445, %474, %cst_186 {dimension_numbers = #tpu.dot_dimension_numbers<[1], [0], [0], [1], [0, 0, 1, 1], [], []>} : vector<16x128xf32>, vector<128x128xf32>, vector<16x128xf32> -> vector<16x128xf32>
    %476 = arith.addf %472, %475 : vector<16x128xf32>
    %477 = arith.addf %367, %476 : vector<16x128xf32>
    %c0_187 = arith.constant 0 : index
    %c0_188 = arith.constant 0 : index
    %478 = vector.load %arg16[%c0_187, %c0_188] : memref<1x128xf32, #tpu.memory_space<vmem>>, vector<1x128xf32>
    %c0_189 = arith.constant 0 : index
    %c0_190 = arith.constant 0 : index
    %479 = vector.load %arg17[%c0_189, %c0_190] : memref<1x128xf32, #tpu.memory_space<vmem>>, vector<1x128xf32>
    %cst_191 = arith.constant dense<0.000000e+00> : vector<16xf32>
    %480 = vector.multi_reduction <add>, %477, %cst_191 [1] : vector<16x128xf32> to vector<16xf32>
    %481 = vector.shape_cast %480 : vector<16xf32> to vector<16x1xf32>
    %cst_192 = arith.constant 1.280000e+02 : f32
    %482 = vector.broadcast %cst_192 : f32 to vector<16x1xf32>
    %483 = arith.divf %481, %482 : vector<16x1xf32>
    %484 = vector.broadcast %483 : vector<16x1xf32> to vector<16x128xf32>
    %485 = arith.subf %477, %484 : vector<16x128xf32>
    %486 = arith.mulf %485, %485 : vector<16x128xf32>
    %cst_193 = arith.constant dense<0.000000e+00> : vector<16xf32>
    %487 = vector.multi_reduction <add>, %486, %cst_193 [1] : vector<16x128xf32> to vector<16xf32>
    %488 = vector.shape_cast %487 : vector<16xf32> to vector<16x1xf32>
    %cst_194 = arith.constant 1.280000e+02 : f32
    %489 = vector.broadcast %cst_194 : f32 to vector<16x1xf32>
    %490 = arith.divf %488, %489 : vector<16x1xf32>
    %491 = vector.broadcast %483 : vector<16x1xf32> to vector<16x128xf32>
    %492 = arith.subf %477, %491 : vector<16x128xf32>
    %cst_195 = arith.constant 9.99999974E-6 : f32
    %493 = vector.broadcast %cst_195 : f32 to vector<16x1xf32>
    %494 = arith.addf %490, %493 : vector<16x1xf32>
    %495 = math.rsqrt %494 : vector<16x1xf32>
    %496 = vector.broadcast %495 : vector<16x1xf32> to vector<16x128xf32>
    %497 = arith.mulf %492, %496 : vector<16x128xf32>
    %498 = vector.broadcast %478 : vector<1x128xf32> to vector<16x128xf32>
    %499 = arith.mulf %497, %498 : vector<16x128xf32>
    %500 = vector.broadcast %479 : vector<1x128xf32> to vector<16x128xf32>
    %501 = arith.addf %499, %500 : vector<16x128xf32>
    %502 = arith.truncf %501 : vector<16x128xf32> to vector<16x128xbf16>
    %c0_196 = arith.constant 0 : index
    %c0_197 = arith.constant 0 : index
    %503 = vector.load %arg18[%c0_196, %c0_197] : memref<128x128xbf16, #tpu.memory_space<vmem>>, vector<128x128xbf16>
    %cst_198 = arith.constant dense<0.000000e+00> : vector<16x128xf32>
    %504 = tpu.matmul %502, %503, %cst_198 {dimension_numbers = #tpu.dot_dimension_numbers<[1], [0], [0], [1], [0, 0, 1, 1], [], []>} : vector<16x128xbf16>, vector<128x128xbf16>, vector<16x128xf32> -> vector<16x128xf32>
    %c0_199 = arith.constant 0 : index
    %c0_200 = arith.constant 0 : index
    %505 = vector.load %arg19[%c0_199, %c0_200] : memref<1x128xf32, #tpu.memory_space<vmem>>, vector<1x128xf32>
    %506 = vector.broadcast %505 : vector<1x128xf32> to vector<16x128xf32>
    %507 = arith.addf %504, %506 : vector<16x128xf32>
    %c0_201 = arith.constant 0 : index
    %c0_202 = arith.constant 0 : index
    %508 = vector.load %arg20[%c0_201, %c0_202] : memref<16x128xf32, #tpu.memory_space<vmem>>, vector<16x128xf32>
    tpu.vector_store %arg20[%c0_201, %c0_202], %507 {strides = array<i32>} : memref<16x128xf32, #tpu.memory_space<vmem>>, vector<16x128xf32>,
    return
  }
  func.func @transform_0(%arg0: i32) -> (i32, i32) {
    %c0_i32 = arith.constant 0 : i32
    %c0_i32_0 = arith.constant 0 : i32
    return %arg0, %c0_i32 : i32, i32
  }
  func.func @transform_1(%arg0: i32) -> (i32, i32) {
    %c0_i32 = arith.constant 0 : i32
    %c0_i32_0 = arith.constant 0 : i32
    %c0_i32_1 = arith.constant 0 : i32
    return %c0_i32, %c0_i32_0 : i32, i32
  }
  func.func @transform_2(%arg0: i32) -> (i32, i32) {
    %c0_i32 = arith.constant 0 : i32
    %c0_i32_0 = arith.constant 0 : i32
    %c0_i32_1 = arith.constant 0 : i32
    return %c0_i32, %c0_i32_0 : i32, i32
  }
  func.func @transform_3(%arg0: i32) -> (i32, i32, i32) {
    %c0_i32 = arith.constant 0 : i32
    %c0_i32_0 = arith.constant 0 : i32
    %c0_i32_1 = arith.constant 0 : i32
    %c0_i32_2 = arith.constant 0 : i32
    return %c0_i32, %c0_i32_0, %c0_i32_1 : i32, i32, i32
  }
  func.func @transform_4(%arg0: i32) -> (i32, i32, i32) {
    %c0_i32 = arith.constant 0 : i32
    %c0_i32_0 = arith.constant 0 : i32
    %c0_i32_1 = arith.constant 0 : i32
    %c0_i32_2 = arith.constant 0 : i32
    return %c0_i32, %c0_i32_0, %c0_i32_1 : i32, i32, i32
  }
  func.func @transform_5(%arg0: i32) -> (i32, i32, i32) {
    %c0_i32 = arith.constant 0 : i32
    %c0_i32_0 = arith.constant 0 : i32
    %c0_i32_1 = arith.constant 0 : i32
    %c0_i32_2 = arith.constant 0 : i32
    return %c0_i32, %c0_i32_0, %c0_i32_1 : i32, i32, i32
  }
  func.func @transform_6(%arg0: i32) -> (i32, i32, i32) {
    %c0_i32 = arith.constant 0 : i32
    %c0_i32_0 = arith.constant 0 : i32
    %c0_i32_1 = arith.constant 0 : i32
    %c0_i32_2 = arith.constant 0 : i32
    return %c0_i32, %c0_i32_0, %c0_i32_1 : i32, i32, i32
  }
  func.func @transform_7(%arg0: i32) -> (i32, i32, i32) {
    %c0_i32 = arith.constant 0 : i32
    %c0_i32_0 = arith.constant 0 : i32
    %c0_i32_1 = arith.constant 0 : i32
    %c0_i32_2 = arith.constant 0 : i32
    return %c0_i32, %c0_i32_0, %c0_i32_1 : i32, i32, i32
  }
  func.func @transform_8(%arg0: i32) -> (i32, i32, i32) {
    %c0_i32 = arith.constant 0 : i32
    %c0_i32_0 = arith.constant 0 : i32
    %c0_i32_1 = arith.constant 0 : i32
    %c0_i32_2 = arith.constant 0 : i32
    return %c0_i32, %c0_i32_0, %c0_i32_1 : i32, i32, i32
  }
  func.func @transform_9(%arg0: i32) -> (i32, i32, i32) {
    %c0_i32 = arith.constant 0 : i32
    %c0_i32_0 = arith.constant 0 : i32
    %c0_i32_1 = arith.constant 0 : i32
    %c0_i32_2 = arith.constant 0 : i32
    return %c0_i32, %c0_i32_0, %c0_i32_1 : i32, i32, i32
  }
  func.func @transform_10(%arg0: i32) -> (i32, i32, i32) {
    %c0_i32 = arith.constant 0 : i32
    %c0_i32_0 = arith.constant 0 : i32
    %c0_i32_1 = arith.constant 0 : i32
    %c0_i32_2 = arith.constant 0 : i32
    return %c0_i32, %c0_i32_0, %c0_i32_1 : i32, i32, i32
  }
  func.func @transform_11(%arg0: i32) -> (i32, i32, i32) {
    %c0_i32 = arith.constant 0 : i32
    %c0_i32_0 = arith.constant 0 : i32
    %c0_i32_1 = arith.constant 0 : i32
    %c0_i32_2 = arith.constant 0 : i32
    return %c0_i32, %c0_i32_0, %c0_i32_1 : i32, i32, i32
  }
  func.func @transform_12(%arg0: i32) -> (i32, i32, i32) {
    %c0_i32 = arith.constant 0 : i32
    %c0_i32_0 = arith.constant 0 : i32
    %c0_i32_1 = arith.constant 0 : i32
    %c0_i32_2 = arith.constant 0 : i32
    return %c0_i32, %c0_i32_0, %c0_i32_1 : i32, i32, i32
  }
  func.func @transform_13(%arg0: i32) -> (i32, i32, i32) {
    %c0_i32 = arith.constant 0 : i32
    %c0_i32_0 = arith.constant 0 : i32
    %c0_i32_1 = arith.constant 0 : i32
    %c0_i32_2 = arith.constant 0 : i32
    return %c0_i32, %c0_i32_0, %c0_i32_1 : i32, i32, i32
  }
  func.func @transform_14(%arg0: i32) -> (i32, i32, i32) {
    %c0_i32 = arith.constant 0 : i32
    %c0_i32_0 = arith.constant 0 : i32
    %c0_i32_1 = arith.constant 0 : i32
    %c0_i32_2 = arith.constant 0 : i32
    return %c0_i32, %c0_i32_0, %c0_i32_1 : i32, i32, i32
  }
  func.func @transform_15(%arg0: i32) -> (i32, i32) {
    %c0_i32 = arith.constant 0 : i32
    %c0_i32_0 = arith.constant 0 : i32
    %c0_i32_1 = arith.constant 0 : i32
    return %c0_i32, %c0_i32_0 : i32, i32
  }
  func.func @transform_16(%arg0: i32) -> (i32, i32) {
    %c0_i32 = arith.constant 0 : i32
    %c0_i32_0 = arith.constant 0 : i32
    %c0_i32_1 = arith.constant 0 : i32
    return %c0_i32, %c0_i32_0 : i32, i32
  }
  func.func @transform_17(%arg0: i32) -> (i32, i32) {
    %c0_i32 = arith.constant 0 : i32
    %c0_i32_0 = arith.constant 0 : i32
    %c0_i32_1 = arith.constant 0 : i32
    return %c0_i32, %c0_i32_0 : i32, i32
  }
  func.func @transform_18(%arg0: i32) -> (i32, i32) {
    %c0_i32 = arith.constant 0 : i32
    %c0_i32_0 = arith.constant 0 : i32
    %c0_i32_1 = arith.constant 0 : i32
    return %c0_i32, %c0_i32_0 : i32, i32
  }
  func.func @transform_19(%arg0: i32) -> (i32, i32) {
    %c0_i32 = arith.constant 0 : i32
    %c0_i32_0 = arith.constant 0 : i32
    return %arg0, %c0_i32 : i32, i32
  }
}

</mosaic_0001>

<llo_original>
// kernel: forward.1
$region0: #{forward.1}
  #allocation0 [shape = 'u32[]', space=smem, size = 0x4, offset = 0x4, fixed_abs, tag = 'smem constant byte address 0x4 - core index']
  #allocation1 [shape = 'u32[144,128]{1,0:T(1,128)}', space=vmem, size = 0x12000, scoped, tag = 'internal scratch']
  %s0 = inlined_call_operand.vmem [shape: s32[32,1], index: 0, kind: input, shape index: {}]
  %s1 = inlined_call_operand.vmem [shape: bf16[128,128], index: 1, kind: input, shape index: {}]
  %s2 = inlined_call_operand.hbm [shape: f32[32,128], index: 2, kind: input, shape index: {}]
  %s3 = inlined_call_operand.vmem [shape: f32[2,1,128], index: 3, kind: input, shape index: {}]
  %s4 = inlined_call_operand.vmem [shape: f32[2,1,128], index: 4, kind: input, shape index: {}]
  %s5 = inlined_call_operand.hbm [shape: bf16[2,128,384], index: 5, kind: input, shape index: {}]
  %s6 = inlined_call_operand.hbm [shape: bf16[2,128,128], index: 6, kind: input, shape index: {}]
  %s7 = inlined_call_operand.vmem [shape: f32[2,1,128], index: 7, kind: input, shape index: {}]
  %s8 = inlined_call_operand.vmem [shape: f32[2,1,128], index: 8, kind: input, shape index: {}]
  %s9 = inlined_call_operand.vmem [shape: f32[2,1,128], index: 9, kind: input, shape index: {}]
  %s10 = inlined_call_operand.hbm [shape: bf16[2,128,128], index: 10, kind: input, shape index: {}]
  %s11 = inlined_call_operand.hbm [shape: bf16[2,128,2048], index: 11, kind: input, shape index: {}]
  %s12 = inlined_call_operand.hbm [shape: f32[2,1,2048], index: 12, kind: input, shape index: {}]
  %s13 = inlined_call_operand.hbm [shape: bf16[2,2048,128], index: 13, kind: input, shape index: {}]
  %s14 = inlined_call_operand.hbm [shape: f32[2,128,128], index: 14, kind: input, shape index: {}]
  %s15 = inlined_call_operand.vmem [shape: f32[1,128], index: 15, kind: input, shape index: {}]
  %s16 = inlined_call_operand.hbm [shape: f32[1,128], index: 16, kind: input, shape index: {}]
  %s17 = inlined_call_operand.hbm [shape: bf16[128,128], index: 17, kind: input, shape index: {}]
  %s18 = inlined_call_operand.hbm [shape: f32[1,128], index: 18, kind: input, shape index: {}]
  %s19 = inlined_call_operand.hbm [shape: f32[32,128], index: 19, kind: output, shape index: {}]
  %s20 = sld [smem:[#allocation0]]
  $region153: #{forward.1} parent=0
    _
  %s22 = ssub.s32 1, %s20
  %s23 = scalar_select 0, %s22, %s20
  $region1: #{forward.1} parent=0
    #allocation2 [shape = 'u8[16384]{0}', space=vmem, size = 0x4000, scoped, tag = 'input window, operand 2, single buffered']
    #allocation3 [shape = 's32[2]{0}', space=sflag, size = 0x8, scoped, tag = 'scoped memory for forward.1']
    #allocation4 [shape = 's32[2]{0}', space=sflag, size = 0x8, scoped, tag = 'scoped memory for forward.1']
    #allocation5 [shape = 'u8[196608]{0}', space=vmem, size = 0x30000, scoped, tag = 'input window, operand 5, single buffered']
    #allocation6 [shape = 's32[1]{0}', space=sflag, size = 0x4, scoped, tag = 'scoped memory for forward.1']
    #allocation7 [shape = 'u8[65536]{0}', space=vmem, size = 0x10000, scoped, tag = 'input window, operand 6, single buffered']
    #allocation8 [shape = 'u8[65536]{0}', space=vmem, size = 0x10000, scoped, tag = 'input window, operand 10, single buffered']
    #allocation9 [shape = 's32[1]{0}', space=sflag, size = 0x4, scoped, tag = 'scoped memory for forward.1']
    #allocation10 [shape = 'u8[1048576]{0}', space=vmem, size = 0x100000, scoped, tag = 'input window, operand 11, single buffered']
    #allocation11 [shape = 'u8[16384]{0}', space=vmem, size = 0x4000, scoped, tag = 'input window, operand 12, single buffered']
    #allocation12 [shape = 's32[1]{0}', space=sflag, size = 0x4, scoped, tag = 'scoped memory for forward.1']
    #allocation13 [shape = 'u8[1048576]{0}', space=vmem, size = 0x100000, scoped, tag = 'input window, operand 13, single buffered']
    #allocation14 [shape = 'u8[131072]{0}', space=vmem, size = 0x20000, scoped, tag = 'input window, operand 14, single buffered']
    #allocation15 [shape = 's32[1]{0}', space=sflag, size = 0x4, scoped, tag = 'scoped memory for forward.1']
    #allocation16 [shape = 'u8[512]{0}', space=vmem, size = 0x400, scoped, tag = 'input window, operand 16, single buffered']
    #allocation17 [shape = 'u8[32768]{0}', space=vmem, size = 0x8000, scoped, tag = 'input window, operand 17, single buffered']
    #allocation18 [shape = 's32[1]{0}', space=sflag, size = 0x4, scoped, tag = 'scoped memory for forward.1']
    #allocation19 [shape = 'u8[512]{0}', space=vmem, size = 0x400, scoped, tag = 'input window, operand 18, single buffered']
    #allocation20 [shape = 'u8[16384]{0}', space=vmem, size = 0x4000, scoped, tag = 'output window, operand 0']
    %24 = vsyncpa [#allocation3], 0
    %25 = vsyncpa [#allocation6], 0
    %26 = vsyncpa [#allocation9], 0
    %27 = vsyncpa [#allocation12], 0
    %28 = vsyncpa [#allocation15], 0
    %29 = vsyncpa [#allocation18], 0
    %30 = vsyncpa [#allocation4], 0
    %s31 = scalar_lea.sflag [#allocation4], 1
    %32 = vsyncpa %s31, 0
    loop: start=0, step=1, limit=4
    $region2: #{forward.1} parent=1 // loop_pre_header
      _
    $region3: #{forward.1} parent=1 // loop_header
      %s34 = sphi 0, %s38
      %p35 = scmp.ge.s32.totalorder %s34, 4
      %s44 = sphi 0, %s46
      %s47 = sphi 0, %s44
      %s48 = sphi 0, %s47
      %s64 = sphi 0, %s48
      %s68 = sphi 0, %s68
      %s70 = sphi 0, %s68
      %s71 = sphi 0, %s70
      %s85 = sphi 0, %s71
      %s89 = sphi 0, %s89
      %s91 = sphi 0, %s89
      %s92 = sphi 0, %s91
      %s106 = sphi 0, %s92
      %s110 = sphi 0, %s110
      %s112 = sphi 0, %s110
      %s113 = sphi 0, %s112
      %s127 = sphi 0, %s113
      %s131 = sphi 0, %s131
      %s133 = sphi 0, %s131
      %s134 = sphi 0, %s133
      %s148 = sphi 0, %s134
      %s152 = sphi 0, %s152
      %s154 = sphi 0, %s152
      %s155 = sphi 0, %s154
      %s169 = sphi 0, %s155
      %s173 = sphi 0, %s173
      %s175 = sphi 0, %s173
      %s176 = sphi 0, %s175
      %s190 = sphi 0, %s176
      %s194 = sphi 0, %s194
      %s196 = sphi 0, %s194
      %s197 = sphi 0, %s196
      %s211 = sphi 0, %s197
      %s215 = sphi 0, %s215
      %s217 = sphi 0, %s215
      %s218 = sphi 0, %s217
      %s232 = sphi 0, %s218
      %s236 = sphi 0, %s236
      %s238 = sphi 0, %s236
      %s239 = sphi 0, %s238
      %s253 = sphi 0, %s239
      %s257 = sphi 0, %s257
      %s259 = sphi 0, %s257
      %s260 = sphi 0, %s259
      %s274 = sphi 0, %s260
      %s278 = sphi 0, %s278
      %s280 = sphi 0, %s278
      %s281 = sphi 0, %s280
      %s295 = sphi 0, %s281
      %s299 = sphi 0, %s299
      %s301 = sphi 0, %s299
      %s302 = sphi 0, %s301
      %s316 = sphi 0, %s302
      %s320 = sphi 0, %s320
      %s322 = sphi 0, %s320
      %s323 = sphi 0, %s322
      %s337 = sphi 0, %s323
      %s341 = sphi 0, %s341
      %s343 = sphi 0, %s341
      %s344 = sphi 0, %s343
      %s358 = sphi 0, %s344
      %s362 = sphi 0, %s362
      %s364 = sphi 0, %s362
      %s365 = sphi 0, %s364
      %s379 = sphi 0, %s365
      %s383 = sphi 0, %s383
      %s385 = sphi 0, %s383
      %s386 = sphi 0, %s385
      %s400 = sphi 0, %s386
      %s404 = sphi 0, %s404
      %s406 = sphi 0, %s404
      %s407 = sphi 0, %s406
      %s421 = sphi 0, %s407
      %s425 = sphi 0, %s425
      %s427 = sphi 0, %s425
      %s428 = sphi 0, %s427
      %s442 = sphi 0, %s428
      %s448 = sphi 0, %s450
      %s451 = sphi 0, %s448
      %s452 = sphi 0, %s451
      %s468 = sphi 0, %s452
    $region4: #{forward.1} parent=1 // loop_header_branch
      %37 = sbr.rel (%p35) target = $region8
    $region5: #{forward.1} parent=1 // loop_body
      %s39 = ssub.s32 %s34, 1
      %s40 = ssub.s32 %s34, 2
      %s41 = sadd.s32 %s34, 1
      %s42 = ssub.s32 %s34, %s41
      %p43 = scmp.eq.s32.totalorder %s42, 0
      %s45 = sadd.s32 %s44, 1
      %s46 = scalar_select %p43, %s44, %s45
      %p49 = pneg %p43
      %p50 = scmp.eq.s32.totalorder %s34, 1
      %p51 = por %p49, %p50
      %p52 = scmp.ne.s32.totalorder %s44, %s47
      %p53 = scmp.eq.s32.totalorder %s34, 0
      %p54 = por %p52, %p53
      %p55 = scmp.ne.s32.totalorder %s44, %s47
      %p56 = scmp.eq.s32.totalorder %s39, 1
      %p57 = por %p55, %p56
      %p58 = scmp.ne.s32.totalorder %s47, %s48
      %p59 = scmp.eq.s32.totalorder %s39, 0
      %p60 = por %p58, %p59
      %p61 = scmp.ne.s32.totalorder %s47, %s48
      %p62 = scmp.eq.s32.totalorder %s40, 1
      %p63 = por %p61, %p62
      %p65 = scmp.ne.s32.totalorder %s48, %s64
      %p66 = scmp.eq.s32.totalorder %s40, 0
      %p67 = por %p65, %p66
      %s69 = sadd.s32 %s68, 1
      %p72 = scmp.eq.s32.totalorder %s34, 1
      %p73 = scmp.ne.s32.totalorder %s68, %s70
      %p74 = scmp.eq.s32.totalorder %s34, 0
      %p75 = por %p73, %p74
      %p76 = scmp.ne.s32.totalorder %s68, %s70
      %p77 = scmp.eq.s32.totalorder %s39, 1
      %p78 = por %p76, %p77
      %p79 = scmp.ne.s32.totalorder %s70, %s71
      %p80 = scmp.eq.s32.totalorder %s39, 0
      %p81 = por %p79, %p80
      %p82 = scmp.ne.s32.totalorder %s70, %s71
      %p83 = scmp.eq.s32.totalorder %s40, 1
      %p84 = por %p82, %p83
      %p86 = scmp.ne.s32.totalorder %s71, %s85
      %p87 = scmp.eq.s32.totalorder %s40, 0
      %p88 = por %p86, %p87
      %s90 = sadd.s32 %s89, 1
      %p93 = scmp.eq.s32.totalorder %s34, 1
      %p94 = scmp.ne.s32.totalorder %s89, %s91
      %p95 = scmp.eq.s32.totalorder %s34, 0
      %p96 = por %p94, %p95
      %p97 = scmp.ne.s32.totalorder %s89, %s91
      %p98 = scmp.eq.s32.totalorder %s39, 1
      %p99 = por %p97, %p98
      %p100 = scmp.ne.s32.totalorder %s91, %s92
      %p101 = scmp.eq.s32.totalorder %s39, 0
      %p102 = por %p100, %p101
      %p103 = scmp.ne.s32.totalorder %s91, %s92
      %p104 = scmp.eq.s32.totalorder %s40, 1
      %p105 = por %p103, %p104
      %p107 = scmp.ne.s32.totalorder %s92, %s106
      %p108 = scmp.eq.s32.totalorder %s40, 0
      %p109 = por %p107, %p108
      %s111 = sadd.s32 %s110, 1
      %p114 = scmp.eq.s32.totalorder %s34, 1
      %p115 = scmp.ne.s32.totalorder %s110, %s112
      %p116 = scmp.eq.s32.totalorder %s34, 0
      %p117 = por %p115, %p116
      %p118 = scmp.ne.s32.totalorder %s110, %s112
      %p119 = scmp.eq.s32.totalorder %s39, 1
      %p120 = por %p118, %p119
      %p121 = scmp.ne.s32.totalorder %s112, %s113
      %p122 = scmp.eq.s32.totalorder %s39, 0
      %p123 = por %p121, %p122
      %p124 = scmp.ne.s32.totalorder %s112, %s113
      %p125 = scmp.eq.s32.totalorder %s40, 1
      %p126 = por %p124, %p125
      %p128 = scmp.ne.s32.totalorder %s113, %s127
      %p129 = scmp.eq.s32.totalorder %s40, 0
      %p130 = por %p128, %p129
      %s132 = sadd.s32 %s131, 1
      %p135 = scmp.eq.s32.totalorder %s34, 1
      %p136 = scmp.ne.s32.totalorder %s131, %s133
      %p137 = scmp.eq.s32.totalorder %s34, 0
      %p138 = por %p136, %p137
      %p139 = scmp.ne.s32.totalorder %s131, %s133
      %p140 = scmp.eq.s32.totalorder %s39, 1
      %p141 = por %p139, %p140
      %p142 = scmp.ne.s32.totalorder %s133, %s134
      %p143 = scmp.eq.s32.totalorder %s39, 0
      %p144 = por %p142, %p143
      %p145 = scmp.ne.s32.totalorder %s133, %s134
      %p146 = scmp.eq.s32.totalorder %s40, 1
      %p147 = por %p145, %p146
      %p149 = scmp.ne.s32.totalorder %s134, %s148
      %p150 = scmp.eq.s32.totalorder %s40, 0
      %p151 = por %p149, %p150
      %s153 = sadd.s32 %s152, 1
      %p156 = scmp.eq.s32.totalorder %s34, 1
      %p157 = scmp.ne.s32.totalorder %s152, %s154
      %p158 = scmp.eq.s32.totalorder %s34, 0
      %p159 = por %p157, %p158
      %p160 = scmp.ne.s32.totalorder %s152, %s154
      %p161 = scmp.eq.s32.totalorder %s39, 1
      %p162 = por %p160, %p161
      %p163 = scmp.ne.s32.totalorder %s154, %s155
      %p164 = scmp.eq.s32.totalorder %s39, 0
      %p165 = por %p163, %p164
      %p166 = scmp.ne.s32.totalorder %s154, %s155
      %p167 = scmp.eq.s32.totalorder %s40, 1
      %p168 = por %p166, %p167
      %p170 = scmp.ne.s32.totalorder %s155, %s169
      %p171 = scmp.eq.s32.totalorder %s40, 0
      %p172 = por %p170, %p171
      %s174 = sadd.s32 %s173, 1
      %p177 = scmp.eq.s32.totalorder %s34, 1
      %p178 = scmp.ne.s32.totalorder %s173, %s175
      %p179 = scmp.eq.s32.totalorder %s34, 0
      %p180 = por %p178, %p179
      %p181 = scmp.ne.s32.totalorder %s173, %s175
      %p182 = scmp.eq.s32.totalorder %s39, 1
      %p183 = por %p181, %p182
      %p184 = scmp.ne.s32.totalorder %s175, %s176
      %p185 = scmp.eq.s32.totalorder %s39, 0
      %p186 = por %p184, %p185
      %p187 = scmp.ne.s32.totalorder %s175, %s176
      %p188 = scmp.eq.s32.totalorder %s40, 1
      %p189 = por %p187, %p188
      %p191 = scmp.ne.s32.totalorder %s176, %s190
      %p192 = scmp.eq.s32.totalorder %s40, 0
      %p193 = por %p191, %p192
      %s195 = sadd.s32 %s194, 1
      %p198 = scmp.eq.s32.totalorder %s34, 1
      %p199 = scmp.ne.s32.totalorder %s194, %s196
      %p200 = scmp.eq.s32.totalorder %s34, 0
      %p201 = por %p199, %p200
      %p202 = scmp.ne.s32.totalorder %s194, %s196
      %p203 = scmp.eq.s32.totalorder %s39, 1
      %p204 = por %p202, %p203
      %p205 = scmp.ne.s32.totalorder %s196, %s197
      %p206 = scmp.eq.s32.totalorder %s39, 0
      %p207 = por %p205, %p206
      %p208 = scmp.ne.s32.totalorder %s196, %s197
      %p209 = scmp.eq.s32.totalorder %s40, 1
      %p210 = por %p208, %p209
      %p212 = scmp.ne.s32.totalorder %s197, %s211
      %p213 = scmp.eq.s32.totalorder %s40, 0
      %p214 = por %p212, %p213
      %s216 = sadd.s32 %s215, 1
      %p219 = scmp.eq.s32.totalorder %s34, 1
      %p220 = scmp.ne.s32.totalorder %s215, %s217
      %p221 = scmp.eq.s32.totalorder %s34, 0
      %p222 = por %p220, %p221
      %p223 = scmp.ne.s32.totalorder %s215, %s217
      %p224 = scmp.eq.s32.totalorder %s39, 1
      %p225 = por %p223, %p224
      %p226 = scmp.ne.s32.totalorder %s217, %s218
      %p227 = scmp.eq.s32.totalorder %s39, 0
      %p228 = por %p226, %p227
      %p229 = scmp.ne.s32.totalorder %s217, %s218
      %p230 = scmp.eq.s32.totalorder %s40, 1
      %p231 = por %p229, %p230
      %p233 = scmp.ne.s32.totalorder %s218, %s232
      %p234 = scmp.eq.s32.totalorder %s40, 0
      %p235 = por %p233, %p234
      %s237 = sadd.s32 %s236, 1
      %p240 = scmp.eq.s32.totalorder %s34, 1
      %p241 = scmp.ne.s32.totalorder %s236, %s238
      %p242 = scmp.eq.s32.totalorder %s34, 0
      %p243 = por %p241, %p242
      %p244 = scmp.ne.s32.totalorder %s236, %s238
      %p245 = scmp.eq.s32.totalorder %s39, 1
      %p246 = por %p244, %p245
      %p247 = scmp.ne.s32.totalorder %s238, %s239
      %p248 = scmp.eq.s32.totalorder %s39, 0
      %p249 = por %p247, %p248
      %p250 = scmp.ne.s32.totalorder %s238, %s239
      %p251 = scmp.eq.s32.totalorder %s40, 1
      %p252 = por %p250, %p251
      %p254 = scmp.ne.s32.totalorder %s239, %s253
      %p255 = scmp.eq.s32.totalorder %s40, 0
      %p256 = por %p254, %p255
      %s258 = sadd.s32 %s257, 1
      %p261 = scmp.eq.s32.totalorder %s34, 1
      %p262 = scmp.ne.s32.totalorder %s257, %s259
      %p263 = scmp.eq.s32.totalorder %s34, 0
      %p264 = por %p262, %p263
      %p265 = scmp.ne.s32.totalorder %s257, %s259
      %p266 = scmp.eq.s32.totalorder %s39, 1
      %p267 = por %p265, %p266
      %p268 = scmp.ne.s32.totalorder %s259, %s260
      %p269 = scmp.eq.s32.totalorder %s39, 0
      %p270 = por %p268, %p269
      %p271 = scmp.ne.s32.totalorder %s259, %s260
      %p272 = scmp.eq.s32.totalorder %s40, 1
      %p273 = por %p271, %p272
      %p275 = scmp.ne.s32.totalorder %s260, %s274
      %p276 = scmp.eq.s32.totalorder %s40, 0
      %p277 = por %p275, %p276
      %s279 = sadd.s32 %s278, 1
      %p282 = scmp.eq.s32.totalorder %s34, 1
      %p283 = scmp.ne.s32.totalorder %s278, %s280
      %p284 = scmp.eq.s32.totalorder %s34, 0
      %p285 = por %p283, %p284
      %p286 = scmp.ne.s32.totalorder %s278, %s280
      %p287 = scmp.eq.s32.totalorder %s39, 1
      %p288 = por %p286, %p287
      %p289 = scmp.ne.s32.totalorder %s280, %s281
      %p290 = scmp.eq.s32.totalorder %s39, 0
      %p291 = por %p289, %p290
      %p292 = scmp.ne.s32.totalorder %s280, %s281
      %p293 = scmp.eq.s32.totalorder %s40, 1
      %p294 = por %p292, %p293
      %p296 = scmp.ne.s32.totalorder %s281, %s295
      %p297 = scmp.eq.s32.totalorder %s40, 0
      %p298 = por %p296, %p297
      %s300 = sadd.s32 %s299, 1
      %p303 = scmp.eq.s32.totalorder %s34, 1
      %p304 = scmp.ne.s32.totalorder %s299, %s301
      %p305 = scmp.eq.s32.totalorder %s34, 0
      %p306 = por %p304, %p305
      %p307 = scmp.ne.s32.totalorder %s299, %s301
      %p308 = scmp.eq.s32.totalorder %s39, 1
      %p309 = por %p307, %p308
      %p310 = scmp.ne.s32.totalorder %s301, %s302
      %p311 = scmp.eq.s32.totalorder %s39, 0
      %p312 = por %p310, %p311
      %p313 = scmp.ne.s32.totalorder %s301, %s302
      %p314 = scmp.eq.s32.totalorder %s40, 1
      %p315 = por %p313, %p314
      %p317 = scmp.ne.s32.totalorder %s302, %s316
      %p318 = scmp.eq.s32.totalorder %s40, 0
      %p319 = por %p317, %p318
      %s321 = sadd.s32 %s320, 1
      %p324 = scmp.eq.s32.totalorder %s34, 1
      %p325 = scmp.ne.s32.totalorder %s320, %s322
      %p326 = scmp.eq.s32.totalorder %s34, 0
      %p327 = por %p325, %p326
      %p328 = scmp.ne.s32.totalorder %s320, %s322
      %p329 = scmp.eq.s32.totalorder %s39, 1
      %p330 = por %p328, %p329
      %p331 = scmp.ne.s32.totalorder %s322, %s323
      %p332 = scmp.eq.s32.totalorder %s39, 0
      %p333 = por %p331, %p332
      %p334 = scmp.ne.s32.totalorder %s322, %s323
      %p335 = scmp.eq.s32.totalorder %s40, 1
      %p336 = por %p334, %p335
      %p338 = scmp.ne.s32.totalorder %s323, %s337
      %p339 = scmp.eq.s32.totalorder %s40, 0
      %p340 = por %p338, %p339
      %s342 = sadd.s32 %s341, 1
      %p345 = scmp.eq.s32.totalorder %s34, 1
      %p346 = scmp.ne.s32.totalorder %s341, %s343
      %p347 = scmp.eq.s32.totalorder %s34, 0
      %p348 = por %p346, %p347
      %p349 = scmp.ne.s32.totalorder %s341, %s343
      %p350 = scmp.eq.s32.totalorder %s39, 1
      %p351 = por %p349, %p350
      %p352 = scmp.ne.s32.totalorder %s343, %s344
      %p353 = scmp.eq.s32.totalorder %s39, 0
      %p354 = por %p352, %p353
      %p355 = scmp.ne.s32.totalorder %s343, %s344
      %p356 = scmp.eq.s32.totalorder %s40, 1
      %p357 = por %p355, %p356
      %p359 = scmp.ne.s32.totalorder %s344, %s358
      %p360 = scmp.eq.s32.totalorder %s40, 0
      %p361 = por %p359, %p360
      %s363 = sadd.s32 %s362, 1
      %p366 = scmp.eq.s32.totalorder %s34, 1
      %p367 = scmp.ne.s32.totalorder %s362, %s364
      %p368 = scmp.eq.s32.totalorder %s34, 0
      %p369 = por %p367, %p368
      %p370 = scmp.ne.s32.totalorder %s362, %s364
      %p371 = scmp.eq.s32.totalorder %s39, 1
      %p372 = por %p370, %p371
      %p373 = scmp.ne.s32.totalorder %s364, %s365
      %p374 = scmp.eq.s32.totalorder %s39, 0
      %p375 = por %p373, %p374
      %p376 = scmp.ne.s32.totalorder %s364, %s365
      %p377 = scmp.eq.s32.totalorder %s40, 1
      %p378 = por %p376, %p377
      %p380 = scmp.ne.s32.totalorder %s365, %s379
      %p381 = scmp.eq.s32.totalorder %s40, 0
      %p382 = por %p380, %p381
      %s384 = sadd.s32 %s383, 1
      %p387 = scmp.eq.s32.totalorder %s34, 1
      %p388 = scmp.ne.s32.totalorder %s383, %s385
      %p389 = scmp.eq.s32.totalorder %s34, 0
      %p390 = por %p388, %p389
      %p391 = scmp.ne.s32.totalorder %s383, %s385
      %p392 = scmp.eq.s32.totalorder %s39, 1
      %p393 = por %p391, %p392
      %p394 = scmp.ne.s32.totalorder %s385, %s386
      %p395 = scmp.eq.s32.totalorder %s39, 0
      %p396 = por %p394, %p395
      %p397 = scmp.ne.s32.totalorder %s385, %s386
      %p398 = scmp.eq.s32.totalorder %s40, 1
      %p399 = por %p397, %p398
      %p401 = scmp.ne.s32.totalorder %s386, %s400
      %p402 = scmp.eq.s32.totalorder %s40, 0
      %p403 = por %p401, %p402
      %s405 = sadd.s32 %s404, 1
      %p408 = scmp.eq.s32.totalorder %s34, 1
      %p409 = scmp.ne.s32.totalorder %s404, %s406
      %p410 = scmp.eq.s32.totalorder %s34, 0
      %p411 = por %p409, %p410
      %p412 = scmp.ne.s32.totalorder %s404, %s406
      %p413 = scmp.eq.s32.totalorder %s39, 1
      %p414 = por %p412, %p413
      %p415 = scmp.ne.s32.totalorder %s406, %s407
      %p416 = scmp.eq.s32.totalorder %s39, 0
      %p417 = por %p415, %p416
      %p418 = scmp.ne.s32.totalorder %s406, %s407
      %p419 = scmp.eq.s32.totalorder %s40, 1
      %p420 = por %p418, %p419
      %p422 = scmp.ne.s32.totalorder %s407, %s421
      %p423 = scmp.eq.s32.totalorder %s40, 0
      %p424 = por %p422, %p423
      %s426 = sadd.s32 %s425, 1
      %p429 = scmp.eq.s32.totalorder %s34, 1
      %p430 = scmp.ne.s32.totalorder %s425, %s427
      %p431 = scmp.eq.s32.totalorder %s34, 0
      %p432 = por %p430, %p431
      %p433 = scmp.ne.s32.totalorder %s425, %s427
      %p434 = scmp.eq.s32.totalorder %s39, 1
      %p435 = por %p433, %p434
      %p436 = scmp.ne.s32.totalorder %s427, %s428
      %p437 = scmp.eq.s32.totalorder %s39, 0
      %p438 = por %p436, %p437
      %p439 = scmp.ne.s32.totalorder %s427, %s428
      %p440 = scmp.eq.s32.totalorder %s40, 1
      %p441 = por %p439, %p440
      %p443 = scmp.ne.s32.totalorder %s428, %s442
      %p444 = scmp.eq.s32.totalorder %s40, 0
      %p445 = por %p443, %p444
      %s446 = ssub.s32 %s34, %s41
      %p447 = scmp.eq.s32.totalorder %s446, 0
      %s449 = sadd.s32 %s448, 1
      %s450 = scalar_select %p447, %s448, %s449
      %p453 = pneg %p447
      %p454 = scmp.eq.s32.totalorder %s34, 1
      %p455 = por %p453, %p454
      %p456 = scmp.ne.s32.totalorder %s448, %s451
      %p457 = scmp.eq.s32.totalorder %s34, 0
      %p458 = por %p456, %p457
      %p459 = scmp.ne.s32.totalorder %s448, %s451
      %p460 = scmp.eq.s32.totalorder %s39, 1
      %p461 = por %p459, %p460
      %p462 = scmp.ne.s32.totalorder %s451, %s452
      %p463 = scmp.eq.s32.totalorder %s39, 0
      %p464 = por %p462, %p463
      %p465 = scmp.ne.s32.totalorder %s451, %s452
      %p466 = scmp.eq.s32.totalorder %s40, 1
      %p467 = por %p465, %p466
      %p469 = scmp.ne.s32.totalorder %s452, %s468
      %p470 = scmp.eq.s32.totalorder %s40, 0
      %p471 = por %p469, %p470
      %p472 = scmp.le.s32.totalorder 1, %s34
      %p473 = scmp.lt.s32.totalorder %s34, 3
      %p474 = pnand %p472, %p473
      %p475 = pneg %p474
      // Predicated region
      $region9: #{forward.1} parent=5 // pred_check
        _
      $region10: #{forward.1} parent=5 // pred_check_branch
        %477 = sbr.rel (%p474) target = $region12
      $region11: #{forward.1} parent=5 // pred_region
        %s478 = ssub.s32 %s34, 1
        // Predicated region
        $region13: #{forward.1} parent=11 // pred_check
          %p479 = pneg %p81
        $region14: #{forward.1} parent=11 // pred_check_branch
          %481 = sbr.rel (%p479) target = $region16
        $region15: #{forward.1} parent=11 // pred_region
          _
        $region16: #{forward.1} parent=11 // pred_fallthru
          _
        // Predicated region
        $region17: #{forward.1} parent=11 // pred_check
          %p482 = pneg %p102
        $region18: #{forward.1} parent=11 // pred_check_branch
          %484 = sbr.rel (%p482) target = $region20
        $region19: #{forward.1} parent=11 // pred_region
          %s486 = ssub.s32 512, 512
          %487 = vsyncadd [#allocation3], %s486
          %s488 = sshll.u32 [#allocation2], 4
          %s489 = int_to_ptr.vmem [resolvable:$true] %s488
          %494 = dma.hbm_to_vmem [thread:$0]  %s2, 512, %s489, [#allocation3], 128, 128, 8
        $region20: #{forward.1} parent=11 // pred_fallthru
          _
        // Predicated region
        $region21: #{forward.1} parent=11 // pred_check
          %p495 = pneg %p123
        $region22: #{forward.1} parent=11 // pred_check_branch
          %497 = sbr.rel (%p495) target = $region24
        $region23: #{forward.1} parent=11 // pred_region
          _
        $region24: #{forward.1} parent=11 // pred_fallthru
          _
        // Predicated region
        $region25: #{forward.1} parent=11 // pred_check
          %p498 = pneg %p144
        $region26: #{forward.1} parent=11 // pred_check_branch
          %500 = sbr.rel (%p498) target = $region28
        $region27: #{forward.1} parent=11 // pred_region
          _
        $region28: #{forward.1} parent=11 // pred_fallthru
          _
        // Predicated region
        $region29: #{forward.1} parent=11 // pred_check
          %p501 = pneg %p165
        $region30: #{forward.1} parent=11 // pred_check_branch
          %503 = sbr.rel (%p501) target = $region32
        $region31: #{forward.1} parent=11 // pred_region
          %s505 = ssub.s32 6144, 6144
          %506 = vsyncadd [#allocation6], %s505
          %s507 = sshll.u32 [#allocation5], 4
          %s508 = int_to_ptr.vmem [resolvable:$true] %s507
          %513 = dma.hbm_to_vmem [thread:$0]  %s5, 6144, %s508, [#allocation6], 192, 192, 12
        $region32: #{forward.1} parent=11 // pred_fallthru
          _
        // Predicated region
        $region33: #{forward.1} parent=11 // pred_check
          %p514 = pneg %p186
        $region34: #{forward.1} parent=11 // pred_check_branch
          %516 = sbr.rel (%p514) target = $region36
        $region35: #{forward.1} parent=11 // pred_region
          %s518 = ssub.s32 2048, 2048
          %519 = vsyncadd [#allocation6], %s518
          %s520 = sshll.u32 [#allocation7], 4
          %s521 = int_to_ptr.vmem [resolvable:$true] %s520
          %526 = dma.hbm_to_vmem [thread:$0]  %s6, 2048, %s521, [#allocation6], 64, 64, 4
        $region36: #{forward.1} parent=11 // pred_fallthru
          _
        // Predicated region
        $region37: #{forward.1} parent=11 // pred_check
          %p527 = pneg %p207
        $region38: #{forward.1} parent=11 // pred_check_branch
          %529 = sbr.rel (%p527) target = $region40
        $region39: #{forward.1} parent=11 // pred_region
          _
        $region40: #{forward.1} parent=11 // pred_fallthru
          _
        // Predicated region
        $region41: #{forward.1} parent=11 // pred_check
          %p530 = pneg %p228
        $region42: #{forward.1} parent=11 // pred_check_branch
          %532 = sbr.rel (%p530) target = $region44
        $region43: #{forward.1} parent=11 // pred_region
          _
        $region44: #{forward.1} parent=11 // pred_fallthru
          _
        // Predicated region
        $region45: #{forward.1} parent=11 // pred_check
          %p533 = pneg %p249
        $region46: #{forward.1} parent=11 // pred_check_branch
          %535 = sbr.rel (%p533) target = $region48
        $region47: #{forward.1} parent=11 // pred_region
          _
        $region48: #{forward.1} parent=11 // pred_fallthru
          _
        // Predicated region
        $region49: #{forward.1} parent=11 // pred_check
          %p536 = pneg %p270
        $region50: #{forward.1} parent=11 // pred_check_branch
          %538 = sbr.rel (%p536) target = $region52
        $region51: #{forward.1} parent=11 // pred_region
          %s540 = ssub.s32 2048, 2048
          %541 = vsyncadd [#allocation9], %s540
          %s542 = sshll.u32 [#allocation8], 4
          %s543 = int_to_ptr.vmem [resolvable:$true] %s542
          %548 = dma.hbm_to_vmem [thread:$0]  %s10, 2048, %s543, [#allocation9], 64, 64, 4
        $region52: #{forward.1} parent=11 // pred_fallthru
          _
        // Predicated region
        $region53: #{forward.1} parent=11 // pred_check
          %p549 = pneg %p291
        $region54: #{forward.1} parent=11 // pred_check_branch
          %551 = sbr.rel (%p549) target = $region56
        $region55: #{forward.1} parent=11 // pred_region
          %s553 = ssub.s32 32768, 32768
          %554 = vsyncadd [#allocation9], %s553
          %s555 = sshll.u32 [#allocation10], 4
          %s556 = int_to_ptr.vmem [resolvable:$true] %s555
          %561 = dma.hbm_to_vmem [thread:$0]  %s11, 32768, %s556, [#allocation9], 1024, 1024, 64
        $region56: #{forward.1} parent=11 // pred_fallthru
          _
        // Predicated region
        $region57: #{forward.1} parent=11 // pred_check
          %p562 = pneg %p312
        $region58: #{forward.1} parent=11 // pred_check_branch
          %564 = sbr.rel (%p562) target = $region60
        $region59: #{forward.1} parent=11 // pred_region
          %s566 = ssub.s32 512, 512
          %567 = vsyncadd [#allocation12], %s566
          %s568 = sshll.u32 [#allocation11], 4
          %s569 = int_to_ptr.vmem [resolvable:$true] %s568
          %574 = dma.hbm_to_vmem [thread:$0]  %s12, 512, %s569, [#allocation12], 256, 256, 16
        $region60: #{forward.1} parent=11 // pred_fallthru
          _
        // Predicated region
        $region61: #{forward.1} parent=11 // pred_check
          %p575 = pneg %p333
        $region62: #{forward.1} parent=11 // pred_check_branch
          %577 = sbr.rel (%p575) target = $region64
        $region63: #{forward.1} parent=11 // pred_region
          %s579 = ssub.s32 32768, 32768
          %580 = vsyncadd [#allocation12], %s579
          %s581 = sshll.u32 [#allocation13], 4
          %s582 = int_to_ptr.vmem [resolvable:$true] %s581
          %587 = dma.hbm_to_vmem [thread:$0]  %s13, 32768, %s582, [#allocation12], 64, 64, 4
        $region64: #{forward.1} parent=11 // pred_fallthru
          _
        // Predicated region
        $region65: #{forward.1} parent=11 // pred_check
          %p588 = pneg %p354
        $region66: #{forward.1} parent=11 // pred_check_branch
          %590 = sbr.rel (%p588) target = $region68
        $region67: #{forward.1} parent=11 // pred_region
          %s592 = ssub.s32 4096, 4096
          %593 = vsyncadd [#allocation15], %s592
          %s594 = sshll.u32 [#allocation14], 4
          %s595 = int_to_ptr.vmem [resolvable:$true] %s594
          %600 = dma.hbm_to_vmem [thread:$0]  %s14, 4096, %s595, [#allocation15], 128, 128, 8
        $region68: #{forward.1} parent=11 // pred_fallthru
          _
        // Predicated region
        $region69: #{forward.1} parent=11 // pred_check
          %p601 = pneg %p375
        $region70: #{forward.1} parent=11 // pred_check_branch
          %603 = sbr.rel (%p601) target = $region72
        $region71: #{forward.1} parent=11 // pred_region
          _
        $region72: #{forward.1} parent=11 // pred_fallthru
          _
        // Predicated region
        $region73: #{forward.1} parent=11 // pred_check
          %p604 = pneg %p396
        $region74: #{forward.1} parent=11 // pred_check_branch
          %606 = sbr.rel (%p604) target = $region76
        $region75: #{forward.1} parent=11 // pred_region
          %s608 = ssub.s32 16, 16
          %609 = vsyncadd [#allocation15], %s608
          %s611 = sshll.u32 [#allocation16], 4
          %s612 = int_to_ptr.vmem [resolvable:$true] %s611
          %614 = dma.hbm_to_vmem [thread:$0]  %s16, 16, %s612, [#allocation15]
        $region76: #{forward.1} parent=11 // pred_fallthru
          _
        // Predicated region
        $region77: #{forward.1} parent=11 // pred_check
          %p615 = pneg %p417
        $region78: #{forward.1} parent=11 // pred_check_branch
          %617 = sbr.rel (%p615) target = $region80
        $region79: #{forward.1} parent=11 // pred_region
          %s619 = ssub.s32 1024, 1024
          %620 = vsyncadd [#allocation18], %s619
          %s621 = sshll.u32 [#allocation17], 4
          %s622 = int_to_ptr.vmem [resolvable:$true] %s621
          %627 = dma.hbm_to_vmem [thread:$0]  %s17, 1024, %s622, [#allocation18], 64, 64, 4
        $region80: #{forward.1} parent=11 // pred_fallthru
          _
        // Predicated region
        $region81: #{forward.1} parent=11 // pred_check
          %p628 = pneg %p438
        $region82: #{forward.1} parent=11 // pred_check_branch
          %630 = sbr.rel (%p628) target = $region84
        $region83: #{forward.1} parent=11 // pred_region
          %s632 = ssub.s32 16, 16
          %633 = vsyncadd [#allocation18], %s632
          %s635 = sshll.u32 [#allocation19], 4
          %s636 = int_to_ptr.vmem [resolvable:$true] %s635
          %638 = dma.hbm_to_vmem [thread:$0]  %s18, 16, %s636, [#allocation18]
        $region84: #{forward.1} parent=11 // pred_fallthru
          _
      $region12: #{forward.1} parent=5 // pred_fallthru
        _
      %p639 = scmp.lt.s32.totalorder %s34, 2
      // Predicated region
      $region85: #{forward.1} parent=5 // pred_check
        %p640 = pneg %p639
      $region86: #{forward.1} parent=5 // pred_check_branch
        %642 = sbr.rel (%p640) target = $region88
      $region87: #{forward.1} parent=5 // pred_region
        // Predicated region
        $region89: #{forward.1} parent=87 // pred_check
          %p643 = pneg %p54
        $region90: #{forward.1} parent=87 // pred_check_branch
          %645 = sbr.rel (%p643) target = $region92
        $region91: #{forward.1} parent=87 // pred_region
          %s646 = smul.u32 2, %s34
          %p647 = scmp.lt.s32.totalorder %s646, 3
          %s648 = scalar_select %p647, %s646, 3
          %s649 = smul.addr %s648, 8
          %s650 = scalar_lea.vmem %s0, %s649
          %s651 = smul.u32 2, %s34
        $region92: #{forward.1} parent=87 // pred_fallthru
          _
      $region88: #{forward.1} parent=5 // pred_fallthru
        _
      %p652 = scmp.le.s32.totalorder 1, %s34
      %p653 = scmp.lt.s32.totalorder %s34, 3
      %p654 = pnand %p652, %p653
      %p655 = pneg %p654
      // Predicated region
      $region93: #{forward.1} parent=5 // pred_check
        _
      $region94: #{forward.1} parent=5 // pred_check_branch
        %657 = sbr.rel (%p654) target = $region96
      $region95: #{forward.1} parent=5 // pred_region
        %s658 = ssub.s32 %s34, 1
        // Predicated region
        $region97: #{forward.1} parent=95 // pred_check
          %p659 = pneg %p102
        $region98: #{forward.1} parent=95 // pred_check_branch
          %661 = sbr.rel (%p659) target = $region100
        $region99: #{forward.1} parent=95 // pred_region
          %662 = dma.done [#allocation3], 512
        $region100: #{forward.1} parent=95 // pred_fallthru
          _
        // Predicated region
        $region101: #{forward.1} parent=95 // pred_check
          %p663 = pneg %p165
        $region102: #{forward.1} parent=95 // pred_check_branch
          %665 = sbr.rel (%p663) target = $region104
        $region103: #{forward.1} parent=95 // pred_region
          %666 = dma.done [#allocation6], 6144
        $region104: #{forward.1} parent=95 // pred_fallthru
          _
        // Predicated region
        $region105: #{forward.1} parent=95 // pred_check
          %p667 = pneg %p186
        $region106: #{forward.1} parent=95 // pred_check_branch
          %669 = sbr.rel (%p667) target = $region108
        $region107: #{forward.1} parent=95 // pred_region
          %670 = dma.done [#allocation6], 2048
        $region108: #{forward.1} parent=95 // pred_fallthru
          _
        // Predicated region
        $region109: #{forward.1} parent=95 // pred_check
          %p671 = pneg %p270
        $region110: #{forward.1} parent=95 // pred_check_branch
          %673 = sbr.rel (%p671) target = $region112
        $region111: #{forward.1} parent=95 // pred_region
          %674 = dma.done [#allocation9], 2048
        $region112: #{forward.1} parent=95 // pred_fallthru
          _
        // Predicated region
        $region113: #{forward.1} parent=95 // pred_check
          %p675 = pneg %p291
        $region114: #{forward.1} parent=95 // pred_check_branch
          %677 = sbr.rel (%p675) target = $region116
        $region115: #{forward.1} parent=95 // pred_region
          %678 = dma.done [#allocation9], 32768
        $region116: #{forward.1} parent=95 // pred_fallthru
          _
        // Predicated region
        $region117: #{forward.1} parent=95 // pred_check
          %p679 = pneg %p312
        $region118: #{forward.1} parent=95 // pred_check_branch
          %681 = sbr.rel (%p679) target = $region120
        $region119: #{forward.1} parent=95 // pred_region
          %682 = dma.done [#allocation12], 512
        $region120: #{forward.1} parent=95 // pred_fallthru
          _
        // Predicated region
        $region121: #{forward.1} parent=95 // pred_check
          %p683 = pneg %p333
        $region122: #{forward.1} parent=95 // pred_check_branch
          %685 = sbr.rel (%p683) target = $region124
        $region123: #{forward.1} parent=95 // pred_region
          %686 = dma.done [#allocation12], 32768
        $region124: #{forward.1} parent=95 // pred_fallthru
          _
        // Predicated region
        $region125: #{forward.1} parent=95 // pred_check
          %p687 = pneg %p354
        $region126: #{forward.1} parent=95 // pred_check_branch
          %689 = sbr.rel (%p687) target = $region128
        $region127: #{forward.1} parent=95 // pred_region
          %690 = dma.done [#allocation15], 4096
        $region128: #{forward.1} parent=95 // pred_fallthru
          _
        // Predicated region
        $region129: #{forward.1} parent=95 // pred_check
          %p691 = pneg %p396
        $region130: #{forward.1} parent=95 // pred_check_branch
          %693 = sbr.rel (%p691) target = $region132
        $region131: #{forward.1} parent=95 // pred_region
          %694 = dma.done [#allocation15], 16
        $region132: #{forward.1} parent=95 // pred_fallthru
          _
        // Predicated region
        $region133: #{forward.1} parent=95 // pred_check
          %p695 = pneg %p417
        $region134: #{forward.1} parent=95 // pred_check_branch
          %697 = sbr.rel (%p695) target = $region136
        $region135: #{forward.1} parent=95 // pred_region
          %698 = dma.done [#allocation18], 1024
        $region136: #{forward.1} parent=95 // pred_fallthru
          _
        // Predicated region
        $region137: #{forward.1} parent=95 // pred_check
          %p699 = pneg %p438
        $region138: #{forward.1} parent=95 // pred_check_branch
          %701 = sbr.rel (%p699) target = $region140
        $region139: #{forward.1} parent=95 // pred_region
          %702 = dma.done [#allocation18], 16
        $region140: #{forward.1} parent=95 // pred_fallthru
          _
        %s703 = smul.u32 2, %s39
        %p704 = scmp.lt.s32.totalorder %s703, 3
        %s705 = scalar_select %p704, %s703, 3
        %s706 = smul.addr %s705, 8
        %s707 = scalar_lea.vmem %s0, %s706
        %p708 = pneg %p60
        %p709 = pneg %p57
        %p710 = pneg %p81
        %p711 = pneg %p78
        %p712 = pneg %p102
        %p713 = pneg %p99
        %p714 = pneg %p123
        %p715 = pneg %p120
        %p716 = pneg %p144
        %p717 = pneg %p141
        %p718 = pneg %p165
        %p719 = pneg %p162
        %p720 = pneg %p186
        %p721 = pneg %p183
        %p722 = pneg %p207
        %p723 = pneg %p204
        %p724 = pneg %p228
        %p725 = pneg %p225
        %p726 = pneg %p249
        %p727 = pneg %p246
        %p728 = pneg %p270
        %p729 = pneg %p267
        %p730 = pneg %p291
        %p731 = pneg %p288
        %p732 = pneg %p312
        %p733 = pneg %p309
        %p734 = pneg %p333
        %p735 = pneg %p330
        %p736 = pneg %p354
        %p737 = pneg %p351
        %p738 = pneg %p375
        %p739 = pneg %p372
        %p740 = pneg %p396
        %p741 = pneg %p393
        %p742 = pneg %p417
        %p743 = pneg %p414
        %p744 = pneg %p438
        %p745 = pneg %p435
        %p746 = pneg %p464
        %p747 = pneg %p461
        %s748 = sand.u32 %s451, 1
        %s749 = scalar_lea.sflag [#allocation4], %s748
        %s750 = sand.u32 %s451, 1
        %s751 = smul.addr %s750, 16
        %s752 = scalar_lea.vmem [#allocation20], %s751
        %s753 = smul.u32 2, %s39
        %p754 = scmp.lt.s32.totalorder %s753, 3
        %s755 = scalar_select %p754, %s753, 3
        %s756 = smul.addr %s755, 8
        %s757 = scalar_lea.vmem %s0, %s756
        %s758 = smul.u32 2, %s39
        %s759 = smul.u32 2, %s39
        %v761 = vld [vmem:[%s757] sm:$0xff]
        %v762 = vld [vmem:[%s757 + $0x8] sm:$0xff]
        %v763 = vlaneseq
        %v764 = vand.u32 %v763, 127
        %765 = vset.pattern.permute.xlu0 0
        %766 = vperm.xlu0 %765, %v761
        %v767 = vpop.permute.xlu0 %766
        %768 = vset.pattern.permute.xlu0 0
        %769 = vperm.xlu0 %768, %v762
        %v770 = vpop.permute.xlu0 %769
        %vm771 = vcmp.eq.s32.totalorder %v764, %v767
        %vm772 = vcmp.eq.s32.totalorder %v764, %v770
        %v773 = vsel %vm771, 1.0, 0.0
        %v774 = vsel %vm772, 1.0, 0.0
        %v775 = vpack.c.bf16 %v774, %v773
        %v776 = vld [vmem:[%s1] sm:$0xf]
        %v777 = vld [vmem:[%s1 + $0x4] sm:$0xf]
        %v778 = vld [vmem:[%s1 + $0x8] sm:$0xf]
        %v779 = vld [vmem:[%s1 + $0xc] sm:$0xf]
        %v780 = vld [vmem:[%s1 + $0x10] sm:$0xf]
        %v781 = vld [vmem:[%s1 + $0x14] sm:$0xf]
        %v782 = vld [vmem:[%s1 + $0x18] sm:$0xf]
        %v783 = vld [vmem:[%s1 + $0x1c] sm:$0xf]
        %v784 = vld [vmem:[%s1 + $0x20] sm:$0xf]
        %v785 = vld [vmem:[%s1 + $0x24] sm:$0xf]
        %v786 = vld [vmem:[%s1 + $0x28] sm:$0xf]
        %v787 = vld [vmem:[%s1 + $0x2c] sm:$0xf]
        %v788 = vld [vmem:[%s1 + $0x30] sm:$0xf]
        %v789 = vld [vmem:[%s1 + $0x34] sm:$0xf]
        %v790 = vld [vmem:[%s1 + $0x38] sm:$0xf]
        %v791 = vld [vmem:[%s1 + $0x3c] sm:$0xf]
        %v792 = vld [vmem:[#allocation2] sm:$0xff]
        %v793 = vld [vmem:[#allocation2 + $0x8] sm:$0xff]
        %v810 = vunpack.c.l.b16 %v776
        %v811 = vunpack.c.l.b16 %v777
        %v812 = vunpack.c.l.b16 %v778
        %v813 = vunpack.c.l.b16 %v779
        %v814 = vunpack.c.l.b16 %v780
        %v815 = vunpack.c.l.b16 %v781
        %v816 = vunpack.c.l.b16 %v782
        %v817 = vunpack.c.l.b16 %v783
        %v818 = vunpack.c.l.b16 %v784
        %v819 = vunpack.c.l.b16 %v785
        %v820 = vunpack.c.l.b16 %v786
        %v821 = vunpack.c.l.b16 %v787
        %v822 = vunpack.c.l.b16 %v788
        %v823 = vunpack.c.l.b16 %v789
        %v824 = vunpack.c.l.b16 %v790
        %v825 = vunpack.c.l.b16 %v791
        %v826 = vpack.c.b16 %v811, %v810
        %v827 = vpack.c.b16 %v813, %v812
        %v828 = vpack.c.b16 %v815, %v814
        %v829 = vpack.c.b16 %v817, %v816
        %v830 = vpack.c.b16 %v819, %v818
        %v831 = vpack.c.b16 %v821, %v820
        %v832 = vpack.c.b16 %v823, %v822
        %v833 = vpack.c.b16 %v825, %v824
        %842 = vmatprep.subr.bf16.mxu0 0
        %843 = vmatpush1.bf16.msra.mxu0 %v826
        %844 = vmatprep.subr.bf16.mxu0 0
        %845 = vmatpush1.bf16.msra.mxu0 %v827
        %846 = vmatprep.subr.bf16.mxu0 0
        %847 = vmatpush1.bf16.msra.mxu0 %v828
        %848 = vmatprep.subr.bf16.mxu0 0
        %849 = vmatpush1.bf16.msra.mxu0 %v829
        %850 = vmatprep.subr.bf16.mxu0 0
        %851 = vmatpush1.bf16.msra.mxu0 %v830
        %852 = vmatprep.subr.bf16.mxu0 0
        %853 = vmatpush1.bf16.msra.mxu0 %v831
        %854 = vmatprep.subr.bf16.mxu0 0
        %855 = vmatpush1.bf16.msra.mxu0 %v832
        %856 = vmatprep.subr.bf16.mxu0 0
        %857 = vmatpush1.bf16.msra.mxu0 %v833
        %858 = vmatprep.subr.bf16.mxu0 0
        %859 = vmatpush1.bf16.msra.mxu0 0
        %860 = vmatprep.subr.bf16.mxu0 0
        %861 = vmatpush1.bf16.msra.mxu0 0
        %862 = vmatprep.subr.bf16.mxu0 0
        %863 = vmatpush1.bf16.msra.mxu0 0
        %864 = vmatprep.subr.bf16.mxu0 0
        %865 = vmatpush1.bf16.msra.mxu0 0
        %866 = vmatprep.subr.bf16.mxu0 0
        %867 = vmatpush1.bf16.msra.mxu0 0
        %868 = vmatprep.subr.bf16.mxu0 0
        %869 = vmatpush1.bf16.msra.mxu0 0
        %870 = vmatprep.subr.bf16.mxu0 0
        %871 = vmatpush1.bf16.msra.mxu0 0
        %872 = vmatprep.subr.bf16.mxu0 0
        %873 = vmatpush1.bf16.msra.mxu0 0
        %874 = vmatprep.mubr.bf16.mxu0 0
        %875 = vmatmul.mubr.bf16.gmra.mrb[0].mxu0 %v775
        %v876 = vpop.f32.mrb[0].mxu0
        %v877 = vadd.f32 %v792, %v876
        %v878 = vpop.f32.mrb[0].mxu0
        %v879 = vpop.f32.mrb[0].mxu0
        %v880 = vadd.f32 %v793, %v879
        %v881 = vpop.f32.mrb[0].mxu0
        %882 = vdwg.mxu0
        %v883 = vlaneseq
        %v884 = vshrl.u32 %v883, 7
        %v885 = vadd.s32 %v884, 8
        %vm886 = vcmp.le.s32.totalorder %v764, %v884
        %vm887 = vcmp.le.s32.totalorder %v764, %v885
        %v888 = vld [vmem:[%s3] sm:$0x1]
        %v889 = vld [vmem:[%s4] sm:$0x1]
        %890 = vadd.xlane.f32.xlu0 %v877
        %v891 = vpop.xlane.xlu0 %890
        %892 = vadd.xlane.f32.xlu0 %v880
        %v893 = vpop.xlane.xlu0 %892
        %v894 = vrcp.pop 128.0
        %v895 = vmul.f32 %v891, %v894
        %v896 = vmul.f32 %v893, %v894
        %v897 = vsub.f32 %v877, %v895
        %v898 = vsub.f32 %v880, %v896
        %v899 = vmul.f32 %v897, %v897
        %v900 = vmul.f32 %v898, %v898
        %901 = vadd.xlane.f32.xlu0 %v899
        %v902 = vpop.xlane.xlu0 %901
        %903 = vadd.xlane.f32.xlu0 %v900
        %v904 = vpop.xlane.xlu0 %903
        %v905 = vmul.f32 %v902, %v894
        %v906 = vmul.f32 %v904, %v894
        %v907 = vadd.f32 %v905, 1e-05
        %v908 = vadd.f32 %v906, 1e-05
        %v909 = vrsqrt.pop %v907
        %v910 = vrsqrt.pop %v908
        %v911 = vmul.f32 %v897, %v909
        %v912 = vmul.f32 %v898, %v910
        %v914 = vlaneseq
        %v915 = vshrl.u32 %v914, 7
        %v916 = vsub.s32 0, %v915
        %v917 = vrot.slane %v888, %v916
        %v919 = vmul.f32 %v911, %v917
        %v920 = vmul.f32 %v912, %v917
        %v922 = vlaneseq
        %v923 = vshrl.u32 %v922, 7
        %v924 = vsub.s32 0, %v923
        %v925 = vrot.slane %v889, %v924
        %v927 = vadd.f32 %v919, %v925
        %v928 = vadd.f32 %v920, %v925
        %v929 = vpack.c.bf16 %v928, %v927
        %v930 = vld [vmem:[#allocation5] sm:$0xff]
        %v931 = vld [vmem:[#allocation5 + $0x8] sm:$0xf]
        %v932 = vld [vmem:[#allocation5 + $0xc] sm:$0xff]
        %v933 = vld [vmem:[#allocation5 + $0x14] sm:$0xf]
        %v934 = vld [vmem:[#allocation5 + $0x18] sm:$0xff]
        %v935 = vld [vmem:[#allocation5 + $0x20] sm:$0xf]
        %v936 = vld [vmem:[#allocation5 + $0x24] sm:$0xff]
        %v937 = vld [vmem:[#allocation5 + $0x2c] sm:$0xf]
        %v938 = vld [vmem:[#allocation5 + $0x30] sm:$0xff]
        %v939 = vld [vmem:[#allocation5 + $0x38] sm:$0xf]
        %v940 = vld [vmem:[#allocation5 + $0x3c] sm:$0xff]
        %v941 = vld [vmem:[#allocation5 + $0x44] sm:$0xf]
        %v942 = vld [vmem:[#allocation5 + $0x48] sm:$0xff]
        %v943 = vld [vmem:[#allocation5 + $0x50] sm:$0xf]
        %v944 = vld [vmem:[#allocation5 + $0x54] sm:$0xff]
        %v945 = vld [vmem:[#allocation5 + $0x5c] sm:$0xf]
        %v946 = vld [vmem:[#allocation5 + $0x60] sm:$0xff]
        %v947 = vld [vmem:[#allocation5 + $0x68] sm:$0xf]
        %v948 = vld [vmem:[#allocation5 + $0x6c] sm:$0xff]
        %v949 = vld [vmem:[#allocation5 + $0x74] sm:$0xf]
        %v950 = vld [vmem:[#allocation5 + $0x78] sm:$0xff]
        %v951 = vld [vmem:[#allocation5 + $0x80] sm:$0xf]
        %v952 = vld [vmem:[#allocation5 + $0x84] sm:$0xff]
        %v953 = vld [vmem:[#allocation5 + $0x8c] sm:$0xf]
        %v954 = vld [vmem:[#allocation5 + $0x90] sm:$0xff]
        %v955 = vld [vmem:[#allocation5 + $0x98] sm:$0xf]
        %v956 = vld [vmem:[#allocation5 + $0x9c] sm:$0xff]
        %v957 = vld [vmem:[#allocation5 + $0xa4] sm:$0xf]
        %v958 = vld [vmem:[#allocation5 + $0xa8] sm:$0xff]
        %v959 = vld [vmem:[#allocation5 + $0xb0] sm:$0xf]
        %v960 = vld [vmem:[#allocation5 + $0xb4] sm:$0xff]
        %v961 = vld [vmem:[#allocation5 + $0xbc] sm:$0xf]
        %v994 = vunpack.c.l.b16 %v930
        %v995 = vunpack.c.h.b16 %v930
        %v996 = vunpack.c.l.b16 %v931
        %v997 = vunpack.c.l.b16 %v932
        %v998 = vunpack.c.h.b16 %v932
        %v999 = vunpack.c.l.b16 %v933
        %v1000 = vunpack.c.l.b16 %v934
        %v1001 = vunpack.c.h.b16 %v934
        %v1002 = vunpack.c.l.b16 %v935
        %v1003 = vunpack.c.l.b16 %v936
        %v1004 = vunpack.c.h.b16 %v936
        %v1005 = vunpack.c.l.b16 %v937
        %v1006 = vunpack.c.l.b16 %v938
        %v1007 = vunpack.c.h.b16 %v938
        %v1008 = vunpack.c.l.b16 %v939
        %v1009 = vunpack.c.l.b16 %v940
        %v1010 = vunpack.c.h.b16 %v940
        %v1011 = vunpack.c.l.b16 %v941
        %v1012 = vunpack.c.l.b16 %v942
        %v1013 = vunpack.c.h.b16 %v942
        %v1014 = vunpack.c.l.b16 %v943
        %v1015 = vunpack.c.l.b16 %v944
        %v1016 = vunpack.c.h.b16 %v944
        %v1017 = vunpack.c.l.b16 %v945
        %v1018 = vunpack.c.l.b16 %v946
        %v1019 = vunpack.c.h.b16 %v946
        %v1020 = vunpack.c.l.b16 %v947
        %v1021 = vunpack.c.l.b16 %v948
        %v1022 = vunpack.c.h.b16 %v948
        %v1023 = vunpack.c.l.b16 %v949
        %v1024 = vunpack.c.l.b16 %v950
        %v1025 = vunpack.c.h.b16 %v950
        %v1026 = vunpack.c.l.b16 %v951
        %v1027 = vunpack.c.l.b16 %v952
        %v1028 = vunpack.c.h.b16 %v952
        %v1029 = vunpack.c.l.b16 %v953
        %v1030 = vunpack.c.l.b16 %v954
        %v1031 = vunpack.c.h.b16 %v954
        %v1032 = vunpack.c.l.b16 %v955
        %v1033 = vunpack.c.l.b16 %v956
        %v1034 = vunpack.c.h.b16 %v956
        %v1035 = vunpack.c.l.b16 %v957
        %v1036 = vunpack.c.l.b16 %v958
        %v1037 = vunpack.c.h.b16 %v958
        %v1038 = vunpack.c.l.b16 %v959
        %v1039 = vunpack.c.l.b16 %v960
        %v1040 = vunpack.c.h.b16 %v960
        %v1041 = vunpack.c.l.b16 %v961
        %v1042 = vpack.c.b16 %v997, %v994
        %v1043 = vpack.c.b16 %v998, %v995
        %v1044 = vpack.c.b16 %v999, %v996
        %v1045 = vpack.c.b16 %v1003, %v1000
        %v1046 = vpack.c.b16 %v1004, %v1001
        %v1047 = vpack.c.b16 %v1005, %v1002
        %v1048 = vpack.c.b16 %v1009, %v1006
        %v1049 = vpack.c.b16 %v1010, %v1007
        %v1050 = vpack.c.b16 %v1011, %v1008
        %v1051 = vpack.c.b16 %v1015, %v1012
        %v1052 = vpack.c.b16 %v1016, %v1013
        %v1053 = vpack.c.b16 %v1017, %v1014
        %v1054 = vpack.c.b16 %v1021, %v1018
        %v1055 = vpack.c.b16 %v1022, %v1019
        %v1056 = vpack.c.b16 %v1023, %v1020
        %v1057 = vpack.c.b16 %v1027, %v1024
        %v1058 = vpack.c.b16 %v1028, %v1025
        %v1059 = vpack.c.b16 %v1029, %v1026
        %v1060 = vpack.c.b16 %v1033, %v1030
        %v1061 = vpack.c.b16 %v1034, %v1031
        %v1062 = vpack.c.b16 %v1035, %v1032
        %v1063 = vpack.c.b16 %v1039, %v1036
        %v1064 = vpack.c.b16 %v1040, %v1037
        %v1065 = vpack.c.b16 %v1041, %v1038
        %1090 = vmatprep.subr.bf16.mxu0 %v1043
        %1091 = vmatpush1.bf16.msra.mxu0 %v1042
        %1092 = vmatprep.subr.bf16.mxu0 %v1046
        %1093 = vmatpush1.bf16.msra.mxu0 %v1045
        %1094 = vmatprep.subr.bf16.mxu0 %v1049
        %1095 = vmatpush1.bf16.msra.mxu0 %v1048
        %1096 = vmatprep.subr.bf16.mxu0 %v1052
        %1097 = vmatpush1.bf16.msra.mxu0 %v1051
        %1098 = vmatprep.subr.bf16.mxu0 %v1055
        %1099 = vmatpush1.bf16.msra.mxu0 %v1054
        %1100 = vmatprep.subr.bf16.mxu0 %v1058
        %1101 = vmatpush1.bf16.msra.mxu0 %v1057
        %1102 = vmatprep.subr.bf16.mxu0 %v1061
        %1103 = vmatpush1.bf16.msra.mxu0 %v1060
        %1104 = vmatprep.subr.bf16.mxu0 %v1064
        %1105 = vmatpush1.bf16.msra.mxu0 %v1063
        %1106 = vmatprep.subr.bf16.mxu0 0
        %1107 = vmatpush1.bf16.msra.mxu0 0
        %1108 = vmatprep.subr.bf16.mxu0 0
        %1109 = vmatpush1.bf16.msra.mxu0 0
        %1110 = vmatprep.subr.bf16.mxu0 0
        %1111 = vmatpush1.bf16.msra.mxu0 0
        %1112 = vmatprep.subr.bf16.mxu0 0
        %1113 = vmatpush1.bf16.msra.mxu0 0
        %1114 = vmatprep.subr.bf16.mxu0 0
        %1115 = vmatpush1.bf16.msra.mxu0 0
        %1116 = vmatprep.subr.bf16.mxu0 0
        %1117 = vmatpush1.bf16.msra.mxu0 0
        %1118 = vmatprep.subr.bf16.mxu0 0
        %1119 = vmatpush1.bf16.msra.mxu0 0
        %1120 = vmatprep.subr.bf16.mxu0 0
        %1121 = vmatpush1.bf16.msra.mxu0 0
        %1122 = vmatprep.mubr.bf16.mxu0 0
        %1123 = vmatmul.mubr.bf16.gmra.mrb[0].mxu0 %v929
        %v1124 = vpop.f32.mrb[0].mxu0
        %v1125 = vadd.f32 0.0, %v1124
        %v1126 = vpop.f32.mrb[0].mxu0
        %v1127 = vadd.f32 0.0, %v1126
        %v1128 = vpop.f32.mrb[0].mxu0
        %v1129 = vadd.f32 0.0, %v1128
        %v1130 = vpop.f32.mrb[0].mxu0
        %v1131 = vadd.f32 0.0, %v1130
        %1132 = vdwg.mxu0
        %1133 = vmatprep.subr.bf16.mxu0 0
        %1134 = vmatpush1.bf16.msra.mxu0 %v1044
        %1135 = vmatprep.subr.bf16.mxu0 0
        %1136 = vmatpush1.bf16.msra.mxu0 %v1047
        %1137 = vmatprep.subr.bf16.mxu0 0
        %1138 = vmatpush1.bf16.msra.mxu0 %v1050
        %1139 = vmatprep.subr.bf16.mxu0 0
        %1140 = vmatpush1.bf16.msra.mxu0 %v1053
        %1141 = vmatprep.subr.bf16.mxu0 0
        %1142 = vmatpush1.bf16.msra.mxu0 %v1056
        %1143 = vmatprep.subr.bf16.mxu0 0
        %1144 = vmatpush1.bf16.msra.mxu0 %v1059
        %1145 = vmatprep.subr.bf16.mxu0 0
        %1146 = vmatpush1.bf16.msra.mxu0 %v1062
        %1147 = vmatprep.subr.bf16.mxu0 0
        %1148 = vmatpush1.bf16.msra.mxu0 %v1065
        %1149 = vmatprep.subr.bf16.mxu0 0
        %1150 = vmatpush1.bf16.msra.mxu0 0
        %1151 = vmatprep.subr.bf16.mxu0 0
        %1152 = vmatpush1.bf16.msra.mxu0 0
        %1153 = vmatprep.subr.bf16.mxu0 0
        %1154 = vmatpush1.bf16.msra.mxu0 0
        %1155 = vmatprep.subr.bf16.mxu0 0
        %1156 = vmatpush1.bf16.msra.mxu0 0
        %1157 = vmatprep.subr.bf16.mxu0 0
        %1158 = vmatpush1.bf16.msra.mxu0 0
        %1159 = vmatprep.subr.bf16.mxu0 0
        %1160 = vmatpush1.bf16.msra.mxu0 0
        %1161 = vmatprep.subr.bf16.mxu0 0
        %1162 = vmatpush1.bf16.msra.mxu0 0
        %1163 = vmatprep.subr.bf16.mxu0 0
        %1164 = vmatpush1.bf16.msra.mxu0 0
        %1165 = vmatprep.mubr.bf16.mxu0 0
        %1166 = vmatmul.mubr.bf16.gmra.mrb[0].mxu0 %v929
        %v1167 = vpop.f32.mrb[0].mxu0
        %v1168 = vadd.f32 0.0, %v1167
        %v1169 = vpop.f32.mrb[0].mxu0
        %v1170 = vpop.f32.mrb[0].mxu0
        %v1171 = vadd.f32 0.0, %v1170
        %v1172 = vpop.f32.mrb[0].mxu0
        %1173 = vdwg.mxu0
        %v1174 = vpack.c.bf16 %v1129, %v1125
        %v1175 = vpack.c.bf16 %v1131, %v1127
        %v1176 = vpack.c.bf16 %v1171, %v1168
        %vm1177 = vcmask 261120
        %v1179 = vsel %vm1177, %v1174, 0
        %v1182 = vsel %vm1177, %v1175, 0
        %1184 = vmatprep.subr.bf16.mxu0 0
        %1185 = vmatpush1.bf16.xpose.msra.mxu0 %v1182
        %1186 = vmatprep.subr.bf16.mxu0 0
        %1187 = vmatpush1.bf16.xpose.msra.mxu0 0
        %1188 = vmatprep.subr.bf16.mxu0 0
        %1189 = vmatpush1.bf16.xpose.msra.mxu0 0
        %1190 = vmatprep.subr.bf16.mxu0 0
        %1191 = vmatpush1.bf16.xpose.msra.mxu0 0
        %1192 = vmatprep.subr.bf16.mxu0 0
        %1193 = vmatpush1.bf16.xpose.msra.mxu0 0
        %1194 = vmatprep.subr.bf16.mxu0 0
        %1195 = vmatpush1.bf16.xpose.msra.mxu0 0
        %1196 = vmatprep.subr.bf16.mxu0 0
        %1197 = vmatpush1.bf16.xpose.msra.mxu0 0
        %1198 = vmatprep.subr.bf16.mxu0 0
        %1199 = vmatpush1.bf16.xpose.msra.mxu0 0
        %1200 = vmatprep.subr.bf16.mxu0 0
        %1201 = vmatpush1.bf16.xpose.msra.mxu0 0
        %1202 = vmatprep.subr.bf16.mxu0 0
        %1203 = vmatpush1.bf16.xpose.msra.mxu0 0
        %1204 = vmatprep.subr.bf16.mxu0 0
        %1205 = vmatpush1.bf16.xpose.msra.mxu0 0
        %1206 = vmatprep.subr.bf16.mxu0 0
        %1207 = vmatpush1.bf16.xpose.msra.mxu0 0
        %1208 = vmatprep.subr.bf16.mxu0 0
        %1209 = vmatpush1.bf16.xpose.msra.mxu0 0
        %1210 = vmatprep.subr.bf16.mxu0 0
        %1211 = vmatpush1.bf16.xpose.msra.mxu0 0
        %1212 = vmatprep.subr.bf16.mxu0 0
        %1213 = vmatpush1.bf16.xpose.msra.mxu0 0
        %1214 = vmatprep.subr.bf16.mxu0 0
        %1215 = vmatpush1.bf16.xpose.msra.mxu0 0
        %1216 = vmatprep.mubr.bf16.mxu0 0
        %1217 = vmatmul.mubr.bf16.gmra.mrb[0].mxu0 %v1179
        %v1218 = vpop.f32.mrb[0].mxu0
        %v1219 = vadd.f32 0.0, %v1218
        %v1220 = vpop.f32.mrb[0].mxu0
        %v1221 = vpop.f32.mrb[0].mxu0
        %v1222 = vadd.f32 0.0, %v1221
        %v1223 = vpop.f32.mrb[0].mxu0
        %1224 = vdwg.mxu0
        %v1225 = vmul.f32 %v1219, 0.17677669
        %v1226 = vmul.f32 %v1222, 0.17677669
        %v1227 = vsel %vm886, %v1225, -1e+30
        %v1228 = vsel %vm887, %v1226, -1e+30
        %vm1229 = vcmask 130048
        %v1230 = vsel %vm1229, %v1227, -inf
        %1231 = vmax.xlane.f32.xlu0 %v1230
        %v1232 = vpop.xlane.xlu0 %1231
        %v1233 = vsel %vm1229, %v1228, -inf
        %1234 = vmax.xlane.f32.xlu0 %v1233
        %v1235 = vpop.xlane.xlu0 %1234
        %v1236 = vsub.f32 %v1227, %v1232
        %v1237 = vsub.f32 %v1228, %v1235
        %v1238 = vmul.f32 %v1236, 1.442695
        %v1239 = vpow.pop %v1238
        %v1240 = vmul.f32 %v1237, 1.442695
        %v1241 = vpow.pop %v1240
        %v1242 = vsel %vm1229, %v1239, 0.0
        %1243 = vadd.xlane.f32.xlu0 %v1242
        %v1244 = vpop.xlane.xlu0 %1243
        %v1245 = vsel %vm1229, %v1241, 0.0
        %1246 = vadd.xlane.f32.xlu0 %v1245
        %v1247 = vpop.xlane.xlu0 %1246
        %v1248 = vrcp.pop %v1244
        %v1249 = vrcp.pop %v1247
        %v1250 = vmul.f32 %v1239, %v1248
        %v1251 = vmul.f32 %v1241, %v1249
        %v1252 = vpack.c.bf16 %v1251, %v1250
        %v1254 = vsel %vm1229, %v1252, 0
        %1256 = vmatprep.subr.bf16.mxu0 0
        %1257 = vmatpush1.bf16.msra.mxu0 %v1176
        %1258 = vmatprep.subr.bf16.mxu0 0
        %1259 = vmatpush1.bf16.msra.mxu0 0
        %1260 = vmatprep.subr.bf16.mxu0 0
        %1261 = vmatpush1.bf16.msra.mxu0 0
        %1262 = vmatprep.subr.bf16.mxu0 0
        %1263 = vmatpush1.bf16.msra.mxu0 0
        %1264 = vmatprep.subr.bf16.mxu0 0
        %1265 = vmatpush1.bf16.msra.mxu0 0
        %1266 = vmatprep.subr.bf16.mxu0 0
        %1267 = vmatpush1.bf16.msra.mxu0 0
        %1268 = vmatprep.subr.bf16.mxu0 0
        %1269 = vmatpush1.bf16.msra.mxu0 0
        %1270 = vmatprep.subr.bf16.mxu0 0
        %1271 = vmatpush1.bf16.msra.mxu0 0
        %1272 = vmatprep.subr.bf16.mxu0 0
        %1273 = vmatpush1.bf16.msra.mxu0 0
        %1274 = vmatprep.subr.bf16.mxu0 0
        %1275 = vmatpush1.bf16.msra.mxu0 0
        %1276 = vmatprep.subr.bf16.mxu0 0
        %1277 = vmatpush1.bf16.msra.mxu0 0
        %1278 = vmatprep.subr.bf16.mxu0 0
        %1279 = vmatpush1.bf16.msra.mxu0 0
        %1280 = vmatprep.subr.bf16.mxu0 0
        %1281 = vmatpush1.bf16.msra.mxu0 0
        %1282 = vmatprep.subr.bf16.mxu0 0
        %1283 = vmatpush1.bf16.msra.mxu0 0
        %1284 = vmatprep.subr.bf16.mxu0 0
        %1285 = vmatpush1.bf16.msra.mxu0 0
        %1286 = vmatprep.subr.bf16.mxu0 0
        %1287 = vmatpush1.bf16.msra.mxu0 0
        %1288 = vmatprep.mubr.bf16.mxu0 0
        %1289 = vmatmul.mubr.bf16.gmra.mrb[0].mxu0 %v1254
        %v1290 = vpop.f32.mrb[0].mxu0
        %v1291 = vadd.f32 0.0, %v1290
        %v1292 = vpop.f32.mrb[0].mxu0
        %v1293 = vpop.f32.mrb[0].mxu0
        %v1294 = vadd.f32 0.0, %v1293
        %v1295 = vpop.f32.mrb[0].mxu0
        %1296 = vdwg.mxu0
        %1298 = vrot.lane.b32.xlu0 %v1174, 96
        %v1299 = vpop.permute.xlu0 %1298
        %1301 = vrot.lane.b32.xlu0 %v1175, 96
        %v1302 = vpop.permute.xlu0 %1301
        %v1304 = vsel %vm1177, %v1299, 0
        %v1307 = vsel %vm1177, %v1302, 0
        %1309 = vmatprep.subr.bf16.mxu0 0
        %1310 = vmatpush1.bf16.xpose.msra.mxu0 %v1307
        %1311 = vmatprep.subr.bf16.mxu0 0
        %1312 = vmatpush1.bf16.xpose.msra.mxu0 0
        %1313 = vmatprep.subr.bf16.mxu0 0
        %1314 = vmatpush1.bf16.xpose.msra.mxu0 0
        %1315 = vmatprep.subr.bf16.mxu0 0
        %1316 = vmatpush1.bf16.xpose.msra.mxu0 0
        %1317 = vmatprep.subr.bf16.mxu0 0
        %1318 = vmatpush1.bf16.xpose.msra.mxu0 0
        %1319 = vmatprep.subr.bf16.mxu0 0
        %1320 = vmatpush1.bf16.xpose.msra.mxu0 0
        %1321 = vmatprep.subr.bf16.mxu0 0
        %1322 = vmatpush1.bf16.xpose.msra.mxu0 0
        %1323 = vmatprep.subr.bf16.mxu0 0
        %1324 = vmatpush1.bf16.xpose.msra.mxu0 0
        %1325 = vmatprep.subr.bf16.mxu0 0
        %1326 = vmatpush1.bf16.xpose.msra.mxu0 0
        %1327 = vmatprep.subr.bf16.mxu0 0
        %1328 = vmatpush1.bf16.xpose.msra.mxu0 0
        %1329 = vmatprep.subr.bf16.mxu0 0
        %1330 = vmatpush1.bf16.xpose.msra.mxu0 0
        %1331 = vmatprep.subr.bf16.mxu0 0
        %1332 = vmatpush1.bf16.xpose.msra.mxu0 0
        %1333 = vmatprep.subr.bf16.mxu0 0
        %1334 = vmatpush1.bf16.xpose.msra.mxu0 0
        %1335 = vmatprep.subr.bf16.mxu0 0
        %1336 = vmatpush1.bf16.xpose.msra.mxu0 0
        %1337 = vmatprep.subr.bf16.mxu0 0
        %1338 = vmatpush1.bf16.xpose.msra.mxu0 0
        %1339 = vmatprep.subr.bf16.mxu0 0
        %1340 = vmatpush1.bf16.xpose.msra.mxu0 0
        %1341 = vmatprep.mubr.bf16.mxu0 0
        %1342 = vmatmul.mubr.bf16.gmra.mrb[0].mxu0 %v1304
        %v1343 = vpop.f32.mrb[0].mxu0
        %v1344 = vadd.f32 0.0, %v1343
        %v1345 = vpop.f32.mrb[0].mxu0
        %v1346 = vpop.f32.mrb[0].mxu0
        %v1347 = vadd.f32 0.0, %v1346
        %v1348 = vpop.f32.mrb[0].mxu0
        %1349 = vdwg.mxu0
        %v1350 = vmul.f32 %v1344, 0.17677669
        %v1351 = vmul.f32 %v1347, 0.17677669
        %v1352 = vsel %vm886, %v1350, -1e+30
        %v1353 = vsel %vm887, %v1351, -1e+30
        %v1354 = vsel %vm1229, %v1352, -inf
        %1355 = vmax.xlane.f32.xlu0 %v1354
        %v1356 = vpop.xlane.xlu0 %1355
        %v1357 = vsel %vm1229, %v1353, -inf
        %1358 = vmax.xlane.f32.xlu0 %v1357
        %v1359 = vpop.xlane.xlu0 %1358
        %v1360 = vsub.f32 %v1352, %v1356
        %v1361 = vsub.f32 %v1353, %v1359
        %v1362 = vmul.f32 %v1360, 1.442695
        %v1363 = vpow.pop %v1362
        %v1364 = vmul.f32 %v1361, 1.442695
        %v1365 = vpow.pop %v1364
        %v1366 = vsel %vm1229, %v1363, 0.0
        %1367 = vadd.xlane.f32.xlu0 %v1366
        %v1368 = vpop.xlane.xlu0 %1367
        %v1369 = vsel %vm1229, %v1365, 0.0
        %1370 = vadd.xlane.f32.xlu0 %v1369
        %v1371 = vpop.xlane.xlu0 %1370
        %v1372 = vrcp.pop %v1368
        %v1373 = vrcp.pop %v1371
        %v1374 = vmul.f32 %v1363, %v1372
        %v1375 = vmul.f32 %v1365, %v1373
        %v1376 = vpack.c.bf16 %v1375, %v1374
        %1378 = vrot.lane.b32.xlu0 %v1176, 96
        %v1379 = vpop.permute.xlu0 %1378
        %v1382 = vsel %vm1229, %v1376, 0
        %1384 = vmatprep.subr.bf16.mxu0 0
        %1385 = vmatpush1.bf16.msra.mxu0 %v1379
        %1386 = vmatprep.subr.bf16.mxu0 0
        %1387 = vmatpush1.bf16.msra.mxu0 0
        %1388 = vmatprep.subr.bf16.mxu0 0
        %1389 = vmatpush1.bf16.msra.mxu0 0
        %1390 = vmatprep.subr.bf16.mxu0 0
        %1391 = vmatpush1.bf16.msra.mxu0 0
        %1392 = vmatprep.subr.bf16.mxu0 0
        %1393 = vmatpush1.bf16.msra.mxu0 0
        %1394 = vmatprep.subr.bf16.mxu0 0
        %1395 = vmatpush1.bf16.msra.mxu0 0
        %1396 = vmatprep.subr.bf16.mxu0 0
        %1397 = vmatpush1.bf16.msra.mxu0 0
        %1398 = vmatprep.subr.bf16.mxu0 0
        %1399 = vmatpush1.bf16.msra.mxu0 0
        %1400 = vmatprep.subr.bf16.mxu0 0
        %1401 = vmatpush1.bf16.msra.mxu0 0
        %1402 = vmatprep.subr.bf16.mxu0 0
        %1403 = vmatpush1.bf16.msra.mxu0 0
        %1404 = vmatprep.subr.bf16.mxu0 0
        %1405 = vmatpush1.bf16.msra.mxu0 0
        %1406 = vmatprep.subr.bf16.mxu0 0
        %1407 = vmatpush1.bf16.msra.mxu0 0
        %1408 = vmatprep.subr.bf16.mxu0 0
        %1409 = vmatpush1.bf16.msra.mxu0 0
        %1410 = vmatprep.subr.bf16.mxu0 0
        %1411 = vmatpush1.bf16.msra.mxu0 0
        %1412 = vmatprep.subr.bf16.mxu0 0
        %1413 = vmatpush1.bf16.msra.mxu0 0
        %1414 = vmatprep.subr.bf16.mxu0 0
        %1415 = vmatpush1.bf16.msra.mxu0 0
        %1416 = vmatprep.mubr.bf16.mxu0 0
        %1417 = vmatmul.mubr.bf16.gmra.mrb[0].mxu0 %v1382
        %v1418 = vpop.f32.mrb[0].mxu0
        %v1419 = vadd.f32 0.0, %v1418
        %v1420 = vpop.f32.mrb[0].mxu0
        %v1421 = vpop.f32.mrb[0].mxu0
        %v1422 = vadd.f32 0.0, %v1421
        %v1423 = vpop.f32.mrb[0].mxu0
        %1424 = vdwg.mxu0
        %1425 = vrot.lane.b32.xlu0 %v1174, 64
        %v1426 = vpop.permute.xlu0 %1425
        %1427 = vrot.lane.b32.xlu0 %v1175, 64
        %v1428 = vpop.permute.xlu0 %1427
        %v1430 = vsel %vm1177, %v1426, 0
        %v1433 = vsel %vm1177, %v1428, 0
        %1435 = vmatprep.subr.bf16.mxu0 0
        %1436 = vmatpush1.bf16.xpose.msra.mxu0 %v1433
        %1437 = vmatprep.subr.bf16.mxu0 0
        %1438 = vmatpush1.bf16.xpose.msra.mxu0 0
        %1439 = vmatprep.subr.bf16.mxu0 0
        %1440 = vmatpush1.bf16.xpose.msra.mxu0 0
        %1441 = vmatprep.subr.bf16.mxu0 0
        %1442 = vmatpush1.bf16.xpose.msra.mxu0 0
        %1443 = vmatprep.subr.bf16.mxu0 0
        %1444 = vmatpush1.bf16.xpose.msra.mxu0 0
        %1445 = vmatprep.subr.bf16.mxu0 0
        %1446 = vmatpush1.bf16.xpose.msra.mxu0 0
        %1447 = vmatprep.subr.bf16.mxu0 0
        %1448 = vmatpush1.bf16.xpose.msra.mxu0 0
        %1449 = vmatprep.subr.bf16.mxu0 0
        %1450 = vmatpush1.bf16.xpose.msra.mxu0 0
        %1451 = vmatprep.subr.bf16.mxu0 0
        %1452 = vmatpush1.bf16.xpose.msra.mxu0 0
        %1453 = vmatprep.subr.bf16.mxu0 0
        %1454 = vmatpush1.bf16.xpose.msra.mxu0 0
        %1455 = vmatprep.subr.bf16.mxu0 0
        %1456 = vmatpush1.bf16.xpose.msra.mxu0 0
        %1457 = vmatprep.subr.bf16.mxu0 0
        %1458 = vmatpush1.bf16.xpose.msra.mxu0 0
        %1459 = vmatprep.subr.bf16.mxu0 0
        %1460 = vmatpush1.bf16.xpose.msra.mxu0 0
        %1461 = vmatprep.subr.bf16.mxu0 0
        %1462 = vmatpush1.bf16.xpose.msra.mxu0 0
        %1463 = vmatprep.subr.bf16.mxu0 0
        %1464 = vmatpush1.bf16.xpose.msra.mxu0 0
        %1465 = vmatprep.subr.bf16.mxu0 0
        %1466 = vmatpush1.bf16.xpose.msra.mxu0 0
        %1467 = vmatprep.mubr.bf16.mxu0 0
        %1468 = vmatmul.mubr.bf16.gmra.mrb[0].mxu0 %v1430
        %v1469 = vpop.f32.mrb[0].mxu0
        %v1470 = vadd.f32 0.0, %v1469
        %v1471 = vpop.f32.mrb[0].mxu0
        %v1472 = vpop.f32.mrb[0].mxu0
        %v1473 = vadd.f32 0.0, %v1472
        %v1474 = vpop.f32.mrb[0].mxu0
        %1475 = vdwg.mxu0
        %v1476 = vmul.f32 %v1470, 0.17677669
        %v1477 = vmul.f32 %v1473, 0.17677669
        %v1478 = vsel %vm886, %v1476, -1e+30
        %v1479 = vsel %vm887, %v1477, -1e+30
        %v1480 = vsel %vm1229, %v1478, -inf
        %1481 = vmax.xlane.f32.xlu0 %v1480
        %v1482 = vpop.xlane.xlu0 %1481
        %v1483 = vsel %vm1229, %v1479, -inf
        %1484 = vmax.xlane.f32.xlu0 %v1483
        %v1485 = vpop.xlane.xlu0 %1484
        %v1486 = vsub.f32 %v1478, %v1482
        %v1487 = vsub.f32 %v1479, %v1485
        %v1488 = vmul.f32 %v1486, 1.442695
        %v1489 = vpow.pop %v1488
        %v1490 = vmul.f32 %v1487, 1.442695
        %v1491 = vpow.pop %v1490
        %v1492 = vsel %vm1229, %v1489, 0.0
        %1493 = vadd.xlane.f32.xlu0 %v1492
        %v1494 = vpop.xlane.xlu0 %1493
        %v1495 = vsel %vm1229, %v1491, 0.0
        %1496 = vadd.xlane.f32.xlu0 %v1495
        %v1497 = vpop.xlane.xlu0 %1496
        %v1498 = vrcp.pop %v1494
        %v1499 = vrcp.pop %v1497
        %v1500 = vmul.f32 %v1489, %v1498
        %v1501 = vmul.f32 %v1491, %v1499
        %v1502 = vpack.c.bf16 %v1501, %v1500
        %1503 = vrot.lane.b32.xlu0 %v1176, 64
        %v1504 = vpop.permute.xlu0 %1503
        %v1507 = vsel %vm1229, %v1502, 0
        %1509 = vmatprep.subr.bf16.mxu0 0
        %1510 = vmatpush1.bf16.msra.mxu0 %v1504
        %1511 = vmatprep.subr.bf16.mxu0 0
        %1512 = vmatpush1.bf16.msra.mxu0 0
        %1513 = vmatprep.subr.bf16.mxu0 0
        %1514 = vmatpush1.bf16.msra.mxu0 0
        %1515 = vmatprep.subr.bf16.mxu0 0
        %1516 = vmatpush1.bf16.msra.mxu0 0
        %1517 = vmatprep.subr.bf16.mxu0 0
        %1518 = vmatpush1.bf16.msra.mxu0 0
        %1519 = vmatprep.subr.bf16.mxu0 0
        %1520 = vmatpush1.bf16.msra.mxu0 0
        %1521 = vmatprep.subr.bf16.mxu0 0
        %1522 = vmatpush1.bf16.msra.mxu0 0
        %1523 = vmatprep.subr.bf16.mxu0 0
        %1524 = vmatpush1.bf16.msra.mxu0 0
        %1525 = vmatprep.subr.bf16.mxu0 0
        %1526 = vmatpush1.bf16.msra.mxu0 0
        %1527 = vmatprep.subr.bf16.mxu0 0
        %1528 = vmatpush1.bf16.msra.mxu0 0
        %1529 = vmatprep.subr.bf16.mxu0 0
        %1530 = vmatpush1.bf16.msra.mxu0 0
        %1531 = vmatprep.subr.bf16.mxu0 0
        %1532 = vmatpush1.bf16.msra.mxu0 0
        %1533 = vmatprep.subr.bf16.mxu0 0
        %1534 = vmatpush1.bf16.msra.mxu0 0
        %1535 = vmatprep.subr.bf16.mxu0 0
        %1536 = vmatpush1.bf16.msra.mxu0 0
        %1537 = vmatprep.subr.bf16.mxu0 0
        %1538 = vmatpush1.bf16.msra.mxu0 0
        %1539 = vmatprep.subr.bf16.mxu0 0
        %1540 = vmatpush1.bf16.msra.mxu0 0
        %1541 = vmatprep.mubr.bf16.mxu0 0
        %1542 = vmatmul.mubr.bf16.gmra.mrb[0].mxu0 %v1507
        %v1543 = vpop.f32.mrb[0].mxu0
        %v1544 = vadd.f32 0.0, %v1543
        %v1545 = vpop.f32.mrb[0].mxu0
        %v1546 = vpop.f32.mrb[0].mxu0
        %v1547 = vadd.f32 0.0, %v1546
        %v1548 = vpop.f32.mrb[0].mxu0
        %1549 = vdwg.mxu0
        %1550 = vrot.lane.b32.xlu0 %v1174, 32
        %v1551 = vpop.permute.xlu0 %1550
        %1552 = vrot.lane.b32.xlu0 %v1175, 32
        %v1553 = vpop.permute.xlu0 %1552
        %v1555 = vsel %vm1177, %v1551, 0
        %v1558 = vsel %vm1177, %v1553, 0
        %1560 = vmatprep.subr.bf16.mxu0 0
        %1561 = vmatpush1.bf16.xpose.msra.mxu0 %v1558
        %1562 = vmatprep.subr.bf16.mxu0 0
        %1563 = vmatpush1.bf16.xpose.msra.mxu0 0
        %1564 = vmatprep.subr.bf16.mxu0 0
        %1565 = vmatpush1.bf16.xpose.msra.mxu0 0
        %1566 = vmatprep.subr.bf16.mxu0 0
        %1567 = vmatpush1.bf16.xpose.msra.mxu0 0
        %1568 = vmatprep.subr.bf16.mxu0 0
        %1569 = vmatpush1.bf16.xpose.msra.mxu0 0
        %1570 = vmatprep.subr.bf16.mxu0 0
        %1571 = vmatpush1.bf16.xpose.msra.mxu0 0
        %1572 = vmatprep.subr.bf16.mxu0 0
        %1573 = vmatpush1.bf16.xpose.msra.mxu0 0
        %1574 = vmatprep.subr.bf16.mxu0 0
        %1575 = vmatpush1.bf16.xpose.msra.mxu0 0
        %1576 = vmatprep.subr.bf16.mxu0 0
        %1577 = vmatpush1.bf16.xpose.msra.mxu0 0
        %1578 = vmatprep.subr.bf16.mxu0 0
        %1579 = vmatpush1.bf16.xpose.msra.mxu0 0
        %1580 = vmatprep.subr.bf16.mxu0 0
        %1581 = vmatpush1.bf16.xpose.msra.mxu0 0
        %1582 = vmatprep.subr.bf16.mxu0 0
        %1583 = vmatpush1.bf16.xpose.msra.mxu0 0
        %1584 = vmatprep.subr.bf16.mxu0 0
        %1585 = vmatpush1.bf16.xpose.msra.mxu0 0
        %1586 = vmatprep.subr.bf16.mxu0 0
        %1587 = vmatpush1.bf16.xpose.msra.mxu0 0
        %1588 = vmatprep.subr.bf16.mxu0 0
        %1589 = vmatpush1.bf16.xpose.msra.mxu0 0
        %1590 = vmatprep.subr.bf16.mxu0 0
        %1591 = vmatpush1.bf16.xpose.msra.mxu0 0
        %1592 = vmatprep.mubr.bf16.mxu0 0
        %1593 = vmatmul.mubr.bf16.gmra.mrb[0].mxu0 %v1555
        %v1594 = vpop.f32.mrb[0].mxu0
        %v1595 = vadd.f32 0.0, %v1594
        %v1596 = vpop.f32.mrb[0].mxu0
        %v1597 = vpop.f32.mrb[0].mxu0
        %v1598 = vadd.f32 0.0, %v1597
        %v1599 = vpop.f32.mrb[0].mxu0
        %1600 = vdwg.mxu0
        %v1601 = vmul.f32 %v1595, 0.17677669
        %v1602 = vmul.f32 %v1598, 0.17677669
        %v1603 = vsel %vm886, %v1601, -1e+30
        %v1604 = vsel %vm887, %v1602, -1e+30
        %v1605 = vsel %vm1229, %v1603, -inf
        %1606 = vmax.xlane.f32.xlu0 %v1605
        %v1607 = vpop.xlane.xlu0 %1606
        %v1608 = vsel %vm1229, %v1604, -inf
        %1609 = vmax.xlane.f32.xlu0 %v1608
        %v1610 = vpop.xlane.xlu0 %1609
        %v1611 = vsub.f32 %v1603, %v1607
        %v1612 = vsub.f32 %v1604, %v1610
        %v1613 = vmul.f32 %v1611, 1.442695
        %v1614 = vpow.pop %v1613
        %v1615 = vmul.f32 %v1612, 1.442695
        %v1616 = vpow.pop %v1615
        %v1617 = vsel %vm1229, %v1614, 0.0
        %1618 = vadd.xlane.f32.xlu0 %v1617
        %v1619 = vpop.xlane.xlu0 %1618
        %v1620 = vsel %vm1229, %v1616, 0.0
        %1621 = vadd.xlane.f32.xlu0 %v1620
        %v1622 = vpop.xlane.xlu0 %1621
        %v1623 = vrcp.pop %v1619
        %v1624 = vrcp.pop %v1622
        %v1625 = vmul.f32 %v1614, %v1623
        %v1626 = vmul.f32 %v1616, %v1624
        %v1627 = vpack.c.bf16 %v1626, %v1625
        %1628 = vrot.lane.b32.xlu0 %v1176, 32
        %v1629 = vpop.permute.xlu0 %1628
        %v1632 = vsel %vm1229, %v1627, 0
        %1634 = vmatprep.subr.bf16.mxu0 0
        %1635 = vmatpush1.bf16.msra.mxu0 %v1629
        %1636 = vmatprep.subr.bf16.mxu0 0
        %1637 = vmatpush1.bf16.msra.mxu0 0
        %1638 = vmatprep.subr.bf16.mxu0 0
        %1639 = vmatpush1.bf16.msra.mxu0 0
        %1640 = vmatprep.subr.bf16.mxu0 0
        %1641 = vmatpush1.bf16.msra.mxu0 0
        %1642 = vmatprep.subr.bf16.mxu0 0
        %1643 = vmatpush1.bf16.msra.mxu0 0
        %1644 = vmatprep.subr.bf16.mxu0 0
        %1645 = vmatpush1.bf16.msra.mxu0 0
        %1646 = vmatprep.subr.bf16.mxu0 0
        %1647 = vmatpush1.bf16.msra.mxu0 0
        %1648 = vmatprep.subr.bf16.mxu0 0
        %1649 = vmatpush1.bf16.msra.mxu0 0
        %1650 = vmatprep.subr.bf16.mxu0 0
        %1651 = vmatpush1.bf16.msra.mxu0 0
        %1652 = vmatprep.subr.bf16.mxu0 0
        %1653 = vmatpush1.bf16.msra.mxu0 0
        %1654 = vmatprep.subr.bf16.mxu0 0
        %1655 = vmatpush1.bf16.msra.mxu0 0
        %1656 = vmatprep.subr.bf16.mxu0 0
        %1657 = vmatpush1.bf16.msra.mxu0 0
        %1658 = vmatprep.subr.bf16.mxu0 0
        %1659 = vmatpush1.bf16.msra.mxu0 0
        %1660 = vmatprep.subr.bf16.mxu0 0
        %1661 = vmatpush1.bf16.msra.mxu0 0
        %1662 = vmatprep.subr.bf16.mxu0 0
        %1663 = vmatpush1.bf16.msra.mxu0 0
        %1664 = vmatprep.subr.bf16.mxu0 0
        %1665 = vmatpush1.bf16.msra.mxu0 0
        %1666 = vmatprep.mubr.bf16.mxu0 0
        %1667 = vmatmul.mubr.bf16.gmra.mrb[0].mxu0 %v1632
        %v1668 = vpop.f32.mrb[0].mxu0
        %v1669 = vadd.f32 0.0, %v1668
        %v1670 = vpop.f32.mrb[0].mxu0
        %v1671 = vpop.f32.mrb[0].mxu0
        %v1672 = vadd.f32 0.0, %v1671
        %v1673 = vpop.f32.mrb[0].mxu0
        %1674 = vdwg.mxu0
        %1677 = vrot.lane.b32.xlu0 %v1419, 32
        %v1678 = vpop.permute.xlu0 %1677
        %1679 = vrot.lane.b32.xlu0 %v1422, 32
        %v1680 = vpop.permute.xlu0 %1679
        %1685 = vrot.lane.b32.xlu0 %v1544, 64
        %v1686 = vpop.permute.xlu0 %1685
        %1687 = vrot.lane.b32.xlu0 %v1547, 64
        %v1688 = vpop.permute.xlu0 %1687
        %1693 = vrot.lane.b32.xlu0 %v1669, 96
        %v1694 = vpop.permute.xlu0 %1693
        %1695 = vrot.lane.b32.xlu0 %v1672, 96
        %v1696 = vpop.permute.xlu0 %1695
        %v1699 = vsel %vm1177, %v1291, %v1678
        %v1700 = vsel %vm1177, %v1294, %v1680
        %vm1701 = vcmask 523264
        %v1702 = vsel %vm1701, %v1699, %v1686
        %v1703 = vsel %vm1701, %v1700, %v1688
        %vm1704 = vcmask 785408
        %v1705 = vsel %vm1704, %v1702, %v1694
        %v1706 = vsel %vm1704, %v1703, %v1696
        %v1707 = vpack.c.bf16 %v1706, %v1705
        %v1708 = vld [vmem:[#allocation7] sm:$0xf]
        %v1709 = vld [vmem:[#allocation7 + $0x4] sm:$0xf]
        %v1710 = vld [vmem:[#allocation7 + $0x8] sm:$0xf]
        %v1711 = vld [vmem:[#allocation7 + $0xc] sm:$0xf]
        %v1712 = vld [vmem:[#allocation7 + $0x10] sm:$0xf]
        %v1713 = vld [vmem:[#allocation7 + $0x14] sm:$0xf]
        %v1714 = vld [vmem:[#allocation7 + $0x18] sm:$0xf]
        %v1715 = vld [vmem:[#allocation7 + $0x1c] sm:$0xf]
        %v1716 = vld [vmem:[#allocation7 + $0x20] sm:$0xf]
        %v1717 = vld [vmem:[#allocation7 + $0x24] sm:$0xf]
        %v1718 = vld [vmem:[#allocation7 + $0x28] sm:$0xf]
        %v1719 = vld [vmem:[#allocation7 + $0x2c] sm:$0xf]
        %v1720 = vld [vmem:[#allocation7 + $0x30] sm:$0xf]
        %v1721 = vld [vmem:[#allocation7 + $0x34] sm:$0xf]
        %v1722 = vld [vmem:[#allocation7 + $0x38] sm:$0xf]
        %v1723 = vld [vmem:[#allocation7 + $0x3c] sm:$0xf]
        %v1724 = vld [vmem:[%s7] sm:$0x1]
        %v1726 = vlaneseq
        %v1727 = vshrl.u32 %v1726, 7
        %v1728 = vsub.s32 0, %v1727
        %v1729 = vrot.slane %v1724, %v1728
        %v1747 = vunpack.c.l.b16 %v1708
        %v1748 = vunpack.c.l.b16 %v1709
        %v1749 = vunpack.c.l.b16 %v1710
        %v1750 = vunpack.c.l.b16 %v1711
        %v1751 = vunpack.c.l.b16 %v1712
        %v1752 = vunpack.c.l.b16 %v1713
        %v1753 = vunpack.c.l.b16 %v1714
        %v1754 = vunpack.c.l.b16 %v1715
        %v1755 = vunpack.c.l.b16 %v1716
        %v1756 = vunpack.c.l.b16 %v1717
        %v1757 = vunpack.c.l.b16 %v1718
        %v1758 = vunpack.c.l.b16 %v1719
        %v1759 = vunpack.c.l.b16 %v1720
        %v1760 = vunpack.c.l.b16 %v1721
        %v1761 = vunpack.c.l.b16 %v1722
        %v1762 = vunpack.c.l.b16 %v1723
        %v1763 = vpack.c.b16 %v1748, %v1747
        %v1764 = vpack.c.b16 %v1750, %v1749
        %v1765 = vpack.c.b16 %v1752, %v1751
        %v1766 = vpack.c.b16 %v1754, %v1753
        %v1767 = vpack.c.b16 %v1756, %v1755
        %v1768 = vpack.c.b16 %v1758, %v1757
        %v1769 = vpack.c.b16 %v1760, %v1759
        %v1770 = vpack.c.b16 %v1762, %v1761
        %1779 = vmatprep.subr.bf16.mxu0 0
        %1780 = vmatpush1.bf16.msra.mxu0 %v1763
        %1781 = vmatprep.subr.bf16.mxu0 0
        %1782 = vmatpush1.bf16.msra.mxu0 %v1764
        %1783 = vmatprep.subr.bf16.mxu0 0
        %1784 = vmatpush1.bf16.msra.mxu0 %v1765
        %1785 = vmatprep.subr.bf16.mxu0 0
        %1786 = vmatpush1.bf16.msra.mxu0 %v1766
        %1787 = vmatprep.subr.bf16.mxu0 0
        %1788 = vmatpush1.bf16.msra.mxu0 %v1767
        %1789 = vmatprep.subr.bf16.mxu0 0
        %1790 = vmatpush1.bf16.msra.mxu0 %v1768
        %1791 = vmatprep.subr.bf16.mxu0 0
        %1792 = vmatpush1.bf16.msra.mxu0 %v1769
        %1793 = vmatprep.subr.bf16.mxu0 0
        %1794 = vmatpush1.bf16.msra.mxu0 %v1770
        %1795 = vmatprep.subr.bf16.mxu0 0
        %1796 = vmatpush1.bf16.msra.mxu0 0
        %1797 = vmatprep.subr.bf16.mxu0 0
        %1798 = vmatpush1.bf16.msra.mxu0 0
        %1799 = vmatprep.subr.bf16.mxu0 0
        %1800 = vmatpush1.bf16.msra.mxu0 0
        %1801 = vmatprep.subr.bf16.mxu0 0
        %1802 = vmatpush1.bf16.msra.mxu0 0
        %1803 = vmatprep.subr.bf16.mxu0 0
        %1804 = vmatpush1.bf16.msra.mxu0 0
        %1805 = vmatprep.subr.bf16.mxu0 0
        %1806 = vmatpush1.bf16.msra.mxu0 0
        %1807 = vmatprep.subr.bf16.mxu0 0
        %1808 = vmatpush1.bf16.msra.mxu0 0
        %1809 = vmatprep.subr.bf16.mxu0 0
        %1810 = vmatpush1.bf16.msra.mxu0 0
        %1811 = vmatprep.mubr.bf16.mxu0 0
        %1812 = vmatmul.mubr.bf16.gmra.mrb[0].mxu0 %v1707
        %v1813 = vpop.f32.mrb[0].mxu0
        %v1814 = vadd.f32 %v1729, %v1813
        %v1815 = vpop.f32.mrb[0].mxu0
        %v1816 = vpop.f32.mrb[0].mxu0
        %v1817 = vadd.f32 %v1729, %v1816
        %v1818 = vpop.f32.mrb[0].mxu0
        %1819 = vdwg.mxu0
        %v1820 = vadd.f32 %v877, %v1814
        %v1821 = vadd.f32 %v880, %v1817
        %v1822 = vld [vmem:[%s8] sm:$0x1]
        %v1823 = vld [vmem:[%s9] sm:$0x1]
        %1824 = vadd.xlane.f32.xlu0 %v1820
        %v1825 = vpop.xlane.xlu0 %1824
        %1826 = vadd.xlane.f32.xlu0 %v1821
        %v1827 = vpop.xlane.xlu0 %1826
        %v1828 = vmul.f32 %v1825, %v894
        %v1829 = vmul.f32 %v1827, %v894
        %v1830 = vsub.f32 %v1820, %v1828
        %v1831 = vsub.f32 %v1821, %v1829
        %v1832 = vmul.f32 %v1830, %v1830
        %v1833 = vmul.f32 %v1831, %v1831
        %1834 = vadd.xlane.f32.xlu0 %v1832
        %v1835 = vpop.xlane.xlu0 %1834
        %1836 = vadd.xlane.f32.xlu0 %v1833
        %v1837 = vpop.xlane.xlu0 %1836
        %v1838 = vmul.f32 %v1835, %v894
        %v1839 = vmul.f32 %v1837, %v894
        %v1840 = vadd.f32 %v1838, 1e-05
        %v1841 = vadd.f32 %v1839, 1e-05
        %v1842 = vrsqrt.pop %v1840
        %v1843 = vrsqrt.pop %v1841
        %v1844 = vmul.f32 %v1830, %v1842
        %v1845 = vmul.f32 %v1831, %v1843
        %v1847 = vlaneseq
        %v1848 = vshrl.u32 %v1847, 7
        %v1849 = vsub.s32 0, %v1848
        %v1850 = vrot.slane %v1822, %v1849
        %v1852 = vmul.f32 %v1844, %v1850
        %v1853 = vmul.f32 %v1845, %v1850
        %v1855 = vlaneseq
        %v1856 = vshrl.u32 %v1855, 7
        %v1857 = vsub.s32 0, %v1856
        %v1858 = vrot.slane %v1823, %v1857
        %v1860 = vadd.f32 %v1852, %v1858
        %v1861 = vadd.f32 %v1853, %v1858
        %v1862 = vpack.c.bf16 %v1861, %v1860
        %v1863 = vld [vmem:[#allocation8] sm:$0xf]
        %v1864 = vld [vmem:[#allocation8 + $0x4] sm:$0xf]
        %v1865 = vld [vmem:[#allocation8 + $0x8] sm:$0xf]
        %v1866 = vld [vmem:[#allocation8 + $0xc] sm:$0xf]
        %v1867 = vld [vmem:[#allocation8 + $0x10] sm:$0xf]
        %v1868 = vld [vmem:[#allocation8 + $0x14] sm:$0xf]
        %v1869 = vld [vmem:[#allocation8 + $0x18] sm:$0xf]
        %v1870 = vld [vmem:[#allocation8 + $0x1c] sm:$0xf]
        %v1871 = vld [vmem:[#allocation8 + $0x20] sm:$0xf]
        %v1872 = vld [vmem:[#allocation8 + $0x24] sm:$0xf]
        %v1873 = vld [vmem:[#allocation8 + $0x28] sm:$0xf]
        %v1874 = vld [vmem:[#allocation8 + $0x2c] sm:$0xf]
        %v1875 = vld [vmem:[#allocation8 + $0x30] sm:$0xf]
        %v1876 = vld [vmem:[#allocation8 + $0x34] sm:$0xf]
        %v1877 = vld [vmem:[#allocation8 + $0x38] sm:$0xf]
        %v1878 = vld [vmem:[#allocation8 + $0x3c] sm:$0xf]
        %v1895 = vunpack.c.l.b16 %v1863
        %v1896 = vunpack.c.l.b16 %v1864
        %v1897 = vunpack.c.l.b16 %v1865
        %v1898 = vunpack.c.l.b16 %v1866
        %v1899 = vunpack.c.l.b16 %v1867
        %v1900 = vunpack.c.l.b16 %v1868
        %v1901 = vunpack.c.l.b16 %v1869
        %v1902 = vunpack.c.l.b16 %v1870
        %v1903 = vunpack.c.l.b16 %v1871
        %v1904 = vunpack.c.l.b16 %v1872
        %v1905 = vunpack.c.l.b16 %v1873
        %v1906 = vunpack.c.l.b16 %v1874
        %v1907 = vunpack.c.l.b16 %v1875
        %v1908 = vunpack.c.l.b16 %v1876
        %v1909 = vunpack.c.l.b16 %v1877
        %v1910 = vunpack.c.l.b16 %v1878
        %v1911 = vpack.c.b16 %v1896, %v1895
        %v1912 = vpack.c.b16 %v1898, %v1897
        %v1913 = vpack.c.b16 %v1900, %v1899
        %v1914 = vpack.c.b16 %v1902, %v1901
        %v1915 = vpack.c.b16 %v1904, %v1903
        %v1916 = vpack.c.b16 %v1906, %v1905
        %v1917 = vpack.c.b16 %v1908, %v1907
        %v1918 = vpack.c.b16 %v1910, %v1909
        %1927 = vmatprep.subr.bf16.mxu0 0
        %1928 = vmatpush1.bf16.msra.mxu0 %v1911
        %1929 = vmatprep.subr.bf16.mxu0 0
        %1930 = vmatpush1.bf16.msra.mxu0 %v1912
        %1931 = vmatprep.subr.bf16.mxu0 0
        %1932 = vmatpush1.bf16.msra.mxu0 %v1913
        %1933 = vmatprep.subr.bf16.mxu0 0
        %1934 = vmatpush1.bf16.msra.mxu0 %v1914
        %1935 = vmatprep.subr.bf16.mxu0 0
        %1936 = vmatpush1.bf16.msra.mxu0 %v1915
        %1937 = vmatprep.subr.bf16.mxu0 0
        %1938 = vmatpush1.bf16.msra.mxu0 %v1916
        %1939 = vmatprep.subr.bf16.mxu0 0
        %1940 = vmatpush1.bf16.msra.mxu0 %v1917
        %1941 = vmatprep.subr.bf16.mxu0 0
        %1942 = vmatpush1.bf16.msra.mxu0 %v1918
        %1943 = vmatprep.subr.bf16.mxu0 0
        %1944 = vmatpush1.bf16.msra.mxu0 0
        %1945 = vmatprep.subr.bf16.mxu0 0
        %1946 = vmatpush1.bf16.msra.mxu0 0
        %1947 = vmatprep.subr.bf16.mxu0 0
        %1948 = vmatpush1.bf16.msra.mxu0 0
        %1949 = vmatprep.subr.bf16.mxu0 0
        %1950 = vmatpush1.bf16.msra.mxu0 0
        %1951 = vmatprep.subr.bf16.mxu0 0
        %1952 = vmatpush1.bf16.msra.mxu0 0
        %1953 = vmatprep.subr.bf16.mxu0 0
        %1954 = vmatpush1.bf16.msra.mxu0 0
        %1955 = vmatprep.subr.bf16.mxu0 0
        %1956 = vmatpush1.bf16.msra.mxu0 0
        %1957 = vmatprep.subr.bf16.mxu0 0
        %1958 = vmatpush1.bf16.msra.mxu0 0
        %1959 = vmatprep.mubr.bf16.mxu0 0
        %1960 = vmatmul.mubr.bf16.gmra.mrb[0].mxu0 %v1862
        %v1961 = vpop.f32.mrb[0].mxu0
        %v1962 = vadd.f32 0.0, %v1961
        %v1963 = vpop.f32.mrb[0].mxu0
        %v1964 = vpop.f32.mrb[0].mxu0
        %v1965 = vadd.f32 0.0, %v1964
        %v1966 = vpop.f32.mrb[0].mxu0
        %1967 = vdwg.mxu0
        %vm1968 = vcmp.lt.s32.totalorder %v764, 4
        %v1969 = vsel %vm1968, %v1962, -1e+30
        %v1970 = vsel %vm1968, %v1965, -1e+30
        %1971 = vmax.xlane.f32.xlu0 %v1969
        %v1972 = vpop.xlane.xlu0 %1971
        %1973 = vmax.xlane.f32.xlu0 %v1970
        %v1974 = vpop.xlane.xlu0 %1973
        %v1975 = vsub.f32 %v1969, %v1972
        %v1976 = vsub.f32 %v1970, %v1974
        %v1977 = vmul.f32 %v1975, 1.442695
        %v1978 = vpow.pop %v1977
        %v1979 = vmul.f32 %v1976, 1.442695
        %v1980 = vpow.pop %v1979
        %1981 = vadd.xlane.f32.xlu0 %v1978
        %v1982 = vpop.xlane.xlu0 %1981
        %1983 = vadd.xlane.f32.xlu0 %v1980
        %v1984 = vpop.xlane.xlu0 %1983
        %v1985 = vrcp.pop %v1982
        %v1986 = vrcp.pop %v1984
        %v1987 = vmul.f32 %v1978, %v1985
        %v1988 = vmul.f32 %v1980, %v1986
        %1989 = vmax.xlane.f32.xlu0 %v1987
        %v1990 = vpop.xlane.xlu0 %1989
        %1991 = vmax.xlane.f32.xlu0 %v1988
        %v1992 = vpop.xlane.xlu0 %1991
        %vm1993 = vcmp.eq.f32.partialorder %v1987, %v1990
        %vm1994 = vcmp.eq.f32.partialorder %v1988, %v1992
        %v1995 = vsel %vm1993, %v764, 128
        %v1996 = vsel %vm1994, %v764, 128
        %v1997 = vand.u32 %v1995, 65535
        %v1998 = vshra.s32 %v1995, 16
        %v1999 = vcvt.s32.f32 %v1997
        %v2000 = vcvt.s32.f32 %v1998
        %2001 = vmin.xlane.f32.xlu0 %v2000
        %v2002 = vpop.xlane.xlu0 %2001
        %vm2003 = vcmp.eq.f32.partialorder %v2000, %v2002
        %v2004 = vsel %vm2003, %v1999, inf
        %2005 = vmin.xlane.f32.xlu0 %v2004
        %v2006 = vpop.xlane.xlu0 %2005
        %v2007 = vcvt.f32.s32 %v2006
        %v2008 = vcvt.f32.s32 %v2002
        %v2009 = vshll.u32 %v2008, 16
        %v2010 = vadd.s32 %v2009, %v2007
        %v2011 = vand.u32 %v1996, 65535
        %v2012 = vshra.s32 %v1996, 16
        %v2013 = vcvt.s32.f32 %v2011
        %v2014 = vcvt.s32.f32 %v2012
        %2015 = vmin.xlane.f32.xlu0 %v2014
        %v2016 = vpop.xlane.xlu0 %2015
        %vm2017 = vcmp.eq.f32.partialorder %v2014, %v2016
        %v2018 = vsel %vm2017, %v2013, inf
        %2019 = vmin.xlane.f32.xlu0 %v2018
        %v2020 = vpop.xlane.xlu0 %2019
        %v2021 = vcvt.f32.s32 %v2020
        %v2022 = vcvt.f32.s32 %v2016
        %v2023 = vshll.u32 %v2022, 16
        %v2024 = vadd.s32 %v2023, %v2021
        %vm2025 = vcmp.eq.s32.totalorder %v764, %v2010
        %vm2026 = vcmp.eq.s32.totalorder %v764, %v2024
        %v2027 = vsel %vm2025, -1.0, %v1987
        %v2028 = vsel %vm2026, -1.0, %v1988
        %2029 = vmax.xlane.f32.xlu0 %v2027
        %v2030 = vpop.xlane.xlu0 %2029
        %2031 = vmax.xlane.f32.xlu0 %v2028
        %v2032 = vpop.xlane.xlu0 %2031
        %vm2033 = vcmp.eq.f32.partialorder %v2027, %v2030
        %vm2034 = vcmp.eq.f32.partialorder %v2028, %v2032
        %v2035 = vsel %vm2033, %v764, 128
        %v2036 = vsel %vm2034, %v764, 128
        %v2037 = vand.u32 %v2035, 65535
        %v2038 = vshra.s32 %v2035, 16
        %v2039 = vcvt.s32.f32 %v2037
        %v2040 = vcvt.s32.f32 %v2038
        %2041 = vmin.xlane.f32.xlu0 %v2040
        %v2042 = vpop.xlane.xlu0 %2041
        %vm2043 = vcmp.eq.f32.partialorder %v2040, %v2042
        %v2044 = vsel %vm2043, %v2039, inf
        %2045 = vmin.xlane.f32.xlu0 %v2044
        %v2046 = vpop.xlane.xlu0 %2045
        %v2047 = vcvt.f32.s32 %v2046
        %v2048 = vcvt.f32.s32 %v2042
        %v2049 = vshll.u32 %v2048, 16
        %v2050 = vadd.s32 %v2049, %v2047
        %v2051 = vand.u32 %v2036, 65535
        %v2052 = vshra.s32 %v2036, 16
        %v2053 = vcvt.s32.f32 %v2051
        %v2054 = vcvt.s32.f32 %v2052
        %2055 = vmin.xlane.f32.xlu0 %v2054
        %v2056 = vpop.xlane.xlu0 %2055
        %vm2057 = vcmp.eq.f32.partialorder %v2054, %v2056
        %v2058 = vsel %vm2057, %v2053, inf
        %2059 = vmin.xlane.f32.xlu0 %v2058
        %v2060 = vpop.xlane.xlu0 %2059
        %v2061 = vcvt.f32.s32 %v2060
        %v2062 = vcvt.f32.s32 %v2056
        %v2063 = vshll.u32 %v2062, 16
        %v2064 = vadd.s32 %v2063, %v2061
        %vm2065 = vcmp.eq.s32.totalorder %v764, %v2050
        %vm2066 = vcmp.eq.s32.totalorder %v764, %v2064
        %vm2067 = vmor %vm2025, %vm2065
        %vm2068 = vmor %vm2026, %vm2066
        %v2069 = vsel %vm2067, %v1987, 0.0
        %v2070 = vsel %vm2068, %v1988, 0.0
        %2071 = vadd.xlane.f32.xlu0 %v2069
        %v2072 = vpop.xlane.xlu0 %2071
        %2073 = vadd.xlane.f32.xlu0 %v2070
        %v2074 = vpop.xlane.xlu0 %2073
        %v2075 = vmax.f32 %v2072, 1e-20
        %v2076 = vmax.f32 %v2074, 1e-20
        %v2077 = vrcp.pop %v2075
        %v2078 = vrcp.pop %v2076
        %v2079 = vmul.f32 %v2069, %v2077
        %v2080 = vmul.f32 %v2070, %v2078
        %v2081 = vld [vmem:[#allocation10] sm:$0xff]
        %v2082 = vld [vmem:[#allocation10 + $0x8] sm:$0xff]
        %v2083 = vld [vmem:[#allocation10 + $0x10] sm:$0xff]
        %v2084 = vld [vmem:[#allocation10 + $0x18] sm:$0xff]
        %v2085 = vld [vmem:[#allocation10 + $0x20] sm:$0xff]
        %v2086 = vld [vmem:[#allocation10 + $0x28] sm:$0xff]
        %v2087 = vld [vmem:[#allocation10 + $0x30] sm:$0xff]
        %v2088 = vld [vmem:[#allocation10 + $0x38] sm:$0xff]
        %v2089 = vld [vmem:[#allocation10 + $0x40] sm:$0xff]
        %v2090 = vld [vmem:[#allocation10 + $0x48] sm:$0xff]
        %v2091 = vld [vmem:[#allocation10 + $0x50] sm:$0xff]
        %v2092 = vld [vmem:[#allocation10 + $0x58] sm:$0xff]
        %v2093 = vld [vmem:[#allocation10 + $0x60] sm:$0xff]
        %v2094 = vld [vmem:[#allocation10 + $0x68] sm:$0xff]
        %v2095 = vld [vmem:[#allocation10 + $0x70] sm:$0xff]
        %v2096 = vld [vmem:[#allocation10 + $0x78] sm:$0xff]
        %v2097 = vld [vmem:[#allocation10 + $0x80] sm:$0xff]
        %v2098 = vld [vmem:[#allocation10 + $0x88] sm:$0xff]
        %v2099 = vld [vmem:[#allocation10 + $0x90] sm:$0xff]
        %v2100 = vld [vmem:[#allocation10 + $0x98] sm:$0xff]
        %v2101 = vld [vmem:[#allocation10 + $0xa0] sm:$0xff]
        %v2102 = vld [vmem:[#allocation10 + $0xa8] sm:$0xff]
        %v2103 = vld [vmem:[#allocation10 + $0xb0] sm:$0xff]
        %v2104 = vld [vmem:[#allocation10 + $0xb8] sm:$0xff]
        %v2105 = vld [vmem:[#allocation10 + $0xc0] sm:$0xff]
        %v2106 = vld [vmem:[#allocation10 + $0xc8] sm:$0xff]
        %v2107 = vld [vmem:[#allocation10 + $0xd0] sm:$0xff]
        %v2108 = vld [vmem:[#allocation10 + $0xd8] sm:$0xff]
        %v2109 = vld [vmem:[#allocation10 + $0xe0] sm:$0xff]
        %v2110 = vld [vmem:[#allocation10 + $0xe8] sm:$0xff]
        %v2111 = vld [vmem:[#allocation10 + $0xf0] sm:$0xff]
        %v2112 = vld [vmem:[#allocation10 + $0xf8] sm:$0xff]
        %v2113 = vld [vmem:[#allocation10 + $0x100] sm:$0xff]
        %v2114 = vld [vmem:[#allocation10 + $0x108] sm:$0xff]
        %v2115 = vld [vmem:[#allocation10 + $0x110] sm:$0xff]
        %v2116 = vld [vmem:[#allocation10 + $0x118] sm:$0xff]
        %v2117 = vld [vmem:[#allocation10 + $0x120] sm:$0xff]
        %v2118 = vld [vmem:[#allocation10 + $0x128] sm:$0xff]
        %v2119 = vld [vmem:[#allocation10 + $0x130] sm:$0xff]
        %v2120 = vld [vmem:[#allocation10 + $0x138] sm:$0xff]
        %v2121 = vld [vmem:[#allocation10 + $0x140] sm:$0xff]
        %v2122 = vld [vmem:[#allocation10 + $0x148] sm:$0xff]
        %v2123 = vld [vmem:[#allocation10 + $0x150] sm:$0xff]
        %v2124 = vld [vmem:[#allocation10 + $0x158] sm:$0xff]
        %v2125 = vld [vmem:[#allocation10 + $0x160] sm:$0xff]
        %v2126 = vld [vmem:[#allocation10 + $0x168] sm:$0xff]
        %v2127 = vld [vmem:[#allocation10 + $0x170] sm:$0xff]
        %v2128 = vld [vmem:[#allocation10 + $0x178] sm:$0xff]
        %v2129 = vld [vmem:[#allocation10 + $0x180] sm:$0xff]
        %v2130 = vld [vmem:[#allocation10 + $0x188] sm:$0xff]
        %v2131 = vld [vmem:[#allocation10 + $0x190] sm:$0xff]
        %v2132 = vld [vmem:[#allocation10 + $0x198] sm:$0xff]
        %v2133 = vld [vmem:[#allocation10 + $0x1a0] sm:$0xff]
        %v2134 = vld [vmem:[#allocation10 + $0x1a8] sm:$0xff]
        %v2135 = vld [vmem:[#allocation10 + $0x1b0] sm:$0xff]
        %v2136 = vld [vmem:[#allocation10 + $0x1b8] sm:$0xff]
        %v2137 = vld [vmem:[#allocation10 + $0x1c0] sm:$0xff]
        %v2138 = vld [vmem:[#allocation10 + $0x1c8] sm:$0xff]
        %v2139 = vld [vmem:[#allocation10 + $0x1d0] sm:$0xff]
        %v2140 = vld [vmem:[#allocation10 + $0x1d8] sm:$0xff]
        %v2141 = vld [vmem:[#allocation10 + $0x1e0] sm:$0xff]
        %v2142 = vld [vmem:[#allocation10 + $0x1e8] sm:$0xff]
        %v2143 = vld [vmem:[#allocation10 + $0x1f0] sm:$0xff]
        %v2144 = vld [vmem:[#allocation10 + $0x1f8] sm:$0xff]
        %v2145 = vld [vmem:[#allocation10 + $0x200] sm:$0xff]
        %v2146 = vld [vmem:[#allocation10 + $0x208] sm:$0xff]
        %v2147 = vld [vmem:[#allocation10 + $0x210] sm:$0xff]
        %v2148 = vld [vmem:[#allocation10 + $0x218] sm:$0xff]
        %v2149 = vld [vmem:[#allocation10 + $0x220] sm:$0xff]
        %v2150 = vld [vmem:[#allocation10 + $0x228] sm:$0xff]
        %v2151 = vld [vmem:[#allocation10 + $0x230] sm:$0xff]
        %v2152 = vld [vmem:[#allocation10 + $0x238] sm:$0xff]
        %v2153 = vld [vmem:[#allocation10 + $0x240] sm:$0xff]
        %v2154 = vld [vmem:[#allocation10 + $0x248] sm:$0xff]
        %v2155 = vld [vmem:[#allocation10 + $0x250] sm:$0xff]
        %v2156 = vld [vmem:[#allocation10 + $0x258] sm:$0xff]
        %v2157 = vld [vmem:[#allocation10 + $0x260] sm:$0xff]
        %v2158 = vld [vmem:[#allocation10 + $0x268] sm:$0xff]
        %v2159 = vld [vmem:[#allocation10 + $0x270] sm:$0xff]
        %v2160 = vld [vmem:[#allocation10 + $0x278] sm:$0xff]
        %v2161 = vld [vmem:[#allocation10 + $0x280] sm:$0xff]
        %v2162 = vld [vmem:[#allocation10 + $0x288] sm:$0xff]
        %v2163 = vld [vmem:[#allocation10 + $0x290] sm:$0xff]
        %v2164 = vld [vmem:[#allocation10 + $0x298] sm:$0xff]
        %v2165 = vld [vmem:[#allocation10 + $0x2a0] sm:$0xff]
        %v2166 = vld [vmem:[#allocation10 + $0x2a8] sm:$0xff]
        %v2167 = vld [vmem:[#allocation10 + $0x2b0] sm:$0xff]
        %v2168 = vld [vmem:[#allocation10 + $0x2b8] sm:$0xff]
        %v2169 = vld [vmem:[#allocation10 + $0x2c0] sm:$0xff]
        %v2170 = vld [vmem:[#allocation10 + $0x2c8] sm:$0xff]
        %v2171 = vld [vmem:[#allocation10 + $0x2d0] sm:$0xff]
        %v2172 = vld [vmem:[#allocation10 + $0x2d8] sm:$0xff]
        %v2173 = vld [vmem:[#allocation10 + $0x2e0] sm:$0xff]
        %v2174 = vld [vmem:[#allocation10 + $0x2e8] sm:$0xff]
        %v2175 = vld [vmem:[#allocation10 + $0x2f0] sm:$0xff]
        %v2176 = vld [vmem:[#allocation10 + $0x2f8] sm:$0xff]
        %v2177 = vld [vmem:[#allocation10 + $0x300] sm:$0xff]
        %v2178 = vld [vmem:[#allocation10 + $0x308] sm:$0xff]
        %v2179 = vld [vmem:[#allocation10 + $0x310] sm:$0xff]
        %v2180 = vld [vmem:[#allocation10 + $0x318] sm:$0xff]
        %v2181 = vld [vmem:[#allocation10 + $0x320] sm:$0xff]
        %v2182 = vld [vmem:[#allocation10 + $0x328] sm:$0xff]
        %v2183 = vld [vmem:[#allocation10 + $0x330] sm:$0xff]
        %v2184 = vld [vmem:[#allocation10 + $0x338] sm:$0xff]
        %v2185 = vld [vmem:[#allocation10 + $0x340] sm:$0xff]
        %v2186 = vld [vmem:[#allocation10 + $0x348] sm:$0xff]
        %v2187 = vld [vmem:[#allocation10 + $0x350] sm:$0xff]
        %v2188 = vld [vmem:[#allocation10 + $0x358] sm:$0xff]
        %v2189 = vld [vmem:[#allocation10 + $0x360] sm:$0xff]
        %v2190 = vld [vmem:[#allocation10 + $0x368] sm:$0xff]
        %v2191 = vld [vmem:[#allocation10 + $0x370] sm:$0xff]
        %v2192 = vld [vmem:[#allocation10 + $0x378] sm:$0xff]
        %v2193 = vld [vmem:[#allocation10 + $0x380] sm:$0xff]
        %v2194 = vld [vmem:[#allocation10 + $0x388] sm:$0xff]
        %v2195 = vld [vmem:[#allocation10 + $0x390] sm:$0xff]
        %v2196 = vld [vmem:[#allocation10 + $0x398] sm:$0xff]
        %v2197 = vld [vmem:[#allocation10 + $0x3a0] sm:$0xff]
        %v2198 = vld [vmem:[#allocation10 + $0x3a8] sm:$0xff]
        %v2199 = vld [vmem:[#allocation10 + $0x3b0] sm:$0xff]
        %v2200 = vld [vmem:[#allocation10 + $0x3b8] sm:$0xff]
        %v2201 = vld [vmem:[#allocation10 + $0x3c0] sm:$0xff]
        %v2202 = vld [vmem:[#allocation10 + $0x3c8] sm:$0xff]
        %v2203 = vld [vmem:[#allocation10 + $0x3d0] sm:$0xff]
        %v2204 = vld [vmem:[#allocation10 + $0x3d8] sm:$0xff]
        %v2205 = vld [vmem:[#allocation10 + $0x3e0] sm:$0xff]
        %v2206 = vld [vmem:[#allocation10 + $0x3e8] sm:$0xff]
        %v2207 = vld [vmem:[#allocation10 + $0x3f0] sm:$0xff]
        %v2208 = vld [vmem:[#allocation10 + $0x3f8] sm:$0xff]
        %v2209 = vld [vmem:[#allocation11] sm:$0xff]
        %v2210 = vld [vmem:[#allocation11 + $0x8] sm:$0xff]
        %v2213 = vlaneseq
        %v2214 = vshrl.u32 %v2213, 7
        %v2215 = vsub.s32 0, %v2214
        %v2216 = vrot.slane %v2209, %v2215
        %v2217 = vlaneseq
        %v2218 = vshrl.u32 %v2217, 7
        %v2219 = vsub.s32 1, %v2218
        %v2220 = vrot.slane %v2209, %v2219
        %v2221 = vlaneseq
        %v2222 = vshrl.u32 %v2221, 7
        %v2223 = vsub.s32 2, %v2222
        %v2224 = vrot.slane %v2209, %v2223
        %v2225 = vlaneseq
        %v2226 = vshrl.u32 %v2225, 7
        %v2227 = vsub.s32 3, %v2226
        %v2228 = vrot.slane %v2209, %v2227
        %v2229 = vlaneseq
        %v2230 = vshrl.u32 %v2229, 7
        %v2231 = vsub.s32 4, %v2230
        %v2232 = vrot.slane %v2209, %v2231
        %v2233 = vlaneseq
        %v2234 = vshrl.u32 %v2233, 7
        %v2235 = vsub.s32 5, %v2234
        %v2236 = vrot.slane %v2209, %v2235
        %v2237 = vlaneseq
        %v2238 = vshrl.u32 %v2237, 7
        %v2239 = vsub.s32 6, %v2238
        %v2240 = vrot.slane %v2209, %v2239
        %v2241 = vlaneseq
        %v2242 = vshrl.u32 %v2241, 7
        %v2243 = vsub.s32 7, %v2242
        %v2244 = vrot.slane %v2209, %v2243
        %v2245 = vlaneseq
        %v2246 = vshrl.u32 %v2245, 7
        %v2247 = vsub.s32 0, %v2246
        %v2248 = vrot.slane %v2210, %v2247
        %v2249 = vlaneseq
        %v2250 = vshrl.u32 %v2249, 7
        %v2251 = vsub.s32 1, %v2250
        %v2252 = vrot.slane %v2210, %v2251
        %v2253 = vlaneseq
        %v2254 = vshrl.u32 %v2253, 7
        %v2255 = vsub.s32 2, %v2254
        %v2256 = vrot.slane %v2210, %v2255
        %v2257 = vlaneseq
        %v2258 = vshrl.u32 %v2257, 7
        %v2259 = vsub.s32 3, %v2258
        %v2260 = vrot.slane %v2210, %v2259
        %v2261 = vlaneseq
        %v2262 = vshrl.u32 %v2261, 7
        %v2263 = vsub.s32 4, %v2262
        %v2264 = vrot.slane %v2210, %v2263
        %v2265 = vlaneseq
        %v2266 = vshrl.u32 %v2265, 7
        %v2267 = vsub.s32 5, %v2266
        %v2268 = vrot.slane %v2210, %v2267
        %v2269 = vlaneseq
        %v2270 = vshrl.u32 %v2269, 7
        %v2271 = vsub.s32 6, %v2270
        %v2272 = vrot.slane %v2210, %v2271
        %v2273 = vlaneseq
        %v2274 = vshrl.u32 %v2273, 7
        %v2275 = vsub.s32 7, %v2274
        %v2276 = vrot.slane %v2210, %v2275
        %v2421 = vunpack.c.l.b16 %v2081
        %v2422 = vunpack.c.h.b16 %v2081
        %v2423 = vunpack.c.l.b16 %v2082
        %v2424 = vunpack.c.h.b16 %v2082
        %v2425 = vunpack.c.l.b16 %v2083
        %v2426 = vunpack.c.h.b16 %v2083
        %v2427 = vunpack.c.l.b16 %v2084
        %v2428 = vunpack.c.h.b16 %v2084
        %v2429 = vunpack.c.l.b16 %v2085
        %v2430 = vunpack.c.h.b16 %v2085
        %v2431 = vunpack.c.l.b16 %v2086
        %v2432 = vunpack.c.h.b16 %v2086
        %v2433 = vunpack.c.l.b16 %v2087
        %v2434 = vunpack.c.h.b16 %v2087
        %v2435 = vunpack.c.l.b16 %v2088
        %v2436 = vunpack.c.h.b16 %v2088
        %v2437 = vunpack.c.l.b16 %v2089
        %v2438 = vunpack.c.h.b16 %v2089
        %v2439 = vunpack.c.l.b16 %v2090
        %v2440 = vunpack.c.h.b16 %v2090
        %v2441 = vunpack.c.l.b16 %v2091
        %v2442 = vunpack.c.h.b16 %v2091
        %v2443 = vunpack.c.l.b16 %v2092
        %v2444 = vunpack.c.h.b16 %v2092
        %v2445 = vunpack.c.l.b16 %v2093
        %v2446 = vunpack.c.h.b16 %v2093
        %v2447 = vunpack.c.l.b16 %v2094
        %v2448 = vunpack.c.h.b16 %v2094
        %v2449 = vunpack.c.l.b16 %v2095
        %v2450 = vunpack.c.h.b16 %v2095
        %v2451 = vunpack.c.l.b16 %v2096
        %v2452 = vunpack.c.h.b16 %v2096
        %v2453 = vunpack.c.l.b16 %v2097
        %v2454 = vunpack.c.h.b16 %v2097
        %v2455 = vunpack.c.l.b16 %v2098
        %v2456 = vunpack.c.h.b16 %v2098
        %v2457 = vunpack.c.l.b16 %v2099
        %v2458 = vunpack.c.h.b16 %v2099
        %v2459 = vunpack.c.l.b16 %v2100
        %v2460 = vunpack.c.h.b16 %v2100
        %v2461 = vunpack.c.l.b16 %v2101
        %v2462 = vunpack.c.h.b16 %v2101
        %v2463 = vunpack.c.l.b16 %v2102
        %v2464 = vunpack.c.h.b16 %v2102
        %v2465 = vunpack.c.l.b16 %v2103
        %v2466 = vunpack.c.h.b16 %v2103
        %v2467 = vunpack.c.l.b16 %v2104
        %v2468 = vunpack.c.h.b16 %v2104
        %v2469 = vunpack.c.l.b16 %v2105
        %v2470 = vunpack.c.h.b16 %v2105
        %v2471 = vunpack.c.l.b16 %v2106
        %v2472 = vunpack.c.h.b16 %v2106
        %v2473 = vunpack.c.l.b16 %v2107
        %v2474 = vunpack.c.h.b16 %v2107
        %v2475 = vunpack.c.l.b16 %v2108
        %v2476 = vunpack.c.h.b16 %v2108
        %v2477 = vunpack.c.l.b16 %v2109
        %v2478 = vunpack.c.h.b16 %v2109
        %v2479 = vunpack.c.l.b16 %v2110
        %v2480 = vunpack.c.h.b16 %v2110
        %v2481 = vunpack.c.l.b16 %v2111
        %v2482 = vunpack.c.h.b16 %v2111
        %v2483 = vunpack.c.l.b16 %v2112
        %v2484 = vunpack.c.h.b16 %v2112
        %v2485 = vunpack.c.l.b16 %v2113
        %v2486 = vunpack.c.h.b16 %v2113
        %v2487 = vunpack.c.l.b16 %v2114
        %v2488 = vunpack.c.h.b16 %v2114
        %v2489 = vunpack.c.l.b16 %v2115
        %v2490 = vunpack.c.h.b16 %v2115
        %v2491 = vunpack.c.l.b16 %v2116
        %v2492 = vunpack.c.h.b16 %v2116
        %v2493 = vunpack.c.l.b16 %v2117
        %v2494 = vunpack.c.h.b16 %v2117
        %v2495 = vunpack.c.l.b16 %v2118
        %v2496 = vunpack.c.h.b16 %v2118
        %v2497 = vunpack.c.l.b16 %v2119
        %v2498 = vunpack.c.h.b16 %v2119
        %v2499 = vunpack.c.l.b16 %v2120
        %v2500 = vunpack.c.h.b16 %v2120
        %v2501 = vunpack.c.l.b16 %v2121
        %v2502 = vunpack.c.h.b16 %v2121
        %v2503 = vunpack.c.l.b16 %v2122
        %v2504 = vunpack.c.h.b16 %v2122
        %v2505 = vunpack.c.l.b16 %v2123
        %v2506 = vunpack.c.h.b16 %v2123
        %v2507 = vunpack.c.l.b16 %v2124
        %v2508 = vunpack.c.h.b16 %v2124
        %v2509 = vunpack.c.l.b16 %v2125
        %v2510 = vunpack.c.h.b16 %v2125
        %v2511 = vunpack.c.l.b16 %v2126
        %v2512 = vunpack.c.h.b16 %v2126
        %v2513 = vunpack.c.l.b16 %v2127
        %v2514 = vunpack.c.h.b16 %v2127
        %v2515 = vunpack.c.l.b16 %v2128
        %v2516 = vunpack.c.h.b16 %v2128
        %v2517 = vunpack.c.l.b16 %v2129
        %v2518 = vunpack.c.h.b16 %v2129
        %v2519 = vunpack.c.l.b16 %v2130
        %v2520 = vunpack.c.h.b16 %v2130
        %v2521 = vunpack.c.l.b16 %v2131
        %v2522 = vunpack.c.h.b16 %v2131
        %v2523 = vunpack.c.l.b16 %v2132
        %v2524 = vunpack.c.h.b16 %v2132
        %v2525 = vunpack.c.l.b16 %v2133
        %v2526 = vunpack.c.h.b16 %v2133
        %v2527 = vunpack.c.l.b16 %v2134
        %v2528 = vunpack.c.h.b16 %v2134
        %v2529 = vunpack.c.l.b16 %v2135
        %v2530 = vunpack.c.h.b16 %v2135
        %v2531 = vunpack.c.l.b16 %v2136
        %v2532 = vunpack.c.h.b16 %v2136
        %v2533 = vunpack.c.l.b16 %v2137
        %v2534 = vunpack.c.h.b16 %v2137
        %v2535 = vunpack.c.l.b16 %v2138
        %v2536 = vunpack.c.h.b16 %v2138
        %v2537 = vunpack.c.l.b16 %v2139
        %v2538 = vunpack.c.h.b16 %v2139
        %v2539 = vunpack.c.l.b16 %v2140
        %v2540 = vunpack.c.h.b16 %v2140
        %v2541 = vunpack.c.l.b16 %v2141
        %v2542 = vunpack.c.h.b16 %v2141
        %v2543 = vunpack.c.l.b16 %v2142
        %v2544 = vunpack.c.h.b16 %v2142
        %v2545 = vunpack.c.l.b16 %v2143
        %v2546 = vunpack.c.h.b16 %v2143
        %v2547 = vunpack.c.l.b16 %v2144
        %v2548 = vunpack.c.h.b16 %v2144
        %v2549 = vunpack.c.l.b16 %v2145
        %v2550 = vunpack.c.h.b16 %v2145
        %v2551 = vunpack.c.l.b16 %v2146
        %v2552 = vunpack.c.h.b16 %v2146
        %v2553 = vunpack.c.l.b16 %v2147
        %v2554 = vunpack.c.h.b16 %v2147
        %v2555 = vunpack.c.l.b16 %v2148
        %v2556 = vunpack.c.h.b16 %v2148
        %v2557 = vunpack.c.l.b16 %v2149
        %v2558 = vunpack.c.h.b16 %v2149
        %v2559 = vunpack.c.l.b16 %v2150
        %v2560 = vunpack.c.h.b16 %v2150
        %v2561 = vunpack.c.l.b16 %v2151
        %v2562 = vunpack.c.h.b16 %v2151
        %v2563 = vunpack.c.l.b16 %v2152
        %v2564 = vunpack.c.h.b16 %v2152
        %v2565 = vunpack.c.l.b16 %v2153
        %v2566 = vunpack.c.h.b16 %v2153
        %v2567 = vunpack.c.l.b16 %v2154
        %v2568 = vunpack.c.h.b16 %v2154
        %v2569 = vunpack.c.l.b16 %v2155
        %v2570 = vunpack.c.h.b16 %v2155
        %v2571 = vunpack.c.l.b16 %v2156
        %v2572 = vunpack.c.h.b16 %v2156
        %v2573 = vunpack.c.l.b16 %v2157
        %v2574 = vunpack.c.h.b16 %v2157
        %v2575 = vunpack.c.l.b16 %v2158
        %v2576 = vunpack.c.h.b16 %v2158
        %v2577 = vunpack.c.l.b16 %v2159
        %v2578 = vunpack.c.h.b16 %v2159
        %v2579 = vunpack.c.l.b16 %v2160
        %v2580 = vunpack.c.h.b16 %v2160
        %v2581 = vunpack.c.l.b16 %v2161
        %v2582 = vunpack.c.h.b16 %v2161
        %v2583 = vunpack.c.l.b16 %v2162
        %v2584 = vunpack.c.h.b16 %v2162
        %v2585 = vunpack.c.l.b16 %v2163
        %v2586 = vunpack.c.h.b16 %v2163
        %v2587 = vunpack.c.l.b16 %v2164
        %v2588 = vunpack.c.h.b16 %v2164
        %v2589 = vunpack.c.l.b16 %v2165
        %v2590 = vunpack.c.h.b16 %v2165
        %v2591 = vunpack.c.l.b16 %v2166
        %v2592 = vunpack.c.h.b16 %v2166
        %v2593 = vunpack.c.l.b16 %v2167
        %v2594 = vunpack.c.h.b16 %v2167
        %v2595 = vunpack.c.l.b16 %v2168
        %v2596 = vunpack.c.h.b16 %v2168
        %v2597 = vunpack.c.l.b16 %v2169
        %v2598 = vunpack.c.h.b16 %v2169
        %v2599 = vunpack.c.l.b16 %v2170
        %v2600 = vunpack.c.h.b16 %v2170
        %v2601 = vunpack.c.l.b16 %v2171
        %v2602 = vunpack.c.h.b16 %v2171
        %v2603 = vunpack.c.l.b16 %v2172
        %v2604 = vunpack.c.h.b16 %v2172
        %v2605 = vunpack.c.l.b16 %v2173
        %v2606 = vunpack.c.h.b16 %v2173
        %v2607 = vunpack.c.l.b16 %v2174
        %v2608 = vunpack.c.h.b16 %v2174
        %v2609 = vunpack.c.l.b16 %v2175
        %v2610 = vunpack.c.h.b16 %v2175
        %v2611 = vunpack.c.l.b16 %v2176
        %v2612 = vunpack.c.h.b16 %v2176
        %v2613 = vunpack.c.l.b16 %v2177
        %v2614 = vunpack.c.h.b16 %v2177
        %v2615 = vunpack.c.l.b16 %v2178
        %v2616 = vunpack.c.h.b16 %v2178
        %v2617 = vunpack.c.l.b16 %v2179
        %v2618 = vunpack.c.h.b16 %v2179
        %v2619 = vunpack.c.l.b16 %v2180
        %v2620 = vunpack.c.h.b16 %v2180
        %v2621 = vunpack.c.l.b16 %v2181
        %v2622 = vunpack.c.h.b16 %v2181
        %v2623 = vunpack.c.l.b16 %v2182
        %v2624 = vunpack.c.h.b16 %v2182
        %v2625 = vunpack.c.l.b16 %v2183
        %v2626 = vunpack.c.h.b16 %v2183
        %v2627 = vunpack.c.l.b16 %v2184
        %v2628 = vunpack.c.h.b16 %v2184
        %v2629 = vunpack.c.l.b16 %v2185
        %v2630 = vunpack.c.h.b16 %v2185
        %v2631 = vunpack.c.l.b16 %v2186
        %v2632 = vunpack.c.h.b16 %v2186
        %v2633 = vunpack.c.l.b16 %v2187
        %v2634 = vunpack.c.h.b16 %v2187
        %v2635 = vunpack.c.l.b16 %v2188
        %v2636 = vunpack.c.h.b16 %v2188
        %v2637 = vunpack.c.l.b16 %v2189
        %v2638 = vunpack.c.h.b16 %v2189
        %v2639 = vunpack.c.l.b16 %v2190
        %v2640 = vunpack.c.h.b16 %v2190
        %v2641 = vunpack.c.l.b16 %v2191
        %v2642 = vunpack.c.h.b16 %v2191
        %v2643 = vunpack.c.l.b16 %v2192
        %v2644 = vunpack.c.h.b16 %v2192
        %v2645 = vunpack.c.l.b16 %v2193
        %v2646 = vunpack.c.h.b16 %v2193
        %v2647 = vunpack.c.l.b16 %v2194
        %v2648 = vunpack.c.h.b16 %v2194
        %v2649 = vunpack.c.l.b16 %v2195
        %v2650 = vunpack.c.h.b16 %v2195
        %v2651 = vunpack.c.l.b16 %v2196
        %v2652 = vunpack.c.h.b16 %v2196
        %v2653 = vunpack.c.l.b16 %v2197
        %v2654 = vunpack.c.h.b16 %v2197
        %v2655 = vunpack.c.l.b16 %v2198
        %v2656 = vunpack.c.h.b16 %v2198
        %v2657 = vunpack.c.l.b16 %v2199
        %v2658 = vunpack.c.h.b16 %v2199
        %v2659 = vunpack.c.l.b16 %v2200
        %v2660 = vunpack.c.h.b16 %v2200
        %v2661 = vunpack.c.l.b16 %v2201
        %v2662 = vunpack.c.h.b16 %v2201
        %v2663 = vunpack.c.l.b16 %v2202
        %v2664 = vunpack.c.h.b16 %v2202
        %v2665 = vunpack.c.l.b16 %v2203
        %v2666 = vunpack.c.h.b16 %v2203
        %v2667 = vunpack.c.l.b16 %v2204
        %v2668 = vunpack.c.h.b16 %v2204
        %v2669 = vunpack.c.l.b16 %v2205
        %v2670 = vunpack.c.h.b16 %v2205
        %v2671 = vunpack.c.l.b16 %v2206
        %v2672 = vunpack.c.h.b16 %v2206
        %v2673 = vunpack.c.l.b16 %v2207
        %v2674 = vunpack.c.h.b16 %v2207
        %v2675 = vunpack.c.l.b16 %v2208
        %v2676 = vunpack.c.h.b16 %v2208
        %v2677 = vpack.c.b16 %v2437, %v2421
        %v2678 = vpack.c.b16 %v2438, %v2422
        %v2679 = vpack.c.b16 %v2439, %v2423
        %v2680 = vpack.c.b16 %v2440, %v2424
        %v2681 = vpack.c.b16 %v2441, %v2425
        %v2682 = vpack.c.b16 %v2442, %v2426
        %v2683 = vpack.c.b16 %v2443, %v2427
        %v2684 = vpack.c.b16 %v2444, %v2428
        %v2685 = vpack.c.b16 %v2445, %v2429
        %v2686 = vpack.c.b16 %v2446, %v2430
        %v2687 = vpack.c.b16 %v2447, %v2431
        %v2688 = vpack.c.b16 %v2448, %v2432
        %v2689 = vpack.c.b16 %v2449, %v2433
        %v2690 = vpack.c.b16 %v2450, %v2434
        %v2691 = vpack.c.b16 %v2451, %v2435
        %v2692 = vpack.c.b16 %v2452, %v2436
        %v2693 = vpack.c.b16 %v2469, %v2453
        %v2694 = vpack.c.b16 %v2470, %v2454
        %v2695 = vpack.c.b16 %v2471, %v2455
        %v2696 = vpack.c.b16 %v2472, %v2456
        %v2697 = vpack.c.b16 %v2473, %v2457
        %v2698 = vpack.c.b16 %v2474, %v2458
        %v2699 = vpack.c.b16 %v2475, %v2459
        %v2700 = vpack.c.b16 %v2476, %v2460
        %v2701 = vpack.c.b16 %v2477, %v2461
        %v2702 = vpack.c.b16 %v2478, %v2462
        %v2703 = vpack.c.b16 %v2479, %v2463
        %v2704 = vpack.c.b16 %v2480, %v2464
        %v2705 = vpack.c.b16 %v2481, %v2465
        %v2706 = vpack.c.b16 %v2482, %v2466
        %v2707 = vpack.c.b16 %v2483, %v2467
        %v2708 = vpack.c.b16 %v2484, %v2468
        %v2709 = vpack.c.b16 %v2501, %v2485
        %v2710 = vpack.c.b16 %v2502, %v2486
        %v2711 = vpack.c.b16 %v2503, %v2487
        %v2712 = vpack.c.b16 %v2504, %v2488
        %v2713 = vpack.c.b16 %v2505, %v2489
        %v2714 = vpack.c.b16 %v2506, %v2490
        %v2715 = vpack.c.b16 %v2507, %v2491
        %v2716 = vpack.c.b16 %v2508, %v2492
        %v2717 = vpack.c.b16 %v2509, %v2493
        %v2718 = vpack.c.b16 %v2510, %v2494
        %v2719 = vpack.c.b16 %v2511, %v2495
        %v2720 = vpack.c.b16 %v2512, %v2496
        %v2721 = vpack.c.b16 %v2513, %v2497
        %v2722 = vpack.c.b16 %v2514, %v2498
        %v2723 = vpack.c.b16 %v2515, %v2499
        %v2724 = vpack.c.b16 %v2516, %v2500
        %v2725 = vpack.c.b16 %v2533, %v2517
        %v2726 = vpack.c.b16 %v2534, %v2518
        %v2727 = vpack.c.b16 %v2535, %v2519
        %v2728 = vpack.c.b16 %v2536, %v2520
        %v2729 = vpack.c.b16 %v2537, %v2521
        %v2730 = vpack.c.b16 %v2538, %v2522
        %v2731 = vpack.c.b16 %v2539, %v2523
        %v2732 = vpack.c.b16 %v2540, %v2524
        %v2733 = vpack.c.b16 %v2541, %v2525
        %v2734 = vpack.c.b16 %v2542, %v2526
        %v2735 = vpack.c.b16 %v2543, %v2527
        %v2736 = vpack.c.b16 %v2544, %v2528
        %v2737 = vpack.c.b16 %v2545, %v2529
        %v2738 = vpack.c.b16 %v2546, %v2530
        %v2739 = vpack.c.b16 %v2547, %v2531
        %v2740 = vpack.c.b16 %v2548, %v2532
        %v2741 = vpack.c.b16 %v2565, %v2549
        %v2742 = vpack.c.b16 %v2566, %v2550
        %v2743 = vpack.c.b16 %v2567, %v2551
        %v2744 = vpack.c.b16 %v2568, %v2552
        %v2745 = vpack.c.b16 %v2569, %v2553
        %v2746 = vpack.c.b16 %v2570, %v2554
        %v2747 = vpack.c.b16 %v2571, %v2555
        %v2748 = vpack.c.b16 %v2572, %v2556
        %v2749 = vpack.c.b16 %v2573, %v2557
        %v2750 = vpack.c.b16 %v2574, %v2558
        %v2751 = vpack.c.b16 %v2575, %v2559
        %v2752 = vpack.c.b16 %v2576, %v2560
        %v2753 = vpack.c.b16 %v2577, %v2561
        %v2754 = vpack.c.b16 %v2578, %v2562
        %v2755 = vpack.c.b16 %v2579, %v2563
        %v2756 = vpack.c.b16 %v2580, %v2564
        %v2757 = vpack.c.b16 %v2597, %v2581
        %v2758 = vpack.c.b16 %v2598, %v2582
        %v2759 = vpack.c.b16 %v2599, %v2583
        %v2760 = vpack.c.b16 %v2600, %v2584
        %v2761 = vpack.c.b16 %v2601, %v2585
        %v2762 = vpack.c.b16 %v2602, %v2586
        %v2763 = vpack.c.b16 %v2603, %v2587
        %v2764 = vpack.c.b16 %v2604, %v2588
        %v2765 = vpack.c.b16 %v2605, %v2589
        %v2766 = vpack.c.b16 %v2606, %v2590
        %v2767 = vpack.c.b16 %v2607, %v2591
        %v2768 = vpack.c.b16 %v2608, %v2592
        %v2769 = vpack.c.b16 %v2609, %v2593
        %v2770 = vpack.c.b16 %v2610, %v2594
        %v2771 = vpack.c.b16 %v2611, %v2595
        %v2772 = vpack.c.b16 %v2612, %v2596
        %v2773 = vpack.c.b16 %v2629, %v2613
        %v2774 = vpack.c.b16 %v2630, %v2614
        %v2775 = vpack.c.b16 %v2631, %v2615
        %v2776 = vpack.c.b16 %v2632, %v2616
        %v2777 = vpack.c.b16 %v2633, %v2617
        %v2778 = vpack.c.b16 %v2634, %v2618
        %v2779 = vpack.c.b16 %v2635, %v2619
        %v2780 = vpack.c.b16 %v2636, %v2620
        %v2781 = vpack.c.b16 %v2637, %v2621
        %v2782 = vpack.c.b16 %v2638, %v2622
        %v2783 = vpack.c.b16 %v2639, %v2623
        %v2784 = vpack.c.b16 %v2640, %v2624
        %v2785 = vpack.c.b16 %v2641, %v2625
        %v2786 = vpack.c.b16 %v2642, %v2626
        %v2787 = vpack.c.b16 %v2643, %v2627
        %v2788 = vpack.c.b16 %v2644, %v2628
        %v2789 = vpack.c.b16 %v2661, %v2645
        %v2790 = vpack.c.b16 %v2662, %v2646
        %v2791 = vpack.c.b16 %v2663, %v2647
        %v2792 = vpack.c.b16 %v2664, %v2648
        %v2793 = vpack.c.b16 %v2665, %v2649
        %v2794 = vpack.c.b16 %v2666, %v2650
        %v2795 = vpack.c.b16 %v2667, %v2651
        %v2796 = vpack.c.b16 %v2668, %v2652
        %v2797 = vpack.c.b16 %v2669, %v2653
        %v2798 = vpack.c.b16 %v2670, %v2654
        %v2799 = vpack.c.b16 %v2671, %v2655
        %v2800 = vpack.c.b16 %v2672, %v2656
        %v2801 = vpack.c.b16 %v2673, %v2657
        %v2802 = vpack.c.b16 %v2674, %v2658
        %v2803 = vpack.c.b16 %v2675, %v2659
        %v2804 = vpack.c.b16 %v2676, %v2660
        %2933 = vmatprep.subr.bf16.mxu0 %v2678
        %2934 = vmatpush1.bf16.msra.mxu0 %v2677
        %2935 = vmatprep.subr.bf16.mxu0 %v2694
        %2936 = vmatpush1.bf16.msra.mxu0 %v2693
        %2937 = vmatprep.subr.bf16.mxu0 %v2710
        %2938 = vmatpush1.bf16.msra.mxu0 %v2709
        %2939 = vmatprep.subr.bf16.mxu0 %v2726
        %2940 = vmatpush1.bf16.msra.mxu0 %v2725
        %2941 = vmatprep.subr.bf16.mxu0 %v2742
        %2942 = vmatpush1.bf16.msra.mxu0 %v2741
        %2943 = vmatprep.subr.bf16.mxu0 %v2758
        %2944 = vmatpush1.bf16.msra.mxu0 %v2757
        %2945 = vmatprep.subr.bf16.mxu0 %v2774
        %2946 = vmatpush1.bf16.msra.mxu0 %v2773
        %2947 = vmatprep.subr.bf16.mxu0 %v2790
        %2948 = vmatpush1.bf16.msra.mxu0 %v2789
        %2949 = vmatprep.subr.bf16.mxu0 0
        %2950 = vmatpush1.bf16.msra.mxu0 0
        %2951 = vmatprep.subr.bf16.mxu0 0
        %2952 = vmatpush1.bf16.msra.mxu0 0
        %2953 = vmatprep.subr.bf16.mxu0 0
        %2954 = vmatpush1.bf16.msra.mxu0 0
        %2955 = vmatprep.subr.bf16.mxu0 0
        %2956 = vmatpush1.bf16.msra.mxu0 0
        %2957 = vmatprep.subr.bf16.mxu0 0
        %2958 = vmatpush1.bf16.msra.mxu0 0
        %2959 = vmatprep.subr.bf16.mxu0 0
        %2960 = vmatpush1.bf16.msra.mxu0 0
        %2961 = vmatprep.subr.bf16.mxu0 0
        %2962 = vmatpush1.bf16.msra.mxu0 0
        %2963 = vmatprep.subr.bf16.mxu0 0
        %2964 = vmatpush1.bf16.msra.mxu0 0
        %2965 = vmatprep.mubr.bf16.mxu0 0
        %2966 = vmatmul.mubr.bf16.gmra.mrb[0].mxu0 %v1862
        %v2967 = vpop.f32.mrb[0].mxu0
        %v2968 = vadd.f32 %v2216, %v2967
        %v2969 = vpop.f32.mrb[0].mxu0
        %v2970 = vadd.f32 %v2220, %v2969
        %v2971 = vpop.f32.mrb[0].mxu0
        %v2972 = vadd.f32 %v2216, %v2971
        %v2973 = vpop.f32.mrb[0].mxu0
        %v2974 = vadd.f32 %v2220, %v2973
        %2975 = vdwg.mxu0
        %2976 = vmatprep.subr.bf16.mxu0 %v2680
        %2977 = vmatpush1.bf16.msra.mxu0 %v2679
        %2978 = vmatprep.subr.bf16.mxu0 %v2696
        %2979 = vmatpush1.bf16.msra.mxu0 %v2695
        %2980 = vmatprep.subr.bf16.mxu0 %v2712
        %2981 = vmatpush1.bf16.msra.mxu0 %v2711
        %2982 = vmatprep.subr.bf16.mxu0 %v2728
        %2983 = vmatpush1.bf16.msra.mxu0 %v2727
        %2984 = vmatprep.subr.bf16.mxu0 %v2744
        %2985 = vmatpush1.bf16.msra.mxu0 %v2743
        %2986 = vmatprep.subr.bf16.mxu0 %v2760
        %2987 = vmatpush1.bf16.msra.mxu0 %v2759
        %2988 = vmatprep.subr.bf16.mxu0 %v2776
        %2989 = vmatpush1.bf16.msra.mxu0 %v2775
        %2990 = vmatprep.subr.bf16.mxu0 %v2792
        %2991 = vmatpush1.bf16.msra.mxu0 %v2791
        %2992 = vmatprep.subr.bf16.mxu0 0
        %2993 = vmatpush1.bf16.msra.mxu0 0
        %2994 = vmatprep.subr.bf16.mxu0 0
        %2995 = vmatpush1.bf16.msra.mxu0 0
        %2996 = vmatprep.subr.bf16.mxu0 0
        %2997 = vmatpush1.bf16.msra.mxu0 0
        %2998 = vmatprep.subr.bf16.mxu0 0
        %2999 = vmatpush1.bf16.msra.mxu0 0
        %3000 = vmatprep.subr.bf16.mxu0 0
        %3001 = vmatpush1.bf16.msra.mxu0 0
        %3002 = vmatprep.subr.bf16.mxu0 0
        %3003 = vmatpush1.bf16.msra.mxu0 0
        %3004 = vmatprep.subr.bf16.mxu0 0
        %3005 = vmatpush1.bf16.msra.mxu0 0
        %3006 = vmatprep.subr.bf16.mxu0 0
        %3007 = vmatpush1.bf16.msra.mxu0 0
        %3008 = vmatprep.mubr.bf16.mxu0 0
        %3009 = vmatmul.mubr.bf16.gmra.mrb[0].mxu0 %v1862
        %v3010 = vpop.f32.mrb[0].mxu0
        %v3011 = vadd.f32 %v2224, %v3010
        %v3012 = vpop.f32.mrb[0].mxu0
        %v3013 = vadd.f32 %v2228, %v3012
        %v3014 = vpop.f32.mrb[0].mxu0
        %v3015 = vadd.f32 %v2224, %v3014
        %v3016 = vpop.f32.mrb[0].mxu0
        %v3017 = vadd.f32 %v2228, %v3016
        %3018 = vdwg.mxu0
        %3019 = vmatprep.subr.bf16.mxu0 %v2682
        %3020 = vmatpush1.bf16.msra.mxu0 %v2681
        %3021 = vmatprep.subr.bf16.mxu0 %v2698
        %3022 = vmatpush1.bf16.msra.mxu0 %v2697
        %3023 = vmatprep.subr.bf16.mxu0 %v2714
        %3024 = vmatpush1.bf16.msra.mxu0 %v2713
        %3025 = vmatprep.subr.bf16.mxu0 %v2730
        %3026 = vmatpush1.bf16.msra.mxu0 %v2729
        %3027 = vmatprep.subr.bf16.mxu0 %v2746
        %3028 = vmatpush1.bf16.msra.mxu0 %v2745
        %3029 = vmatprep.subr.bf16.mxu0 %v2762
        %3030 = vmatpush1.bf16.msra.mxu0 %v2761
        %3031 = vmatprep.subr.bf16.mxu0 %v2778
        %3032 = vmatpush1.bf16.msra.mxu0 %v2777
        %3033 = vmatprep.subr.bf16.mxu0 %v2794
        %3034 = vmatpush1.bf16.msra.mxu0 %v2793
        %3035 = vmatprep.subr.bf16.mxu0 0
        %3036 = vmatpush1.bf16.msra.mxu0 0
        %3037 = vmatprep.subr.bf16.mxu0 0
        %3038 = vmatpush1.bf16.msra.mxu0 0
        %3039 = vmatprep.subr.bf16.mxu0 0
        %3040 = vmatpush1.bf16.msra.mxu0 0
        %3041 = vmatprep.subr.bf16.mxu0 0
        %3042 = vmatpush1.bf16.msra.mxu0 0
        %3043 = vmatprep.subr.bf16.mxu0 0
        %3044 = vmatpush1.bf16.msra.mxu0 0
        %3045 = vmatprep.subr.bf16.mxu0 0
        %3046 = vmatpush1.bf16.msra.mxu0 0
        %3047 = vmatprep.subr.bf16.mxu0 0
        %3048 = vmatpush1.bf16.msra.mxu0 0
        %3049 = vmatprep.subr.bf16.mxu0 0
        %3050 = vmatpush1.bf16.msra.mxu0 0
        %3051 = vmatprep.mubr.bf16.mxu0 0
        %3052 = vmatmul.mubr.bf16.gmra.mrb[0].mxu0 %v1862
        %v3053 = vpop.f32.mrb[0].mxu0
        %v3054 = vadd.f32 %v2232, %v3053
        %v3055 = vpop.f32.mrb[0].mxu0
        %v3056 = vadd.f32 %v2236, %v3055
        %v3057 = vpop.f32.mrb[0].mxu0
        %v3058 = vadd.f32 %v2232, %v3057
        %v3059 = vpop.f32.mrb[0].mxu0
        %v3060 = vadd.f32 %v2236, %v3059
        %3061 = vdwg.mxu0
        %3062 = vmatprep.subr.bf16.mxu0 %v2684
        %3063 = vmatpush1.bf16.msra.mxu0 %v2683
        %3064 = vmatprep.subr.bf16.mxu0 %v2700
        %3065 = vmatpush1.bf16.msra.mxu0 %v2699
        %3066 = vmatprep.subr.bf16.mxu0 %v2716
        %3067 = vmatpush1.bf16.msra.mxu0 %v2715
        %3068 = vmatprep.subr.bf16.mxu0 %v2732
        %3069 = vmatpush1.bf16.msra.mxu0 %v2731
        %3070 = vmatprep.subr.bf16.mxu0 %v2748
        %3071 = vmatpush1.bf16.msra.mxu0 %v2747
        %3072 = vmatprep.subr.bf16.mxu0 %v2764
        %3073 = vmatpush1.bf16.msra.mxu0 %v2763
        %3074 = vmatprep.subr.bf16.mxu0 %v2780
        %3075 = vmatpush1.bf16.msra.mxu0 %v2779
        %3076 = vmatprep.subr.bf16.mxu0 %v2796
        %3077 = vmatpush1.bf16.msra.mxu0 %v2795
        %3078 = vmatprep.subr.bf16.mxu0 0
        %3079 = vmatpush1.bf16.msra.mxu0 0
        %3080 = vmatprep.subr.bf16.mxu0 0
        %3081 = vmatpush1.bf16.msra.mxu0 0
        %3082 = vmatprep.subr.bf16.mxu0 0
        %3083 = vmatpush1.bf16.msra.mxu0 0
        %3084 = vmatprep.subr.bf16.mxu0 0
        %3085 = vmatpush1.bf16.msra.mxu0 0
        %3086 = vmatprep.subr.bf16.mxu0 0
        %3087 = vmatpush1.bf16.msra.mxu0 0
        %3088 = vmatprep.subr.bf16.mxu0 0
        %3089 = vmatpush1.bf16.msra.mxu0 0
        %3090 = vmatprep.subr.bf16.mxu0 0
        %3091 = vmatpush1.bf16.msra.mxu0 0
        %3092 = vmatprep.subr.bf16.mxu0 0
        %3093 = vmatpush1.bf16.msra.mxu0 0
        %3094 = vmatprep.mubr.bf16.mxu0 0
        %3095 = vmatmul.mubr.bf16.gmra.mrb[0].mxu0 %v1862
        %v3096 = vpop.f32.mrb[0].mxu0
        %v3097 = vadd.f32 %v2240, %v3096
        %v3098 = vpop.f32.mrb[0].mxu0
        %v3099 = vadd.f32 %v2244, %v3098
        %v3100 = vpop.f32.mrb[0].mxu0
        %v3101 = vadd.f32 %v2240, %v3100
        %v3102 = vpop.f32.mrb[0].mxu0
        %v3103 = vadd.f32 %v2244, %v3102
        %3104 = vdwg.mxu0
        %3105 = vmatprep.subr.bf16.mxu0 %v2686
        %3106 = vmatpush1.bf16.msra.mxu0 %v2685
        %3107 = vmatprep.subr.bf16.mxu0 %v2702
        %3108 = vmatpush1.bf16.msra.mxu0 %v2701
        %3109 = vmatprep.subr.bf16.mxu0 %v2718
        %3110 = vmatpush1.bf16.msra.mxu0 %v2717
        %3111 = vmatprep.subr.bf16.mxu0 %v2734
        %3112 = vmatpush1.bf16.msra.mxu0 %v2733
        %3113 = vmatprep.subr.bf16.mxu0 %v2750
        %3114 = vmatpush1.bf16.msra.mxu0 %v2749
        %3115 = vmatprep.subr.bf16.mxu0 %v2766
        %3116 = vmatpush1.bf16.msra.mxu0 %v2765
        %3117 = vmatprep.subr.bf16.mxu0 %v2782
        %3118 = vmatpush1.bf16.msra.mxu0 %v2781
        %3119 = vmatprep.subr.bf16.mxu0 %v2798
        %3120 = vmatpush1.bf16.msra.mxu0 %v2797
        %3121 = vmatprep.subr.bf16.mxu0 0
        %3122 = vmatpush1.bf16.msra.mxu0 0
        %3123 = vmatprep.subr.bf16.mxu0 0
        %3124 = vmatpush1.bf16.msra.mxu0 0
        %3125 = vmatprep.subr.bf16.mxu0 0
        %3126 = vmatpush1.bf16.msra.mxu0 0
        %3127 = vmatprep.subr.bf16.mxu0 0
        %3128 = vmatpush1.bf16.msra.mxu0 0
        %3129 = vmatprep.subr.bf16.mxu0 0
        %3130 = vmatpush1.bf16.msra.mxu0 0
        %3131 = vmatprep.subr.bf16.mxu0 0
        %3132 = vmatpush1.bf16.msra.mxu0 0
        %3133 = vmatprep.subr.bf16.mxu0 0
        %3134 = vmatpush1.bf16.msra.mxu0 0
        %3135 = vmatprep.subr.bf16.mxu0 0
        %3136 = vmatpush1.bf16.msra.mxu0 0
        %3137 = vmatprep.mubr.bf16.mxu0 0
        %3138 = vmatmul.mubr.bf16.gmra.mrb[0].mxu0 %v1862
        %v3139 = vpop.f32.mrb[0].mxu0
        %v3140 = vadd.f32 %v2248, %v3139
        %v3141 = vpop.f32.mrb[0].mxu0
        %v3142 = vadd.f32 %v2252, %v3141
        %v3143 = vpop.f32.mrb[0].mxu0
        %v3144 = vadd.f32 %v2248, %v3143
        %v3145 = vpop.f32.mrb[0].mxu0
        %v3146 = vadd.f32 %v2252, %v3145
        %3147 = vdwg.mxu0
        %3148 = vmatprep.subr.bf16.mxu0 %v2688
        %3149 = vmatpush1.bf16.msra.mxu0 %v2687
        %3150 = vmatprep.subr.bf16.mxu0 %v2704
        %3151 = vmatpush1.bf16.msra.mxu0 %v2703
        %3152 = vmatprep.subr.bf16.mxu0 %v2720
        %3153 = vmatpush1.bf16.msra.mxu0 %v2719
        %3154 = vmatprep.subr.bf16.mxu0 %v2736
        %3155 = vmatpush1.bf16.msra.mxu0 %v2735
        %3156 = vmatprep.subr.bf16.mxu0 %v2752
        %3157 = vmatpush1.bf16.msra.mxu0 %v2751
        %3158 = vmatprep.subr.bf16.mxu0 %v2768
        %3159 = vmatpush1.bf16.msra.mxu0 %v2767
        %3160 = vmatprep.subr.bf16.mxu0 %v2784
        %3161 = vmatpush1.bf16.msra.mxu0 %v2783
        %3162 = vmatprep.subr.bf16.mxu0 %v2800
        %3163 = vmatpush1.bf16.msra.mxu0 %v2799
        %3164 = vmatprep.subr.bf16.mxu0 0
        %3165 = vmatpush1.bf16.msra.mxu0 0
        %3166 = vmatprep.subr.bf16.mxu0 0
        %3167 = vmatpush1.bf16.msra.mxu0 0
        %3168 = vmatprep.subr.bf16.mxu0 0
        %3169 = vmatpush1.bf16.msra.mxu0 0
        %3170 = vmatprep.subr.bf16.mxu0 0
        %3171 = vmatpush1.bf16.msra.mxu0 0
        %3172 = vmatprep.subr.bf16.mxu0 0
        %3173 = vmatpush1.bf16.msra.mxu0 0
        %3174 = vmatprep.subr.bf16.mxu0 0
        %3175 = vmatpush1.bf16.msra.mxu0 0
        %3176 = vmatprep.subr.bf16.mxu0 0
        %3177 = vmatpush1.bf16.msra.mxu0 0
        %3178 = vmatprep.subr.bf16.mxu0 0
        %3179 = vmatpush1.bf16.msra.mxu0 0
        %3180 = vmatprep.mubr.bf16.mxu0 0
        %3181 = vmatmul.mubr.bf16.gmra.mrb[0].mxu0 %v1862
        %v3182 = vpop.f32.mrb[0].mxu0
        %v3183 = vadd.f32 %v2256, %v3182
        %v3184 = vpop.f32.mrb[0].mxu0
        %v3185 = vadd.f32 %v2260, %v3184
        %v3186 = vpop.f32.mrb[0].mxu0
        %v3187 = vadd.f32 %v2256, %v3186
        %v3188 = vpop.f32.mrb[0].mxu0
        %v3189 = vadd.f32 %v2260, %v3188
        %3190 = vdwg.mxu0
        %3191 = vmatprep.subr.bf16.mxu0 %v2690
        %3192 = vmatpush1.bf16.msra.mxu0 %v2689
        %3193 = vmatprep.subr.bf16.mxu0 %v2706
        %3194 = vmatpush1.bf16.msra.mxu0 %v2705
        %3195 = vmatprep.subr.bf16.mxu0 %v2722
        %3196 = vmatpush1.bf16.msra.mxu0 %v2721
        %3197 = vmatprep.subr.bf16.mxu0 %v2738
        %3198 = vmatpush1.bf16.msra.mxu0 %v2737
        %3199 = vmatprep.subr.bf16.mxu0 %v2754
        %3200 = vmatpush1.bf16.msra.mxu0 %v2753
        %3201 = vmatprep.subr.bf16.mxu0 %v2770
        %3202 = vmatpush1.bf16.msra.mxu0 %v2769
        %3203 = vmatprep.subr.bf16.mxu0 %v2786
        %3204 = vmatpush1.bf16.msra.mxu0 %v2785
        %3205 = vmatprep.subr.bf16.mxu0 %v2802
        %3206 = vmatpush1.bf16.msra.mxu0 %v2801
        %3207 = vmatprep.subr.bf16.mxu0 0
        %3208 = vmatpush1.bf16.msra.mxu0 0
        %3209 = vmatprep.subr.bf16.mxu0 0
        %3210 = vmatpush1.bf16.msra.mxu0 0
        %3211 = vmatprep.subr.bf16.mxu0 0
        %3212 = vmatpush1.bf16.msra.mxu0 0
        %3213 = vmatprep.subr.bf16.mxu0 0
        %3214 = vmatpush1.bf16.msra.mxu0 0
        %3215 = vmatprep.subr.bf16.mxu0 0
        %3216 = vmatpush1.bf16.msra.mxu0 0
        %3217 = vmatprep.subr.bf16.mxu0 0
        %3218 = vmatpush1.bf16.msra.mxu0 0
        %3219 = vmatprep.subr.bf16.mxu0 0
        %3220 = vmatpush1.bf16.msra.mxu0 0
        %3221 = vmatprep.subr.bf16.mxu0 0
        %3222 = vmatpush1.bf16.msra.mxu0 0
        %3223 = vmatprep.mubr.bf16.mxu0 0
        %3224 = vmatmul.mubr.bf16.gmra.mrb[0].mxu0 %v1862
        %v3225 = vpop.f32.mrb[0].mxu0
        %v3226 = vadd.f32 %v2264, %v3225
        %v3227 = vpop.f32.mrb[0].mxu0
        %v3228 = vadd.f32 %v2268, %v3227
        %v3229 = vpop.f32.mrb[0].mxu0
        %v3230 = vadd.f32 %v2264, %v3229
        %v3231 = vpop.f32.mrb[0].mxu0
        %v3232 = vadd.f32 %v2268, %v3231
        %3233 = vdwg.mxu0
        %3234 = vmatprep.subr.bf16.mxu0 %v2692
        %3235 = vmatpush1.bf16.msra.mxu0 %v2691
        %3236 = vmatprep.subr.bf16.mxu0 %v2708
        %3237 = vmatpush1.bf16.msra.mxu0 %v2707
        %3238 = vmatprep.subr.bf16.mxu0 %v2724
        %3239 = vmatpush1.bf16.msra.mxu0 %v2723
        %3240 = vmatprep.subr.bf16.mxu0 %v2740
        %3241 = vmatpush1.bf16.msra.mxu0 %v2739
        %3242 = vmatprep.subr.bf16.mxu0 %v2756
        %3243 = vmatpush1.bf16.msra.mxu0 %v2755
        %3244 = vmatprep.subr.bf16.mxu0 %v2772
        %3245 = vmatpush1.bf16.msra.mxu0 %v2771
        %3246 = vmatprep.subr.bf16.mxu0 %v2788
        %3247 = vmatpush1.bf16.msra.mxu0 %v2787
        %3248 = vmatprep.subr.bf16.mxu0 %v2804
        %3249 = vmatpush1.bf16.msra.mxu0 %v2803
        %3250 = vmatprep.subr.bf16.mxu0 0
        %3251 = vmatpush1.bf16.msra.mxu0 0
        %3252 = vmatprep.subr.bf16.mxu0 0
        %3253 = vmatpush1.bf16.msra.mxu0 0
        %3254 = vmatprep.subr.bf16.mxu0 0
        %3255 = vmatpush1.bf16.msra.mxu0 0
        %3256 = vmatprep.subr.bf16.mxu0 0
        %3257 = vmatpush1.bf16.msra.mxu0 0
        %3258 = vmatprep.subr.bf16.mxu0 0
        %3259 = vmatpush1.bf16.msra.mxu0 0
        %3260 = vmatprep.subr.bf16.mxu0 0
        %3261 = vmatpush1.bf16.msra.mxu0 0
        %3262 = vmatprep.subr.bf16.mxu0 0
        %3263 = vmatpush1.bf16.msra.mxu0 0
        %3264 = vmatprep.subr.bf16.mxu0 0
        %3265 = vmatpush1.bf16.msra.mxu0 0
        %3266 = vmatprep.mubr.bf16.mxu0 0
        %3267 = vmatmul.mubr.bf16.gmra.mrb[0].mxu0 %v1862
        %v3268 = vpop.f32.mrb[0].mxu0
        %v3269 = vadd.f32 %v2272, %v3268
        %v3270 = vpop.f32.mrb[0].mxu0
        %v3271 = vadd.f32 %v2276, %v3270
        %v3272 = vpop.f32.mrb[0].mxu0
        %v3273 = vadd.f32 %v2272, %v3272
        %v3274 = vpop.f32.mrb[0].mxu0
        %v3275 = vadd.f32 %v2276, %v3274
        %3276 = vdwg.mxu0
        %v3277 = vmax.f32 %v2968, 0.0
        %v3278 = vmax.f32 %v2970, 0.0
        %v3279 = vmax.f32 %v3011, 0.0
        %v3280 = vmax.f32 %v3013, 0.0
        %v3281 = vmax.f32 %v3054, 0.0
        %v3282 = vmax.f32 %v3056, 0.0
        %v3283 = vmax.f32 %v3097, 0.0
        %v3284 = vmax.f32 %v3099, 0.0
        %v3285 = vmax.f32 %v3140, 0.0
        %v3286 = vmax.f32 %v3142, 0.0
        %v3287 = vmax.f32 %v3183, 0.0
        %v3288 = vmax.f32 %v3185, 0.0
        %v3289 = vmax.f32 %v3226, 0.0
        %v3290 = vmax.f32 %v3228, 0.0
        %v3291 = vmax.f32 %v3269, 0.0
        %v3292 = vmax.f32 %v3271, 0.0
        %v3293 = vmax.f32 %v2972, 0.0
        %v3294 = vmax.f32 %v2974, 0.0
        %v3295 = vmax.f32 %v3015, 0.0
        %v3296 = vmax.f32 %v3017, 0.0
        %v3297 = vmax.f32 %v3058, 0.0
        %v3298 = vmax.f32 %v3060, 0.0
        %v3299 = vmax.f32 %v3101, 0.0
        %v3300 = vmax.f32 %v3103, 0.0
        %v3301 = vmax.f32 %v3144, 0.0
        %v3302 = vmax.f32 %v3146, 0.0
        %v3303 = vmax.f32 %v3187, 0.0
        %v3304 = vmax.f32 %v3189, 0.0
        %v3305 = vmax.f32 %v3230, 0.0
        %v3306 = vmax.f32 %v3232, 0.0
        %v3307 = vmax.f32 %v3273, 0.0
        %v3308 = vmax.f32 %v3275, 0.0
        %3310 = vset.pattern.permute.xlu0 0
        %3311 = vperm.xlu0 %3310, %v2079
        %v3312 = vpop.permute.xlu0 %3311
        %3315 = vset.pattern.permute.xlu0 0
        %3316 = vperm.xlu0 %3315, %v2080
        %v3317 = vpop.permute.xlu0 %3316
        %3319 = vset.pattern.permute.xlu0 1
        %3320 = vperm.xlu0 %3319, %v2079
        %v3321 = vpop.permute.xlu0 %3320
        %3323 = vset.pattern.permute.xlu0 1
        %3324 = vperm.xlu0 %3323, %v2080
        %v3325 = vpop.permute.xlu0 %3324
        %3327 = vset.pattern.permute.xlu0 2
        %3328 = vperm.xlu0 %3327, %v2079
        %v3329 = vpop.permute.xlu0 %3328
        %3331 = vset.pattern.permute.xlu0 2
        %3332 = vperm.xlu0 %3331, %v2080
        %v3333 = vpop.permute.xlu0 %3332
        %3335 = vset.pattern.permute.xlu0 3
        %3336 = vperm.xlu0 %3335, %v2079
        %v3337 = vpop.permute.xlu0 %3336
        %3339 = vset.pattern.permute.xlu0 3
        %3340 = vperm.xlu0 %3339, %v2080
        %v3341 = vpop.permute.xlu0 %3340
        %v3343 = vmul.f32 %v3277, %v3312
        %v3344 = vmul.f32 %v3278, %v3312
        %v3345 = vmul.f32 %v3279, %v3312
        %v3346 = vmul.f32 %v3280, %v3312
        %v3347 = vmul.f32 %v3281, %v3321
        %v3348 = vmul.f32 %v3282, %v3321
        %v3349 = vmul.f32 %v3283, %v3321
        %v3350 = vmul.f32 %v3284, %v3321
        %v3351 = vmul.f32 %v3285, %v3329
        %v3352 = vmul.f32 %v3286, %v3329
        %v3353 = vmul.f32 %v3287, %v3329
        %v3354 = vmul.f32 %v3288, %v3329
        %v3355 = vmul.f32 %v3289, %v3337
        %v3356 = vmul.f32 %v3290, %v3337
        %v3357 = vmul.f32 %v3291, %v3337
        %v3358 = vmul.f32 %v3292, %v3337
        %v3359 = vmul.f32 %v3293, %v3317
        %v3360 = vmul.f32 %v3294, %v3317
        %v3361 = vmul.f32 %v3295, %v3317
        %v3362 = vmul.f32 %v3296, %v3317
        %v3363 = vmul.f32 %v3297, %v3325
        %v3364 = vmul.f32 %v3298, %v3325
        %v3365 = vmul.f32 %v3299, %v3325
        %v3366 = vmul.f32 %v3300, %v3325
        %v3367 = vmul.f32 %v3301, %v3333
        %v3368 = vmul.f32 %v3302, %v3333
        %v3369 = vmul.f32 %v3303, %v3333
        %v3370 = vmul.f32 %v3304, %v3333
        %v3371 = vmul.f32 %v3305, %v3341
        %v3372 = vmul.f32 %v3306, %v3341
        %v3373 = vmul.f32 %v3307, %v3341
        %v3374 = vmul.f32 %v3308, %v3341
        %v3375 = vpack.c.bf16 %v3359, %v3343
        %v3376 = vpack.c.bf16 %v3360, %v3344
        %v3377 = vpack.c.bf16 %v3361, %v3345
        %v3378 = vpack.c.bf16 %v3362, %v3346
        %v3379 = vpack.c.bf16 %v3363, %v3347
        %v3380 = vpack.c.bf16 %v3364, %v3348
        %v3381 = vpack.c.bf16 %v3365, %v3349
        %v3382 = vpack.c.bf16 %v3366, %v3350
        %v3383 = vpack.c.bf16 %v3367, %v3351
        %v3384 = vpack.c.bf16 %v3368, %v3352
        %v3385 = vpack.c.bf16 %v3369, %v3353
        %v3386 = vpack.c.bf16 %v3370, %v3354
        %v3387 = vpack.c.bf16 %v3371, %v3355
        %v3388 = vpack.c.bf16 %v3372, %v3356
        %v3389 = vpack.c.bf16 %v3373, %v3357
        %v3390 = vpack.c.bf16 %v3374, %v3358
        %v3391 = vld [vmem:[#allocation13] sm:$0xf]
        %v3392 = vld [vmem:[#allocation13 + $0x4] sm:$0xf]
        %v3393 = vld [vmem:[#allocation13 + $0x8] sm:$0xf]
        %v3394 = vld [vmem:[#allocation13 + $0xc] sm:$0xf]
        %v3395 = vld [vmem:[#allocation13 + $0x10] sm:$0xf]
        %v3396 = vld [vmem:[#allocation13 + $0x14] sm:$0xf]
        %v3397 = vld [vmem:[#allocation13 + $0x18] sm:$0xf]
        %v3398 = vld [vmem:[#allocation13 + $0x1c] sm:$0xf]
        %v3399 = vld [vmem:[#allocation13 + $0x20] sm:$0xf]
        %v3400 = vld [vmem:[#allocation13 + $0x24] sm:$0xf]
        %v3401 = vld [vmem:[#allocation13 + $0x28] sm:$0xf]
        %v3402 = vld [vmem:[#allocation13 + $0x2c] sm:$0xf]
        %v3403 = vld [vmem:[#allocation13 + $0x30] sm:$0xf]
        %v3404 = vld [vmem:[#allocation13 + $0x34] sm:$0xf]
        %v3405 = vld [vmem:[#allocation13 + $0x38] sm:$0xf]
        %v3406 = vld [vmem:[#allocation13 + $0x3c] sm:$0xf]
        %v3407 = vld [vmem:[#allocation13 + $0x40] sm:$0xf]
        %v3408 = vld [vmem:[#allocation13 + $0x44] sm:$0xf]
        %v3409 = vld [vmem:[#allocation13 + $0x48] sm:$0xf]
        %v3410 = vld [vmem:[#allocation13 + $0x4c] sm:$0xf]
        %v3411 = vld [vmem:[#allocation13 + $0x50] sm:$0xf]
        %v3412 = vld [vmem:[#allocation13 + $0x54] sm:$0xf]
        %v3413 = vld [vmem:[#allocation13 + $0x58] sm:$0xf]
        %v3414 = vld [vmem:[#allocation13 + $0x5c] sm:$0xf]
        %v3415 = vld [vmem:[#allocation13 + $0x60] sm:$0xf]
        %v3416 = vld [vmem:[#allocation13 + $0x64] sm:$0xf]
        %v3417 = vld [vmem:[#allocation13 + $0x68] sm:$0xf]
        %v3418 = vld [vmem:[#allocation13 + $0x6c] sm:$0xf]
        %v3419 = vld [vmem:[#allocation13 + $0x70] sm:$0xf]
        %v3420 = vld [vmem:[#allocation13 + $0x74] sm:$0xf]
        %v3421 = vld [vmem:[#allocation13 + $0x78] sm:$0xf]
        %v3422 = vld [vmem:[#allocation13 + $0x7c] sm:$0xf]
        %v3423 = vld [vmem:[#allocation13 + $0x80] sm:$0xf]
        %v3424 = vld [vmem:[#allocation13 + $0x84] sm:$0xf]
        %v3425 = vld [vmem:[#allocation13 + $0x88] sm:$0xf]
        %v3426 = vld [vmem:[#allocation13 + $0x8c] sm:$0xf]
        %v3427 = vld [vmem:[#allocation13 + $0x90] sm:$0xf]
        %v3428 = vld [vmem:[#allocation13 + $0x94] sm:$0xf]
        %v3429 = vld [vmem:[#allocation13 + $0x98] sm:$0xf]
        %v3430 = vld [vmem:[#allocation13 + $0x9c] sm:$0xf]
        %v3431 = vld [vmem:[#allocation13 + $0xa0] sm:$0xf]
        %v3432 = vld [vmem:[#allocation13 + $0xa4] sm:$0xf]
        %v3433 = vld [vmem:[#allocation13 + $0xa8] sm:$0xf]
        %v3434 = vld [vmem:[#allocation13 + $0xac] sm:$0xf]
        %v3435 = vld [vmem:[#allocation13 + $0xb0] sm:$0xf]
        %v3436 = vld [vmem:[#allocation13 + $0xb4] sm:$0xf]
        %v3437 = vld [vmem:[#allocation13 + $0xb8] sm:$0xf]
        %v3438 = vld [vmem:[#allocation13 + $0xbc] sm:$0xf]
        %v3439 = vld [vmem:[#allocation13 + $0xc0] sm:$0xf]
        %v3440 = vld [vmem:[#allocation13 + $0xc4] sm:$0xf]
        %v3441 = vld [vmem:[#allocation13 + $0xc8] sm:$0xf]
        %v3442 = vld [vmem:[#allocation13 + $0xcc] sm:$0xf]
        %v3443 = vld [vmem:[#allocation13 + $0xd0] sm:$0xf]
        %v3444 = vld [vmem:[#allocation13 + $0xd4] sm:$0xf]
        %v3445 = vld [vmem:[#allocation13 + $0xd8] sm:$0xf]
        %v3446 = vld [vmem:[#allocation13 + $0xdc] sm:$0xf]
        %v3447 = vld [vmem:[#allocation13 + $0xe0] sm:$0xf]
        %v3448 = vld [vmem:[#allocation13 + $0xe4] sm:$0xf]
        %v3449 = vld [vmem:[#allocation13 + $0xe8] sm:$0xf]
        %v3450 = vld [vmem:[#allocation13 + $0xec] sm:$0xf]
        %v3451 = vld [vmem:[#allocation13 + $0xf0] sm:$0xf]
        %v3452 = vld [vmem:[#allocation13 + $0xf4] sm:$0xf]
        %v3453 = vld [vmem:[#allocation13 + $0xf8] sm:$0xf]
        %v3454 = vld [vmem:[#allocation13 + $0xfc] sm:$0xf]
        %v3455 = vld [vmem:[#allocation13 + $0x100] sm:$0xf]
        %v3456 = vld [vmem:[#allocation13 + $0x104] sm:$0xf]
        %v3457 = vld [vmem:[#allocation13 + $0x108] sm:$0xf]
        %v3458 = vld [vmem:[#allocation13 + $0x10c] sm:$0xf]
        %v3459 = vld [vmem:[#allocation13 + $0x110] sm:$0xf]
        %v3460 = vld [vmem:[#allocation13 + $0x114] sm:$0xf]
        %v3461 = vld [vmem:[#allocation13 + $0x118] sm:$0xf]
        %v3462 = vld [vmem:[#allocation13 + $0x11c] sm:$0xf]
        %v3463 = vld [vmem:[#allocation13 + $0x120] sm:$0xf]
        %v3464 = vld [vmem:[#allocation13 + $0x124] sm:$0xf]
        %v3465 = vld [vmem:[#allocation13 + $0x128] sm:$0xf]
        %v3466 = vld [vmem:[#allocation13 + $0x12c] sm:$0xf]
        %v3467 = vld [vmem:[#allocation13 + $0x130] sm:$0xf]
        %v3468 = vld [vmem:[#allocation13 + $0x134] sm:$0xf]
        %v3469 = vld [vmem:[#allocation13 + $0x138] sm:$0xf]
        %v3470 = vld [vmem:[#allocation13 + $0x13c] sm:$0xf]
        %v3471 = vld [vmem:[#allocation13 + $0x140] sm:$0xf]
        %v3472 = vld [vmem:[#allocation13 + $0x144] sm:$0xf]
        %v3473 = vld [vmem:[#allocation13 + $0x148] sm:$0xf]
        %v3474 = vld [vmem:[#allocation13 + $0x14c] sm:$0xf]
        %v3475 = vld [vmem:[#allocation13 + $0x150] sm:$0xf]
        %v3476 = vld [vmem:[#allocation13 + $0x154] sm:$0xf]
        %v3477 = vld [vmem:[#allocation13 + $0x158] sm:$0xf]
        %v3478 = vld [vmem:[#allocation13 + $0x15c] sm:$0xf]
        %v3479 = vld [vmem:[#allocation13 + $0x160] sm:$0xf]
        %v3480 = vld [vmem:[#allocation13 + $0x164] sm:$0xf]
        %v3481 = vld [vmem:[#allocation13 + $0x168] sm:$0xf]
        %v3482 = vld [vmem:[#allocation13 + $0x16c] sm:$0xf]
        %v3483 = vld [vmem:[#allocation13 + $0x170] sm:$0xf]
        %v3484 = vld [vmem:[#allocation13 + $0x174] sm:$0xf]
        %v3485 = vld [vmem:[#allocation13 + $0x178] sm:$0xf]
        %v3486 = vld [vmem:[#allocation13 + $0x17c] sm:$0xf]
        %v3487 = vld [vmem:[#allocation13 + $0x180] sm:$0xf]
        %v3488 = vld [vmem:[#allocation13 + $0x184] sm:$0xf]
        %v3489 = vld [vmem:[#allocation13 + $0x188] sm:$0xf]
        %v3490 = vld [vmem:[#allocation13 + $0x18c] sm:$0xf]
        %v3491 = vld [vmem:[#allocation13 + $0x190] sm:$0xf]
        %v3492 = vld [vmem:[#allocation13 + $0x194] sm:$0xf]
        %v3493 = vld [vmem:[#allocation13 + $0x198] sm:$0xf]
        %v3494 = vld [vmem:[#allocation13 + $0x19c] sm:$0xf]
        %v3495 = vld [vmem:[#allocation13 + $0x1a0] sm:$0xf]
        %v3496 = vld [vmem:[#allocation13 + $0x1a4] sm:$0xf]
        %v3497 = vld [vmem:[#allocation13 + $0x1a8] sm:$0xf]
        %v3498 = vld [vmem:[#allocation13 + $0x1ac] sm:$0xf]
        %v3499 = vld [vmem:[#allocation13 + $0x1b0] sm:$0xf]
        %v3500 = vld [vmem:[#allocation13 + $0x1b4] sm:$0xf]
        %v3501 = vld [vmem:[#allocation13 + $0x1b8] sm:$0xf]
        %v3502 = vld [vmem:[#allocation13 + $0x1bc] sm:$0xf]
        %v3503 = vld [vmem:[#allocation13 + $0x1c0] sm:$0xf]
        %v3504 = vld [vmem:[#allocation13 + $0x1c4] sm:$0xf]
        %v3505 = vld [vmem:[#allocation13 + $0x1c8] sm:$0xf]
        %v3506 = vld [vmem:[#allocation13 + $0x1cc] sm:$0xf]
        %v3507 = vld [vmem:[#allocation13 + $0x1d0] sm:$0xf]
        %v3508 = vld [vmem:[#allocation13 + $0x1d4] sm:$0xf]
        %v3509 = vld [vmem:[#allocation13 + $0x1d8] sm:$0xf]
        %v3510 = vld [vmem:[#allocation13 + $0x1dc] sm:$0xf]
        %v3511 = vld [vmem:[#allocation13 + $0x1e0] sm:$0xf]
        %v3512 = vld [vmem:[#allocation13 + $0x1e4] sm:$0xf]
        %v3513 = vld [vmem:[#allocation13 + $0x1e8] sm:$0xf]
        %v3514 = vld [vmem:[#allocation13 + $0x1ec] sm:$0xf]
        %v3515 = vld [vmem:[#allocation13 + $0x1f0] sm:$0xf]
        %v3516 = vld [vmem:[#allocation13 + $0x1f4] sm:$0xf]
        %v3517 = vld [vmem:[#allocation13 + $0x1f8] sm:$0xf]
        %v3518 = vld [vmem:[#allocation13 + $0x1fc] sm:$0xf]
        %v3519 = vld [vmem:[#allocation13 + $0x200] sm:$0xf]
        %v3520 = vld [vmem:[#allocation13 + $0x204] sm:$0xf]
        %v3521 = vld [vmem:[#allocation13 + $0x208] sm:$0xf]
        %v3522 = vld [vmem:[#allocation13 + $0x20c] sm:$0xf]
        %v3523 = vld [vmem:[#allocation13 + $0x210] sm:$0xf]
        %v3524 = vld [vmem:[#allocation13 + $0x214] sm:$0xf]
        %v3525 = vld [vmem:[#allocation13 + $0x218] sm:$0xf]
        %v3526 = vld [vmem:[#allocation13 + $0x21c] sm:$0xf]
        %v3527 = vld [vmem:[#allocation13 + $0x220] sm:$0xf]
        %v3528 = vld [vmem:[#allocation13 + $0x224] sm:$0xf]
        %v3529 = vld [vmem:[#allocation13 + $0x228] sm:$0xf]
        %v3530 = vld [vmem:[#allocation13 + $0x22c] sm:$0xf]
        %v3531 = vld [vmem:[#allocation13 + $0x230] sm:$0xf]
        %v3532 = vld [vmem:[#allocation13 + $0x234] sm:$0xf]
        %v3533 = vld [vmem:[#allocation13 + $0x238] sm:$0xf]
        %v3534 = vld [vmem:[#allocation13 + $0x23c] sm:$0xf]
        %v3535 = vld [vmem:[#allocation13 + $0x240] sm:$0xf]
        %v3536 = vld [vmem:[#allocation13 + $0x244] sm:$0xf]
        %v3537 = vld [vmem:[#allocation13 + $0x248] sm:$0xf]
        %v3538 = vld [vmem:[#allocation13 + $0x24c] sm:$0xf]
        %v3539 = vld [vmem:[#allocation13 + $0x250] sm:$0xf]
        %v3540 = vld [vmem:[#allocation13 + $0x254] sm:$0xf]
        %v3541 = vld [vmem:[#allocation13 + $0x258] sm:$0xf]
        %v3542 = vld [vmem:[#allocation13 + $0x25c] sm:$0xf]
        %v3543 = vld [vmem:[#allocation13 + $0x260] sm:$0xf]
        %v3544 = vld [vmem:[#allocation13 + $0x264] sm:$0xf]
        %v3545 = vld [vmem:[#allocation13 + $0x268] sm:$0xf]
        %v3546 = vld [vmem:[#allocation13 + $0x26c] sm:$0xf]
        %v3547 = vld [vmem:[#allocation13 + $0x270] sm:$0xf]
        %v3548 = vld [vmem:[#allocation13 + $0x274] sm:$0xf]
        %v3549 = vld [vmem:[#allocation13 + $0x278] sm:$0xf]
        %v3550 = vld [vmem:[#allocation13 + $0x27c] sm:$0xf]
        %v3551 = vld [vmem:[#allocation13 + $0x280] sm:$0xf]
        %v3552 = vld [vmem:[#allocation13 + $0x284] sm:$0xf]
        %v3553 = vld [vmem:[#allocation13 + $0x288] sm:$0xf]
        %v3554 = vld [vmem:[#allocation13 + $0x28c] sm:$0xf]
        %v3555 = vld [vmem:[#allocation13 + $0x290] sm:$0xf]
        %v3556 = vld [vmem:[#allocation13 + $0x294] sm:$0xf]
        %v3557 = vld [vmem:[#allocation13 + $0x298] sm:$0xf]
        %v3558 = vld [vmem:[#allocation13 + $0x29c] sm:$0xf]
        %v3559 = vld [vmem:[#allocation13 + $0x2a0] sm:$0xf]
        %v3560 = vld [vmem:[#allocation13 + $0x2a4] sm:$0xf]
        %v3561 = vld [vmem:[#allocation13 + $0x2a8] sm:$0xf]
        %v3562 = vld [vmem:[#allocation13 + $0x2ac] sm:$0xf]
        %v3563 = vld [vmem:[#allocation13 + $0x2b0] sm:$0xf]
        %v3564 = vld [vmem:[#allocation13 + $0x2b4] sm:$0xf]
        %v3565 = vld [vmem:[#allocation13 + $0x2b8] sm:$0xf]
        %v3566 = vld [vmem:[#allocation13 + $0x2bc] sm:$0xf]
        %v3567 = vld [vmem:[#allocation13 + $0x2c0] sm:$0xf]
        %v3568 = vld [vmem:[#allocation13 + $0x2c4] sm:$0xf]
        %v3569 = vld [vmem:[#allocation13 + $0x2c8] sm:$0xf]
        %v3570 = vld [vmem:[#allocation13 + $0x2cc] sm:$0xf]
        %v3571 = vld [vmem:[#allocation13 + $0x2d0] sm:$0xf]
        %v3572 = vld [vmem:[#allocation13 + $0x2d4] sm:$0xf]
        %v3573 = vld [vmem:[#allocation13 + $0x2d8] sm:$0xf]
        %v3574 = vld [vmem:[#allocation13 + $0x2dc] sm:$0xf]
        %v3575 = vld [vmem:[#allocation13 + $0x2e0] sm:$0xf]
        %v3576 = vld [vmem:[#allocation13 + $0x2e4] sm:$0xf]
        %v3577 = vld [vmem:[#allocation13 + $0x2e8] sm:$0xf]
        %v3578 = vld [vmem:[#allocation13 + $0x2ec] sm:$0xf]
        %v3579 = vld [vmem:[#allocation13 + $0x2f0] sm:$0xf]
        %v3580 = vld [vmem:[#allocation13 + $0x2f4] sm:$0xf]
        %v3581 = vld [vmem:[#allocation13 + $0x2f8] sm:$0xf]
        %v3582 = vld [vmem:[#allocation13 + $0x2fc] sm:$0xf]
        %v3583 = vld [vmem:[#allocation13 + $0x300] sm:$0xf]
        %v3584 = vld [vmem:[#allocation13 + $0x304] sm:$0xf]
        %v3585 = vld [vmem:[#allocation13 + $0x308] sm:$0xf]
        %v3586 = vld [vmem:[#allocation13 + $0x30c] sm:$0xf]
        %v3587 = vld [vmem:[#allocation13 + $0x310] sm:$0xf]
        %v3588 = vld [vmem:[#allocation13 + $0x314] sm:$0xf]
        %v3589 = vld [vmem:[#allocation13 + $0x318] sm:$0xf]
        %v3590 = vld [vmem:[#allocation13 + $0x31c] sm:$0xf]
        %v3591 = vld [vmem:[#allocation13 + $0x320] sm:$0xf]
        %v3592 = vld [vmem:[#allocation13 + $0x324] sm:$0xf]
        %v3593 = vld [vmem:[#allocation13 + $0x328] sm:$0xf]
        %v3594 = vld [vmem:[#allocation13 + $0x32c] sm:$0xf]
        %v3595 = vld [vmem:[#allocation13 + $0x330] sm:$0xf]
        %v3596 = vld [vmem:[#allocation13 + $0x334] sm:$0xf]
        %v3597 = vld [vmem:[#allocation13 + $0x338] sm:$0xf]
        %v3598 = vld [vmem:[#allocation13 + $0x33c] sm:$0xf]
        %v3599 = vld [vmem:[#allocation13 + $0x340] sm:$0xf]
        %v3600 = vld [vmem:[#allocation13 + $0x344] sm:$0xf]
        %v3601 = vld [vmem:[#allocation13 + $0x348] sm:$0xf]
        %v3602 = vld [vmem:[#allocation13 + $0x34c] sm:$0xf]
        %v3603 = vld [vmem:[#allocation13 + $0x350] sm:$0xf]
        %v3604 = vld [vmem:[#allocation13 + $0x354] sm:$0xf]
        %v3605 = vld [vmem:[#allocation13 + $0x358] sm:$0xf]
        %v3606 = vld [vmem:[#allocation13 + $0x35c] sm:$0xf]
        %v3607 = vld [vmem:[#allocation13 + $0x360] sm:$0xf]
        %v3608 = vld [vmem:[#allocation13 + $0x364] sm:$0xf]
        %v3609 = vld [vmem:[#allocation13 + $0x368] sm:$0xf]
        %v3610 = vld [vmem:[#allocation13 + $0x36c] sm:$0xf]
        %v3611 = vld [vmem:[#allocation13 + $0x370] sm:$0xf]
        %v3612 = vld [vmem:[#allocation13 + $0x374] sm:$0xf]
        %v3613 = vld [vmem:[#allocation13 + $0x378] sm:$0xf]
        %v3614 = vld [vmem:[#allocation13 + $0x37c] sm:$0xf]
        %v3615 = vld [vmem:[#allocation13 + $0x380] sm:$0xf]
        %v3616 = vld [vmem:[#allocation13 + $0x384] sm:$0xf]
        %v3617 = vld [vmem:[#allocation13 + $0x388] sm:$0xf]
        %v3618 = vld [vmem:[#allocation13 + $0x38c] sm:$0xf]
        %v3619 = vld [vmem:[#allocation13 + $0x390] sm:$0xf]
        %v3620 = vld [vmem:[#allocation13 + $0x394] sm:$0xf]
        %v3621 = vld [vmem:[#allocation13 + $0x398] sm:$0xf]
        %v3622 = vld [vmem:[#allocation13 + $0x39c] sm:$0xf]
        %v3623 = vld [vmem:[#allocation13 + $0x3a0] sm:$0xf]
        %v3624 = vld [vmem:[#allocation13 + $0x3a4] sm:$0xf]
        %v3625 = vld [vmem:[#allocation13 + $0x3a8] sm:$0xf]
        %v3626 = vld [vmem:[#allocation13 + $0x3ac] sm:$0xf]
        %v3627 = vld [vmem:[#allocation13 + $0x3b0] sm:$0xf]
        %v3628 = vld [vmem:[#allocation13 + $0x3b4] sm:$0xf]
        %v3629 = vld [vmem:[#allocation13 + $0x3b8] sm:$0xf]
        %v3630 = vld [vmem:[#allocation13 + $0x3bc] sm:$0xf]
        %v3631 = vld [vmem:[#allocation13 + $0x3c0] sm:$0xf]
        %v3632 = vld [vmem:[#allocation13 + $0x3c4] sm:$0xf]
        %v3633 = vld [vmem:[#allocation13 + $0x3c8] sm:$0xf]
        %v3634 = vld [vmem:[#allocation13 + $0x3cc] sm:$0xf]
        %v3635 = vld [vmem:[#allocation13 + $0x3d0] sm:$0xf]
        %v3636 = vld [vmem:[#allocation13 + $0x3d4] sm:$0xf]
        %v3637 = vld [vmem:[#allocation13 + $0x3d8] sm:$0xf]
        %v3638 = vld [vmem:[#allocation13 + $0x3dc] sm:$0xf]
        %v3639 = vld [vmem:[#allocation13 + $0x3e0] sm:$0xf]
        %v3640 = vld [vmem:[#allocation13 + $0x3e4] sm:$0xf]
        %v3641 = vld [vmem:[#allocation13 + $0x3e8] sm:$0xf]
        %v3642 = vld [vmem:[#allocation13 + $0x3ec] sm:$0xf]
        %v3643 = vld [vmem:[#allocation13 + $0x3f0] sm:$0xf]
        %v3644 = vld [vmem:[#allocation13 + $0x3f4] sm:$0xf]
        %v3645 = vld [vmem:[#allocation13 + $0x3f8] sm:$0xf]
        %v3646 = vld [vmem:[#allocation13 + $0x3fc] sm:$0xf]
        %v3647 = vld [vmem:[#allocation14] sm:$0xff]
        %v3648 = vld [vmem:[#allocation14 + $0x8] sm:$0xff]
        %v3649 = vld [vmem:[#allocation14 + $0x10] sm:$0xff]
        %v3650 = vld [vmem:[#allocation14 + $0x18] sm:$0xff]
        %v3651 = vld [vmem:[#allocation14 + $0x20] sm:$0xff]
        %v3652 = vld [vmem:[#allocation14 + $0x28] sm:$0xff]
        %v3653 = vld [vmem:[#allocation14 + $0x30] sm:$0xff]
        %v3654 = vld [vmem:[#allocation14 + $0x38] sm:$0xff]
        %v3655 = vld [vmem:[#allocation14 + $0x40] sm:$0xff]
        %v3656 = vld [vmem:[#allocation14 + $0x48] sm:$0xff]
        %v3657 = vld [vmem:[#allocation14 + $0x50] sm:$0xff]
        %v3658 = vld [vmem:[#allocation14 + $0x58] sm:$0xff]
        %v3659 = vld [vmem:[#allocation14 + $0x60] sm:$0xff]
        %v3660 = vld [vmem:[#allocation14 + $0x68] sm:$0xff]
        %v3661 = vld [vmem:[#allocation14 + $0x70] sm:$0xff]
        %v3662 = vld [vmem:[#allocation14 + $0x78] sm:$0xff]
        %3663 = vmatprep.subr.mxu0 0.0
        %3664 = vmatpush1.msra.mxu0 %v3647
        %3665 = vmatprep.subr.mxu0 0.0
        %3666 = vmatpush1.msra.mxu0 %v3648
        %3667 = vmatprep.subr.mxu0 0.0
        %3668 = vmatpush1.msra.mxu0 %v3649
        %3669 = vmatprep.subr.mxu0 0.0
        %3670 = vmatpush1.msra.mxu0 %v3650
        %3671 = vmatprep.subr.mxu0 0.0
        %3672 = vmatpush1.msra.mxu0 %v3651
        %3673 = vmatprep.subr.mxu0 0.0
        %3674 = vmatpush1.msra.mxu0 %v3652
        %3675 = vmatprep.subr.mxu0 0.0
        %3676 = vmatpush1.msra.mxu0 %v3653
        %3677 = vmatprep.subr.mxu0 0.0
        %3678 = vmatpush1.msra.mxu0 %v3654
        %3679 = vmatprep.subr.mxu0 0.0
        %3680 = vmatpush1.msra.mxu0 %v3655
        %3681 = vmatprep.subr.mxu0 0.0
        %3682 = vmatpush1.msra.mxu0 %v3656
        %3683 = vmatprep.subr.mxu0 0.0
        %3684 = vmatpush1.msra.mxu0 %v3657
        %3685 = vmatprep.subr.mxu0 0.0
        %3686 = vmatpush1.msra.mxu0 %v3658
        %3687 = vmatprep.subr.mxu0 0.0
        %3688 = vmatpush1.msra.mxu0 %v3659
        %3689 = vmatprep.subr.mxu0 0.0
        %3690 = vmatpush1.msra.mxu0 %v3660
        %3691 = vmatprep.subr.mxu0 0.0
        %3692 = vmatpush1.msra.mxu0 %v3661
        %3693 = vmatprep.subr.mxu0 0.0
        %3694 = vmatpush1.msra.mxu0 %v3662
        %3695 = vmatprep.subr.mxu0 0.0
        %3696 = vmatpush1.msra.mxu0 0.0
        %3697 = vmatprep.subr.mxu0 0.0
        %3698 = vmatpush1.msra.mxu0 0.0
        %3699 = vmatprep.subr.mxu0 0.0
        %3700 = vmatpush1.msra.mxu0 0.0
        %3701 = vmatprep.subr.mxu0 0.0
        %3702 = vmatpush1.msra.mxu0 0.0
        %3703 = vmatprep.subr.mxu0 0.0
        %3704 = vmatpush1.msra.mxu0 0.0
        %3705 = vmatprep.subr.mxu0 0.0
        %3706 = vmatpush1.msra.mxu0 0.0
        %3707 = vmatprep.subr.mxu0 0.0
        %3708 = vmatpush1.msra.mxu0 0.0
        %3709 = vmatprep.subr.mxu0 0.0
        %3710 = vmatpush1.msra.mxu0 0.0
        %3711 = vmatprep.subr.mxu0 0.0
        %3712 = vmatpush1.msra.mxu0 0.0
        %3713 = vmatprep.subr.mxu0 0.0
        %3714 = vmatpush1.msra.mxu0 0.0
        %3715 = vmatprep.subr.mxu0 0.0
        %3716 = vmatpush1.msra.mxu0 0.0
        %3717 = vmatprep.subr.mxu0 0.0
        %3718 = vmatpush1.msra.mxu0 0.0
        %3719 = vmatprep.subr.mxu0 0.0
        %3720 = vmatpush1.msra.mxu0 0.0
        %3721 = vmatprep.subr.mxu0 0.0
        %3722 = vmatpush1.msra.mxu0 0.0
        %3723 = vmatprep.subr.mxu0 0.0
        %3724 = vmatpush1.msra.mxu0 0.0
        %3725 = vmatprep.subr.mxu0 0.0
        %3726 = vmatpush1.msra.mxu0 0.0
        %3727 = vmatprep.mubr.f32.mxu0 0.0
        %3728 = vmatmul.mubr.f32.gmra.mrb[0].mxu0 %v2079
        %v3729 = vpop.f32.mrb[0].mxu0
        %v3730 = vadd.f32 0.0, %v3729
        %v3731 = vpop.f32.mrb[0].mxu0
        %3732 = vmatprep.mubr.f32.mxu0 0.0
        %3733 = vmatmul.mubr.f32.gmra.mrb[0].mxu0 %v2080
        %v3734 = vpop.f32.mrb[0].mxu0
        %v3735 = vadd.f32 0.0, %v3734
        %v3736 = vpop.f32.mrb[0].mxu0
        %3737 = vdwg.mxu0
        %v3994 = vunpack.c.l.b16 %v3391
        %v3995 = vunpack.c.l.b16 %v3392
        %v3996 = vunpack.c.l.b16 %v3393
        %v3997 = vunpack.c.l.b16 %v3394
        %v3998 = vunpack.c.l.b16 %v3395
        %v3999 = vunpack.c.l.b16 %v3396
        %v4000 = vunpack.c.l.b16 %v3397
        %v4001 = vunpack.c.l.b16 %v3398
        %v4002 = vunpack.c.l.b16 %v3399
        %v4003 = vunpack.c.l.b16 %v3400
        %v4004 = vunpack.c.l.b16 %v3401
        %v4005 = vunpack.c.l.b16 %v3402
        %v4006 = vunpack.c.l.b16 %v3403
        %v4007 = vunpack.c.l.b16 %v3404
        %v4008 = vunpack.c.l.b16 %v3405
        %v4009 = vunpack.c.l.b16 %v3406
        %v4010 = vunpack.c.l.b16 %v3407
        %v4011 = vunpack.c.l.b16 %v3408
        %v4012 = vunpack.c.l.b16 %v3409
        %v4013 = vunpack.c.l.b16 %v3410
        %v4014 = vunpack.c.l.b16 %v3411
        %v4015 = vunpack.c.l.b16 %v3412
        %v4016 = vunpack.c.l.b16 %v3413
        %v4017 = vunpack.c.l.b16 %v3414
        %v4018 = vunpack.c.l.b16 %v3415
        %v4019 = vunpack.c.l.b16 %v3416
        %v4020 = vunpack.c.l.b16 %v3417
        %v4021 = vunpack.c.l.b16 %v3418
        %v4022 = vunpack.c.l.b16 %v3419
        %v4023 = vunpack.c.l.b16 %v3420
        %v4024 = vunpack.c.l.b16 %v3421
        %v4025 = vunpack.c.l.b16 %v3422
        %v4026 = vunpack.c.l.b16 %v3423
        %v4027 = vunpack.c.l.b16 %v3424
        %v4028 = vunpack.c.l.b16 %v3425
        %v4029 = vunpack.c.l.b16 %v3426
        %v4030 = vunpack.c.l.b16 %v3427
        %v4031 = vunpack.c.l.b16 %v3428
        %v4032 = vunpack.c.l.b16 %v3429
        %v4033 = vunpack.c.l.b16 %v3430
        %v4034 = vunpack.c.l.b16 %v3431
        %v4035 = vunpack.c.l.b16 %v3432
        %v4036 = vunpack.c.l.b16 %v3433
        %v4037 = vunpack.c.l.b16 %v3434
        %v4038 = vunpack.c.l.b16 %v3435
        %v4039 = vunpack.c.l.b16 %v3436
        %v4040 = vunpack.c.l.b16 %v3437
        %v4041 = vunpack.c.l.b16 %v3438
        %v4042 = vunpack.c.l.b16 %v3439
        %v4043 = vunpack.c.l.b16 %v3440
        %v4044 = vunpack.c.l.b16 %v3441
        %v4045 = vunpack.c.l.b16 %v3442
        %v4046 = vunpack.c.l.b16 %v3443
        %v4047 = vunpack.c.l.b16 %v3444
        %v4048 = vunpack.c.l.b16 %v3445
        %v4049 = vunpack.c.l.b16 %v3446
        %v4050 = vunpack.c.l.b16 %v3447
        %v4051 = vunpack.c.l.b16 %v3448
        %v4052 = vunpack.c.l.b16 %v3449
        %v4053 = vunpack.c.l.b16 %v3450
        %v4054 = vunpack.c.l.b16 %v3451
        %v4055 = vunpack.c.l.b16 %v3452
        %v4056 = vunpack.c.l.b16 %v3453
        %v4057 = vunpack.c.l.b16 %v3454
        %v4058 = vunpack.c.l.b16 %v3455
        %v4059 = vunpack.c.l.b16 %v3456
        %v4060 = vunpack.c.l.b16 %v3457
        %v4061 = vunpack.c.l.b16 %v3458
        %v4062 = vunpack.c.l.b16 %v3459
        %v4063 = vunpack.c.l.b16 %v3460
        %v4064 = vunpack.c.l.b16 %v3461
        %v4065 = vunpack.c.l.b16 %v3462
        %v4066 = vunpack.c.l.b16 %v3463
        %v4067 = vunpack.c.l.b16 %v3464
        %v4068 = vunpack.c.l.b16 %v3465
        %v4069 = vunpack.c.l.b16 %v3466
        %v4070 = vunpack.c.l.b16 %v3467
        %v4071 = vunpack.c.l.b16 %v3468
        %v4072 = vunpack.c.l.b16 %v3469
        %v4073 = vunpack.c.l.b16 %v3470
        %v4074 = vunpack.c.l.b16 %v3471
        %v4075 = vunpack.c.l.b16 %v3472
        %v4076 = vunpack.c.l.b16 %v3473
        %v4077 = vunpack.c.l.b16 %v3474
        %v4078 = vunpack.c.l.b16 %v3475
        %v4079 = vunpack.c.l.b16 %v3476
        %v4080 = vunpack.c.l.b16 %v3477
        %v4081 = vunpack.c.l.b16 %v3478
        %v4082 = vunpack.c.l.b16 %v3479
        %v4083 = vunpack.c.l.b16 %v3480
        %v4084 = vunpack.c.l.b16 %v3481
        %v4085 = vunpack.c.l.b16 %v3482
        %v4086 = vunpack.c.l.b16 %v3483
        %v4087 = vunpack.c.l.b16 %v3484
        %v4088 = vunpack.c.l.b16 %v3485
        %v4089 = vunpack.c.l.b16 %v3486
        %v4090 = vunpack.c.l.b16 %v3487
        %v4091 = vunpack.c.l.b16 %v3488
        %v4092 = vunpack.c.l.b16 %v3489
        %v4093 = vunpack.c.l.b16 %v3490
        %v4094 = vunpack.c.l.b16 %v3491
        %v4095 = vunpack.c.l.b16 %v3492
        %v4096 = vunpack.c.l.b16 %v3493
        %v4097 = vunpack.c.l.b16 %v3494
        %v4098 = vunpack.c.l.b16 %v3495
        %v4099 = vunpack.c.l.b16 %v3496
        %v4100 = vunpack.c.l.b16 %v3497
        %v4101 = vunpack.c.l.b16 %v3498
        %v4102 = vunpack.c.l.b16 %v3499
        %v4103 = vunpack.c.l.b16 %v3500
        %v4104 = vunpack.c.l.b16 %v3501
        %v4105 = vunpack.c.l.b16 %v3502
        %v4106 = vunpack.c.l.b16 %v3503
        %v4107 = vunpack.c.l.b16 %v3504
        %v4108 = vunpack.c.l.b16 %v3505
        %v4109 = vunpack.c.l.b16 %v3506
        %v4110 = vunpack.c.l.b16 %v3507
        %v4111 = vunpack.c.l.b16 %v3508
        %v4112 = vunpack.c.l.b16 %v3509
        %v4113 = vunpack.c.l.b16 %v3510
        %v4114 = vunpack.c.l.b16 %v3511
        %v4115 = vunpack.c.l.b16 %v3512
        %v4116 = vunpack.c.l.b16 %v3513
        %v4117 = vunpack.c.l.b16 %v3514
        %v4118 = vunpack.c.l.b16 %v3515
        %v4119 = vunpack.c.l.b16 %v3516
        %v4120 = vunpack.c.l.b16 %v3517
        %v4121 = vunpack.c.l.b16 %v3518
        %v4122 = vunpack.c.l.b16 %v3519
        %v4123 = vunpack.c.l.b16 %v3520
        %v4124 = vunpack.c.l.b16 %v3521
        %v4125 = vunpack.c.l.b16 %v3522
        %v4126 = vunpack.c.l.b16 %v3523
        %v4127 = vunpack.c.l.b16 %v3524
        %v4128 = vunpack.c.l.b16 %v3525
        %v4129 = vunpack.c.l.b16 %v3526
        %v4130 = vunpack.c.l.b16 %v3527
        %v4131 = vunpack.c.l.b16 %v3528
        %v4132 = vunpack.c.l.b16 %v3529
        %v4133 = vunpack.c.l.b16 %v3530
        %v4134 = vunpack.c.l.b16 %v3531
        %v4135 = vunpack.c.l.b16 %v3532
        %v4136 = vunpack.c.l.b16 %v3533
        %v4137 = vunpack.c.l.b16 %v3534
        %v4138 = vunpack.c.l.b16 %v3535
        %v4139 = vunpack.c.l.b16 %v3536
        %v4140 = vunpack.c.l.b16 %v3537
        %v4141 = vunpack.c.l.b16 %v3538
        %v4142 = vunpack.c.l.b16 %v3539
        %v4143 = vunpack.c.l.b16 %v3540
        %v4144 = vunpack.c.l.b16 %v3541
        %v4145 = vunpack.c.l.b16 %v3542
        %v4146 = vunpack.c.l.b16 %v3543
        %v4147 = vunpack.c.l.b16 %v3544
        %v4148 = vunpack.c.l.b16 %v3545
        %v4149 = vunpack.c.l.b16 %v3546
        %v4150 = vunpack.c.l.b16 %v3547
        %v4151 = vunpack.c.l.b16 %v3548
        %v4152 = vunpack.c.l.b16 %v3549
        %v4153 = vunpack.c.l.b16 %v3550
        %v4154 = vunpack.c.l.b16 %v3551
        %v4155 = vunpack.c.l.b16 %v3552
        %v4156 = vunpack.c.l.b16 %v3553
        %v4157 = vunpack.c.l.b16 %v3554
        %v4158 = vunpack.c.l.b16 %v3555
        %v4159 = vunpack.c.l.b16 %v3556
        %v4160 = vunpack.c.l.b16 %v3557
        %v4161 = vunpack.c.l.b16 %v3558
        %v4162 = vunpack.c.l.b16 %v3559
        %v4163 = vunpack.c.l.b16 %v3560
        %v4164 = vunpack.c.l.b16 %v3561
        %v4165 = vunpack.c.l.b16 %v3562
        %v4166 = vunpack.c.l.b16 %v3563
        %v4167 = vunpack.c.l.b16 %v3564
        %v4168 = vunpack.c.l.b16 %v3565
        %v4169 = vunpack.c.l.b16 %v3566
        %v4170 = vunpack.c.l.b16 %v3567
        %v4171 = vunpack.c.l.b16 %v3568
        %v4172 = vunpack.c.l.b16 %v3569
        %v4173 = vunpack.c.l.b16 %v3570
        %v4174 = vunpack.c.l.b16 %v3571
        %v4175 = vunpack.c.l.b16 %v3572
        %v4176 = vunpack.c.l.b16 %v3573
        %v4177 = vunpack.c.l.b16 %v3574
        %v4178 = vunpack.c.l.b16 %v3575
        %v4179 = vunpack.c.l.b16 %v3576
        %v4180 = vunpack.c.l.b16 %v3577
        %v4181 = vunpack.c.l.b16 %v3578
        %v4182 = vunpack.c.l.b16 %v3579
        %v4183 = vunpack.c.l.b16 %v3580
        %v4184 = vunpack.c.l.b16 %v3581
        %v4185 = vunpack.c.l.b16 %v3582
        %v4186 = vunpack.c.l.b16 %v3583
        %v4187 = vunpack.c.l.b16 %v3584
        %v4188 = vunpack.c.l.b16 %v3585
        %v4189 = vunpack.c.l.b16 %v3586
        %v4190 = vunpack.c.l.b16 %v3587
        %v4191 = vunpack.c.l.b16 %v3588
        %v4192 = vunpack.c.l.b16 %v3589
        %v4193 = vunpack.c.l.b16 %v3590
        %v4194 = vunpack.c.l.b16 %v3591
        %v4195 = vunpack.c.l.b16 %v3592
        %v4196 = vunpack.c.l.b16 %v3593
        %v4197 = vunpack.c.l.b16 %v3594
        %v4198 = vunpack.c.l.b16 %v3595
        %v4199 = vunpack.c.l.b16 %v3596
        %v4200 = vunpack.c.l.b16 %v3597
        %v4201 = vunpack.c.l.b16 %v3598
        %v4202 = vunpack.c.l.b16 %v3599
        %v4203 = vunpack.c.l.b16 %v3600
        %v4204 = vunpack.c.l.b16 %v3601
        %v4205 = vunpack.c.l.b16 %v3602
        %v4206 = vunpack.c.l.b16 %v3603
        %v4207 = vunpack.c.l.b16 %v3604
        %v4208 = vunpack.c.l.b16 %v3605
        %v4209 = vunpack.c.l.b16 %v3606
        %v4210 = vunpack.c.l.b16 %v3607
        %v4211 = vunpack.c.l.b16 %v3608
        %v4212 = vunpack.c.l.b16 %v3609
        %v4213 = vunpack.c.l.b16 %v3610
        %v4214 = vunpack.c.l.b16 %v3611
        %v4215 = vunpack.c.l.b16 %v3612
        %v4216 = vunpack.c.l.b16 %v3613
        %v4217 = vunpack.c.l.b16 %v3614
        %v4218 = vunpack.c.l.b16 %v3615
        %v4219 = vunpack.c.l.b16 %v3616
        %v4220 = vunpack.c.l.b16 %v3617
        %v4221 = vunpack.c.l.b16 %v3618
        %v4222 = vunpack.c.l.b16 %v3619
        %v4223 = vunpack.c.l.b16 %v3620
        %v4224 = vunpack.c.l.b16 %v3621
        %v4225 = vunpack.c.l.b16 %v3622
        %v4226 = vunpack.c.l.b16 %v3623
        %v4227 = vunpack.c.l.b16 %v3624
        %v4228 = vunpack.c.l.b16 %v3625
        %v4229 = vunpack.c.l.b16 %v3626
        %v4230 = vunpack.c.l.b16 %v3627
        %v4231 = vunpack.c.l.b16 %v3628
        %v4232 = vunpack.c.l.b16 %v3629
        %v4233 = vunpack.c.l.b16 %v3630
        %v4234 = vunpack.c.l.b16 %v3631
        %v4235 = vunpack.c.l.b16 %v3632
        %v4236 = vunpack.c.l.b16 %v3633
        %v4237 = vunpack.c.l.b16 %v3634
        %v4238 = vunpack.c.l.b16 %v3635
        %v4239 = vunpack.c.l.b16 %v3636
        %v4240 = vunpack.c.l.b16 %v3637
        %v4241 = vunpack.c.l.b16 %v3638
        %v4242 = vunpack.c.l.b16 %v3639
        %v4243 = vunpack.c.l.b16 %v3640
        %v4244 = vunpack.c.l.b16 %v3641
        %v4245 = vunpack.c.l.b16 %v3642
        %v4246 = vunpack.c.l.b16 %v3643
        %v4247 = vunpack.c.l.b16 %v3644
        %v4248 = vunpack.c.l.b16 %v3645
        %v4249 = vunpack.c.l.b16 %v3646
        %v4250 = vpack.c.b16 %v3995, %v3994
        %v4251 = vpack.c.b16 %v3997, %v3996
        %v4252 = vpack.c.b16 %v3999, %v3998
        %v4253 = vpack.c.b16 %v4001, %v4000
        %v4254 = vpack.c.b16 %v4003, %v4002
        %v4255 = vpack.c.b16 %v4005, %v4004
        %v4256 = vpack.c.b16 %v4007, %v4006
        %v4257 = vpack.c.b16 %v4009, %v4008
        %v4258 = vpack.c.b16 %v4011, %v4010
        %v4259 = vpack.c.b16 %v4013, %v4012
        %v4260 = vpack.c.b16 %v4015, %v4014
        %v4261 = vpack.c.b16 %v4017, %v4016
        %v4262 = vpack.c.b16 %v4019, %v4018
        %v4263 = vpack.c.b16 %v4021, %v4020
        %v4264 = vpack.c.b16 %v4023, %v4022
        %v4265 = vpack.c.b16 %v4025, %v4024
        %v4266 = vpack.c.b16 %v4027, %v4026
        %v4267 = vpack.c.b16 %v4029, %v4028
        %v4268 = vpack.c.b16 %v4031, %v4030
        %v4269 = vpack.c.b16 %v4033, %v4032
        %v4270 = vpack.c.b16 %v4035, %v4034
        %v4271 = vpack.c.b16 %v4037, %v4036
        %v4272 = vpack.c.b16 %v4039, %v4038
        %v4273 = vpack.c.b16 %v4041, %v4040
        %v4274 = vpack.c.b16 %v4043, %v4042
        %v4275 = vpack.c.b16 %v4045, %v4044
        %v4276 = vpack.c.b16 %v4047, %v4046
        %v4277 = vpack.c.b16 %v4049, %v4048
        %v4278 = vpack.c.b16 %v4051, %v4050
        %v4279 = vpack.c.b16 %v4053, %v4052
        %v4280 = vpack.c.b16 %v4055, %v4054
        %v4281 = vpack.c.b16 %v4057, %v4056
        %v4282 = vpack.c.b16 %v4059, %v4058
        %v4283 = vpack.c.b16 %v4061, %v4060
        %v4284 = vpack.c.b16 %v4063, %v4062
        %v4285 = vpack.c.b16 %v4065, %v4064
        %v4286 = vpack.c.b16 %v4067, %v4066
        %v4287 = vpack.c.b16 %v4069, %v4068
        %v4288 = vpack.c.b16 %v4071, %v4070
        %v4289 = vpack.c.b16 %v4073, %v4072
        %v4290 = vpack.c.b16 %v4075, %v4074
        %v4291 = vpack.c.b16 %v4077, %v4076
        %v4292 = vpack.c.b16 %v4079, %v4078
        %v4293 = vpack.c.b16 %v4081, %v4080
        %v4294 = vpack.c.b16 %v4083, %v4082
        %v4295 = vpack.c.b16 %v4085, %v4084
        %v4296 = vpack.c.b16 %v4087, %v4086
        %v4297 = vpack.c.b16 %v4089, %v4088
        %v4298 = vpack.c.b16 %v4091, %v4090
        %v4299 = vpack.c.b16 %v4093, %v4092
        %v4300 = vpack.c.b16 %v4095, %v4094
        %v4301 = vpack.c.b16 %v4097, %v4096
        %v4302 = vpack.c.b16 %v4099, %v4098
        %v4303 = vpack.c.b16 %v4101, %v4100
        %v4304 = vpack.c.b16 %v4103, %v4102
        %v4305 = vpack.c.b16 %v4105, %v4104
        %v4306 = vpack.c.b16 %v4107, %v4106
        %v4307 = vpack.c.b16 %v4109, %v4108
        %v4308 = vpack.c.b16 %v4111, %v4110
        %v4309 = vpack.c.b16 %v4113, %v4112
        %v4310 = vpack.c.b16 %v4115, %v4114
        %v4311 = vpack.c.b16 %v4117, %v4116
        %v4312 = vpack.c.b16 %v4119, %v4118
        %v4313 = vpack.c.b16 %v4121, %v4120
        %v4314 = vpack.c.b16 %v4123, %v4122
        %v4315 = vpack.c.b16 %v4125, %v4124
        %v4316 = vpack.c.b16 %v4127, %v4126
        %v4317 = vpack.c.b16 %v4129, %v4128
        %v4318 = vpack.c.b16 %v4131, %v4130
        %v4319 = vpack.c.b16 %v4133, %v4132
        %v4320 = vpack.c.b16 %v4135, %v4134
        %v4321 = vpack.c.b16 %v4137, %v4136
        %v4322 = vpack.c.b16 %v4139, %v4138
        %v4323 = vpack.c.b16 %v4141, %v4140
        %v4324 = vpack.c.b16 %v4143, %v4142
        %v4325 = vpack.c.b16 %v4145, %v4144
        %v4326 = vpack.c.b16 %v4147, %v4146
        %v4327 = vpack.c.b16 %v4149, %v4148
        %v4328 = vpack.c.b16 %v4151, %v4150
        %v4329 = vpack.c.b16 %v4153, %v4152
        %v4330 = vpack.c.b16 %v4155, %v4154
        %v4331 = vpack.c.b16 %v4157, %v4156
        %v4332 = vpack.c.b16 %v4159, %v4158
        %v4333 = vpack.c.b16 %v4161, %v4160
        %v4334 = vpack.c.b16 %v4163, %v4162
        %v4335 = vpack.c.b16 %v4165, %v4164
        %v4336 = vpack.c.b16 %v4167, %v4166
        %v4337 = vpack.c.b16 %v4169, %v4168
        %v4338 = vpack.c.b16 %v4171, %v4170
        %v4339 = vpack.c.b16 %v4173, %v4172
        %v4340 = vpack.c.b16 %v4175, %v4174
        %v4341 = vpack.c.b16 %v4177, %v4176
        %v4342 = vpack.c.b16 %v4179, %v4178
        %v4343 = vpack.c.b16 %v4181, %v4180
        %v4344 = vpack.c.b16 %v4183, %v4182
        %v4345 = vpack.c.b16 %v4185, %v4184
        %v4346 = vpack.c.b16 %v4187, %v4186
        %v4347 = vpack.c.b16 %v4189, %v4188
        %v4348 = vpack.c.b16 %v4191, %v4190
        %v4349 = vpack.c.b16 %v4193, %v4192
        %v4350 = vpack.c.b16 %v4195, %v4194
        %v4351 = vpack.c.b16 %v4197, %v4196
        %v4352 = vpack.c.b16 %v4199, %v4198
        %v4353 = vpack.c.b16 %v4201, %v4200
        %v4354 = vpack.c.b16 %v4203, %v4202
        %v4355 = vpack.c.b16 %v4205, %v4204
        %v4356 = vpack.c.b16 %v4207, %v4206
        %v4357 = vpack.c.b16 %v4209, %v4208
        %v4358 = vpack.c.b16 %v4211, %v4210
        %v4359 = vpack.c.b16 %v4213, %v4212
        %v4360 = vpack.c.b16 %v4215, %v4214
        %v4361 = vpack.c.b16 %v4217, %v4216
        %v4362 = vpack.c.b16 %v4219, %v4218
        %v4363 = vpack.c.b16 %v4221, %v4220
        %v4364 = vpack.c.b16 %v4223, %v4222
        %v4365 = vpack.c.b16 %v4225, %v4224
        %v4366 = vpack.c.b16 %v4227, %v4226
        %v4367 = vpack.c.b16 %v4229, %v4228
        %v4368 = vpack.c.b16 %v4231, %v4230
        %v4369 = vpack.c.b16 %v4233, %v4232
        %v4370 = vpack.c.b16 %v4235, %v4234
        %v4371 = vpack.c.b16 %v4237, %v4236
        %v4372 = vpack.c.b16 %v4239, %v4238
        %v4373 = vpack.c.b16 %v4241, %v4240
        %v4374 = vpack.c.b16 %v4243, %v4242
        %v4375 = vpack.c.b16 %v4245, %v4244
        %v4376 = vpack.c.b16 %v4247, %v4246
        %v4377 = vpack.c.b16 %v4249, %v4248
        %4506 = vmatprep.subr.bf16.mxu0 0
        %4507 = vmatpush1.bf16.msra.mxu0 %v4250
        %4508 = vmatprep.subr.bf16.mxu0 0
        %4509 = vmatpush1.bf16.msra.mxu0 %v4251
        %4510 = vmatprep.subr.bf16.mxu0 0
        %4511 = vmatpush1.bf16.msra.mxu0 %v4252
        %4512 = vmatprep.subr.bf16.mxu0 0
        %4513 = vmatpush1.bf16.msra.mxu0 %v4253
        %4514 = vmatprep.subr.bf16.mxu0 0
        %4515 = vmatpush1.bf16.msra.mxu0 %v4254
        %4516 = vmatprep.subr.bf16.mxu0 0
        %4517 = vmatpush1.bf16.msra.mxu0 %v4255
        %4518 = vmatprep.subr.bf16.mxu0 0
        %4519 = vmatpush1.bf16.msra.mxu0 %v4256
        %4520 = vmatprep.subr.bf16.mxu0 0
        %4521 = vmatpush1.bf16.msra.mxu0 %v4257
        %4522 = vmatprep.subr.bf16.mxu0 0
        %4523 = vmatpush1.bf16.msra.mxu0 %v4258
        %4524 = vmatprep.subr.bf16.mxu0 0
        %4525 = vmatpush1.bf16.msra.mxu0 %v4259
        %4526 = vmatprep.subr.bf16.mxu0 0
        %4527 = vmatpush1.bf16.msra.mxu0 %v4260
        %4528 = vmatprep.subr.bf16.mxu0 0
        %4529 = vmatpush1.bf16.msra.mxu0 %v4261
        %4530 = vmatprep.subr.bf16.mxu0 0
        %4531 = vmatpush1.bf16.msra.mxu0 %v4262
        %4532 = vmatprep.subr.bf16.mxu0 0
        %4533 = vmatpush1.bf16.msra.mxu0 %v4263
        %4534 = vmatprep.subr.bf16.mxu0 0
        %4535 = vmatpush1.bf16.msra.mxu0 %v4264
        %4536 = vmatprep.subr.bf16.mxu0 0
        %4537 = vmatpush1.bf16.msra.mxu0 %v4265
        %4538 = vmatprep.mubr.bf16.mxu0 %v3376
        %4539 = vmatmul.mubr.bf16.gmra.mrb[0].mxu0 %v3375
        %v4540 = vpop.f32.mrb[0].mxu0
        %v4541 = vadd.f32 %v3730, %v4540
        %v4542 = vpop.f32.mrb[0].mxu0
        %v4543 = vpop.f32.mrb[0].mxu0
        %v4544 = vadd.f32 %v3735, %v4543
        %v4545 = vpop.f32.mrb[0].mxu0
        %4546 = vdwg.mxu0
        %4547 = vmatprep.subr.bf16.mxu0 0
        %4548 = vmatpush1.bf16.msra.mxu0 %v4266
        %4549 = vmatprep.subr.bf16.mxu0 0
        %4550 = vmatpush1.bf16.msra.mxu0 %v4267
        %4551 = vmatprep.subr.bf16.mxu0 0
        %4552 = vmatpush1.bf16.msra.mxu0 %v4268
        %4553 = vmatprep.subr.bf16.mxu0 0
        %4554 = vmatpush1.bf16.msra.mxu0 %v4269
        %4555 = vmatprep.subr.bf16.mxu0 0
        %4556 = vmatpush1.bf16.msra.mxu0 %v4270
        %4557 = vmatprep.subr.bf16.mxu0 0
        %4558 = vmatpush1.bf16.msra.mxu0 %v4271
        %4559 = vmatprep.subr.bf16.mxu0 0
        %4560 = vmatpush1.bf16.msra.mxu0 %v4272
        %4561 = vmatprep.subr.bf16.mxu0 0
        %4562 = vmatpush1.bf16.msra.mxu0 %v4273
        %4563 = vmatprep.subr.bf16.mxu0 0
        %4564 = vmatpush1.bf16.msra.mxu0 %v4274
        %4565 = vmatprep.subr.bf16.mxu0 0
        %4566 = vmatpush1.bf16.msra.mxu0 %v4275
        %4567 = vmatprep.subr.bf16.mxu0 0
        %4568 = vmatpush1.bf16.msra.mxu0 %v4276
        %4569 = vmatprep.subr.bf16.mxu0 0
        %4570 = vmatpush1.bf16.msra.mxu0 %v4277
        %4571 = vmatprep.subr.bf16.mxu0 0
        %4572 = vmatpush1.bf16.msra.mxu0 %v4278
        %4573 = vmatprep.subr.bf16.mxu0 0
        %4574 = vmatpush1.bf16.msra.mxu0 %v4279
        %4575 = vmatprep.subr.bf16.mxu0 0
        %4576 = vmatpush1.bf16.msra.mxu0 %v4280
        %4577 = vmatprep.subr.bf16.mxu0 0
        %4578 = vmatpush1.bf16.msra.mxu0 %v4281
        %4579 = vmatprep.mubr.bf16.mxu0 %v3378
        %4580 = vmatmul.mubr.bf16.gmra.mrb[0].mxu0 %v3377
        %v4581 = vpop.f32.mrb[0].mxu0
        %v4582 = vadd.f32 %v4541, %v4581
        %v4583 = vpop.f32.mrb[0].mxu0
        %v4584 = vpop.f32.mrb[0].mxu0
        %v4585 = vadd.f32 %v4544, %v4584
        %v4586 = vpop.f32.mrb[0].mxu0
        %4587 = vdwg.mxu0
        %4588 = vmatprep.subr.bf16.mxu0 0
        %4589 = vmatpush1.bf16.msra.mxu0 %v4282
        %4590 = vmatprep.subr.bf16.mxu0 0
        %4591 = vmatpush1.bf16.msra.mxu0 %v4283
        %4592 = vmatprep.subr.bf16.mxu0 0
        %4593 = vmatpush1.bf16.msra.mxu0 %v4284
        %4594 = vmatprep.subr.bf16.mxu0 0
        %4595 = vmatpush1.bf16.msra.mxu0 %v4285
        %4596 = vmatprep.subr.bf16.mxu0 0
        %4597 = vmatpush1.bf16.msra.mxu0 %v4286
        %4598 = vmatprep.subr.bf16.mxu0 0
        %4599 = vmatpush1.bf16.msra.mxu0 %v4287
        %4600 = vmatprep.subr.bf16.mxu0 0
        %4601 = vmatpush1.bf16.msra.mxu0 %v4288
        %4602 = vmatprep.subr.bf16.mxu0 0
        %4603 = vmatpush1.bf16.msra.mxu0 %v4289
        %4604 = vmatprep.subr.bf16.mxu0 0
        %4605 = vmatpush1.bf16.msra.mxu0 %v4290
        %4606 = vmatprep.subr.bf16.mxu0 0
        %4607 = vmatpush1.bf16.msra.mxu0 %v4291
        %4608 = vmatprep.subr.bf16.mxu0 0
        %4609 = vmatpush1.bf16.msra.mxu0 %v4292
        %4610 = vmatprep.subr.bf16.mxu0 0
        %4611 = vmatpush1.bf16.msra.mxu0 %v4293
        %4612 = vmatprep.subr.bf16.mxu0 0
        %4613 = vmatpush1.bf16.msra.mxu0 %v4294
        %4614 = vmatprep.subr.bf16.mxu0 0
        %4615 = vmatpush1.bf16.msra.mxu0 %v4295
        %4616 = vmatprep.subr.bf16.mxu0 0
        %4617 = vmatpush1.bf16.msra.mxu0 %v4296
        %4618 = vmatprep.subr.bf16.mxu0 0
        %4619 = vmatpush1.bf16.msra.mxu0 %v4297
        %4620 = vmatprep.mubr.bf16.mxu0 %v3380
        %4621 = vmatmul.mubr.bf16.gmra.mrb[0].mxu0 %v3379
        %v4622 = vpop.f32.mrb[0].mxu0
        %v4623 = vadd.f32 %v4582, %v4622
        %v4624 = vpop.f32.mrb[0].mxu0
        %v4625 = vpop.f32.mrb[0].mxu0
        %v4626 = vadd.f32 %v4585, %v4625
        %v4627 = vpop.f32.mrb[0].mxu0
        %4628 = vdwg.mxu0
        %4629 = vmatprep.subr.bf16.mxu0 0
        %4630 = vmatpush1.bf16.msra.mxu0 %v4298
        %4631 = vmatprep.subr.bf16.mxu0 0
        %4632 = vmatpush1.bf16.msra.mxu0 %v4299
        %4633 = vmatprep.subr.bf16.mxu0 0
        %4634 = vmatpush1.bf16.msra.mxu0 %v4300
        %4635 = vmatprep.subr.bf16.mxu0 0
        %4636 = vmatpush1.bf16.msra.mxu0 %v4301
        %4637 = vmatprep.subr.bf16.mxu0 0
        %4638 = vmatpush1.bf16.msra.mxu0 %v4302
        %4639 = vmatprep.subr.bf16.mxu0 0
        %4640 = vmatpush1.bf16.msra.mxu0 %v4303
        %4641 = vmatprep.subr.bf16.mxu0 0
        %4642 = vmatpush1.bf16.msra.mxu0 %v4304
        %4643 = vmatprep.subr.bf16.mxu0 0
        %4644 = vmatpush1.bf16.msra.mxu0 %v4305
        %4645 = vmatprep.subr.bf16.mxu0 0
        %4646 = vmatpush1.bf16.msra.mxu0 %v4306
        %4647 = vmatprep.subr.bf16.mxu0 0
        %4648 = vmatpush1.bf16.msra.mxu0 %v4307
        %4649 = vmatprep.subr.bf16.mxu0 0
        %4650 = vmatpush1.bf16.msra.mxu0 %v4308
        %4651 = vmatprep.subr.bf16.mxu0 0
        %4652 = vmatpush1.bf16.msra.mxu0 %v4309
        %4653 = vmatprep.subr.bf16.mxu0 0
        %4654 = vmatpush1.bf16.msra.mxu0 %v4310
        %4655 = vmatprep.subr.bf16.mxu0 0
        %4656 = vmatpush1.bf16.msra.mxu0 %v4311
        %4657 = vmatprep.subr.bf16.mxu0 0
        %4658 = vmatpush1.bf16.msra.mxu0 %v4312
        %4659 = vmatprep.subr.bf16.mxu0 0
        %4660 = vmatpush1.bf16.msra.mxu0 %v4313
        %4661 = vmatprep.mubr.bf16.mxu0 %v3382
        %4662 = vmatmul.mubr.bf16.gmra.mrb[0].mxu0 %v3381
        %v4663 = vpop.f32.mrb[0].mxu0
        %v4664 = vadd.f32 %v4623, %v4663
        %v4665 = vpop.f32.mrb[0].mxu0
        %v4666 = vpop.f32.mrb[0].mxu0
        %v4667 = vadd.f32 %v4626, %v4666
        %v4668 = vpop.f32.mrb[0].mxu0
        %4669 = vdwg.mxu0
        %4670 = vmatprep.subr.bf16.mxu0 0
        %4671 = vmatpush1.bf16.msra.mxu0 %v4314
        %4672 = vmatprep.subr.bf16.mxu0 0
        %4673 = vmatpush1.bf16.msra.mxu0 %v4315
        %4674 = vmatprep.subr.bf16.mxu0 0
        %4675 = vmatpush1.bf16.msra.mxu0 %v4316
        %4676 = vmatprep.subr.bf16.mxu0 0
        %4677 = vmatpush1.bf16.msra.mxu0 %v4317
        %4678 = vmatprep.subr.bf16.mxu0 0
        %4679 = vmatpush1.bf16.msra.mxu0 %v4318
        %4680 = vmatprep.subr.bf16.mxu0 0
        %4681 = vmatpush1.bf16.msra.mxu0 %v4319
        %4682 = vmatprep.subr.bf16.mxu0 0
        %4683 = vmatpush1.bf16.msra.mxu0 %v4320
        %4684 = vmatprep.subr.bf16.mxu0 0
        %4685 = vmatpush1.bf16.msra.mxu0 %v4321
        %4686 = vmatprep.subr.bf16.mxu0 0
        %4687 = vmatpush1.bf16.msra.mxu0 %v4322
        %4688 = vmatprep.subr.bf16.mxu0 0
        %4689 = vmatpush1.bf16.msra.mxu0 %v4323
        %4690 = vmatprep.subr.bf16.mxu0 0
        %4691 = vmatpush1.bf16.msra.mxu0 %v4324
        %4692 = vmatprep.subr.bf16.mxu0 0
        %4693 = vmatpush1.bf16.msra.mxu0 %v4325
        %4694 = vmatprep.subr.bf16.mxu0 0
        %4695 = vmatpush1.bf16.msra.mxu0 %v4326
        %4696 = vmatprep.subr.bf16.mxu0 0
        %4697 = vmatpush1.bf16.msra.mxu0 %v4327
        %4698 = vmatprep.subr.bf16.mxu0 0
        %4699 = vmatpush1.bf16.msra.mxu0 %v4328
        %4700 = vmatprep.subr.bf16.mxu0 0
        %4701 = vmatpush1.bf16.msra.mxu0 %v4329
        %4702 = vmatprep.mubr.bf16.mxu0 %v3384
        %4703 = vmatmul.mubr.bf16.gmra.mrb[0].mxu0 %v3383
        %v4704 = vpop.f32.mrb[0].mxu0
        %v4705 = vadd.f32 %v4664, %v4704
        %v4706 = vpop.f32.mrb[0].mxu0
        %v4707 = vpop.f32.mrb[0].mxu0
        %v4708 = vadd.f32 %v4667, %v4707
        %v4709 = vpop.f32.mrb[0].mxu0
        %4710 = vdwg.mxu0
        %4711 = vmatprep.subr.bf16.mxu0 0
        %4712 = vmatpush1.bf16.msra.mxu0 %v4330
        %4713 = vmatprep.subr.bf16.mxu0 0
        %4714 = vmatpush1.bf16.msra.mxu0 %v4331
        %4715 = vmatprep.subr.bf16.mxu0 0
        %4716 = vmatpush1.bf16.msra.mxu0 %v4332
        %4717 = vmatprep.subr.bf16.mxu0 0
        %4718 = vmatpush1.bf16.msra.mxu0 %v4333
        %4719 = vmatprep.subr.bf16.mxu0 0
        %4720 = vmatpush1.bf16.msra.mxu0 %v4334
        %4721 = vmatprep.subr.bf16.mxu0 0
        %4722 = vmatpush1.bf16.msra.mxu0 %v4335
        %4723 = vmatprep.subr.bf16.mxu0 0
        %4724 = vmatpush1.bf16.msra.mxu0 %v4336
        %4725 = vmatprep.subr.bf16.mxu0 0
        %4726 = vmatpush1.bf16.msra.mxu0 %v4337
        %4727 = vmatprep.subr.bf16.mxu0 0
        %4728 = vmatpush1.bf16.msra.mxu0 %v4338
        %4729 = vmatprep.subr.bf16.mxu0 0
        %4730 = vmatpush1.bf16.msra.mxu0 %v4339
        %4731 = vmatprep.subr.bf16.mxu0 0
        %4732 = vmatpush1.bf16.msra.mxu0 %v4340
        %4733 = vmatprep.subr.bf16.mxu0 0
        %4734 = vmatpush1.bf16.msra.mxu0 %v4341
        %4735 = vmatprep.subr.bf16.mxu0 0
        %4736 = vmatpush1.bf16.msra.mxu0 %v4342
        %4737 = vmatprep.subr.bf16.mxu0 0
        %4738 = vmatpush1.bf16.msra.mxu0 %v4343
        %4739 = vmatprep.subr.bf16.mxu0 0
        %4740 = vmatpush1.bf16.msra.mxu0 %v4344
        %4741 = vmatprep.subr.bf16.mxu0 0
        %4742 = vmatpush1.bf16.msra.mxu0 %v4345
        %4743 = vmatprep.mubr.bf16.mxu0 %v3386
        %4744 = vmatmul.mubr.bf16.gmra.mrb[0].mxu0 %v3385
        %v4745 = vpop.f32.mrb[0].mxu0
        %v4746 = vadd.f32 %v4705, %v4745
        %v4747 = vpop.f32.mrb[0].mxu0
        %v4748 = vpop.f32.mrb[0].mxu0
        %v4749 = vadd.f32 %v4708, %v4748
        %v4750 = vpop.f32.mrb[0].mxu0
        %4751 = vdwg.mxu0
        %4752 = vmatprep.subr.bf16.mxu0 0
        %4753 = vmatpush1.bf16.msra.mxu0 %v4346
        %4754 = vmatprep.subr.bf16.mxu0 0
        %4755 = vmatpush1.bf16.msra.mxu0 %v4347
        %4756 = vmatprep.subr.bf16.mxu0 0
        %4757 = vmatpush1.bf16.msra.mxu0 %v4348
        %4758 = vmatprep.subr.bf16.mxu0 0
        %4759 = vmatpush1.bf16.msra.mxu0 %v4349
        %4760 = vmatprep.subr.bf16.mxu0 0
        %4761 = vmatpush1.bf16.msra.mxu0 %v4350
        %4762 = vmatprep.subr.bf16.mxu0 0
        %4763 = vmatpush1.bf16.msra.mxu0 %v4351
        %4764 = vmatprep.subr.bf16.mxu0 0
        %4765 = vmatpush1.bf16.msra.mxu0 %v4352
        %4766 = vmatprep.subr.bf16.mxu0 0
        %4767 = vmatpush1.bf16.msra.mxu0 %v4353
        %4768 = vmatprep.subr.bf16.mxu0 0
        %4769 = vmatpush1.bf16.msra.mxu0 %v4354
        %4770 = vmatprep.subr.bf16.mxu0 0
        %4771 = vmatpush1.bf16.msra.mxu0 %v4355
        %4772 = vmatprep.subr.bf16.mxu0 0
        %4773 = vmatpush1.bf16.msra.mxu0 %v4356
        %4774 = vmatprep.subr.bf16.mxu0 0
        %4775 = vmatpush1.bf16.msra.mxu0 %v4357
        %4776 = vmatprep.subr.bf16.mxu0 0
        %4777 = vmatpush1.bf16.msra.mxu0 %v4358
        %4778 = vmatprep.subr.bf16.mxu0 0
        %4779 = vmatpush1.bf16.msra.mxu0 %v4359
        %4780 = vmatprep.subr.bf16.mxu0 0
        %4781 = vmatpush1.bf16.msra.mxu0 %v4360
        %4782 = vmatprep.subr.bf16.mxu0 0
        %4783 = vmatpush1.bf16.msra.mxu0 %v4361
        %4784 = vmatprep.mubr.bf16.mxu0 %v3388
        %4785 = vmatmul.mubr.bf16.gmra.mrb[0].mxu0 %v3387
        %v4786 = vpop.f32.mrb[0].mxu0
        %v4787 = vadd.f32 %v4746, %v4786
        %v4788 = vpop.f32.mrb[0].mxu0
        %v4789 = vpop.f32.mrb[0].mxu0
        %v4790 = vadd.f32 %v4749, %v4789
        %v4791 = vpop.f32.mrb[0].mxu0
        %4792 = vdwg.mxu0
        %4793 = vmatprep.subr.bf16.mxu0 0
        %4794 = vmatpush1.bf16.msra.mxu0 %v4362
        %4795 = vmatprep.subr.bf16.mxu0 0
        %4796 = vmatpush1.bf16.msra.mxu0 %v4363
        %4797 = vmatprep.subr.bf16.mxu0 0
        %4798 = vmatpush1.bf16.msra.mxu0 %v4364
        %4799 = vmatprep.subr.bf16.mxu0 0
        %4800 = vmatpush1.bf16.msra.mxu0 %v4365
        %4801 = vmatprep.subr.bf16.mxu0 0
        %4802 = vmatpush1.bf16.msra.mxu0 %v4366
        %4803 = vmatprep.subr.bf16.mxu0 0
        %4804 = vmatpush1.bf16.msra.mxu0 %v4367
        %4805 = vmatprep.subr.bf16.mxu0 0
        %4806 = vmatpush1.bf16.msra.mxu0 %v4368
        %4807 = vmatprep.subr.bf16.mxu0 0
        %4808 = vmatpush1.bf16.msra.mxu0 %v4369
        %4809 = vmatprep.subr.bf16.mxu0 0
        %4810 = vmatpush1.bf16.msra.mxu0 %v4370
        %4811 = vmatprep.subr.bf16.mxu0 0
        %4812 = vmatpush1.bf16.msra.mxu0 %v4371
        %4813 = vmatprep.subr.bf16.mxu0 0
        %4814 = vmatpush1.bf16.msra.mxu0 %v4372
        %4815 = vmatprep.subr.bf16.mxu0 0
        %4816 = vmatpush1.bf16.msra.mxu0 %v4373
        %4817 = vmatprep.subr.bf16.mxu0 0
        %4818 = vmatpush1.bf16.msra.mxu0 %v4374
        %4819 = vmatprep.subr.bf16.mxu0 0
        %4820 = vmatpush1.bf16.msra.mxu0 %v4375
        %4821 = vmatprep.subr.bf16.mxu0 0
        %4822 = vmatpush1.bf16.msra.mxu0 %v4376
        %4823 = vmatprep.subr.bf16.mxu0 0
        %4824 = vmatpush1.bf16.msra.mxu0 %v4377
        %4825 = vmatprep.mubr.bf16.mxu0 %v3390
        %4826 = vmatmul.mubr.bf16.gmra.mrb[0].mxu0 %v3389
        %v4827 = vpop.f32.mrb[0].mxu0
        %v4828 = vadd.f32 %v4787, %v4827
        %v4829 = vpop.f32.mrb[0].mxu0
        %v4830 = vpop.f32.mrb[0].mxu0
        %v4831 = vadd.f32 %v4790, %v4830
        %v4832 = vpop.f32.mrb[0].mxu0
        %4833 = vdwg.mxu0
        %v4834 = vadd.f32 %v1820, %v4828
        %v4835 = vadd.f32 %v1821, %v4831
        %s4836 = scalar_lea.vmem %s3, 1
        %v4837 = vld [vmem:[%s4836] sm:$0x1]
        %s4838 = scalar_lea.vmem %s4, 1
        %v4839 = vld [vmem:[%s4838] sm:$0x1]
        %4840 = vadd.xlane.f32.xlu0 %v4834
        %v4841 = vpop.xlane.xlu0 %4840
        %4842 = vadd.xlane.f32.xlu0 %v4835
        %v4843 = vpop.xlane.xlu0 %4842
        %v4844 = vmul.f32 %v4841, %v894
        %v4845 = vmul.f32 %v4843, %v894
        %v4846 = vsub.f32 %v4834, %v4844
        %v4847 = vsub.f32 %v4835, %v4845
        %v4848 = vmul.f32 %v4846, %v4846
        %v4849 = vmul.f32 %v4847, %v4847
        %4850 = vadd.xlane.f32.xlu0 %v4848
        %v4851 = vpop.xlane.xlu0 %4850
        %4852 = vadd.xlane.f32.xlu0 %v4849
        %v4853 = vpop.xlane.xlu0 %4852
        %v4854 = vmul.f32 %v4851, %v894
        %v4855 = vmul.f32 %v4853, %v894
        %v4856 = vadd.f32 %v4854, 1e-05
        %v4857 = vadd.f32 %v4855, 1e-05
        %v4858 = vrsqrt.pop %v4856
        %v4859 = vrsqrt.pop %v4857
        %v4860 = vmul.f32 %v4846, %v4858
        %v4861 = vmul.f32 %v4847, %v4859
        %v4863 = vlaneseq
        %v4864 = vshrl.u32 %v4863, 7
        %v4865 = vsub.s32 0, %v4864
        %v4866 = vrot.slane %v4837, %v4865
        %v4868 = vmul.f32 %v4860, %v4866
        %v4869 = vmul.f32 %v4861, %v4866
        %v4871 = vlaneseq
        %v4872 = vshrl.u32 %v4871, 7
        %v4873 = vsub.s32 0, %v4872
        %v4874 = vrot.slane %v4839, %v4873
        %v4876 = vadd.f32 %v4868, %v4874
        %v4877 = vadd.f32 %v4869, %v4874
        %v4878 = vpack.c.bf16 %v4877, %v4876
        %s4879 = scalar_lea.vmem [#allocation5], 192
        %v4880 = vld [vmem:[%s4879] sm:$0xff]
        %v4881 = vld [vmem:[%s4879 + $0x8] sm:$0xf]
        %v4882 = vld [vmem:[%s4879 + $0xc] sm:$0xff]
        %v4883 = vld [vmem:[%s4879 + $0x14] sm:$0xf]
        %v4884 = vld [vmem:[%s4879 + $0x18] sm:$0xff]
        %v4885 = vld [vmem:[%s4879 + $0x20] sm:$0xf]
        %v4886 = vld [vmem:[%s4879 + $0x24] sm:$0xff]
        %v4887 = vld [vmem:[%s4879 + $0x2c] sm:$0xf]
        %v4888 = vld [vmem:[%s4879 + $0x30] sm:$0xff]
        %v4889 = vld [vmem:[%s4879 + $0x38] sm:$0xf]
        %v4890 = vld [vmem:[%s4879 + $0x3c] sm:$0xff]
        %v4891 = vld [vmem:[%s4879 + $0x44] sm:$0xf]
        %v4892 = vld [vmem:[%s4879 + $0x48] sm:$0xff]
        %v4893 = vld [vmem:[%s4879 + $0x50] sm:$0xf]
        %v4894 = vld [vmem:[%s4879 + $0x54] sm:$0xff]
        %v4895 = vld [vmem:[%s4879 + $0x5c] sm:$0xf]
        %v4896 = vld [vmem:[%s4879 + $0x60] sm:$0xff]
        %v4897 = vld [vmem:[%s4879 + $0x68] sm:$0xf]
        %v4898 = vld [vmem:[%s4879 + $0x6c] sm:$0xff]
        %v4899 = vld [vmem:[%s4879 + $0x74] sm:$0xf]
        %v4900 = vld [vmem:[%s4879 + $0x78] sm:$0xff]
        %v4901 = vld [vmem:[%s4879 + $0x80] sm:$0xf]
        %v4902 = vld [vmem:[%s4879 + $0x84] sm:$0xff]
        %v4903 = vld [vmem:[%s4879 + $0x8c] sm:$0xf]
        %v4904 = vld [vmem:[%s4879 + $0x90] sm:$0xff]
        %v4905 = vld [vmem:[%s4879 + $0x98] sm:$0xf]
        %v4906 = vld [vmem:[%s4879 + $0x9c] sm:$0xff]
        %v4907 = vld [vmem:[%s4879 + $0xa4] sm:$0xf]
        %v4908 = vld [vmem:[%s4879 + $0xa8] sm:$0xff]
        %v4909 = vld [vmem:[%s4879 + $0xb0] sm:$0xf]
        %v4910 = vld [vmem:[%s4879 + $0xb4] sm:$0xff]
        %v4911 = vld [vmem:[%s4879 + $0xbc] sm:$0xf]
        %v4944 = vunpack.c.l.b16 %v4880
        %v4945 = vunpack.c.h.b16 %v4880
        %v4946 = vunpack.c.l.b16 %v4881
        %v4947 = vunpack.c.l.b16 %v4882
        %v4948 = vunpack.c.h.b16 %v4882
        %v4949 = vunpack.c.l.b16 %v4883
        %v4950 = vunpack.c.l.b16 %v4884
        %v4951 = vunpack.c.h.b16 %v4884
        %v4952 = vunpack.c.l.b16 %v4885
        %v4953 = vunpack.c.l.b16 %v4886
        %v4954 = vunpack.c.h.b16 %v4886
        %v4955 = vunpack.c.l.b16 %v4887
        %v4956 = vunpack.c.l.b16 %v4888
        %v4957 = vunpack.c.h.b16 %v4888
        %v4958 = vunpack.c.l.b16 %v4889
        %v4959 = vunpack.c.l.b16 %v4890
        %v4960 = vunpack.c.h.b16 %v4890
        %v4961 = vunpack.c.l.b16 %v4891
        %v4962 = vunpack.c.l.b16 %v4892
        %v4963 = vunpack.c.h.b16 %v4892
        %v4964 = vunpack.c.l.b16 %v4893
        %v4965 = vunpack.c.l.b16 %v4894
        %v4966 = vunpack.c.h.b16 %v4894
        %v4967 = vunpack.c.l.b16 %v4895
        %v4968 = vunpack.c.l.b16 %v4896
        %v4969 = vunpack.c.h.b16 %v4896
        %v4970 = vunpack.c.l.b16 %v4897
        %v4971 = vunpack.c.l.b16 %v4898
        %v4972 = vunpack.c.h.b16 %v4898
        %v4973 = vunpack.c.l.b16 %v4899
        %v4974 = vunpack.c.l.b16 %v4900
        %v4975 = vunpack.c.h.b16 %v4900
        %v4976 = vunpack.c.l.b16 %v4901
        %v4977 = vunpack.c.l.b16 %v4902
        %v4978 = vunpack.c.h.b16 %v4902
        %v4979 = vunpack.c.l.b16 %v4903
        %v4980 = vunpack.c.l.b16 %v4904
        %v4981 = vunpack.c.h.b16 %v4904
        %v4982 = vunpack.c.l.b16 %v4905
        %v4983 = vunpack.c.l.b16 %v4906
        %v4984 = vunpack.c.h.b16 %v4906
        %v4985 = vunpack.c.l.b16 %v4907
        %v4986 = vunpack.c.l.b16 %v4908
        %v4987 = vunpack.c.h.b16 %v4908
        %v4988 = vunpack.c.l.b16 %v4909
        %v4989 = vunpack.c.l.b16 %v4910
        %v4990 = vunpack.c.h.b16 %v4910
        %v4991 = vunpack.c.l.b16 %v4911
        %v4992 = vpack.c.b16 %v4947, %v4944
        %v4993 = vpack.c.b16 %v4948, %v4945
        %v4994 = vpack.c.b16 %v4949, %v4946
        %v4995 = vpack.c.b16 %v4953, %v4950
        %v4996 = vpack.c.b16 %v4954, %v4951
        %v4997 = vpack.c.b16 %v4955, %v4952
        %v4998 = vpack.c.b16 %v4959, %v4956
        %v4999 = vpack.c.b16 %v4960, %v4957
        %v5000 = vpack.c.b16 %v4961, %v4958
        %v5001 = vpack.c.b16 %v4965, %v4962
        %v5002 = vpack.c.b16 %v4966, %v4963
        %v5003 = vpack.c.b16 %v4967, %v4964
        %v5004 = vpack.c.b16 %v4971, %v4968
        %v5005 = vpack.c.b16 %v4972, %v4969
        %v5006 = vpack.c.b16 %v4973, %v4970
        %v5007 = vpack.c.b16 %v4977, %v4974
        %v5008 = vpack.c.b16 %v4978, %v4975
        %v5009 = vpack.c.b16 %v4979, %v4976
        %v5010 = vpack.c.b16 %v4983, %v4980
        %v5011 = vpack.c.b16 %v4984, %v4981
        %v5012 = vpack.c.b16 %v4985, %v4982
        %v5013 = vpack.c.b16 %v4989, %v4986
        %v5014 = vpack.c.b16 %v4990, %v4987
        %v5015 = vpack.c.b16 %v4991, %v4988
        %5040 = vmatprep.subr.bf16.mxu0 %v4993
        %5041 = vmatpush1.bf16.msra.mxu0 %v4992
        %5042 = vmatprep.subr.bf16.mxu0 %v4996
        %5043 = vmatpush1.bf16.msra.mxu0 %v4995
        %5044 = vmatprep.subr.bf16.mxu0 %v4999
        %5045 = vmatpush1.bf16.msra.mxu0 %v4998
        %5046 = vmatprep.subr.bf16.mxu0 %v5002
        %5047 = vmatpush1.bf16.msra.mxu0 %v5001
        %5048 = vmatprep.subr.bf16.mxu0 %v5005
        %5049 = vmatpush1.bf16.msra.mxu0 %v5004
        %5050 = vmatprep.subr.bf16.mxu0 %v5008
        %5051 = vmatpush1.bf16.msra.mxu0 %v5007
        %5052 = vmatprep.subr.bf16.mxu0 %v5011
        %5053 = vmatpush1.bf16.msra.mxu0 %v5010
        %5054 = vmatprep.subr.bf16.mxu0 %v5014
        %5055 = vmatpush1.bf16.msra.mxu0 %v5013
        %5056 = vmatprep.subr.bf16.mxu0 0
        %5057 = vmatpush1.bf16.msra.mxu0 0
        %5058 = vmatprep.subr.bf16.mxu0 0
        %5059 = vmatpush1.bf16.msra.mxu0 0
        %5060 = vmatprep.subr.bf16.mxu0 0
        %5061 = vmatpush1.bf16.msra.mxu0 0
        %5062 = vmatprep.subr.bf16.mxu0 0
        %5063 = vmatpush1.bf16.msra.mxu0 0
        %5064 = vmatprep.subr.bf16.mxu0 0
        %5065 = vmatpush1.bf16.msra.mxu0 0
        %5066 = vmatprep.subr.bf16.mxu0 0
        %5067 = vmatpush1.bf16.msra.mxu0 0
        %5068 = vmatprep.subr.bf16.mxu0 0
        %5069 = vmatpush1.bf16.msra.mxu0 0
        %5070 = vmatprep.subr.bf16.mxu0 0
        %5071 = vmatpush1.bf16.msra.mxu0 0
        %5072 = vmatprep.mubr.bf16.mxu0 0
        %5073 = vmatmul.mubr.bf16.gmra.mrb[0].mxu0 %v4878
        %v5074 = vpop.f32.mrb[0].mxu0
        %v5075 = vadd.f32 0.0, %v5074
        %v5076 = vpop.f32.mrb[0].mxu0
        %v5077 = vadd.f32 0.0, %v5076
        %v5078 = vpop.f32.mrb[0].mxu0
        %v5079 = vadd.f32 0.0, %v5078
        %v5080 = vpop.f32.mrb[0].mxu0
        %v5081 = vadd.f32 0.0, %v5080
        %5082 = vdwg.mxu0
        %5083 = vmatprep.subr.bf16.mxu0 0
        %5084 = vmatpush1.bf16.msra.mxu0 %v4994
        %5085 = vmatprep.subr.bf16.mxu0 0
        %5086 = vmatpush1.bf16.msra.mxu0 %v4997
        %5087 = vmatprep.subr.bf16.mxu0 0
        %5088 = vmatpush1.bf16.msra.mxu0 %v5000
        %5089 = vmatprep.subr.bf16.mxu0 0
        %5090 = vmatpush1.bf16.msra.mxu0 %v5003
        %5091 = vmatprep.subr.bf16.mxu0 0
        %5092 = vmatpush1.bf16.msra.mxu0 %v5006
        %5093 = vmatprep.subr.bf16.mxu0 0
        %5094 = vmatpush1.bf16.msra.mxu0 %v5009
        %5095 = vmatprep.subr.bf16.mxu0 0
        %5096 = vmatpush1.bf16.msra.mxu0 %v5012
        %5097 = vmatprep.subr.bf16.mxu0 0
        %5098 = vmatpush1.bf16.msra.mxu0 %v5015
        %5099 = vmatprep.subr.bf16.mxu0 0
        %5100 = vmatpush1.bf16.msra.mxu0 0
        %5101 = vmatprep.subr.bf16.mxu0 0
        %5102 = vmatpush1.bf16.msra.mxu0 0
        %5103 = vmatprep.subr.bf16.mxu0 0
        %5104 = vmatpush1.bf16.msra.mxu0 0
        %5105 = vmatprep.subr.bf16.mxu0 0
        %5106 = vmatpush1.bf16.msra.mxu0 0
        %5107 = vmatprep.subr.bf16.mxu0 0
        %5108 = vmatpush1.bf16.msra.mxu0 0
        %5109 = vmatprep.subr.bf16.mxu0 0
        %5110 = vmatpush1.bf16.msra.mxu0 0
        %5111 = vmatprep.subr.bf16.mxu0 0
        %5112 = vmatpush1.bf16.msra.mxu0 0
        %5113 = vmatprep.subr.bf16.mxu0 0
        %5114 = vmatpush1.bf16.msra.mxu0 0
        %5115 = vmatprep.mubr.bf16.mxu0 0
        %5116 = vmatmul.mubr.bf16.gmra.mrb[0].mxu0 %v4878
        %v5117 = vpop.f32.mrb[0].mxu0
        %v5118 = vadd.f32 0.0, %v5117
        %v5119 = vpop.f32.mrb[0].mxu0
        %v5120 = vpop.f32.mrb[0].mxu0
        %v5121 = vadd.f32 0.0, %v5120
        %v5122 = vpop.f32.mrb[0].mxu0
        %5123 = vdwg.mxu0
        %v5124 = vpack.c.bf16 %v5079, %v5075
        %v5125 = vpack.c.bf16 %v5081, %v5077
        %v5126 = vpack.c.bf16 %v5121, %v5118
        %v5128 = vsel %vm1177, %v5124, 0
        %v5131 = vsel %vm1177, %v5125, 0
        %5133 = vmatprep.subr.bf16.mxu0 0
        %5134 = vmatpush1.bf16.xpose.msra.mxu0 %v5131
        %5135 = vmatprep.subr.bf16.mxu0 0
        %5136 = vmatpush1.bf16.xpose.msra.mxu0 0
        %5137 = vmatprep.subr.bf16.mxu0 0
        %5138 = vmatpush1.bf16.xpose.msra.mxu0 0
        %5139 = vmatprep.subr.bf16.mxu0 0
        %5140 = vmatpush1.bf16.xpose.msra.mxu0 0
        %5141 = vmatprep.subr.bf16.mxu0 0
        %5142 = vmatpush1.bf16.xpose.msra.mxu0 0
        %5143 = vmatprep.subr.bf16.mxu0 0
        %5144 = vmatpush1.bf16.xpose.msra.mxu0 0
        %5145 = vmatprep.subr.bf16.mxu0 0
        %5146 = vmatpush1.bf16.xpose.msra.mxu0 0
        %5147 = vmatprep.subr.bf16.mxu0 0
        %5148 = vmatpush1.bf16.xpose.msra.mxu0 0
        %5149 = vmatprep.subr.bf16.mxu0 0
        %5150 = vmatpush1.bf16.xpose.msra.mxu0 0
        %5151 = vmatprep.subr.bf16.mxu0 0
        %5152 = vmatpush1.bf16.xpose.msra.mxu0 0
        %5153 = vmatprep.subr.bf16.mxu0 0
        %5154 = vmatpush1.bf16.xpose.msra.mxu0 0
        %5155 = vmatprep.subr.bf16.mxu0 0
        %5156 = vmatpush1.bf16.xpose.msra.mxu0 0
        %5157 = vmatprep.subr.bf16.mxu0 0
        %5158 = vmatpush1.bf16.xpose.msra.mxu0 0
        %5159 = vmatprep.subr.bf16.mxu0 0
        %5160 = vmatpush1.bf16.xpose.msra.mxu0 0
        %5161 = vmatprep.subr.bf16.mxu0 0
        %5162 = vmatpush1.bf16.xpose.msra.mxu0 0
        %5163 = vmatprep.subr.bf16.mxu0 0
        %5164 = vmatpush1.bf16.xpose.msra.mxu0 0
        %5165 = vmatprep.mubr.bf16.mxu0 0
        %5166 = vmatmul.mubr.bf16.gmra.mrb[0].mxu0 %v5128
        %v5167 = vpop.f32.mrb[0].mxu0
        %v5168 = vadd.f32 0.0, %v5167
        %v5169 = vpop.f32.mrb[0].mxu0
        %v5170 = vpop.f32.mrb[0].mxu0
        %v5171 = vadd.f32 0.0, %v5170
        %v5172 = vpop.f32.mrb[0].mxu0
        %5173 = vdwg.mxu0
        %v5174 = vmul.f32 %v5168, 0.17677669
        %v5175 = vmul.f32 %v5171, 0.17677669
        %v5176 = vsel %vm886, %v5174, -1e+30
        %v5177 = vsel %vm887, %v5175, -1e+30
        %v5178 = vsel %vm1229, %v5176, -inf
        %5179 = vmax.xlane.f32.xlu0 %v5178
        %v5180 = vpop.xlane.xlu0 %5179
        %v5181 = vsel %vm1229, %v5177, -inf
        %5182 = vmax.xlane.f32.xlu0 %v5181
        %v5183 = vpop.xlane.xlu0 %5182
        %v5184 = vsub.f32 %v5176, %v5180
        %v5185 = vsub.f32 %v5177, %v5183
        %v5186 = vmul.f32 %v5184, 1.442695
        %v5187 = vpow.pop %v5186
        %v5188 = vmul.f32 %v5185, 1.442695
        %v5189 = vpow.pop %v5188
        %v5190 = vsel %vm1229, %v5187, 0.0
        %5191 = vadd.xlane.f32.xlu0 %v5190
        %v5192 = vpop.xlane.xlu0 %5191
        %v5193 = vsel %vm1229, %v5189, 0.0
        %5194 = vadd.xlane.f32.xlu0 %v5193
        %v5195 = vpop.xlane.xlu0 %5194
        %v5196 = vrcp.pop %v5192
        %v5197 = vrcp.pop %v5195
        %v5198 = vmul.f32 %v5187, %v5196
        %v5199 = vmul.f32 %v5189, %v5197
        %v5200 = vpack.c.bf16 %v5199, %v5198
        %v5202 = vsel %vm1229, %v5200, 0
        %5204 = vmatprep.subr.bf16.mxu0 0
        %5205 = vmatpush1.bf16.msra.mxu0 %v5126
        %5206 = vmatprep.subr.bf16.mxu0 0
        %5207 = vmatpush1.bf16.msra.mxu0 0
        %5208 = vmatprep.subr.bf16.mxu0 0
        %5209 = vmatpush1.bf16.msra.mxu0 0
        %5210 = vmatprep.subr.bf16.mxu0 0
        %5211 = vmatpush1.bf16.msra.mxu0 0
        %5212 = vmatprep.subr.bf16.mxu0 0
        %5213 = vmatpush1.bf16.msra.mxu0 0
        %5214 = vmatprep.subr.bf16.mxu0 0
        %5215 = vmatpush1.bf16.msra.mxu0 0
        %5216 = vmatprep.subr.bf16.mxu0 0
        %5217 = vmatpush1.bf16.msra.mxu0 0
        %5218 = vmatprep.subr.bf16.mxu0 0
        %5219 = vmatpush1.bf16.msra.mxu0 0
        %5220 = vmatprep.subr.bf16.mxu0 0
        %5221 = vmatpush1.bf16.msra.mxu0 0
        %5222 = vmatprep.subr.bf16.mxu0 0
        %5223 = vmatpush1.bf16.msra.mxu0 0
        %5224 = vmatprep.subr.bf16.mxu0 0
        %5225 = vmatpush1.bf16.msra.mxu0 0
        %5226 = vmatprep.subr.bf16.mxu0 0
        %5227 = vmatpush1.bf16.msra.mxu0 0
        %5228 = vmatprep.subr.bf16.mxu0 0
        %5229 = vmatpush1.bf16.msra.mxu0 0
        %5230 = vmatprep.subr.bf16.mxu0 0
        %5231 = vmatpush1.bf16.msra.mxu0 0
        %5232 = vmatprep.subr.bf16.mxu0 0
        %5233 = vmatpush1.bf16.msra.mxu0 0
        %5234 = vmatprep.subr.bf16.mxu0 0
        %5235 = vmatpush1.bf16.msra.mxu0 0
        %5236 = vmatprep.mubr.bf16.mxu0 0
        %5237 = vmatmul.mubr.bf16.gmra.mrb[0].mxu0 %v5202
        %v5238 = vpop.f32.mrb[0].mxu0
        %v5239 = vadd.f32 0.0, %v5238
        %v5240 = vpop.f32.mrb[0].mxu0
        %v5241 = vpop.f32.mrb[0].mxu0
        %v5242 = vadd.f32 0.0, %v5241
        %v5243 = vpop.f32.mrb[0].mxu0
        %5244 = vdwg.mxu0
        %5246 = vrot.lane.b32.xlu0 %v5124, 96
        %v5247 = vpop.permute.xlu0 %5246
        %5249 = vrot.lane.b32.xlu0 %v5125, 96
        %v5250 = vpop.permute.xlu0 %5249
        %v5252 = vsel %vm1177, %v5247, 0
        %v5255 = vsel %vm1177, %v5250, 0
        %5257 = vmatprep.subr.bf16.mxu0 0
        %5258 = vmatpush1.bf16.xpose.msra.mxu0 %v5255
        %5259 = vmatprep.subr.bf16.mxu0 0
        %5260 = vmatpush1.bf16.xpose.msra.mxu0 0
        %5261 = vmatprep.subr.bf16.mxu0 0
        %5262 = vmatpush1.bf16.xpose.msra.mxu0 0
        %5263 = vmatprep.subr.bf16.mxu0 0
        %5264 = vmatpush1.bf16.xpose.msra.mxu0 0
        %5265 = vmatprep.subr.bf16.mxu0 0
        %5266 = vmatpush1.bf16.xpose.msra.mxu0 0
        %5267 = vmatprep.subr.bf16.mxu0 0
        %5268 = vmatpush1.bf16.xpose.msra.mxu0 0
        %5269 = vmatprep.subr.bf16.mxu0 0
        %5270 = vmatpush1.bf16.xpose.msra.mxu0 0
        %5271 = vmatprep.subr.bf16.mxu0 0
        %5272 = vmatpush1.bf16.xpose.msra.mxu0 0
        %5273 = vmatprep.subr.bf16.mxu0 0
        %5274 = vmatpush1.bf16.xpose.msra.mxu0 0
        %5275 = vmatprep.subr.bf16.mxu0 0
        %5276 = vmatpush1.bf16.xpose.msra.mxu0 0
        %5277 = vmatprep.subr.bf16.mxu0 0
        %5278 = vmatpush1.bf16.xpose.msra.mxu0 0
        %5279 = vmatprep.subr.bf16.mxu0 0
        %5280 = vmatpush1.bf16.xpose.msra.mxu0 0
        %5281 = vmatprep.subr.bf16.mxu0 0
        %5282 = vmatpush1.bf16.xpose.msra.mxu0 0
        %5283 = vmatprep.subr.bf16.mxu0 0
        %5284 = vmatpush1.bf16.xpose.msra.mxu0 0
        %5285 = vmatprep.subr.bf16.mxu0 0
        %5286 = vmatpush1.bf16.xpose.msra.mxu0 0
        %5287 = vmatprep.subr.bf16.mxu0 0
        %5288 = vmatpush1.bf16.xpose.msra.mxu0 0
        %5289 = vmatprep.mubr.bf16.mxu0 0
        %5290 = vmatmul.mubr.bf16.gmra.mrb[0].mxu0 %v5252
        %v5291 = vpop.f32.mrb[0].mxu0
        %v5292 = vadd.f32 0.0, %v5291
        %v5293 = vpop.f32.mrb[0].mxu0
        %v5294 = vpop.f32.mrb[0].mxu0
        %v5295 = vadd.f32 0.0, %v5294
        %v5296 = vpop.f32.mrb[0].mxu0
        %5297 = vdwg.mxu0
        %v5298 = vmul.f32 %v5292, 0.17677669
        %v5299 = vmul.f32 %v5295, 0.17677669
        %v5300 = vsel %vm886, %v5298, -1e+30
        %v5301 = vsel %vm887, %v5299, -1e+30
        %v5302 = vsel %vm1229, %v5300, -inf
        %5303 = vmax.xlane.f32.xlu0 %v5302
        %v5304 = vpop.xlane.xlu0 %5303
        %v5305 = vsel %vm1229, %v5301, -inf
        %5306 = vmax.xlane.f32.xlu0 %v5305
        %v5307 = vpop.xlane.xlu0 %5306
        %v5308 = vsub.f32 %v5300, %v5304
        %v5309 = vsub.f32 %v5301, %v5307
        %v5310 = vmul.f32 %v5308, 1.442695
        %v5311 = vpow.pop %v5310
        %v5312 = vmul.f32 %v5309, 1.442695
        %v5313 = vpow.pop %v5312
        %v5314 = vsel %vm1229, %v5311, 0.0
        %5315 = vadd.xlane.f32.xlu0 %v5314
        %v5316 = vpop.xlane.xlu0 %5315
        %v5317 = vsel %vm1229, %v5313, 0.0
        %5318 = vadd.xlane.f32.xlu0 %v5317
        %v5319 = vpop.xlane.xlu0 %5318
        %v5320 = vrcp.pop %v5316
        %v5321 = vrcp.pop %v5319
        %v5322 = vmul.f32 %v5311, %v5320
        %v5323 = vmul.f32 %v5313, %v5321
        %v5324 = vpack.c.bf16 %v5323, %v5322
        %5326 = vrot.lane.b32.xlu0 %v5126, 96
        %v5327 = vpop.permute.xlu0 %5326
        %v5330 = vsel %vm1229, %v5324, 0
        %5332 = vmatprep.subr.bf16.mxu0 0
        %5333 = vmatpush1.bf16.msra.mxu0 %v5327
        %5334 = vmatprep.subr.bf16.mxu0 0
        %5335 = vmatpush1.bf16.msra.mxu0 0
        %5336 = vmatprep.subr.bf16.mxu0 0
        %5337 = vmatpush1.bf16.msra.mxu0 0
        %5338 = vmatprep.subr.bf16.mxu0 0
        %5339 = vmatpush1.bf16.msra.mxu0 0
        %5340 = vmatprep.subr.bf16.mxu0 0
        %5341 = vmatpush1.bf16.msra.mxu0 0
        %5342 = vmatprep.subr.bf16.mxu0 0
        %5343 = vmatpush1.bf16.msra.mxu0 0
        %5344 = vmatprep.subr.bf16.mxu0 0
        %5345 = vmatpush1.bf16.msra.mxu0 0
        %5346 = vmatprep.subr.bf16.mxu0 0
        %5347 = vmatpush1.bf16.msra.mxu0 0
        %5348 = vmatprep.subr.bf16.mxu0 0
        %5349 = vmatpush1.bf16.msra.mxu0 0
        %5350 = vmatprep.subr.bf16.mxu0 0
        %5351 = vmatpush1.bf16.msra.mxu0 0
        %5352 = vmatprep.subr.bf16.mxu0 0
        %5353 = vmatpush1.bf16.msra.mxu0 0
        %5354 = vmatprep.subr.bf16.mxu0 0
        %5355 = vmatpush1.bf16.msra.mxu0 0
        %5356 = vmatprep.subr.bf16.mxu0 0
        %5357 = vmatpush1.bf16.msra.mxu0 0
        %5358 = vmatprep.subr.bf16.mxu0 0
        %5359 = vmatpush1.bf16.msra.mxu0 0
        %5360 = vmatprep.subr.bf16.mxu0 0
        %5361 = vmatpush1.bf16.msra.mxu0 0
        %5362 = vmatprep.subr.bf16.mxu0 0
        %5363 = vmatpush1.bf16.msra.mxu0 0
        %5364 = vmatprep.mubr.bf16.mxu0 0
        %5365 = vmatmul.mubr.bf16.gmra.mrb[0].mxu0 %v5330
        %v5366 = vpop.f32.mrb[0].mxu0
        %v5367 = vadd.f32 0.0, %v5366
        %v5368 = vpop.f32.mrb[0].mxu0
        %v5369 = vpop.f32.mrb[0].mxu0
        %v5370 = vadd.f32 0.0, %v5369
        %v5371 = vpop.f32.mrb[0].mxu0
        %5372 = vdwg.mxu0
        %5373 = vrot.lane.b32.xlu0 %v5124, 64
        %v5374 = vpop.permute.xlu0 %5373
        %5375 = vrot.lane.b32.xlu0 %v5125, 64
        %v5376 = vpop.permute.xlu0 %5375
        %v5378 = vsel %vm1177, %v5374, 0
        %v5381 = vsel %vm1177, %v5376, 0
        %5383 = vmatprep.subr.bf16.mxu0 0
        %5384 = vmatpush1.bf16.xpose.msra.mxu0 %v5381
        %5385 = vmatprep.subr.bf16.mxu0 0
        %5386 = vmatpush1.bf16.xpose.msra.mxu0 0
        %5387 = vmatprep.subr.bf16.mxu0 0
        %5388 = vmatpush1.bf16.xpose.msra.mxu0 0
        %5389 = vmatprep.subr.bf16.mxu0 0
        %5390 = vmatpush1.bf16.xpose.msra.mxu0 0
        %5391 = vmatprep.subr.bf16.mxu0 0
        %5392 = vmatpush1.bf16.xpose.msra.mxu0 0
        %5393 = vmatprep.subr.bf16.mxu0 0
        %5394 = vmatpush1.bf16.xpose.msra.mxu0 0
        %5395 = vmatprep.subr.bf16.mxu0 0
        %5396 = vmatpush1.bf16.xpose.msra.mxu0 0
        %5397 = vmatprep.subr.bf16.mxu0 0
        %5398 = vmatpush1.bf16.xpose.msra.mxu0 0
        %5399 = vmatprep.subr.bf16.mxu0 0
        %5400 = vmatpush1.bf16.xpose.msra.mxu0 0
        %5401 = vmatprep.subr.bf16.mxu0 0
        %5402 = vmatpush1.bf16.xpose.msra.mxu0 0
        %5403 = vmatprep.subr.bf16.mxu0 0
        %5404 = vmatpush1.bf16.xpose.msra.mxu0 0
        %5405 = vmatprep.subr.bf16.mxu0 0
        %5406 = vmatpush1.bf16.xpose.msra.mxu0 0
        %5407 = vmatprep.subr.bf16.mxu0 0
        %5408 = vmatpush1.bf16.xpose.msra.mxu0 0
        %5409 = vmatprep.subr.bf16.mxu0 0
        %5410 = vmatpush1.bf16.xpose.msra.mxu0 0
        %5411 = vmatprep.subr.bf16.mxu0 0
        %5412 = vmatpush1.bf16.xpose.msra.mxu0 0
        %5413 = vmatprep.subr.bf16.mxu0 0
        %5414 = vmatpush1.bf16.xpose.msra.mxu0 0
        %5415 = vmatprep.mubr.bf16.mxu0 0
        %5416 = vmatmul.mubr.bf16.gmra.mrb[0].mxu0 %v5378
        %v5417 = vpop.f32.mrb[0].mxu0
        %v5418 = vadd.f32 0.0, %v5417
        %v5419 = vpop.f32.mrb[0].mxu0
        %v5420 = vpop.f32.mrb[0].mxu0
        %v5421 = vadd.f32 0.0, %v5420
        %v5422 = vpop.f32.mrb[0].mxu0
        %5423 = vdwg.mxu0
        %v5424 = vmul.f32 %v5418, 0.17677669
        %v5425 = vmul.f32 %v5421, 0.17677669
        %v5426 = vsel %vm886, %v5424, -1e+30
        %v5427 = vsel %vm887, %v5425, -1e+30
        %v5428 = vsel %vm1229, %v5426, -inf
        %5429 = vmax.xlane.f32.xlu0 %v5428
        %v5430 = vpop.xlane.xlu0 %5429
        %v5431 = vsel %vm1229, %v5427, -inf
        %5432 = vmax.xlane.f32.xlu0 %v5431
        %v5433 = vpop.xlane.xlu0 %5432
        %v5434 = vsub.f32 %v5426, %v5430
        %v5435 = vsub.f32 %v5427, %v5433
        %v5436 = vmul.f32 %v5434, 1.442695
        %v5437 = vpow.pop %v5436
        %v5438 = vmul.f32 %v5435, 1.442695
        %v5439 = vpow.pop %v5438
        %v5440 = vsel %vm1229, %v5437, 0.0
        %5441 = vadd.xlane.f32.xlu0 %v5440
        %v5442 = vpop.xlane.xlu0 %5441
        %v5443 = vsel %vm1229, %v5439, 0.0
        %5444 = vadd.xlane.f32.xlu0 %v5443
        %v5445 = vpop.xlane.xlu0 %5444
        %v5446 = vrcp.pop %v5442
        %v5447 = vrcp.pop %v5445
        %v5448 = vmul.f32 %v5437, %v5446
        %v5449 = vmul.f32 %v5439, %v5447
        %v5450 = vpack.c.bf16 %v5449, %v5448
        %5451 = vrot.lane.b32.xlu0 %v5126, 64
        %v5452 = vpop.permute.xlu0 %5451
        %v5455 = vsel %vm1229, %v5450, 0
        %5457 = vmatprep.subr.bf16.mxu0 0
        %5458 = vmatpush1.bf16.msra.mxu0 %v5452
        %5459 = vmatprep.subr.bf16.mxu0 0
        %5460 = vmatpush1.bf16.msra.mxu0 0
        %5461 = vmatprep.subr.bf16.mxu0 0
        %5462 = vmatpush1.bf16.msra.mxu0 0
        %5463 = vmatprep.subr.bf16.mxu0 0
        %5464 = vmatpush1.bf16.msra.mxu0 0
        %5465 = vmatprep.subr.bf16.mxu0 0
        %5466 = vmatpush1.bf16.msra.mxu0 0
        %5467 = vmatprep.subr.bf16.mxu0 0
        %5468 = vmatpush1.bf16.msra.mxu0 0
        %5469 = vmatprep.subr.bf16.mxu0 0
        %5470 = vmatpush1.bf16.msra.mxu0 0
        %5471 = vmatprep.subr.bf16.mxu0 0
        %5472 = vmatpush1.bf16.msra.mxu0 0
        %5473 = vmatprep.subr.bf16.mxu0 0
        %5474 = vmatpush1.bf16.msra.mxu0 0
        %5475 = vmatprep.subr.bf16.mxu0 0
        %5476 = vmatpush1.bf16.msra.mxu0 0
        %5477 = vmatprep.subr.bf16.mxu0 0
        %5478 = vmatpush1.bf16.msra.mxu0 0
        %5479 = vmatprep.subr.bf16.mxu0 0
        %5480 = vmatpush1.bf16.msra.mxu0 0
        %5481 = vmatprep.subr.bf16.mxu0 0
        %5482 = vmatpush1.bf16.msra.mxu0 0
        %5483 = vmatprep.subr.bf16.mxu0 0
        %5484 = vmatpush1.bf16.msra.mxu0 0
        %5485 = vmatprep.subr.bf16.mxu0 0
        %5486 = vmatpush1.bf16.msra.mxu0 0
        %5487 = vmatprep.subr.bf16.mxu0 0
        %5488 = vmatpush1.bf16.msra.mxu0 0
        %5489 = vmatprep.mubr.bf16.mxu0 0
        %5490 = vmatmul.mubr.bf16.gmra.mrb[0].mxu0 %v5455
        %v5491 = vpop.f32.mrb[0].mxu0
        %v5492 = vadd.f32 0.0, %v5491
        %v5493 = vpop.f32.mrb[0].mxu0
        %v5494 = vpop.f32.mrb[0].mxu0
        %v5495 = vadd.f32 0.0, %v5494
        %v5496 = vpop.f32.mrb[0].mxu0
        %5497 = vdwg.mxu0
        %5498 = vrot.lane.b32.xlu0 %v5124, 32
        %v5499 = vpop.permute.xlu0 %5498
        %5500 = vrot.lane.b32.xlu0 %v5125, 32
        %v5501 = vpop.permute.xlu0 %5500
        %v5503 = vsel %vm1177, %v5499, 0
        %v5506 = vsel %vm1177, %v5501, 0
        %5508 = vmatprep.subr.bf16.mxu0 0
        %5509 = vmatpush1.bf16.xpose.msra.mxu0 %v5506
        %5510 = vmatprep.subr.bf16.mxu0 0
        %5511 = vmatpush1.bf16.xpose.msra.mxu0 0
        %5512 = vmatprep.subr.bf16.mxu0 0
        %5513 = vmatpush1.bf16.xpose.msra.mxu0 0
        %5514 = vmatprep.subr.bf16.mxu0 0
        %5515 = vmatpush1.bf16.xpose.msra.mxu0 0
        %5516 = vmatprep.subr.bf16.mxu0 0
        %5517 = vmatpush1.bf16.xpose.msra.mxu0 0
        %5518 = vmatprep.subr.bf16.mxu0 0
        %5519 = vmatpush1.bf16.xpose.msra.mxu0 0
        %5520 = vmatprep.subr.bf16.mxu0 0
        %5521 = vmatpush1.bf16.xpose.msra.mxu0 0
        %5522 = vmatprep.subr.bf16.mxu0 0
        %5523 = vmatpush1.bf16.xpose.msra.mxu0 0
        %5524 = vmatprep.subr.bf16.mxu0 0
        %5525 = vmatpush1.bf16.xpose.msra.mxu0 0
        %5526 = vmatprep.subr.bf16.mxu0 0
        %5527 = vmatpush1.bf16.xpose.msra.mxu0 0
        %5528 = vmatprep.subr.bf16.mxu0 0
        %5529 = vmatpush1.bf16.xpose.msra.mxu0 0
        %5530 = vmatprep.subr.bf16.mxu0 0
        %5531 = vmatpush1.bf16.xpose.msra.mxu0 0
        %5532 = vmatprep.subr.bf16.mxu0 0
        %5533 = vmatpush1.bf16.xpose.msra.mxu0 0
        %5534 = vmatprep.subr.bf16.mxu0 0
        %5535 = vmatpush1.bf16.xpose.msra.mxu0 0
        %5536 = vmatprep.subr.bf16.mxu0 0
        %5537 = vmatpush1.bf16.xpose.msra.mxu0 0
        %5538 = vmatprep.subr.bf16.mxu0 0
        %5539 = vmatpush1.bf16.xpose.msra.mxu0 0
        %5540 = vmatprep.mubr.bf16.mxu0 0
        %5541 = vmatmul.mubr.bf16.gmra.mrb[0].mxu0 %v5503
        %v5542 = vpop.f32.mrb[0].mxu0
        %v5543 = vadd.f32 0.0, %v5542
        %v5544 = vpop.f32.mrb[0].mxu0
        %v5545 = vpop.f32.mrb[0].mxu0
        %v5546 = vadd.f32 0.0, %v5545
        %v5547 = vpop.f32.mrb[0].mxu0
        %5548 = vdwg.mxu0
        %v5549 = vmul.f32 %v5543, 0.17677669
        %v5550 = vmul.f32 %v5546, 0.17677669
        %v5551 = vsel %vm886, %v5549, -1e+30
        %v5552 = vsel %vm887, %v5550, -1e+30
        %v5553 = vsel %vm1229, %v5551, -inf
        %5554 = vmax.xlane.f32.xlu0 %v5553
        %v5555 = vpop.xlane.xlu0 %5554
        %v5556 = vsel %vm1229, %v5552, -inf
        %5557 = vmax.xlane.f32.xlu0 %v5556
        %v5558 = vpop.xlane.xlu0 %5557
        %v5559 = vsub.f32 %v5551, %v5555
        %v5560 = vsub.f32 %v5552, %v5558
        %v5561 = vmul.f32 %v5559, 1.442695
        %v5562 = vpow.pop %v5561
        %v5563 = vmul.f32 %v5560, 1.442695
        %v5564 = vpow.pop %v5563
        %v5565 = vsel %vm1229, %v5562, 0.0
        %5566 = vadd.xlane.f32.xlu0 %v5565
        %v5567 = vpop.xlane.xlu0 %5566
        %v5568 = vsel %vm1229, %v5564, 0.0
        %5569 = vadd.xlane.f32.xlu0 %v5568
        %v5570 = vpop.xlane.xlu0 %5569
        %v5571 = vrcp.pop %v5567
        %v5572 = vrcp.pop %v5570
        %v5573 = vmul.f32 %v5562, %v5571
        %v5574 = vmul.f32 %v5564, %v5572
        %v5575 = vpack.c.bf16 %v5574, %v5573
        %5576 = vrot.lane.b32.xlu0 %v5126, 32
        %v5577 = vpop.permute.xlu0 %5576
        %v5580 = vsel %vm1229, %v5575, 0
        %5582 = vmatprep.subr.bf16.mxu0 0
        %5583 = vmatpush1.bf16.msra.mxu0 %v5577
        %5584 = vmatprep.subr.bf16.mxu0 0
        %5585 = vmatpush1.bf16.msra.mxu0 0
        %5586 = vmatprep.subr.bf16.mxu0 0
        %5587 = vmatpush1.bf16.msra.mxu0 0
        %5588 = vmatprep.subr.bf16.mxu0 0
        %5589 = vmatpush1.bf16.msra.mxu0 0
        %5590 = vmatprep.subr.bf16.mxu0 0
        %5591 = vmatpush1.bf16.msra.mxu0 0
        %5592 = vmatprep.subr.bf16.mxu0 0
        %5593 = vmatpush1.bf16.msra.mxu0 0
        %5594 = vmatprep.subr.bf16.mxu0 0
        %5595 = vmatpush1.bf16.msra.mxu0 0
        %5596 = vmatprep.subr.bf16.mxu0 0
        %5597 = vmatpush1.bf16.msra.mxu0 0
        %5598 = vmatprep.subr.bf16.mxu0 0
        %5599 = vmatpush1.bf16.msra.mxu0 0
        %5600 = vmatprep.subr.bf16.mxu0 0
        %5601 = vmatpush1.bf16.msra.mxu0 0
        %5602 = vmatprep.subr.bf16.mxu0 0
        %5603 = vmatpush1.bf16.msra.mxu0 0
        %5604 = vmatprep.subr.bf16.mxu0 0
        %5605 = vmatpush1.bf16.msra.mxu0 0
        %5606 = vmatprep.subr.bf16.mxu0 0
        %5607 = vmatpush1.bf16.msra.mxu0 0
        %5608 = vmatprep.subr.bf16.mxu0 0
        %5609 = vmatpush1.bf16.msra.mxu0 0
        %5610 = vmatprep.subr.bf16.mxu0 0
        %5611 = vmatpush1.bf16.msra.mxu0 0
        %5612 = vmatprep.subr.bf16.mxu0 0
        %5613 = vmatpush1.bf16.msra.mxu0 0
        %5614 = vmatprep.mubr.bf16.mxu0 0
        %5615 = vmatmul.mubr.bf16.gmra.mrb[0].mxu0 %v5580
        %v5616 = vpop.f32.mrb[0].mxu0
        %v5617 = vadd.f32 0.0, %v5616
        %v5618 = vpop.f32.mrb[0].mxu0
        %v5619 = vpop.f32.mrb[0].mxu0
        %v5620 = vadd.f32 0.0, %v5619
        %v5621 = vpop.f32.mrb[0].mxu0
        %5622 = vdwg.mxu0
        %5625 = vrot.lane.b32.xlu0 %v5367, 32
        %v5626 = vpop.permute.xlu0 %5625
        %5627 = vrot.lane.b32.xlu0 %v5370, 32
        %v5628 = vpop.permute.xlu0 %5627
        %5633 = vrot.lane.b32.xlu0 %v5492, 64
        %v5634 = vpop.permute.xlu0 %5633
        %5635 = vrot.lane.b32.xlu0 %v5495, 64
        %v5636 = vpop.permute.xlu0 %5635
        %5641 = vrot.lane.b32.xlu0 %v5617, 96
        %v5642 = vpop.permute.xlu0 %5641
        %5643 = vrot.lane.b32.xlu0 %v5620, 96
        %v5644 = vpop.permute.xlu0 %5643
        %v5647 = vsel %vm1177, %v5239, %v5626
        %v5648 = vsel %vm1177, %v5242, %v5628
        %v5649 = vsel %vm1701, %v5647, %v5634
        %v5650 = vsel %vm1701, %v5648, %v5636
        %v5651 = vsel %vm1704, %v5649, %v5642
        %v5652 = vsel %vm1704, %v5650, %v5644
        %v5653 = vpack.c.bf16 %v5652, %v5651
        %s5654 = scalar_lea.vmem [#allocation7], 64
        %v5655 = vld [vmem:[%s5654] sm:$0xf]
        %v5656 = vld [vmem:[%s5654 + $0x4] sm:$0xf]
        %v5657 = vld [vmem:[%s5654 + $0x8] sm:$0xf]
        %v5658 = vld [vmem:[%s5654 + $0xc] sm:$0xf]
        %v5659 = vld [vmem:[%s5654 + $0x10] sm:$0xf]
        %v5660 = vld [vmem:[%s5654 + $0x14] sm:$0xf]
        %v5661 = vld [vmem:[%s5654 + $0x18] sm:$0xf]
        %v5662 = vld [vmem:[%s5654 + $0x1c] sm:$0xf]
        %v5663 = vld [vmem:[%s5654 + $0x20] sm:$0xf]
        %v5664 = vld [vmem:[%s5654 + $0x24] sm:$0xf]
        %v5665 = vld [vmem:[%s5654 + $0x28] sm:$0xf]
        %v5666 = vld [vmem:[%s5654 + $0x2c] sm:$0xf]
        %v5667 = vld [vmem:[%s5654 + $0x30] sm:$0xf]
        %v5668 = vld [vmem:[%s5654 + $0x34] sm:$0xf]
        %v5669 = vld [vmem:[%s5654 + $0x38] sm:$0xf]
        %v5670 = vld [vmem:[%s5654 + $0x3c] sm:$0xf]
        %s5671 = scalar_lea.vmem %s7, 1
        %v5672 = vld [vmem:[%s5671] sm:$0x1]
        %v5674 = vlaneseq
        %v5675 = vshrl.u32 %v5674, 7
        %v5676 = vsub.s32 0, %v5675
        %v5677 = vrot.slane %v5672, %v5676
        %v5695 = vunpack.c.l.b16 %v5655
        %v5696 = vunpack.c.l.b16 %v5656
        %v5697 = vunpack.c.l.b16 %v5657
        %v5698 = vunpack.c.l.b16 %v5658
        %v5699 = vunpack.c.l.b16 %v5659
        %v5700 = vunpack.c.l.b16 %v5660
        %v5701 = vunpack.c.l.b16 %v5661
        %v5702 = vunpack.c.l.b16 %v5662
        %v5703 = vunpack.c.l.b16 %v5663
        %v5704 = vunpack.c.l.b16 %v5664
        %v5705 = vunpack.c.l.b16 %v5665
        %v5706 = vunpack.c.l.b16 %v5666
        %v5707 = vunpack.c.l.b16 %v5667
        %v5708 = vunpack.c.l.b16 %v5668
        %v5709 = vunpack.c.l.b16 %v5669
        %v5710 = vunpack.c.l.b16 %v5670
        %v5711 = vpack.c.b16 %v5696, %v5695
        %v5712 = vpack.c.b16 %v5698, %v5697
        %v5713 = vpack.c.b16 %v5700, %v5699
        %v5714 = vpack.c.b16 %v5702, %v5701
        %v5715 = vpack.c.b16 %v5704, %v5703
        %v5716 = vpack.c.b16 %v5706, %v5705
        %v5717 = vpack.c.b16 %v5708, %v5707
        %v5718 = vpack.c.b16 %v5710, %v5709
        %5727 = vmatprep.subr.bf16.mxu0 0
        %5728 = vmatpush1.bf16.msra.mxu0 %v5711
        %5729 = vmatprep.subr.bf16.mxu0 0
        %5730 = vmatpush1.bf16.msra.mxu0 %v5712
        %5731 = vmatprep.subr.bf16.mxu0 0
        %5732 = vmatpush1.bf16.msra.mxu0 %v5713
        %5733 = vmatprep.subr.bf16.mxu0 0
        %5734 = vmatpush1.bf16.msra.mxu0 %v5714
        %5735 = vmatprep.subr.bf16.mxu0 0
        %5736 = vmatpush1.bf16.msra.mxu0 %v5715
        %5737 = vmatprep.subr.bf16.mxu0 0
        %5738 = vmatpush1.bf16.msra.mxu0 %v5716
        %5739 = vmatprep.subr.bf16.mxu0 0
        %5740 = vmatpush1.bf16.msra.mxu0 %v5717
        %5741 = vmatprep.subr.bf16.mxu0 0
        %5742 = vmatpush1.bf16.msra.mxu0 %v5718
        %5743 = vmatprep.subr.bf16.mxu0 0
        %5744 = vmatpush1.bf16.msra.mxu0 0
        %5745 = vmatprep.subr.bf16.mxu0 0
        %5746 = vmatpush1.bf16.msra.mxu0 0
        %5747 = vmatprep.subr.bf16.mxu0 0
        %5748 = vmatpush1.bf16.msra.mxu0 0
        %5749 = vmatprep.subr.bf16.mxu0 0
        %5750 = vmatpush1.bf16.msra.mxu0 0
        %5751 = vmatprep.subr.bf16.mxu0 0
        %5752 = vmatpush1.bf16.msra.mxu0 0
        %5753 = vmatprep.subr.bf16.mxu0 0
        %5754 = vmatpush1.bf16.msra.mxu0 0
        %5755 = vmatprep.subr.bf16.mxu0 0
        %5756 = vmatpush1.bf16.msra.mxu0 0
        %5757 = vmatprep.subr.bf16.mxu0 0
        %5758 = vmatpush1.bf16.msra.mxu0 0
        %5759 = vmatprep.mubr.bf16.mxu0 0
        %5760 = vmatmul.mubr.bf16.gmra.mrb[0].mxu0 %v5653
        %v5761 = vpop.f32.mrb[0].mxu0
        %v5762 = vadd.f32 %v5677, %v5761
        %v5763 = vpop.f32.mrb[0].mxu0
        %v5764 = vpop.f32.mrb[0].mxu0
        %v5765 = vadd.f32 %v5677, %v5764
        %v5766 = vpop.f32.mrb[0].mxu0
        %5767 = vdwg.mxu0
        %v5768 = vadd.f32 %v4834, %v5762
        %v5769 = vadd.f32 %v4835, %v5765
        %s5770 = scalar_lea.vmem %s8, 1
        %v5771 = vld [vmem:[%s5770] sm:$0x1]
        %s5772 = scalar_lea.vmem %s9, 1
        %v5773 = vld [vmem:[%s5772] sm:$0x1]
        %5774 = vadd.xlane.f32.xlu0 %v5768
        %v5775 = vpop.xlane.xlu0 %5774
        %5776 = vadd.xlane.f32.xlu0 %v5769
        %v5777 = vpop.xlane.xlu0 %5776
        %v5778 = vmul.f32 %v5775, %v894
        %v5779 = vmul.f32 %v5777, %v894
        %v5780 = vsub.f32 %v5768, %v5778
        %v5781 = vsub.f32 %v5769, %v5779
        %v5782 = vmul.f32 %v5780, %v5780
        %v5783 = vmul.f32 %v5781, %v5781
        %5784 = vadd.xlane.f32.xlu0 %v5782
        %v5785 = vpop.xlane.xlu0 %5784
        %5786 = vadd.xlane.f32.xlu0 %v5783
        %v5787 = vpop.xlane.xlu0 %5786
        %v5788 = vmul.f32 %v5785, %v894
        %v5789 = vmul.f32 %v5787, %v894
        %v5790 = vadd.f32 %v5788, 1e-05
        %v5791 = vadd.f32 %v5789, 1e-05
        %v5792 = vrsqrt.pop %v5790
        %v5793 = vrsqrt.pop %v5791
        %v5794 = vmul.f32 %v5780, %v5792
        %v5795 = vmul.f32 %v5781, %v5793
        %v5797 = vlaneseq
        %v5798 = vshrl.u32 %v5797, 7
        %v5799 = vsub.s32 0, %v5798
        %v5800 = vrot.slane %v5771, %v5799
        %v5802 = vmul.f32 %v5794, %v5800
        %v5803 = vmul.f32 %v5795, %v5800
        %v5805 = vlaneseq
        %v5806 = vshrl.u32 %v5805, 7
        %v5807 = vsub.s32 0, %v5806
        %v5808 = vrot.slane %v5773, %v5807
        %v5810 = vadd.f32 %v5802, %v5808
        %v5811 = vadd.f32 %v5803, %v5808
        %v5812 = vpack.c.bf16 %v5811, %v5810
        %s5813 = scalar_lea.vmem [#allocation8], 64
        %v5814 = vld [vmem:[%s5813] sm:$0xf]
        %v5815 = vld [vmem:[%s5813 + $0x4] sm:$0xf]
        %v5816 = vld [vmem:[%s5813 + $0x8] sm:$0xf]
        %v5817 = vld [vmem:[%s5813 + $0xc] sm:$0xf]
        %v5818 = vld [vmem:[%s5813 + $0x10] sm:$0xf]
        %v5819 = vld [vmem:[%s5813 + $0x14] sm:$0xf]
        %v5820 = vld [vmem:[%s5813 + $0x18] sm:$0xf]
        %v5821 = vld [vmem:[%s5813 + $0x1c] sm:$0xf]
        %v5822 = vld [vmem:[%s5813 + $0x20] sm:$0xf]
        %v5823 = vld [vmem:[%s5813 + $0x24] sm:$0xf]
        %v5824 = vld [vmem:[%s5813 + $0x28] sm:$0xf]
        %v5825 = vld [vmem:[%s5813 + $0x2c] sm:$0xf]
        %v5826 = vld [vmem:[%s5813 + $0x30] sm:$0xf]
        %v5827 = vld [vmem:[%s5813 + $0x34] sm:$0xf]
        %v5828 = vld [vmem:[%s5813 + $0x38] sm:$0xf]
        %v5829 = vld [vmem:[%s5813 + $0x3c] sm:$0xf]
        %v5846 = vunpack.c.l.b16 %v5814
        %v5847 = vunpack.c.l.b16 %v5815
        %v5848 = vunpack.c.l.b16 %v5816
        %v5849 = vunpack.c.l.b16 %v5817
        %v5850 = vunpack.c.l.b16 %v5818
        %v5851 = vunpack.c.l.b16 %v5819
        %v5852 = vunpack.c.l.b16 %v5820
        %v5853 = vunpack.c.l.b16 %v5821
        %v5854 = vunpack.c.l.b16 %v5822
        %v5855 = vunpack.c.l.b16 %v5823
        %v5856 = vunpack.c.l.b16 %v5824
        %v5857 = vunpack.c.l.b16 %v5825
        %v5858 = vunpack.c.l.b16 %v5826
        %v5859 = vunpack.c.l.b16 %v5827
        %v5860 = vunpack.c.l.b16 %v5828
        %v5861 = vunpack.c.l.b16 %v5829
        %v5862 = vpack.c.b16 %v5847, %v5846
        %v5863 = vpack.c.b16 %v5849, %v5848
        %v5864 = vpack.c.b16 %v5851, %v5850
        %v5865 = vpack.c.b16 %v5853, %v5852
        %v5866 = vpack.c.b16 %v5855, %v5854
        %v5867 = vpack.c.b16 %v5857, %v5856
        %v5868 = vpack.c.b16 %v5859, %v5858
        %v5869 = vpack.c.b16 %v5861, %v5860
        %5878 = vmatprep.subr.bf16.mxu0 0
        %5879 = vmatpush1.bf16.msra.mxu0 %v5862
        %5880 = vmatprep.subr.bf16.mxu0 0
        %5881 = vmatpush1.bf16.msra.mxu0 %v5863
        %5882 = vmatprep.subr.bf16.mxu0 0
        %5883 = vmatpush1.bf16.msra.mxu0 %v5864
        %5884 = vmatprep.subr.bf16.mxu0 0
        %5885 = vmatpush1.bf16.msra.mxu0 %v5865
        %5886 = vmatprep.subr.bf16.mxu0 0
        %5887 = vmatpush1.bf16.msra.mxu0 %v5866
        %5888 = vmatprep.subr.bf16.mxu0 0
        %5889 = vmatpush1.bf16.msra.mxu0 %v5867
        %5890 = vmatprep.subr.bf16.mxu0 0
        %5891 = vmatpush1.bf16.msra.mxu0 %v5868
        %5892 = vmatprep.subr.bf16.mxu0 0
        %5893 = vmatpush1.bf16.msra.mxu0 %v5869
        %5894 = vmatprep.subr.bf16.mxu0 0
        %5895 = vmatpush1.bf16.msra.mxu0 0
        %5896 = vmatprep.subr.bf16.mxu0 0
        %5897 = vmatpush1.bf16.msra.mxu0 0
        %5898 = vmatprep.subr.bf16.mxu0 0
        %5899 = vmatpush1.bf16.msra.mxu0 0
        %5900 = vmatprep.subr.bf16.mxu0 0
        %5901 = vmatpush1.bf16.msra.mxu0 0
        %5902 = vmatprep.subr.bf16.mxu0 0
        %5903 = vmatpush1.bf16.msra.mxu0 0
        %5904 = vmatprep.subr.bf16.mxu0 0
        %5905 = vmatpush1.bf16.msra.mxu0 0
        %5906 = vmatprep.subr.bf16.mxu0 0
        %5907 = vmatpush1.bf16.msra.mxu0 0
        %5908 = vmatprep.subr.bf16.mxu0 0
        %5909 = vmatpush1.bf16.msra.mxu0 0
        %5910 = vmatprep.mubr.bf16.mxu0 0
        %5911 = vmatmul.mubr.bf16.gmra.mrb[0].mxu0 %v5812
        %v5912 = vpop.f32.mrb[0].mxu0
        %v5913 = vadd.f32 0.0, %v5912
        %v5914 = vpop.f32.mrb[0].mxu0
        %v5915 = vpop.f32.mrb[0].mxu0
        %v5916 = vadd.f32 0.0, %v5915
        %v5917 = vpop.f32.mrb[0].mxu0
        %5918 = vdwg.mxu0
        %v5919 = vsel %vm1968, %v5913, -1e+30
        %v5920 = vsel %vm1968, %v5916, -1e+30
        %5921 = vmax.xlane.f32.xlu0 %v5919
        %v5922 = vpop.xlane.xlu0 %5921
        %5923 = vmax.xlane.f32.xlu0 %v5920
        %v5924 = vpop.xlane.xlu0 %5923
        %v5925 = vsub.f32 %v5919, %v5922
        %v5926 = vsub.f32 %v5920, %v5924
        %v5927 = vmul.f32 %v5925, 1.442695
        %v5928 = vpow.pop %v5927
        %v5929 = vmul.f32 %v5926, 1.442695
        %v5930 = vpow.pop %v5929
        %5931 = vadd.xlane.f32.xlu0 %v5928
        %v5932 = vpop.xlane.xlu0 %5931
        %5933 = vadd.xlane.f32.xlu0 %v5930
        %v5934 = vpop.xlane.xlu0 %5933
        %v5935 = vrcp.pop %v5932
        %v5936 = vrcp.pop %v5934
        %v5937 = vmul.f32 %v5928, %v5935
        %v5938 = vmul.f32 %v5930, %v5936
        %5939 = vmax.xlane.f32.xlu0 %v5937
        %v5940 = vpop.xlane.xlu0 %5939
        %5941 = vmax.xlane.f32.xlu0 %v5938
        %v5942 = vpop.xlane.xlu0 %5941
        %vm5943 = vcmp.eq.f32.partialorder %v5937, %v5940
        %vm5944 = vcmp.eq.f32.partialorder %v5938, %v5942
        %v5945 = vsel %vm5943, %v764, 128
        %v5946 = vsel %vm5944, %v764, 128
        %v5947 = vand.u32 %v5945, 65535
        %v5948 = vshra.s32 %v5945, 16
        %v5949 = vcvt.s32.f32 %v5947
        %v5950 = vcvt.s32.f32 %v5948
        %5951 = vmin.xlane.f32.xlu0 %v5950
        %v5952 = vpop.xlane.xlu0 %5951
        %vm5953 = vcmp.eq.f32.partialorder %v5950, %v5952
        %v5954 = vsel %vm5953, %v5949, inf
        %5955 = vmin.xlane.f32.xlu0 %v5954
        %v5956 = vpop.xlane.xlu0 %5955
        %v5957 = vcvt.f32.s32 %v5956
        %v5958 = vcvt.f32.s32 %v5952
        %v5959 = vshll.u32 %v5958, 16
        %v5960 = vadd.s32 %v5959, %v5957
        %v5961 = vand.u32 %v5946, 65535
        %v5962 = vshra.s32 %v5946, 16
        %v5963 = vcvt.s32.f32 %v5961
        %v5964 = vcvt.s32.f32 %v5962
        %5965 = vmin.xlane.f32.xlu0 %v5964
        %v5966 = vpop.xlane.xlu0 %5965
        %vm5967 = vcmp.eq.f32.partialorder %v5964, %v5966
        %v5968 = vsel %vm5967, %v5963, inf
        %5969 = vmin.xlane.f32.xlu0 %v5968
        %v5970 = vpop.xlane.xlu0 %5969
        %v5971 = vcvt.f32.s32 %v5970
        %v5972 = vcvt.f32.s32 %v5966
        %v5973 = vshll.u32 %v5972, 16
        %v5974 = vadd.s32 %v5973, %v5971
        %vm5975 = vcmp.eq.s32.totalorder %v764, %v5960
        %vm5976 = vcmp.eq.s32.totalorder %v764, %v5974
        %v5977 = vsel %vm5975, -1.0, %v5937
        %v5978 = vsel %vm5976, -1.0, %v5938
        %5979 = vmax.xlane.f32.xlu0 %v5977
        %v5980 = vpop.xlane.xlu0 %5979
        %5981 = vmax.xlane.f32.xlu0 %v5978
        %v5982 = vpop.xlane.xlu0 %5981
        %vm5983 = vcmp.eq.f32.partialorder %v5977, %v5980
        %vm5984 = vcmp.eq.f32.partialorder %v5978, %v5982
        %v5985 = vsel %vm5983, %v764, 128
        %v5986 = vsel %vm5984, %v764, 128
        %v5987 = vand.u32 %v5985, 65535
        %v5988 = vshra.s32 %v5985, 16
        %v5989 = vcvt.s32.f32 %v5987
        %v5990 = vcvt.s32.f32 %v5988
        %5991 = vmin.xlane.f32.xlu0 %v5990
        %v5992 = vpop.xlane.xlu0 %5991
        %vm5993 = vcmp.eq.f32.partialorder %v5990, %v5992
        %v5994 = vsel %vm5993, %v5989, inf
        %5995 = vmin.xlane.f32.xlu0 %v5994
        %v5996 = vpop.xlane.xlu0 %5995
        %v5997 = vcvt.f32.s32 %v5996
        %v5998 = vcvt.f32.s32 %v5992
        %v5999 = vshll.u32 %v5998, 16
        %v6000 = vadd.s32 %v5999, %v5997
        %v6001 = vand.u32 %v5986, 65535
        %v6002 = vshra.s32 %v5986, 16
        %v6003 = vcvt.s32.f32 %v6001
        %v6004 = vcvt.s32.f32 %v6002
        %6005 = vmin.xlane.f32.xlu0 %v6004
        %v6006 = vpop.xlane.xlu0 %6005
        %vm6007 = vcmp.eq.f32.partialorder %v6004, %v6006
        %v6008 = vsel %vm6007, %v6003, inf
        %6009 = vmin.xlane.f32.xlu0 %v6008
        %v6010 = vpop.xlane.xlu0 %6009
        %v6011 = vcvt.f32.s32 %v6010
        %v6012 = vcvt.f32.s32 %v6006
        %v6013 = vshll.u32 %v6012, 16
        %v6014 = vadd.s32 %v6013, %v6011
        %vm6015 = vcmp.eq.s32.totalorder %v764, %v6000
        %vm6016 = vcmp.eq.s32.totalorder %v764, %v6014
        %vm6017 = vmor %vm5975, %vm6015
        %vm6018 = vmor %vm5976, %vm6016
        %v6019 = vsel %vm6017, %v5937, 0.0
        %v6020 = vsel %vm6018, %v5938, 0.0
        %6021 = vadd.xlane.f32.xlu0 %v6019
        %v6022 = vpop.xlane.xlu0 %6021
        %6023 = vadd.xlane.f32.xlu0 %v6020
        %v6024 = vpop.xlane.xlu0 %6023
        %v6025 = vmax.f32 %v6022, 1e-20
        %v6026 = vmax.f32 %v6024, 1e-20
        %v6027 = vrcp.pop %v6025
        %v6028 = vrcp.pop %v6026
        %v6029 = vmul.f32 %v6019, %v6027
        %v6030 = vmul.f32 %v6020, %v6028
        %s6031 = scalar_lea.vmem [#allocation10], 1024
        %v6032 = vld [vmem:[%s6031] sm:$0xff]
        %v6033 = vld [vmem:[%s6031 + $0x8] sm:$0xff]
        %v6034 = vld [vmem:[%s6031 + $0x10] sm:$0xff]
        %v6035 = vld [vmem:[%s6031 + $0x18] sm:$0xff]
        %v6036 = vld [vmem:[%s6031 + $0x20] sm:$0xff]
        %v6037 = vld [vmem:[%s6031 + $0x28] sm:$0xff]
        %v6038 = vld [vmem:[%s6031 + $0x30] sm:$0xff]
        %v6039 = vld [vmem:[%s6031 + $0x38] sm:$0xff]
        %v6040 = vld [vmem:[%s6031 + $0x40] sm:$0xff]
        %v6041 = vld [vmem:[%s6031 + $0x48] sm:$0xff]
        %v6042 = vld [vmem:[%s6031 + $0x50] sm:$0xff]
        %v6043 = vld [vmem:[%s6031 + $0x58] sm:$0xff]
        %v6044 = vld [vmem:[%s6031 + $0x60] sm:$0xff]
        %v6045 = vld [vmem:[%s6031 + $0x68] sm:$0xff]
        %v6046 = vld [vmem:[%s6031 + $0x70] sm:$0xff]
        %v6047 = vld [vmem:[%s6031 + $0x78] sm:$0xff]
        %v6048 = vld [vmem:[%s6031 + $0x80] sm:$0xff]
        %v6049 = vld [vmem:[%s6031 + $0x88] sm:$0xff]
        %v6050 = vld [vmem:[%s6031 + $0x90] sm:$0xff]
        %v6051 = vld [vmem:[%s6031 + $0x98] sm:$0xff]
        %v6052 = vld [vmem:[%s6031 + $0xa0] sm:$0xff]
        %v6053 = vld [vmem:[%s6031 + $0xa8] sm:$0xff]
        %v6054 = vld [vmem:[%s6031 + $0xb0] sm:$0xff]
        %v6055 = vld [vmem:[%s6031 + $0xb8] sm:$0xff]
        %v6056 = vld [vmem:[%s6031 + $0xc0] sm:$0xff]
        %v6057 = vld [vmem:[%s6031 + $0xc8] sm:$0xff]
        %v6058 = vld [vmem:[%s6031 + $0xd0] sm:$0xff]
        %v6059 = vld [vmem:[%s6031 + $0xd8] sm:$0xff]
        %v6060 = vld [vmem:[%s6031 + $0xe0] sm:$0xff]
        %v6061 = vld [vmem:[%s6031 + $0xe8] sm:$0xff]
        %v6062 = vld [vmem:[%s6031 + $0xf0] sm:$0xff]
        %v6063 = vld [vmem:[%s6031 + $0xf8] sm:$0xff]
        %v6064 = vld [vmem:[%s6031 + $0x100] sm:$0xff]
        %v6065 = vld [vmem:[%s6031 + $0x108] sm:$0xff]
        %v6066 = vld [vmem:[%s6031 + $0x110] sm:$0xff]
        %v6067 = vld [vmem:[%s6031 + $0x118] sm:$0xff]
        %v6068 = vld [vmem:[%s6031 + $0x120] sm:$0xff]
        %v6069 = vld [vmem:[%s6031 + $0x128] sm:$0xff]
        %v6070 = vld [vmem:[%s6031 + $0x130] sm:$0xff]
        %v6071 = vld [vmem:[%s6031 + $0x138] sm:$0xff]
        %v6072 = vld [vmem:[%s6031 + $0x140] sm:$0xff]
        %v6073 = vld [vmem:[%s6031 + $0x148] sm:$0xff]
        %v6074 = vld [vmem:[%s6031 + $0x150] sm:$0xff]
        %v6075 = vld [vmem:[%s6031 + $0x158] sm:$0xff]
        %v6076 = vld [vmem:[%s6031 + $0x160] sm:$0xff]
        %v6077 = vld [vmem:[%s6031 + $0x168] sm:$0xff]
        %v6078 = vld [vmem:[%s6031 + $0x170] sm:$0xff]
        %v6079 = vld [vmem:[%s6031 + $0x178] sm:$0xff]
        %v6080 = vld [vmem:[%s6031 + $0x180] sm:$0xff]
        %v6081 = vld [vmem:[%s6031 + $0x188] sm:$0xff]
        %v6082 = vld [vmem:[%s6031 + $0x190] sm:$0xff]
        %v6083 = vld [vmem:[%s6031 + $0x198] sm:$0xff]
        %v6084 = vld [vmem:[%s6031 + $0x1a0] sm:$0xff]
        %v6085 = vld [vmem:[%s6031 + $0x1a8] sm:$0xff]
        %v6086 = vld [vmem:[%s6031 + $0x1b0] sm:$0xff]
        %v6087 = vld [vmem:[%s6031 + $0x1b8] sm:$0xff]
        %v6088 = vld [vmem:[%s6031 + $0x1c0] sm:$0xff]
        %v6089 = vld [vmem:[%s6031 + $0x1c8] sm:$0xff]
        %v6090 = vld [vmem:[%s6031 + $0x1d0] sm:$0xff]
        %v6091 = vld [vmem:[%s6031 + $0x1d8] sm:$0xff]
        %v6092 = vld [vmem:[%s6031 + $0x1e0] sm:$0xff]
        %v6093 = vld [vmem:[%s6031 + $0x1e8] sm:$0xff]
        %v6094 = vld [vmem:[%s6031 + $0x1f0] sm:$0xff]
        %v6095 = vld [vmem:[%s6031 + $0x1f8] sm:$0xff]
        %v6096 = vld [vmem:[%s6031 + $0x200] sm:$0xff]
        %v6097 = vld [vmem:[%s6031 + $0x208] sm:$0xff]
        %v6098 = vld [vmem:[%s6031 + $0x210] sm:$0xff]
        %v6099 = vld [vmem:[%s6031 + $0x218] sm:$0xff]
        %v6100 = vld [vmem:[%s6031 + $0x220] sm:$0xff]
        %v6101 = vld [vmem:[%s6031 + $0x228] sm:$0xff]
        %v6102 = vld [vmem:[%s6031 + $0x230] sm:$0xff]
        %v6103 = vld [vmem:[%s6031 + $0x238] sm:$0xff]
        %v6104 = vld [vmem:[%s6031 + $0x240] sm:$0xff]
        %v6105 = vld [vmem:[%s6031 + $0x248] sm:$0xff]
        %v6106 = vld [vmem:[%s6031 + $0x250] sm:$0xff]
        %v6107 = vld [vmem:[%s6031 + $0x258] sm:$0xff]
        %v6108 = vld [vmem:[%s6031 + $0x260] sm:$0xff]
        %v6109 = vld [vmem:[%s6031 + $0x268] sm:$0xff]
        %v6110 = vld [vmem:[%s6031 + $0x270] sm:$0xff]
        %v6111 = vld [vmem:[%s6031 + $0x278] sm:$0xff]
        %v6112 = vld [vmem:[%s6031 + $0x280] sm:$0xff]
        %v6113 = vld [vmem:[%s6031 + $0x288] sm:$0xff]
        %v6114 = vld [vmem:[%s6031 + $0x290] sm:$0xff]
        %v6115 = vld [vmem:[%s6031 + $0x298] sm:$0xff]
        %v6116 = vld [vmem:[%s6031 + $0x2a0] sm:$0xff]
        %v6117 = vld [vmem:[%s6031 + $0x2a8] sm:$0xff]
        %v6118 = vld [vmem:[%s6031 + $0x2b0] sm:$0xff]
        %v6119 = vld [vmem:[%s6031 + $0x2b8] sm:$0xff]
        %v6120 = vld [vmem:[%s6031 + $0x2c0] sm:$0xff]
        %v6121 = vld [vmem:[%s6031 + $0x2c8] sm:$0xff]
        %v6122 = vld [vmem:[%s6031 + $0x2d0] sm:$0xff]
        %v6123 = vld [vmem:[%s6031 + $0x2d8] sm:$0xff]
        %v6124 = vld [vmem:[%s6031 + $0x2e0] sm:$0xff]
        %v6125 = vld [vmem:[%s6031 + $0x2e8] sm:$0xff]
        %v6126 = vld [vmem:[%s6031 + $0x2f0] sm:$0xff]
        %v6127 = vld [vmem:[%s6031 + $0x2f8] sm:$0xff]
        %v6128 = vld [vmem:[%s6031 + $0x300] sm:$0xff]
        %v6129 = vld [vmem:[%s6031 + $0x308] sm:$0xff]
        %v6130 = vld [vmem:[%s6031 + $0x310] sm:$0xff]
        %v6131 = vld [vmem:[%s6031 + $0x318] sm:$0xff]
        %v6132 = vld [vmem:[%s6031 + $0x320] sm:$0xff]
        %v6133 = vld [vmem:[%s6031 + $0x328] sm:$0xff]
        %v6134 = vld [vmem:[%s6031 + $0x330] sm:$0xff]
        %v6135 = vld [vmem:[%s6031 + $0x338] sm:$0xff]
        %v6136 = vld [vmem:[%s6031 + $0x340] sm:$0xff]
        %v6137 = vld [vmem:[%s6031 + $0x348] sm:$0xff]
        %v6138 = vld [vmem:[%s6031 + $0x350] sm:$0xff]
        %v6139 = vld [vmem:[%s6031 + $0x358] sm:$0xff]
        %v6140 = vld [vmem:[%s6031 + $0x360] sm:$0xff]
        %v6141 = vld [vmem:[%s6031 + $0x368] sm:$0xff]
        %v6142 = vld [vmem:[%s6031 + $0x370] sm:$0xff]
        %v6143 = vld [vmem:[%s6031 + $0x378] sm:$0xff]
        %v6144 = vld [vmem:[%s6031 + $0x380] sm:$0xff]
        %v6145 = vld [vmem:[%s6031 + $0x388] sm:$0xff]
        %v6146 = vld [vmem:[%s6031 + $0x390] sm:$0xff]
        %v6147 = vld [vmem:[%s6031 + $0x398] sm:$0xff]
        %v6148 = vld [vmem:[%s6031 + $0x3a0] sm:$0xff]
        %v6149 = vld [vmem:[%s6031 + $0x3a8] sm:$0xff]
        %v6150 = vld [vmem:[%s6031 + $0x3b0] sm:$0xff]
        %v6151 = vld [vmem:[%s6031 + $0x3b8] sm:$0xff]
        %v6152 = vld [vmem:[%s6031 + $0x3c0] sm:$0xff]
        %v6153 = vld [vmem:[%s6031 + $0x3c8] sm:$0xff]
        %v6154 = vld [vmem:[%s6031 + $0x3d0] sm:$0xff]
        %v6155 = vld [vmem:[%s6031 + $0x3d8] sm:$0xff]
        %v6156 = vld [vmem:[%s6031 + $0x3e0] sm:$0xff]
        %v6157 = vld [vmem:[%s6031 + $0x3e8] sm:$0xff]
        %v6158 = vld [vmem:[%s6031 + $0x3f0] sm:$0xff]
        %v6159 = vld [vmem:[%s6031 + $0x3f8] sm:$0xff]
        %s6160 = scalar_lea.vmem [#allocation11], 16
        %v6161 = vld [vmem:[%s6160] sm:$0xff]
        %v6162 = vld [vmem:[%s6160 + $0x8] sm:$0xff]
        %v6165 = vlaneseq
        %v6166 = vshrl.u32 %v6165, 7
        %v6167 = vsub.s32 0, %v6166
        %v6168 = vrot.slane %v6161, %v6167
        %v6169 = vlaneseq
        %v6170 = vshrl.u32 %v6169, 7
        %v6171 = vsub.s32 1, %v6170
        %v6172 = vrot.slane %v6161, %v6171
        %v6173 = vlaneseq
        %v6174 = vshrl.u32 %v6173, 7
        %v6175 = vsub.s32 2, %v6174
        %v6176 = vrot.slane %v6161, %v6175
        %v6177 = vlaneseq
        %v6178 = vshrl.u32 %v6177, 7
        %v6179 = vsub.s32 3, %v6178
        %v6180 = vrot.slane %v6161, %v6179
        %v6181 = vlaneseq
        %v6182 = vshrl.u32 %v6181, 7
        %v6183 = vsub.s32 4, %v6182
        %v6184 = vrot.slane %v6161, %v6183
        %v6185 = vlaneseq
        %v6186 = vshrl.u32 %v6185, 7
        %v6187 = vsub.s32 5, %v6186
        %v6188 = vrot.slane %v6161, %v6187
        %v6189 = vlaneseq
        %v6190 = vshrl.u32 %v6189, 7
        %v6191 = vsub.s32 6, %v6190
        %v6192 = vrot.slane %v6161, %v6191
        %v6193 = vlaneseq
        %v6194 = vshrl.u32 %v6193, 7
        %v6195 = vsub.s32 7, %v6194
        %v6196 = vrot.slane %v6161, %v6195
        %v6197 = vlaneseq
        %v6198 = vshrl.u32 %v6197, 7
        %v6199 = vsub.s32 0, %v6198
        %v6200 = vrot.slane %v6162, %v6199
        %v6201 = vlaneseq
        %v6202 = vshrl.u32 %v6201, 7
        %v6203 = vsub.s32 1, %v6202
        %v6204 = vrot.slane %v6162, %v6203
        %v6205 = vlaneseq
        %v6206 = vshrl.u32 %v6205, 7
        %v6207 = vsub.s32 2, %v6206
        %v6208 = vrot.slane %v6162, %v6207
        %v6209 = vlaneseq
        %v6210 = vshrl.u32 %v6209, 7
        %v6211 = vsub.s32 3, %v6210
        %v6212 = vrot.slane %v6162, %v6211
        %v6213 = vlaneseq
        %v6214 = vshrl.u32 %v6213, 7
        %v6215 = vsub.s32 4, %v6214
        %v6216 = vrot.slane %v6162, %v6215
        %v6217 = vlaneseq
        %v6218 = vshrl.u32 %v6217, 7
        %v6219 = vsub.s32 5, %v6218
        %v6220 = vrot.slane %v6162, %v6219
        %v6221 = vlaneseq
        %v6222 = vshrl.u32 %v6221, 7
        %v6223 = vsub.s32 6, %v6222
        %v6224 = vrot.slane %v6162, %v6223
        %v6225 = vlaneseq
        %v6226 = vshrl.u32 %v6225, 7
        %v6227 = vsub.s32 7, %v6226
        %v6228 = vrot.slane %v6162, %v6227
        %v6373 = vunpack.c.l.b16 %v6032
        %v6374 = vunpack.c.h.b16 %v6032
        %v6375 = vunpack.c.l.b16 %v6033
        %v6376 = vunpack.c.h.b16 %v6033
        %v6377 = vunpack.c.l.b16 %v6034
        %v6378 = vunpack.c.h.b16 %v6034
        %v6379 = vunpack.c.l.b16 %v6035
        %v6380 = vunpack.c.h.b16 %v6035
        %v6381 = vunpack.c.l.b16 %v6036
        %v6382 = vunpack.c.h.b16 %v6036
        %v6383 = vunpack.c.l.b16 %v6037
        %v6384 = vunpack.c.h.b16 %v6037
        %v6385 = vunpack.c.l.b16 %v6038
        %v6386 = vunpack.c.h.b16 %v6038
        %v6387 = vunpack.c.l.b16 %v6039
        %v6388 = vunpack.c.h.b16 %v6039
        %v6389 = vunpack.c.l.b16 %v6040
        %v6390 = vunpack.c.h.b16 %v6040
        %v6391 = vunpack.c.l.b16 %v6041
        %v6392 = vunpack.c.h.b16 %v6041
        %v6393 = vunpack.c.l.b16 %v6042
        %v6394 = vunpack.c.h.b16 %v6042
        %v6395 = vunpack.c.l.b16 %v6043
        %v6396 = vunpack.c.h.b16 %v6043
        %v6397 = vunpack.c.l.b16 %v6044
        %v6398 = vunpack.c.h.b16 %v6044
        %v6399 = vunpack.c.l.b16 %v6045
        %v6400 = vunpack.c.h.b16 %v6045
        %v6401 = vunpack.c.l.b16 %v6046
        %v6402 = vunpack.c.h.b16 %v6046
        %v6403 = vunpack.c.l.b16 %v6047
        %v6404 = vunpack.c.h.b16 %v6047
        %v6405 = vunpack.c.l.b16 %v6048
        %v6406 = vunpack.c.h.b16 %v6048
        %v6407 = vunpack.c.l.b16 %v6049
        %v6408 = vunpack.c.h.b16 %v6049
        %v6409 = vunpack.c.l.b16 %v6050
        %v6410 = vunpack.c.h.b16 %v6050
        %v6411 = vunpack.c.l.b16 %v6051
        %v6412 = vunpack.c.h.b16 %v6051
        %v6413 = vunpack.c.l.b16 %v6052
        %v6414 = vunpack.c.h.b16 %v6052
        %v6415 = vunpack.c.l.b16 %v6053
        %v6416 = vunpack.c.h.b16 %v6053
        %v6417 = vunpack.c.l.b16 %v6054
        %v6418 = vunpack.c.h.b16 %v6054
        %v6419 = vunpack.c.l.b16 %v6055
        %v6420 = vunpack.c.h.b16 %v6055
        %v6421 = vunpack.c.l.b16 %v6056
        %v6422 = vunpack.c.h.b16 %v6056
        %v6423 = vunpack.c.l.b16 %v6057
        %v6424 = vunpack.c.h.b16 %v6057
        %v6425 = vunpack.c.l.b16 %v6058
        %v6426 = vunpack.c.h.b16 %v6058
        %v6427 = vunpack.c.l.b16 %v6059
        %v6428 = vunpack.c.h.b16 %v6059
        %v6429 = vunpack.c.l.b16 %v6060
        %v6430 = vunpack.c.h.b16 %v6060
        %v6431 = vunpack.c.l.b16 %v6061
        %v6432 = vunpack.c.h.b16 %v6061
        %v6433 = vunpack.c.l.b16 %v6062
        %v6434 = vunpack.c.h.b16 %v6062
        %v6435 = vunpack.c.l.b16 %v6063
        %v6436 = vunpack.c.h.b16 %v6063
        %v6437 = vunpack.c.l.b16 %v6064
        %v6438 = vunpack.c.h.b16 %v6064
        %v6439 = vunpack.c.l.b16 %v6065
        %v6440 = vunpack.c.h.b16 %v6065
        %v6441 = vunpack.c.l.b16 %v6066
        %v6442 = vunpack.c.h.b16 %v6066
        %v6443 = vunpack.c.l.b16 %v6067
        %v6444 = vunpack.c.h.b16 %v6067
        %v6445 = vunpack.c.l.b16 %v6068
        %v6446 = vunpack.c.h.b16 %v6068
        %v6447 = vunpack.c.l.b16 %v6069
        %v6448 = vunpack.c.h.b16 %v6069
        %v6449 = vunpack.c.l.b16 %v6070
        %v6450 = vunpack.c.h.b16 %v6070
        %v6451 = vunpack.c.l.b16 %v6071
        %v6452 = vunpack.c.h.b16 %v6071
        %v6453 = vunpack.c.l.b16 %v6072
        %v6454 = vunpack.c.h.b16 %v6072
        %v6455 = vunpack.c.l.b16 %v6073
        %v6456 = vunpack.c.h.b16 %v6073
        %v6457 = vunpack.c.l.b16 %v6074
        %v6458 = vunpack.c.h.b16 %v6074
        %v6459 = vunpack.c.l.b16 %v6075
        %v6460 = vunpack.c.h.b16 %v6075
        %v6461 = vunpack.c.l.b16 %v6076
        %v6462 = vunpack.c.h.b16 %v6076
        %v6463 = vunpack.c.l.b16 %v6077
        %v6464 = vunpack.c.h.b16 %v6077
        %v6465 = vunpack.c.l.b16 %v6078
        %v6466 = vunpack.c.h.b16 %v6078
        %v6467 = vunpack.c.l.b16 %v6079
        %v6468 = vunpack.c.h.b16 %v6079
        %v6469 = vunpack.c.l.b16 %v6080
        %v6470 = vunpack.c.h.b16 %v6080
        %v6471 = vunpack.c.l.b16 %v6081
        %v6472 = vunpack.c.h.b16 %v6081
        %v6473 = vunpack.c.l.b16 %v6082
        %v6474 = vunpack.c.h.b16 %v6082
        %v6475 = vunpack.c.l.b16 %v6083
        %v6476 = vunpack.c.h.b16 %v6083
        %v6477 = vunpack.c.l.b16 %v6084
        %v6478 = vunpack.c.h.b16 %v6084
        %v6479 = vunpack.c.l.b16 %v6085
        %v6480 = vunpack.c.h.b16 %v6085
        %v6481 = vunpack.c.l.b16 %v6086
        %v6482 = vunpack.c.h.b16 %v6086
        %v6483 = vunpack.c.l.b16 %v6087
        %v6484 = vunpack.c.h.b16 %v6087
        %v6485 = vunpack.c.l.b16 %v6088
        %v6486 = vunpack.c.h.b16 %v6088
        %v6487 = vunpack.c.l.b16 %v6089
        %v6488 = vunpack.c.h.b16 %v6089
        %v6489 = vunpack.c.l.b16 %v6090
        %v6490 = vunpack.c.h.b16 %v6090
        %v6491 = vunpack.c.l.b16 %v6091
        %v6492 = vunpack.c.h.b16 %v6091
        %v6493 = vunpack.c.l.b16 %v6092
        %v6494 = vunpack.c.h.b16 %v6092
        %v6495 = vunpack.c.l.b16 %v6093
        %v6496 = vunpack.c.h.b16 %v6093
        %v6497 = vunpack.c.l.b16 %v6094
        %v6498 = vunpack.c.h.b16 %v6094
        %v6499 = vunpack.c.l.b16 %v6095
        %v6500 = vunpack.c.h.b16 %v6095
        %v6501 = vunpack.c.l.b16 %v6096
        %v6502 = vunpack.c.h.b16 %v6096
        %v6503 = vunpack.c.l.b16 %v6097
        %v6504 = vunpack.c.h.b16 %v6097
        %v6505 = vunpack.c.l.b16 %v6098
        %v6506 = vunpack.c.h.b16 %v6098
        %v6507 = vunpack.c.l.b16 %v6099
        %v6508 = vunpack.c.h.b16 %v6099
        %v6509 = vunpack.c.l.b16 %v6100
        %v6510 = vunpack.c.h.b16 %v6100
        %v6511 = vunpack.c.l.b16 %v6101
        %v6512 = vunpack.c.h.b16 %v6101
        %v6513 = vunpack.c.l.b16 %v6102
        %v6514 = vunpack.c.h.b16 %v6102
        %v6515 = vunpack.c.l.b16 %v6103
        %v6516 = vunpack.c.h.b16 %v6103
        %v6517 = vunpack.c.l.b16 %v6104
        %v6518 = vunpack.c.h.b16 %v6104
        %v6519 = vunpack.c.l.b16 %v6105
        %v6520 = vunpack.c.h.b16 %v6105
        %v6521 = vunpack.c.l.b16 %v6106
        %v6522 = vunpack.c.h.b16 %v6106
        %v6523 = vunpack.c.l.b16 %v6107
        %v6524 = vunpack.c.h.b16 %v6107
        %v6525 = vunpack.c.l.b16 %v6108
        %v6526 = vunpack.c.h.b16 %v6108
        %v6527 = vunpack.c.l.b16 %v6109
        %v6528 = vunpack.c.h.b16 %v6109
        %v6529 = vunpack.c.l.b16 %v6110
        %v6530 = vunpack.c.h.b16 %v6110
        %v6531 = vunpack.c.l.b16 %v6111
        %v6532 = vunpack.c.h.b16 %v6111
        %v6533 = vunpack.c.l.b16 %v6112
        %v6534 = vunpack.c.h.b16 %v6112
        %v6535 = vunpack.c.l.b16 %v6113
        %v6536 = vunpack.c.h.b16 %v6113
        %v6537 = vunpack.c.l.b16 %v6114
        %v6538 = vunpack.c.h.b16 %v6114
        %v6539 = vunpack.c.l.b16 %v6115
        %v6540 = vunpack.c.h.b16 %v6115
        %v6541 = vunpack.c.l.b16 %v6116
        %v6542 = vunpack.c.h.b16 %v6116
        %v6543 = vunpack.c.l.b16 %v6117
        %v6544 = vunpack.c.h.b16 %v6117
        %v6545 = vunpack.c.l.b16 %v6118
        %v6546 = vunpack.c.h.b16 %v6118
        %v6547 = vunpack.c.l.b16 %v6119
        %v6548 = vunpack.c.h.b16 %v6119
        %v6549 = vunpack.c.l.b16 %v6120
        %v6550 = vunpack.c.h.b16 %v6120
        %v6551 = vunpack.c.l.b16 %v6121
        %v6552 = vunpack.c.h.b16 %v6121
        %v6553 = vunpack.c.l.b16 %v6122
        %v6554 = vunpack.c.h.b16 %v6122
        %v6555 = vunpack.c.l.b16 %v6123
        %v6556 = vunpack.c.h.b16 %v6123
        %v6557 = vunpack.c.l.b16 %v6124
        %v6558 = vunpack.c.h.b16 %v6124
        %v6559 = vunpack.c.l.b16 %v6125
        %v6560 = vunpack.c.h.b16 %v6125
        %v6561 = vunpack.c.l.b16 %v6126
        %v6562 = vunpack.c.h.b16 %v6126
        %v6563 = vunpack.c.l.b16 %v6127
        %v6564 = vunpack.c.h.b16 %v6127
        %v6565 = vunpack.c.l.b16 %v6128
        %v6566 = vunpack.c.h.b16 %v6128
        %v6567 = vunpack.c.l.b16 %v6129
        %v6568 = vunpack.c.h.b16 %v6129
        %v6569 = vunpack.c.l.b16 %v6130
        %v6570 = vunpack.c.h.b16 %v6130
        %v6571 = vunpack.c.l.b16 %v6131
        %v6572 = vunpack.c.h.b16 %v6131
        %v6573 = vunpack.c.l.b16 %v6132
        %v6574 = vunpack.c.h.b16 %v6132
        %v6575 = vunpack.c.l.b16 %v6133
        %v6576 = vunpack.c.h.b16 %v6133
        %v6577 = vunpack.c.l.b16 %v6134
        %v6578 = vunpack.c.h.b16 %v6134
        %v6579 = vunpack.c.l.b16 %v6135
        %v6580 = vunpack.c.h.b16 %v6135
        %v6581 = vunpack.c.l.b16 %v6136
        %v6582 = vunpack.c.h.b16 %v6136
        %v6583 = vunpack.c.l.b16 %v6137
        %v6584 = vunpack.c.h.b16 %v6137
        %v6585 = vunpack.c.l.b16 %v6138
        %v6586 = vunpack.c.h.b16 %v6138
        %v6587 = vunpack.c.l.b16 %v6139
        %v6588 = vunpack.c.h.b16 %v6139
        %v6589 = vunpack.c.l.b16 %v6140
        %v6590 = vunpack.c.h.b16 %v6140
        %v6591 = vunpack.c.l.b16 %v6141
        %v6592 = vunpack.c.h.b16 %v6141
        %v6593 = vunpack.c.l.b16 %v6142
        %v6594 = vunpack.c.h.b16 %v6142
        %v6595 = vunpack.c.l.b16 %v6143
        %v6596 = vunpack.c.h.b16 %v6143
        %v6597 = vunpack.c.l.b16 %v6144
        %v6598 = vunpack.c.h.b16 %v6144
        %v6599 = vunpack.c.l.b16 %v6145
        %v6600 = vunpack.c.h.b16 %v6145
        %v6601 = vunpack.c.l.b16 %v6146
        %v6602 = vunpack.c.h.b16 %v6146
        %v6603 = vunpack.c.l.b16 %v6147
        %v6604 = vunpack.c.h.b16 %v6147
        %v6605 = vunpack.c.l.b16 %v6148
        %v6606 = vunpack.c.h.b16 %v6148
        %v6607 = vunpack.c.l.b16 %v6149
        %v6608 = vunpack.c.h.b16 %v6149
        %v6609 = vunpack.c.l.b16 %v6150
        %v6610 = vunpack.c.h.b16 %v6150
        %v6611 = vunpack.c.l.b16 %v6151
        %v6612 = vunpack.c.h.b16 %v6151
        %v6613 = vunpack.c.l.b16 %v6152
        %v6614 = vunpack.c.h.b16 %v6152
        %v6615 = vunpack.c.l.b16 %v6153
        %v6616 = vunpack.c.h.b16 %v6153
        %v6617 = vunpack.c.l.b16 %v6154
        %v6618 = vunpack.c.h.b16 %v6154
        %v6619 = vunpack.c.l.b16 %v6155
        %v6620 = vunpack.c.h.b16 %v6155
        %v6621 = vunpack.c.l.b16 %v6156
        %v6622 = vunpack.c.h.b16 %v6156
        %v6623 = vunpack.c.l.b16 %v6157
        %v6624 = vunpack.c.h.b16 %v6157
        %v6625 = vunpack.c.l.b16 %v6158
        %v6626 = vunpack.c.h.b16 %v6158
        %v6627 = vunpack.c.l.b16 %v6159
        %v6628 = vunpack.c.h.b16 %v6159
        %v6629 = vpack.c.b16 %v6389, %v6373
        %v6630 = vpack.c.b16 %v6390, %v6374
        %v6631 = vpack.c.b16 %v6391, %v6375
        %v6632 = vpack.c.b16 %v6392, %v6376
        %v6633 = vpack.c.b16 %v6393, %v6377
        %v6634 = vpack.c.b16 %v6394, %v6378
        %v6635 = vpack.c.b16 %v6395, %v6379
        %v6636 = vpack.c.b16 %v6396, %v6380
        %v6637 = vpack.c.b16 %v6397, %v6381
        %v6638 = vpack.c.b16 %v6398, %v6382
        %v6639 = vpack.c.b16 %v6399, %v6383
        %v6640 = vpack.c.b16 %v6400, %v6384
        %v6641 = vpack.c.b16 %v6401, %v6385
        %v6642 = vpack.c.b16 %v6402, %v6386
        %v6643 = vpack.c.b16 %v6403, %v6387
        %v6644 = vpack.c.b16 %v6404, %v6388
        %v6645 = vpack.c.b16 %v6421, %v6405
        %v6646 = vpack.c.b16 %v6422, %v6406
        %v6647 = vpack.c.b16 %v6423, %v6407
        %v6648 = vpack.c.b16 %v6424, %v6408
        %v6649 = vpack.c.b16 %v6425, %v6409
        %v6650 = vpack.c.b16 %v6426, %v6410
        %v6651 = vpack.c.b16 %v6427, %v6411
        %v6652 = vpack.c.b16 %v6428, %v6412
        %v6653 = vpack.c.b16 %v6429, %v6413
        %v6654 = vpack.c.b16 %v6430, %v6414
        %v6655 = vpack.c.b16 %v6431, %v6415
        %v6656 = vpack.c.b16 %v6432, %v6416
        %v6657 = vpack.c.b16 %v6433, %v6417
        %v6658 = vpack.c.b16 %v6434, %v6418
        %v6659 = vpack.c.b16 %v6435, %v6419
        %v6660 = vpack.c.b16 %v6436, %v6420
        %v6661 = vpack.c.b16 %v6453, %v6437
        %v6662 = vpack.c.b16 %v6454, %v6438
        %v6663 = vpack.c.b16 %v6455, %v6439
        %v6664 = vpack.c.b16 %v6456, %v6440
        %v6665 = vpack.c.b16 %v6457, %v6441
        %v6666 = vpack.c.b16 %v6458, %v6442
        %v6667 = vpack.c.b16 %v6459, %v6443
        %v6668 = vpack.c.b16 %v6460, %v6444
        %v6669 = vpack.c.b16 %v6461, %v6445
        %v6670 = vpack.c.b16 %v6462, %v6446
        %v6671 = vpack.c.b16 %v6463, %v6447
        %v6672 = vpack.c.b16 %v6464, %v6448
        %v6673 = vpack.c.b16 %v6465, %v6449
        %v6674 = vpack.c.b16 %v6466, %v6450
        %v6675 = vpack.c.b16 %v6467, %v6451
        %v6676 = vpack.c.b16 %v6468, %v6452
        %v6677 = vpack.c.b16 %v6485, %v6469
        %v6678 = vpack.c.b16 %v6486, %v6470
        %v6679 = vpack.c.b16 %v6487, %v6471
        %v6680 = vpack.c.b16 %v6488, %v6472
        %v6681 = vpack.c.b16 %v6489, %v6473
        %v6682 = vpack.c.b16 %v6490, %v6474
        %v6683 = vpack.c.b16 %v6491, %v6475
        %v6684 = vpack.c.b16 %v6492, %v6476
        %v6685 = vpack.c.b16 %v6493, %v6477
        %v6686 = vpack.c.b16 %v6494, %v6478
        %v6687 = vpack.c.b16 %v6495, %v6479
        %v6688 = vpack.c.b16 %v6496, %v6480
        %v6689 = vpack.c.b16 %v6497, %v6481
        %v6690 = vpack.c.b16 %v6498, %v6482
        %v6691 = vpack.c.b16 %v6499, %v6483
        %v6692 = vpack.c.b16 %v6500, %v6484
        %v6693 = vpack.c.b16 %v6517, %v6501
        %v6694 = vpack.c.b16 %v6518, %v6502
        %v6695 = vpack.c.b16 %v6519, %v6503
        %v6696 = vpack.c.b16 %v6520, %v6504
        %v6697 = vpack.c.b16 %v6521, %v6505
        %v6698 = vpack.c.b16 %v6522, %v6506
        %v6699 = vpack.c.b16 %v6523, %v6507
        %v6700 = vpack.c.b16 %v6524, %v6508
        %v6701 = vpack.c.b16 %v6525, %v6509
        %v6702 = vpack.c.b16 %v6526, %v6510
        %v6703 = vpack.c.b16 %v6527, %v6511
        %v6704 = vpack.c.b16 %v6528, %v6512
        %v6705 = vpack.c.b16 %v6529, %v6513
        %v6706 = vpack.c.b16 %v6530, %v6514
        %v6707 = vpack.c.b16 %v6531, %v6515
        %v6708 = vpack.c.b16 %v6532, %v6516
        %v6709 = vpack.c.b16 %v6549, %v6533
        %v6710 = vpack.c.b16 %v6550, %v6534
        %v6711 = vpack.c.b16 %v6551, %v6535
        %v6712 = vpack.c.b16 %v6552, %v6536
        %v6713 = vpack.c.b16 %v6553, %v6537
        %v6714 = vpack.c.b16 %v6554, %v6538
        %v6715 = vpack.c.b16 %v6555, %v6539
        %v6716 = vpack.c.b16 %v6556, %v6540
        %v6717 = vpack.c.b16 %v6557, %v6541
        %v6718 = vpack.c.b16 %v6558, %v6542
        %v6719 = vpack.c.b16 %v6559, %v6543
        %v6720 = vpack.c.b16 %v6560, %v6544
        %v6721 = vpack.c.b16 %v6561, %v6545
        %v6722 = vpack.c.b16 %v6562, %v6546
        %v6723 = vpack.c.b16 %v6563, %v6547
        %v6724 = vpack.c.b16 %v6564, %v6548
        %v6725 = vpack.c.b16 %v6581, %v6565
        %v6726 = vpack.c.b16 %v6582, %v6566
        %v6727 = vpack.c.b16 %v6583, %v6567
        %v6728 = vpack.c.b16 %v6584, %v6568
        %v6729 = vpack.c.b16 %v6585, %v6569
        %v6730 = vpack.c.b16 %v6586, %v6570
        %v6731 = vpack.c.b16 %v6587, %v6571
        %v6732 = vpack.c.b16 %v6588, %v6572
        %v6733 = vpack.c.b16 %v6589, %v6573
        %v6734 = vpack.c.b16 %v6590, %v6574
        %v6735 = vpack.c.b16 %v6591, %v6575
        %v6736 = vpack.c.b16 %v6592, %v6576
        %v6737 = vpack.c.b16 %v6593, %v6577
        %v6738 = vpack.c.b16 %v6594, %v6578
        %v6739 = vpack.c.b16 %v6595, %v6579
        %v6740 = vpack.c.b16 %v6596, %v6580
        %v6741 = vpack.c.b16 %v6613, %v6597
        %v6742 = vpack.c.b16 %v6614, %v6598
        %v6743 = vpack.c.b16 %v6615, %v6599
        %v6744 = vpack.c.b16 %v6616, %v6600
        %v6745 = vpack.c.b16 %v6617, %v6601
        %v6746 = vpack.c.b16 %v6618, %v6602
        %v6747 = vpack.c.b16 %v6619, %v6603
        %v6748 = vpack.c.b16 %v6620, %v6604
        %v6749 = vpack.c.b16 %v6621, %v6605
        %v6750 = vpack.c.b16 %v6622, %v6606
        %v6751 = vpack.c.b16 %v6623, %v6607
        %v6752 = vpack.c.b16 %v6624, %v6608
        %v6753 = vpack.c.b16 %v6625, %v6609
        %v6754 = vpack.c.b16 %v6626, %v6610
        %v6755 = vpack.c.b16 %v6627, %v6611
        %v6756 = vpack.c.b16 %v6628, %v6612
        %6885 = vmatprep.subr.bf16.mxu0 %v6630
        %6886 = vmatpush1.bf16.msra.mxu0 %v6629
        %6887 = vmatprep.subr.bf16.mxu0 %v6646
        %6888 = vmatpush1.bf16.msra.mxu0 %v6645
        %6889 = vmatprep.subr.bf16.mxu0 %v6662
        %6890 = vmatpush1.bf16.msra.mxu0 %v6661
        %6891 = vmatprep.subr.bf16.mxu0 %v6678
        %6892 = vmatpush1.bf16.msra.mxu0 %v6677
        %6893 = vmatprep.subr.bf16.mxu0 %v6694
        %6894 = vmatpush1.bf16.msra.mxu0 %v6693
        %6895 = vmatprep.subr.bf16.mxu0 %v6710
        %6896 = vmatpush1.bf16.msra.mxu0 %v6709
        %6897 = vmatprep.subr.bf16.mxu0 %v6726
        %6898 = vmatpush1.bf16.msra.mxu0 %v6725
        %6899 = vmatprep.subr.bf16.mxu0 %v6742
        %6900 = vmatpush1.bf16.msra.mxu0 %v6741
        %6901 = vmatprep.subr.bf16.mxu0 0
        %6902 = vmatpush1.bf16.msra.mxu0 0
        %6903 = vmatprep.subr.bf16.mxu0 0
        %6904 = vmatpush1.bf16.msra.mxu0 0
        %6905 = vmatprep.subr.bf16.mxu0 0
        %6906 = vmatpush1.bf16.msra.mxu0 0
        %6907 = vmatprep.subr.bf16.mxu0 0
        %6908 = vmatpush1.bf16.msra.mxu0 0
        %6909 = vmatprep.subr.bf16.mxu0 0
        %6910 = vmatpush1.bf16.msra.mxu0 0
        %6911 = vmatprep.subr.bf16.mxu0 0
        %6912 = vmatpush1.bf16.msra.mxu0 0
        %6913 = vmatprep.subr.bf16.mxu0 0
        %6914 = vmatpush1.bf16.msra.mxu0 0
        %6915 = vmatprep.subr.bf16.mxu0 0
        %6916 = vmatpush1.bf16.msra.mxu0 0
        %6917 = vmatprep.mubr.bf16.mxu0 0
        %6918 = vmatmul.mubr.bf16.gmra.mrb[0].mxu0 %v5812
        %v6919 = vpop.f32.mrb[0].mxu0
        %v6920 = vadd.f32 %v6168, %v6919
        %v6921 = vpop.f32.mrb[0].mxu0
        %v6922 = vadd.f32 %v6172, %v6921
        %v6923 = vpop.f32.mrb[0].mxu0
        %v6924 = vadd.f32 %v6168, %v6923
        %v6925 = vpop.f32.mrb[0].mxu0
        %v6926 = vadd.f32 %v6172, %v6925
        %6927 = vdwg.mxu0
        %6928 = vmatprep.subr.bf16.mxu0 %v6632
        %6929 = vmatpush1.bf16.msra.mxu0 %v6631
        %6930 = vmatprep.subr.bf16.mxu0 %v6648
        %6931 = vmatpush1.bf16.msra.mxu0 %v6647
        %6932 = vmatprep.subr.bf16.mxu0 %v6664
        %6933 = vmatpush1.bf16.msra.mxu0 %v6663
        %6934 = vmatprep.subr.bf16.mxu0 %v6680
        %6935 = vmatpush1.bf16.msra.mxu0 %v6679
        %6936 = vmatprep.subr.bf16.mxu0 %v6696
        %6937 = vmatpush1.bf16.msra.mxu0 %v6695
        %6938 = vmatprep.subr.bf16.mxu0 %v6712
        %6939 = vmatpush1.bf16.msra.mxu0 %v6711
        %6940 = vmatprep.subr.bf16.mxu0 %v6728
        %6941 = vmatpush1.bf16.msra.mxu0 %v6727
        %6942 = vmatprep.subr.bf16.mxu0 %v6744
        %6943 = vmatpush1.bf16.msra.mxu0 %v6743
        %6944 = vmatprep.subr.bf16.mxu0 0
        %6945 = vmatpush1.bf16.msra.mxu0 0
        %6946 = vmatprep.subr.bf16.mxu0 0
        %6947 = vmatpush1.bf16.msra.mxu0 0
        %6948 = vmatprep.subr.bf16.mxu0 0
        %6949 = vmatpush1.bf16.msra.mxu0 0
        %6950 = vmatprep.subr.bf16.mxu0 0
        %6951 = vmatpush1.bf16.msra.mxu0 0
        %6952 = vmatprep.subr.bf16.mxu0 0
        %6953 = vmatpush1.bf16.msra.mxu0 0
        %6954 = vmatprep.subr.bf16.mxu0 0
        %6955 = vmatpush1.bf16.msra.mxu0 0
        %6956 = vmatprep.subr.bf16.mxu0 0
        %6957 = vmatpush1.bf16.msra.mxu0 0
        %6958 = vmatprep.subr.bf16.mxu0 0
        %6959 = vmatpush1.bf16.msra.mxu0 0
        %6960 = vmatprep.mubr.bf16.mxu0 0
        %6961 = vmatmul.mubr.bf16.gmra.mrb[0].mxu0 %v5812
        %v6962 = vpop.f32.mrb[0].mxu0
        %v6963 = vadd.f32 %v6176, %v6962
        %v6964 = vpop.f32.mrb[0].mxu0
        %v6965 = vadd.f32 %v6180, %v6964
        %v6966 = vpop.f32.mrb[0].mxu0
        %v6967 = vadd.f32 %v6176, %v6966
        %v6968 = vpop.f32.mrb[0].mxu0
        %v6969 = vadd.f32 %v6180, %v6968
        %6970 = vdwg.mxu0
        %6971 = vmatprep.subr.bf16.mxu0 %v6634
        %6972 = vmatpush1.bf16.msra.mxu0 %v6633
        %6973 = vmatprep.subr.bf16.mxu0 %v6650
        %6974 = vmatpush1.bf16.msra.mxu0 %v6649
        %6975 = vmatprep.subr.bf16.mxu0 %v6666
        %6976 = vmatpush1.bf16.msra.mxu0 %v6665
        %6977 = vmatprep.subr.bf16.mxu0 %v6682
        %6978 = vmatpush1.bf16.msra.mxu0 %v6681
        %6979 = vmatprep.subr.bf16.mxu0 %v6698
        %6980 = vmatpush1.bf16.msra.mxu0 %v6697
        %6981 = vmatprep.subr.bf16.mxu0 %v6714
        %6982 = vmatpush1.bf16.msra.mxu0 %v6713
        %6983 = vmatprep.subr.bf16.mxu0 %v6730
        %6984 = vmatpush1.bf16.msra.mxu0 %v6729
        %6985 = vmatprep.subr.bf16.mxu0 %v6746
        %6986 = vmatpush1.bf16.msra.mxu0 %v6745
        %6987 = vmatprep.subr.bf16.mxu0 0
        %6988 = vmatpush1.bf16.msra.mxu0 0
        %6989 = vmatprep.subr.bf16.mxu0 0
        %6990 = vmatpush1.bf16.msra.mxu0 0
        %6991 = vmatprep.subr.bf16.mxu0 0
        %6992 = vmatpush1.bf16.msra.mxu0 0
        %6993 = vmatprep.subr.bf16.mxu0 0
        %6994 = vmatpush1.bf16.msra.mxu0 0
        %6995 = vmatprep.subr.bf16.mxu0 0
        %6996 = vmatpush1.bf16.msra.mxu0 0
        %6997 = vmatprep.subr.bf16.mxu0 0
        %6998 = vmatpush1.bf16.msra.mxu0 0
        %6999 = vmatprep.subr.bf16.mxu0 0
        %7000 = vmatpush1.bf16.msra.mxu0 0
        %7001 = vmatprep.subr.bf16.mxu0 0
        %7002 = vmatpush1.bf16.msra.mxu0 0
        %7003 = vmatprep.mubr.bf16.mxu0 0
        %7004 = vmatmul.mubr.bf16.gmra.mrb[0].mxu0 %v5812
        %v7005 = vpop.f32.mrb[0].mxu0
        %v7006 = vadd.f32 %v6184, %v7005
        %v7007 = vpop.f32.mrb[0].mxu0
        %v7008 = vadd.f32 %v6188, %v7007
        %v7009 = vpop.f32.mrb[0].mxu0
        %v7010 = vadd.f32 %v6184, %v7009
        %v7011 = vpop.f32.mrb[0].mxu0
        %v7012 = vadd.f32 %v6188, %v7011
        %7013 = vdwg.mxu0
        %7014 = vmatprep.subr.bf16.mxu0 %v6636
        %7015 = vmatpush1.bf16.msra.mxu0 %v6635
        %7016 = vmatprep.subr.bf16.mxu0 %v6652
        %7017 = vmatpush1.bf16.msra.mxu0 %v6651
        %7018 = vmatprep.subr.bf16.mxu0 %v6668
        %7019 = vmatpush1.bf16.msra.mxu0 %v6667
        %7020 = vmatprep.subr.bf16.mxu0 %v6684
        %7021 = vmatpush1.bf16.msra.mxu0 %v6683
        %7022 = vmatprep.subr.bf16.mxu0 %v6700
        %7023 = vmatpush1.bf16.msra.mxu0 %v6699
        %7024 = vmatprep.subr.bf16.mxu0 %v6716
        %7025 = vmatpush1.bf16.msra.mxu0 %v6715
        %7026 = vmatprep.subr.bf16.mxu0 %v6732
        %7027 = vmatpush1.bf16.msra.mxu0 %v6731
        %7028 = vmatprep.subr.bf16.mxu0 %v6748
        %7029 = vmatpush1.bf16.msra.mxu0 %v6747
        %7030 = vmatprep.subr.bf16.mxu0 0
        %7031 = vmatpush1.bf16.msra.mxu0 0
        %7032 = vmatprep.subr.bf16.mxu0 0
        %7033 = vmatpush1.bf16.msra.mxu0 0
        %7034 = vmatprep.subr.bf16.mxu0 0
        %7035 = vmatpush1.bf16.msra.mxu0 0
        %7036 = vmatprep.subr.bf16.mxu0 0
        %7037 = vmatpush1.bf16.msra.mxu0 0
        %7038 = vmatprep.subr.bf16.mxu0 0
        %7039 = vmatpush1.bf16.msra.mxu0 0
        %7040 = vmatprep.subr.bf16.mxu0 0
        %7041 = vmatpush1.bf16.msra.mxu0 0
        %7042 = vmatprep.subr.bf16.mxu0 0
        %7043 = vmatpush1.bf16.msra.mxu0 0
        %7044 = vmatprep.subr.bf16.mxu0 0
        %7045 = vmatpush1.bf16.msra.mxu0 0
        %7046 = vmatprep.mubr.bf16.mxu0 0
        %7047 = vmatmul.mubr.bf16.gmra.mrb[0].mxu0 %v5812
        %v7048 = vpop.f32.mrb[0].mxu0
        %v7049 = vadd.f32 %v6192, %v7048
        %v7050 = vpop.f32.mrb[0].mxu0
        %v7051 = vadd.f32 %v6196, %v7050
        %v7052 = vpop.f32.mrb[0].mxu0
        %v7053 = vadd.f32 %v6192, %v7052
        %v7054 = vpop.f32.mrb[0].mxu0
        %v7055 = vadd.f32 %v6196, %v7054
        %7056 = vdwg.mxu0
        %7057 = vmatprep.subr.bf16.mxu0 %v6638
        %7058 = vmatpush1.bf16.msra.mxu0 %v6637
        %7059 = vmatprep.subr.bf16.mxu0 %v6654
        %7060 = vmatpush1.bf16.msra.mxu0 %v6653
        %7061 = vmatprep.subr.bf16.mxu0 %v6670
        %7062 = vmatpush1.bf16.msra.mxu0 %v6669
        %7063 = vmatprep.subr.bf16.mxu0 %v6686
        %7064 = vmatpush1.bf16.msra.mxu0 %v6685
        %7065 = vmatprep.subr.bf16.mxu0 %v6702
        %7066 = vmatpush1.bf16.msra.mxu0 %v6701
        %7067 = vmatprep.subr.bf16.mxu0 %v6718
        %7068 = vmatpush1.bf16.msra.mxu0 %v6717
        %7069 = vmatprep.subr.bf16.mxu0 %v6734
        %7070 = vmatpush1.bf16.msra.mxu0 %v6733
        %7071 = vmatprep.subr.bf16.mxu0 %v6750
        %7072 = vmatpush1.bf16.msra.mxu0 %v6749
        %7073 = vmatprep.subr.bf16.mxu0 0
        %7074 = vmatpush1.bf16.msra.mxu0 0
        %7075 = vmatprep.subr.bf16.mxu0 0
        %7076 = vmatpush1.bf16.msra.mxu0 0
        %7077 = vmatprep.subr.bf16.mxu0 0
        %7078 = vmatpush1.bf16.msra.mxu0 0
        %7079 = vmatprep.subr.bf16.mxu0 0
        %7080 = vmatpush1.bf16.msra.mxu0 0
        %7081 = vmatprep.subr.bf16.mxu0 0
        %7082 = vmatpush1.bf16.msra.mxu0 0
        %7083 = vmatprep.subr.bf16.mxu0 0
        %7084 = vmatpush1.bf16.msra.mxu0 0
        %7085 = vmatprep.subr.bf16.mxu0 0
        %7086 = vmatpush1.bf16.msra.mxu0 0
        %7087 = vmatprep.subr.bf16.mxu0 0
        %7088 = vmatpush1.bf16.msra.mxu0 0
        %7089 = vmatprep.mubr.bf16.mxu0 0
        %7090 = vmatmul.mubr.bf16.gmra.mrb[0].mxu0 %v5812
        %v7091 = vpop.f32.mrb[0].mxu0
        %v7092 = vadd.f32 %v6200, %v7091
        %v7093 = vpop.f32.mrb[0].mxu0
        %v7094 = vadd.f32 %v6204, %v7093
        %v7095 = vpop.f32.mrb[0].mxu0
        %v7096 = vadd.f32 %v6200, %v7095
        %v7097 = vpop.f32.mrb[0].mxu0
        %v7098 = vadd.f32 %v6204, %v7097
        %7099 = vdwg.mxu0
        %7100 = vmatprep.subr.bf16.mxu0 %v6640
        %7101 = vmatpush1.bf16.msra.mxu0 %v6639
        %7102 = vmatprep.subr.bf16.mxu0 %v6656
        %7103 = vmatpush1.bf16.msra.mxu0 %v6655
        %7104 = vmatprep.subr.bf16.mxu0 %v6672
        %7105 = vmatpush1.bf16.msra.mxu0 %v6671
        %7106 = vmatprep.subr.bf16.mxu0 %v6688
        %7107 = vmatpush1.bf16.msra.mxu0 %v6687
        %7108 = vmatprep.subr.bf16.mxu0 %v6704
        %7109 = vmatpush1.bf16.msra.mxu0 %v6703
        %7110 = vmatprep.subr.bf16.mxu0 %v6720
        %7111 = vmatpush1.bf16.msra.mxu0 %v6719
        %7112 = vmatprep.subr.bf16.mxu0 %v6736
        %7113 = vmatpush1.bf16.msra.mxu0 %v6735
        %7114 = vmatprep.subr.bf16.mxu0 %v6752
        %7115 = vmatpush1.bf16.msra.mxu0 %v6751
        %7116 = vmatprep.subr.bf16.mxu0 0
        %7117 = vmatpush1.bf16.msra.mxu0 0
        %7118 = vmatprep.subr.bf16.mxu0 0
        %7119 = vmatpush1.bf16.msra.mxu0 0
        %7120 = vmatprep.subr.bf16.mxu0 0
        %7121 = vmatpush1.bf16.msra.mxu0 0
        %7122 = vmatprep.subr.bf16.mxu0 0
        %7123 = vmatpush1.bf16.msra.mxu0 0
        %7124 = vmatprep.subr.bf16.mxu0 0
        %7125 = vmatpush1.bf16.msra.mxu0 0
        %7126 = vmatprep.subr.bf16.mxu0 0
        %7127 = vmatpush1.bf16.msra.mxu0 0
        %7128 = vmatprep.subr.bf16.mxu0 0
        %7129 = vmatpush1.bf16.msra.mxu0 0
        %7130 = vmatprep.subr.bf16.mxu0 0
        %7131 = vmatpush1.bf16.msra.mxu0 0
        %7132 = vmatprep.mubr.bf16.mxu0 0
        %7133 = vmatmul.mubr.bf16.gmra.mrb[0].mxu0 %v5812
        %v7134 = vpop.f32.mrb[0].mxu0
        %v7135 = vadd.f32 %v6208, %v7134
        %v7136 = vpop.f32.mrb[0].mxu0
        %v7137 = vadd.f32 %v6212, %v7136
        %v7138 = vpop.f32.mrb[0].mxu0
        %v7139 = vadd.f32 %v6208, %v7138
        %v7140 = vpop.f32.mrb[0].mxu0
        %v7141 = vadd.f32 %v6212, %v7140
        %7142 = vdwg.mxu0
        %7143 = vmatprep.subr.bf16.mxu0 %v6642
        %7144 = vmatpush1.bf16.msra.mxu0 %v6641
        %7145 = vmatprep.subr.bf16.mxu0 %v6658
        %7146 = vmatpush1.bf16.msra.mxu0 %v6657
        %7147 = vmatprep.subr.bf16.mxu0 %v6674
        %7148 = vmatpush1.bf16.msra.mxu0 %v6673
        %7149 = vmatprep.subr.bf16.mxu0 %v6690
        %7150 = vmatpush1.bf16.msra.mxu0 %v6689
        %7151 = vmatprep.subr.bf16.mxu0 %v6706
        %7152 = vmatpush1.bf16.msra.mxu0 %v6705
        %7153 = vmatprep.subr.bf16.mxu0 %v6722
        %7154 = vmatpush1.bf16.msra.mxu0 %v6721
        %7155 = vmatprep.subr.bf16.mxu0 %v6738
        %7156 = vmatpush1.bf16.msra.mxu0 %v6737
        %7157 = vmatprep.subr.bf16.mxu0 %v6754
        %7158 = vmatpush1.bf16.msra.mxu0 %v6753
        %7159 = vmatprep.subr.bf16.mxu0 0
        %7160 = vmatpush1.bf16.msra.mxu0 0
        %7161 = vmatprep.subr.bf16.mxu0 0
        %7162 = vmatpush1.bf16.msra.mxu0 0
        %7163 = vmatprep.subr.bf16.mxu0 0
        %7164 = vmatpush1.bf16.msra.mxu0 0
        %7165 = vmatprep.subr.bf16.mxu0 0
        %7166 = vmatpush1.bf16.msra.mxu0 0
        %7167 = vmatprep.subr.bf16.mxu0 0
        %7168 = vmatpush1.bf16.msra.mxu0 0
        %7169 = vmatprep.subr.bf16.mxu0 0
        %7170 = vmatpush1.bf16.msra.mxu0 0
        %7171 = vmatprep.subr.bf16.mxu0 0
        %7172 = vmatpush1.bf16.msra.mxu0 0
        %7173 = vmatprep.subr.bf16.mxu0 0
        %7174 = vmatpush1.bf16.msra.mxu0 0
        %7175 = vmatprep.mubr.bf16.mxu0 0
        %7176 = vmatmul.mubr.bf16.gmra.mrb[0].mxu0 %v5812
        %v7177 = vpop.f32.mrb[0].mxu0
        %v7178 = vadd.f32 %v6216, %v7177
        %v7179 = vpop.f32.mrb[0].mxu0
        %v7180 = vadd.f32 %v6220, %v7179
        %v7181 = vpop.f32.mrb[0].mxu0
        %v7182 = vadd.f32 %v6216, %v7181
        %v7183 = vpop.f32.mrb[0].mxu0
        %v7184 = vadd.f32 %v6220, %v7183
        %7185 = vdwg.mxu0
        %7186 = vmatprep.subr.bf16.mxu0 %v6644
        %7187 = vmatpush1.bf16.msra.mxu0 %v6643
        %7188 = vmatprep.subr.bf16.mxu0 %v6660
        %7189 = vmatpush1.bf16.msra.mxu0 %v6659
        %7190 = vmatprep.subr.bf16.mxu0 %v6676
        %7191 = vmatpush1.bf16.msra.mxu0 %v6675
        %7192 = vmatprep.subr.bf16.mxu0 %v6692
        %7193 = vmatpush1.bf16.msra.mxu0 %v6691
        %7194 = vmatprep.subr.bf16.mxu0 %v6708
        %7195 = vmatpush1.bf16.msra.mxu0 %v6707
        %7196 = vmatprep.subr.bf16.mxu0 %v6724
        %7197 = vmatpush1.bf16.msra.mxu0 %v6723
        %7198 = vmatprep.subr.bf16.mxu0 %v6740
        %7199 = vmatpush1.bf16.msra.mxu0 %v6739
        %7200 = vmatprep.subr.bf16.mxu0 %v6756
        %7201 = vmatpush1.bf16.msra.mxu0 %v6755
        %7202 = vmatprep.subr.bf16.mxu0 0
        %7203 = vmatpush1.bf16.msra.mxu0 0
        %7204 = vmatprep.subr.bf16.mxu0 0
        %7205 = vmatpush1.bf16.msra.mxu0 0
        %7206 = vmatprep.subr.bf16.mxu0 0
        %7207 = vmatpush1.bf16.msra.mxu0 0
        %7208 = vmatprep.subr.bf16.mxu0 0
        %7209 = vmatpush1.bf16.msra.mxu0 0
        %7210 = vmatprep.subr.bf16.mxu0 0
        %7211 = vmatpush1.bf16.msra.mxu0 0
        %7212 = vmatprep.subr.bf16.mxu0 0
        %7213 = vmatpush1.bf16.msra.mxu0 0
        %7214 = vmatprep.subr.bf16.mxu0 0
        %7215 = vmatpush1.bf16.msra.mxu0 0
        %7216 = vmatprep.subr.bf16.mxu0 0
        %7217 = vmatpush1.bf16.msra.mxu0 0
        %7218 = vmatprep.mubr.bf16.mxu0 0
        %7219 = vmatmul.mubr.bf16.gmra.mrb[0].mxu0 %v5812
        %v7220 = vpop.f32.mrb[0].mxu0
        %v7221 = vadd.f32 %v6224, %v7220
        %v7222 = vpop.f32.mrb[0].mxu0
        %v7223 = vadd.f32 %v6228, %v7222
        %v7224 = vpop.f32.mrb[0].mxu0
        %v7225 = vadd.f32 %v6224, %v7224
        %v7226 = vpop.f32.mrb[0].mxu0
        %v7227 = vadd.f32 %v6228, %v7226
        %7228 = vdwg.mxu0
        %v7229 = vmax.f32 %v6920, 0.0
        %v7230 = vmax.f32 %v6922, 0.0
        %v7231 = vmax.f32 %v6963, 0.0
        %v7232 = vmax.f32 %v6965, 0.0
        %v7233 = vmax.f32 %v7006, 0.0
        %v7234 = vmax.f32 %v7008, 0.0
        %v7235 = vmax.f32 %v7049, 0.0
        %v7236 = vmax.f32 %v7051, 0.0
        %v7237 = vmax.f32 %v7092, 0.0
        %v7238 = vmax.f32 %v7094, 0.0
        %v7239 = vmax.f32 %v7135, 0.0
        %v7240 = vmax.f32 %v7137, 0.0
        %v7241 = vmax.f32 %v7178, 0.0
        %v7242 = vmax.f32 %v7180, 0.0
        %v7243 = vmax.f32 %v7221, 0.0
        %v7244 = vmax.f32 %v7223, 0.0
        %v7245 = vmax.f32 %v6924, 0.0
        %v7246 = vmax.f32 %v6926, 0.0
        %v7247 = vmax.f32 %v6967, 0.0
        %v7248 = vmax.f32 %v6969, 0.0
        %v7249 = vmax.f32 %v7010, 0.0
        %v7250 = vmax.f32 %v7012, 0.0
        %v7251 = vmax.f32 %v7053, 0.0
        %v7252 = vmax.f32 %v7055, 0.0
        %v7253 = vmax.f32 %v7096, 0.0
        %v7254 = vmax.f32 %v7098, 0.0
        %v7255 = vmax.f32 %v7139, 0.0
        %v7256 = vmax.f32 %v7141, 0.0
        %v7257 = vmax.f32 %v7182, 0.0
        %v7258 = vmax.f32 %v7184, 0.0
        %v7259 = vmax.f32 %v7225, 0.0
        %v7260 = vmax.f32 %v7227, 0.0
        %7262 = vset.pattern.permute.xlu0 0
        %7263 = vperm.xlu0 %7262, %v6029
        %v7264 = vpop.permute.xlu0 %7263
        %7267 = vset.pattern.permute.xlu0 0
        %7268 = vperm.xlu0 %7267, %v6030
        %v7269 = vpop.permute.xlu0 %7268
        %7271 = vset.pattern.permute.xlu0 1
        %7272 = vperm.xlu0 %7271, %v6029
        %v7273 = vpop.permute.xlu0 %7272
        %7275 = vset.pattern.permute.xlu0 1
        %7276 = vperm.xlu0 %7275, %v6030
        %v7277 = vpop.permute.xlu0 %7276
        %7279 = vset.pattern.permute.xlu0 2
        %7280 = vperm.xlu0 %7279, %v6029
        %v7281 = vpop.permute.xlu0 %7280
        %7283 = vset.pattern.permute.xlu0 2
        %7284 = vperm.xlu0 %7283, %v6030
        %v7285 = vpop.permute.xlu0 %7284
        %7287 = vset.pattern.permute.xlu0 3
        %7288 = vperm.xlu0 %7287, %v6029
        %v7289 = vpop.permute.xlu0 %7288
        %7291 = vset.pattern.permute.xlu0 3
        %7292 = vperm.xlu0 %7291, %v6030
        %v7293 = vpop.permute.xlu0 %7292
        %v7295 = vmul.f32 %v7229, %v7264
        %v7296 = vmul.f32 %v7230, %v7264
        %v7297 = vmul.f32 %v7231, %v7264
        %v7298 = vmul.f32 %v7232, %v7264
        %v7299 = vmul.f32 %v7233, %v7273
        %v7300 = vmul.f32 %v7234, %v7273
        %v7301 = vmul.f32 %v7235, %v7273
        %v7302 = vmul.f32 %v7236, %v7273
        %v7303 = vmul.f32 %v7237, %v7281
        %v7304 = vmul.f32 %v7238, %v7281
        %v7305 = vmul.f32 %v7239, %v7281
        %v7306 = vmul.f32 %v7240, %v7281
        %v7307 = vmul.f32 %v7241, %v7289
        %v7308 = vmul.f32 %v7242, %v7289
        %v7309 = vmul.f32 %v7243, %v7289
        %v7310 = vmul.f32 %v7244, %v7289
        %v7311 = vmul.f32 %v7245, %v7269
        %v7312 = vmul.f32 %v7246, %v7269
        %v7313 = vmul.f32 %v7247, %v7269
        %v7314 = vmul.f32 %v7248, %v7269
        %v7315 = vmul.f32 %v7249, %v7277
        %v7316 = vmul.f32 %v7250, %v7277
        %v7317 = vmul.f32 %v7251, %v7277
        %v7318 = vmul.f32 %v7252, %v7277
        %v7319 = vmul.f32 %v7253, %v7285
        %v7320 = vmul.f32 %v7254, %v7285
        %v7321 = vmul.f32 %v7255, %v7285
        %v7322 = vmul.f32 %v7256, %v7285
        %v7323 = vmul.f32 %v7257, %v7293
        %v7324 = vmul.f32 %v7258, %v7293
        %v7325 = vmul.f32 %v7259, %v7293
        %v7326 = vmul.f32 %v7260, %v7293
        %v7327 = vpack.c.bf16 %v7311, %v7295
        %v7328 = vpack.c.bf16 %v7312, %v7296
        %v7329 = vpack.c.bf16 %v7313, %v7297
        %v7330 = vpack.c.bf16 %v7314, %v7298
        %v7331 = vpack.c.bf16 %v7315, %v7299
        %v7332 = vpack.c.bf16 %v7316, %v7300
        %v7333 = vpack.c.bf16 %v7317, %v7301
        %v7334 = vpack.c.bf16 %v7318, %v7302
        %v7335 = vpack.c.bf16 %v7319, %v7303
        %v7336 = vpack.c.bf16 %v7320, %v7304
        %v7337 = vpack.c.bf16 %v7321, %v7305
        %v7338 = vpack.c.bf16 %v7322, %v7306
        %v7339 = vpack.c.bf16 %v7323, %v7307
        %v7340 = vpack.c.bf16 %v7324, %v7308
        %v7341 = vpack.c.bf16 %v7325, %v7309
        %v7342 = vpack.c.bf16 %v7326, %v7310
        %s7343 = scalar_lea.vmem [#allocation13], 1024
        %v7344 = vld [vmem:[%s7343] sm:$0xf]
        %v7345 = vld [vmem:[%s7343 + $0x4] sm:$0xf]
        %v7346 = vld [vmem:[%s7343 + $0x8] sm:$0xf]
        %v7347 = vld [vmem:[%s7343 + $0xc] sm:$0xf]
        %v7348 = vld [vmem:[%s7343 + $0x10] sm:$0xf]
        %v7349 = vld [vmem:[%s7343 + $0x14] sm:$0xf]
        %v7350 = vld [vmem:[%s7343 + $0x18] sm:$0xf]
        %v7351 = vld [vmem:[%s7343 + $0x1c] sm:$0xf]
        %v7352 = vld [vmem:[%s7343 + $0x20] sm:$0xf]
        %v7353 = vld [vmem:[%s7343 + $0x24] sm:$0xf]
        %v7354 = vld [vmem:[%s7343 + $0x28] sm:$0xf]
        %v7355 = vld [vmem:[%s7343 + $0x2c] sm:$0xf]
        %v7356 = vld [vmem:[%s7343 + $0x30] sm:$0xf]
        %v7357 = vld [vmem:[%s7343 + $0x34] sm:$0xf]
        %v7358 = vld [vmem:[%s7343 + $0x38] sm:$0xf]
        %v7359 = vld [vmem:[%s7343 + $0x3c] sm:$0xf]
        %v7360 = vld [vmem:[%s7343 + $0x40] sm:$0xf]
        %v7361 = vld [vmem:[%s7343 + $0x44] sm:$0xf]
        %v7362 = vld [vmem:[%s7343 + $0x48] sm:$0xf]
        %v7363 = vld [vmem:[%s7343 + $0x4c] sm:$0xf]
        %v7364 = vld [vmem:[%s7343 + $0x50] sm:$0xf]
        %v7365 = vld [vmem:[%s7343 + $0x54] sm:$0xf]
        %v7366 = vld [vmem:[%s7343 + $0x58] sm:$0xf]
        %v7367 = vld [vmem:[%s7343 + $0x5c] sm:$0xf]
        %v7368 = vld [vmem:[%s7343 + $0x60] sm:$0xf]
        %v7369 = vld [vmem:[%s7343 + $0x64] sm:$0xf]
        %v7370 = vld [vmem:[%s7343 + $0x68] sm:$0xf]
        %v7371 = vld [vmem:[%s7343 + $0x6c] sm:$0xf]
        %v7372 = vld [vmem:[%s7343 + $0x70] sm:$0xf]
        %v7373 = vld [vmem:[%s7343 + $0x74] sm:$0xf]
        %v7374 = vld [vmem:[%s7343 + $0x78] sm:$0xf]
        %v7375 = vld [vmem:[%s7343 + $0x7c] sm:$0xf]
        %v7376 = vld [vmem:[%s7343 + $0x80] sm:$0xf]
        %v7377 = vld [vmem:[%s7343 + $0x84] sm:$0xf]
        %v7378 = vld [vmem:[%s7343 + $0x88] sm:$0xf]
        %v7379 = vld [vmem:[%s7343 + $0x8c] sm:$0xf]
        %v7380 = vld [vmem:[%s7343 + $0x90] sm:$0xf]
        %v7381 = vld [vmem:[%s7343 + $0x94] sm:$0xf]
        %v7382 = vld [vmem:[%s7343 + $0x98] sm:$0xf]
        %v7383 = vld [vmem:[%s7343 + $0x9c] sm:$0xf]
        %v7384 = vld [vmem:[%s7343 + $0xa0] sm:$0xf]
        %v7385 = vld [vmem:[%s7343 + $0xa4] sm:$0xf]
        %v7386 = vld [vmem:[%s7343 + $0xa8] sm:$0xf]
        %v7387 = vld [vmem:[%s7343 + $0xac] sm:$0xf]
        %v7388 = vld [vmem:[%s7343 + $0xb0] sm:$0xf]
        %v7389 = vld [vmem:[%s7343 + $0xb4] sm:$0xf]
        %v7390 = vld [vmem:[%s7343 + $0xb8] sm:$0xf]
        %v7391 = vld [vmem:[%s7343 + $0xbc] sm:$0xf]
        %v7392 = vld [vmem:[%s7343 + $0xc0] sm:$0xf]
        %v7393 = vld [vmem:[%s7343 + $0xc4] sm:$0xf]
        %v7394 = vld [vmem:[%s7343 + $0xc8] sm:$0xf]
        %v7395 = vld [vmem:[%s7343 + $0xcc] sm:$0xf]
        %v7396 = vld [vmem:[%s7343 + $0xd0] sm:$0xf]
        %v7397 = vld [vmem:[%s7343 + $0xd4] sm:$0xf]
        %v7398 = vld [vmem:[%s7343 + $0xd8] sm:$0xf]
        %v7399 = vld [vmem:[%s7343 + $0xdc] sm:$0xf]
        %v7400 = vld [vmem:[%s7343 + $0xe0] sm:$0xf]
        %v7401 = vld [vmem:[%s7343 + $0xe4] sm:$0xf]
        %v7402 = vld [vmem:[%s7343 + $0xe8] sm:$0xf]
        %v7403 = vld [vmem:[%s7343 + $0xec] sm:$0xf]
        %v7404 = vld [vmem:[%s7343 + $0xf0] sm:$0xf]
        %v7405 = vld [vmem:[%s7343 + $0xf4] sm:$0xf]
        %v7406 = vld [vmem:[%s7343 + $0xf8] sm:$0xf]
        %v7407 = vld [vmem:[%s7343 + $0xfc] sm:$0xf]
        %v7408 = vld [vmem:[%s7343 + $0x100] sm:$0xf]
        %v7409 = vld [vmem:[%s7343 + $0x104] sm:$0xf]
        %v7410 = vld [vmem:[%s7343 + $0x108] sm:$0xf]
        %v7411 = vld [vmem:[%s7343 + $0x10c] sm:$0xf]
        %v7412 = vld [vmem:[%s7343 + $0x110] sm:$0xf]
        %v7413 = vld [vmem:[%s7343 + $0x114] sm:$0xf]
        %v7414 = vld [vmem:[%s7343 + $0x118] sm:$0xf]
        %v7415 = vld [vmem:[%s7343 + $0x11c] sm:$0xf]
        %v7416 = vld [vmem:[%s7343 + $0x120] sm:$0xf]
        %v7417 = vld [vmem:[%s7343 + $0x124] sm:$0xf]
        %v7418 = vld [vmem:[%s7343 + $0x128] sm:$0xf]
        %v7419 = vld [vmem:[%s7343 + $0x12c] sm:$0xf]
        %v7420 = vld [vmem:[%s7343 + $0x130] sm:$0xf]
        %v7421 = vld [vmem:[%s7343 + $0x134] sm:$0xf]
        %v7422 = vld [vmem:[%s7343 + $0x138] sm:$0xf]
        %v7423 = vld [vmem:[%s7343 + $0x13c] sm:$0xf]
        %v7424 = vld [vmem:[%s7343 + $0x140] sm:$0xf]
        %v7425 = vld [vmem:[%s7343 + $0x144] sm:$0xf]
        %v7426 = vld [vmem:[%s7343 + $0x148] sm:$0xf]
        %v7427 = vld [vmem:[%s7343 + $0x14c] sm:$0xf]
        %v7428 = vld [vmem:[%s7343 + $0x150] sm:$0xf]
        %v7429 = vld [vmem:[%s7343 + $0x154] sm:$0xf]
        %v7430 = vld [vmem:[%s7343 + $0x158] sm:$0xf]
        %v7431 = vld [vmem:[%s7343 + $0x15c] sm:$0xf]
        %v7432 = vld [vmem:[%s7343 + $0x160] sm:$0xf]
        %v7433 = vld [vmem:[%s7343 + $0x164] sm:$0xf]
        %v7434 = vld [vmem:[%s7343 + $0x168] sm:$0xf]
        %v7435 = vld [vmem:[%s7343 + $0x16c] sm:$0xf]
        %v7436 = vld [vmem:[%s7343 + $0x170] sm:$0xf]
        %v7437 = vld [vmem:[%s7343 + $0x174] sm:$0xf]
        %v7438 = vld [vmem:[%s7343 + $0x178] sm:$0xf]
        %v7439 = vld [vmem:[%s7343 + $0x17c] sm:$0xf]
        %v7440 = vld [vmem:[%s7343 + $0x180] sm:$0xf]
        %v7441 = vld [vmem:[%s7343 + $0x184] sm:$0xf]
        %v7442 = vld [vmem:[%s7343 + $0x188] sm:$0xf]
        %v7443 = vld [vmem:[%s7343 + $0x18c] sm:$0xf]
        %v7444 = vld [vmem:[%s7343 + $0x190] sm:$0xf]
        %v7445 = vld [vmem:[%s7343 + $0x194] sm:$0xf]
        %v7446 = vld [vmem:[%s7343 + $0x198] sm:$0xf]
        %v7447 = vld [vmem:[%s7343 + $0x19c] sm:$0xf]
        %v7448 = vld [vmem:[%s7343 + $0x1a0] sm:$0xf]
        %v7449 = vld [vmem:[%s7343 + $0x1a4] sm:$0xf]
        %v7450 = vld [vmem:[%s7343 + $0x1a8] sm:$0xf]
        %v7451 = vld [vmem:[%s7343 + $0x1ac] sm:$0xf]
        %v7452 = vld [vmem:[%s7343 + $0x1b0] sm:$0xf]
        %v7453 = vld [vmem:[%s7343 + $0x1b4] sm:$0xf]
        %v7454 = vld [vmem:[%s7343 + $0x1b8] sm:$0xf]
        %v7455 = vld [vmem:[%s7343 + $0x1bc] sm:$0xf]
        %v7456 = vld [vmem:[%s7343 + $0x1c0] sm:$0xf]
        %v7457 = vld [vmem:[%s7343 + $0x1c4] sm:$0xf]
        %v7458 = vld [vmem:[%s7343 + $0x1c8] sm:$0xf]
        %v7459 = vld [vmem:[%s7343 + $0x1cc] sm:$0xf]
        %v7460 = vld [vmem:[%s7343 + $0x1d0] sm:$0xf]
        %v7461 = vld [vmem:[%s7343 + $0x1d4] sm:$0xf]
        %v7462 = vld [vmem:[%s7343 + $0x1d8] sm:$0xf]
        %v7463 = vld [vmem:[%s7343 + $0x1dc] sm:$0xf]
        %v7464 = vld [vmem:[%s7343 + $0x1e0] sm:$0xf]
        %v7465 = vld [vmem:[%s7343 + $0x1e4] sm:$0xf]
        %v7466 = vld [vmem:[%s7343 + $0x1e8] sm:$0xf]
        %v7467 = vld [vmem:[%s7343 + $0x1ec] sm:$0xf]
        %v7468 = vld [vmem:[%s7343 + $0x1f0] sm:$0xf]
        %v7469 = vld [vmem:[%s7343 + $0x1f4] sm:$0xf]
        %v7470 = vld [vmem:[%s7343 + $0x1f8] sm:$0xf]
        %v7471 = vld [vmem:[%s7343 + $0x1fc] sm:$0xf]
        %v7472 = vld [vmem:[%s7343 + $0x200] sm:$0xf]
        %v7473 = vld [vmem:[%s7343 + $0x204] sm:$0xf]
        %v7474 = vld [vmem:[%s7343 + $0x208] sm:$0xf]
        %v7475 = vld [vmem:[%s7343 + $0x20c] sm:$0xf]
        %v7476 = vld [vmem:[%s7343 + $0x210] sm:$0xf]
        %v7477 = vld [vmem:[%s7343 + $0x214] sm:$0xf]
        %v7478 = vld [vmem:[%s7343 + $0x218] sm:$0xf]
        %v7479 = vld [vmem:[%s7343 + $0x21c] sm:$0xf]
        %v7480 = vld [vmem:[%s7343 + $0x220] sm:$0xf]
        %v7481 = vld [vmem:[%s7343 + $0x224] sm:$0xf]
        %v7482 = vld [vmem:[%s7343 + $0x228] sm:$0xf]
        %v7483 = vld [vmem:[%s7343 + $0x22c] sm:$0xf]
        %v7484 = vld [vmem:[%s7343 + $0x230] sm:$0xf]
        %v7485 = vld [vmem:[%s7343 + $0x234] sm:$0xf]
        %v7486 = vld [vmem:[%s7343 + $0x238] sm:$0xf]
        %v7487 = vld [vmem:[%s7343 + $0x23c] sm:$0xf]
        %v7488 = vld [vmem:[%s7343 + $0x240] sm:$0xf]
        %v7489 = vld [vmem:[%s7343 + $0x244] sm:$0xf]
        %v7490 = vld [vmem:[%s7343 + $0x248] sm:$0xf]
        %v7491 = vld [vmem:[%s7343 + $0x24c] sm:$0xf]
        %v7492 = vld [vmem:[%s7343 + $0x250] sm:$0xf]
        %v7493 = vld [vmem:[%s7343 + $0x254] sm:$0xf]
        %v7494 = vld [vmem:[%s7343 + $0x258] sm:$0xf]
        %v7495 = vld [vmem:[%s7343 + $0x25c] sm:$0xf]
        %v7496 = vld [vmem:[%s7343 + $0x260] sm:$0xf]
        %v7497 = vld [vmem:[%s7343 + $0x264] sm:$0xf]
        %v7498 = vld [vmem:[%s7343 + $0x268] sm:$0xf]
        %v7499 = vld [vmem:[%s7343 + $0x26c] sm:$0xf]
        %v7500 = vld [vmem:[%s7343 + $0x270] sm:$0xf]
        %v7501 = vld [vmem:[%s7343 + $0x274] sm:$0xf]
        %v7502 = vld [vmem:[%s7343 + $0x278] sm:$0xf]
        %v7503 = vld [vmem:[%s7343 + $0x27c] sm:$0xf]
        %v7504 = vld [vmem:[%s7343 + $0x280] sm:$0xf]
        %v7505 = vld [vmem:[%s7343 + $0x284] sm:$0xf]
        %v7506 = vld [vmem:[%s7343 + $0x288] sm:$0xf]
        %v7507 = vld [vmem:[%s7343 + $0x28c] sm:$0xf]
        %v7508 = vld [vmem:[%s7343 + $0x290] sm:$0xf]
        %v7509 = vld [vmem:[%s7343 + $0x294] sm:$0xf]
        %v7510 = vld [vmem:[%s7343 + $0x298] sm:$0xf]
        %v7511 = vld [vmem:[%s7343 + $0x29c] sm:$0xf]
        %v7512 = vld [vmem:[%s7343 + $0x2a0] sm:$0xf]
        %v7513 = vld [vmem:[%s7343 + $0x2a4] sm:$0xf]
        %v7514 = vld [vmem:[%s7343 + $0x2a8] sm:$0xf]
        %v7515 = vld [vmem:[%s7343 + $0x2ac] sm:$0xf]
        %v7516 = vld [vmem:[%s7343 + $0x2b0] sm:$0xf]
        %v7517 = vld [vmem:[%s7343 + $0x2b4] sm:$0xf]
        %v7518 = vld [vmem:[%s7343 + $0x2b8] sm:$0xf]
        %v7519 = vld [vmem:[%s7343 + $0x2bc] sm:$0xf]
        %v7520 = vld [vmem:[%s7343 + $0x2c0] sm:$0xf]
        %v7521 = vld [vmem:[%s7343 + $0x2c4] sm:$0xf]
        %v7522 = vld [vmem:[%s7343 + $0x2c8] sm:$0xf]
        %v7523 = vld [vmem:[%s7343 + $0x2cc] sm:$0xf]
        %v7524 = vld [vmem:[%s7343 + $0x2d0] sm:$0xf]
        %v7525 = vld [vmem:[%s7343 + $0x2d4] sm:$0xf]
        %v7526 = vld [vmem:[%s7343 + $0x2d8] sm:$0xf]
        %v7527 = vld [vmem:[%s7343 + $0x2dc] sm:$0xf]
        %v7528 = vld [vmem:[%s7343 + $0x2e0] sm:$0xf]
        %v7529 = vld [vmem:[%s7343 + $0x2e4] sm:$0xf]
        %v7530 = vld [vmem:[%s7343 + $0x2e8] sm:$0xf]
        %v7531 = vld [vmem:[%s7343 + $0x2ec] sm:$0xf]
        %v7532 = vld [vmem:[%s7343 + $0x2f0] sm:$0xf]
        %v7533 = vld [vmem:[%s7343 + $0x2f4] sm:$0xf]
        %v7534 = vld [vmem:[%s7343 + $0x2f8] sm:$0xf]
        %v7535 = vld [vmem:[%s7343 + $0x2fc] sm:$0xf]
        %v7536 = vld [vmem:[%s7343 + $0x300] sm:$0xf]
        %v7537 = vld [vmem:[%s7343 + $0x304] sm:$0xf]
        %v7538 = vld [vmem:[%s7343 + $0x308] sm:$0xf]
        %v7539 = vld [vmem:[%s7343 + $0x30c] sm:$0xf]
        %v7540 = vld [vmem:[%s7343 + $0x310] sm:$0xf]
        %v7541 = vld [vmem:[%s7343 + $0x314] sm:$0xf]
        %v7542 = vld [vmem:[%s7343 + $0x318] sm:$0xf]
        %v7543 = vld [vmem:[%s7343 + $0x31c] sm:$0xf]
        %v7544 = vld [vmem:[%s7343 + $0x320] sm:$0xf]
        %v7545 = vld [vmem:[%s7343 + $0x324] sm:$0xf]
        %v7546 = vld [vmem:[%s7343 + $0x328] sm:$0xf]
        %v7547 = vld [vmem:[%s7343 + $0x32c] sm:$0xf]
        %v7548 = vld [vmem:[%s7343 + $0x330] sm:$0xf]
        %v7549 = vld [vmem:[%s7343 + $0x334] sm:$0xf]
        %v7550 = vld [vmem:[%s7343 + $0x338] sm:$0xf]
        %v7551 = vld [vmem:[%s7343 + $0x33c] sm:$0xf]
        %v7552 = vld [vmem:[%s7343 + $0x340] sm:$0xf]
        %v7553 = vld [vmem:[%s7343 + $0x344] sm:$0xf]
        %v7554 = vld [vmem:[%s7343 + $0x348] sm:$0xf]
        %v7555 = vld [vmem:[%s7343 + $0x34c] sm:$0xf]
        %v7556 = vld [vmem:[%s7343 + $0x350] sm:$0xf]
        %v7557 = vld [vmem:[%s7343 + $0x354] sm:$0xf]
        %v7558 = vld [vmem:[%s7343 + $0x358] sm:$0xf]
        %v7559 = vld [vmem:[%s7343 + $0x35c] sm:$0xf]
        %v7560 = vld [vmem:[%s7343 + $0x360] sm:$0xf]
        %v7561 = vld [vmem:[%s7343 + $0x364] sm:$0xf]
        %v7562 = vld [vmem:[%s7343 + $0x368] sm:$0xf]
        %v7563 = vld [vmem:[%s7343 + $0x36c] sm:$0xf]
        %v7564 = vld [vmem:[%s7343 + $0x370] sm:$0xf]
        %v7565 = vld [vmem:[%s7343 + $0x374] sm:$0xf]
        %v7566 = vld [vmem:[%s7343 + $0x378] sm:$0xf]
        %v7567 = vld [vmem:[%s7343 + $0x37c] sm:$0xf]
        %v7568 = vld [vmem:[%s7343 + $0x380] sm:$0xf]
        %v7569 = vld [vmem:[%s7343 + $0x384] sm:$0xf]
        %v7570 = vld [vmem:[%s7343 + $0x388] sm:$0xf]
        %v7571 = vld [vmem:[%s7343 + $0x38c] sm:$0xf]
        %v7572 = vld [vmem:[%s7343 + $0x390] sm:$0xf]
        %v7573 = vld [vmem:[%s7343 + $0x394] sm:$0xf]
        %v7574 = vld [vmem:[%s7343 + $0x398] sm:$0xf]
        %v7575 = vld [vmem:[%s7343 + $0x39c] sm:$0xf]
        %v7576 = vld [vmem:[%s7343 + $0x3a0] sm:$0xf]
        %v7577 = vld [vmem:[%s7343 + $0x3a4] sm:$0xf]
        %v7578 = vld [vmem:[%s7343 + $0x3a8] sm:$0xf]
        %v7579 = vld [vmem:[%s7343 + $0x3ac] sm:$0xf]
        %v7580 = vld [vmem:[%s7343 + $0x3b0] sm:$0xf]
        %v7581 = vld [vmem:[%s7343 + $0x3b4] sm:$0xf]
        %v7582 = vld [vmem:[%s7343 + $0x3b8] sm:$0xf]
        %v7583 = vld [vmem:[%s7343 + $0x3bc] sm:$0xf]
        %v7584 = vld [vmem:[%s7343 + $0x3c0] sm:$0xf]
        %v7585 = vld [vmem:[%s7343 + $0x3c4] sm:$0xf]
        %v7586 = vld [vmem:[%s7343 + $0x3c8] sm:$0xf]
        %v7587 = vld [vmem:[%s7343 + $0x3cc] sm:$0xf]
        %v7588 = vld [vmem:[%s7343 + $0x3d0] sm:$0xf]
        %v7589 = vld [vmem:[%s7343 + $0x3d4] sm:$0xf]
        %v7590 = vld [vmem:[%s7343 + $0x3d8] sm:$0xf]
        %v7591 = vld [vmem:[%s7343 + $0x3dc] sm:$0xf]
        %v7592 = vld [vmem:[%s7343 + $0x3e0] sm:$0xf]
        %v7593 = vld [vmem:[%s7343 + $0x3e4] sm:$0xf]
        %v7594 = vld [vmem:[%s7343 + $0x3e8] sm:$0xf]
        %v7595 = vld [vmem:[%s7343 + $0x3ec] sm:$0xf]
        %v7596 = vld [vmem:[%s7343 + $0x3f0] sm:$0xf]
        %v7597 = vld [vmem:[%s7343 + $0x3f4] sm:$0xf]
        %v7598 = vld [vmem:[%s7343 + $0x3f8] sm:$0xf]
        %v7599 = vld [vmem:[%s7343 + $0x3fc] sm:$0xf]
        %s7600 = scalar_lea.vmem [#allocation14], 128
        %v7601 = vld [vmem:[%s7600] sm:$0xff]
        %v7602 = vld [vmem:[%s7600 + $0x8] sm:$0xff]
        %v7603 = vld [vmem:[%s7600 + $0x10] sm:$0xff]
        %v7604 = vld [vmem:[%s7600 + $0x18] sm:$0xff]
        %v7605 = vld [vmem:[%s7600 + $0x20] sm:$0xff]
        %v7606 = vld [vmem:[%s7600 + $0x28] sm:$0xff]
        %v7607 = vld [vmem:[%s7600 + $0x30] sm:$0xff]
        %v7608 = vld [vmem:[%s7600 + $0x38] sm:$0xff]
        %v7609 = vld [vmem:[%s7600 + $0x40] sm:$0xff]
        %v7610 = vld [vmem:[%s7600 + $0x48] sm:$0xff]
        %v7611 = vld [vmem:[%s7600 + $0x50] sm:$0xff]
        %v7612 = vld [vmem:[%s7600 + $0x58] sm:$0xff]
        %v7613 = vld [vmem:[%s7600 + $0x60] sm:$0xff]
        %v7614 = vld [vmem:[%s7600 + $0x68] sm:$0xff]
        %v7615 = vld [vmem:[%s7600 + $0x70] sm:$0xff]
        %v7616 = vld [vmem:[%s7600 + $0x78] sm:$0xff]
        %7617 = vmatprep.subr.mxu0 0.0
        %7618 = vmatpush1.msra.mxu0 %v7601
        %7619 = vmatprep.subr.mxu0 0.0
        %7620 = vmatpush1.msra.mxu0 %v7602
        %7621 = vmatprep.subr.mxu0 0.0
        %7622 = vmatpush1.msra.mxu0 %v7603
        %7623 = vmatprep.subr.mxu0 0.0
        %7624 = vmatpush1.msra.mxu0 %v7604
        %7625 = vmatprep.subr.mxu0 0.0
        %7626 = vmatpush1.msra.mxu0 %v7605
        %7627 = vmatprep.subr.mxu0 0.0
        %7628 = vmatpush1.msra.mxu0 %v7606
        %7629 = vmatprep.subr.mxu0 0.0
        %7630 = vmatpush1.msra.mxu0 %v7607
        %7631 = vmatprep.subr.mxu0 0.0
        %7632 = vmatpush1.msra.mxu0 %v7608
        %7633 = vmatprep.subr.mxu0 0.0
        %7634 = vmatpush1.msra.mxu0 %v7609
        %7635 = vmatprep.subr.mxu0 0.0
        %7636 = vmatpush1.msra.mxu0 %v7610
        %7637 = vmatprep.subr.mxu0 0.0
        %7638 = vmatpush1.msra.mxu0 %v7611
        %7639 = vmatprep.subr.mxu0 0.0
        %7640 = vmatpush1.msra.mxu0 %v7612
        %7641 = vmatprep.subr.mxu0 0.0
        %7642 = vmatpush1.msra.mxu0 %v7613
        %7643 = vmatprep.subr.mxu0 0.0
        %7644 = vmatpush1.msra.mxu0 %v7614
        %7645 = vmatprep.subr.mxu0 0.0
        %7646 = vmatpush1.msra.mxu0 %v7615
        %7647 = vmatprep.subr.mxu0 0.0
        %7648 = vmatpush1.msra.mxu0 %v7616
        %7649 = vmatprep.subr.mxu0 0.0
        %7650 = vmatpush1.msra.mxu0 0.0
        %7651 = vmatprep.subr.mxu0 0.0
        %7652 = vmatpush1.msra.mxu0 0.0
        %7653 = vmatprep.subr.mxu0 0.0
        %7654 = vmatpush1.msra.mxu0 0.0
        %7655 = vmatprep.subr.mxu0 0.0
        %7656 = vmatpush1.msra.mxu0 0.0
        %7657 = vmatprep.subr.mxu0 0.0
        %7658 = vmatpush1.msra.mxu0 0.0
        %7659 = vmatprep.subr.mxu0 0.0
        %7660 = vmatpush1.msra.mxu0 0.0
        %7661 = vmatprep.subr.mxu0 0.0
        %7662 = vmatpush1.msra.mxu0 0.0
        %7663 = vmatprep.subr.mxu0 0.0
        %7664 = vmatpush1.msra.mxu0 0.0
        %7665 = vmatprep.subr.mxu0 0.0
        %7666 = vmatpush1.msra.mxu0 0.0
        %7667 = vmatprep.subr.mxu0 0.0
        %7668 = vmatpush1.msra.mxu0 0.0
        %7669 = vmatprep.subr.mxu0 0.0
        %7670 = vmatpush1.msra.mxu0 0.0
        %7671 = vmatprep.subr.mxu0 0.0
        %7672 = vmatpush1.msra.mxu0 0.0
        %7673 = vmatprep.subr.mxu0 0.0
        %7674 = vmatpush1.msra.mxu0 0.0
        %7675 = vmatprep.subr.mxu0 0.0
        %7676 = vmatpush1.msra.mxu0 0.0
        %7677 = vmatprep.subr.mxu0 0.0
        %7678 = vmatpush1.msra.mxu0 0.0
        %7679 = vmatprep.subr.mxu0 0.0
        %7680 = vmatpush1.msra.mxu0 0.0
        %7681 = vmatprep.mubr.f32.mxu0 0.0
        %7682 = vmatmul.mubr.f32.gmra.mrb[0].mxu0 %v6029
        %v7683 = vpop.f32.mrb[0].mxu0
        %v7684 = vadd.f32 0.0, %v7683
        %v7685 = vpop.f32.mrb[0].mxu0
        %7686 = vmatprep.mubr.f32.mxu0 0.0
        %7687 = vmatmul.mubr.f32.gmra.mrb[0].mxu0 %v6030
        %v7688 = vpop.f32.mrb[0].mxu0
        %v7689 = vadd.f32 0.0, %v7688
        %v7690 = vpop.f32.mrb[0].mxu0
        %7691 = vdwg.mxu0
        %v7948 = vunpack.c.l.b16 %v7344
        %v7949 = vunpack.c.l.b16 %v7345
        %v7950 = vunpack.c.l.b16 %v7346
        %v7951 = vunpack.c.l.b16 %v7347
        %v7952 = vunpack.c.l.b16 %v7348
        %v7953 = vunpack.c.l.b16 %v7349
        %v7954 = vunpack.c.l.b16 %v7350
        %v7955 = vunpack.c.l.b16 %v7351
        %v7956 = vunpack.c.l.b16 %v7352
        %v7957 = vunpack.c.l.b16 %v7353
        %v7958 = vunpack.c.l.b16 %v7354
        %v7959 = vunpack.c.l.b16 %v7355
        %v7960 = vunpack.c.l.b16 %v7356
        %v7961 = vunpack.c.l.b16 %v7357
        %v7962 = vunpack.c.l.b16 %v7358
        %v7963 = vunpack.c.l.b16 %v7359
        %v7964 = vunpack.c.l.b16 %v7360
        %v7965 = vunpack.c.l.b16 %v7361
        %v7966 = vunpack.c.l.b16 %v7362
        %v7967 = vunpack.c.l.b16 %v7363
        %v7968 = vunpack.c.l.b16 %v7364
        %v7969 = vunpack.c.l.b16 %v7365
        %v7970 = vunpack.c.l.b16 %v7366
        %v7971 = vunpack.c.l.b16 %v7367
        %v7972 = vunpack.c.l.b16 %v7368
        %v7973 = vunpack.c.l.b16 %v7369
        %v7974 = vunpack.c.l.b16 %v7370
        %v7975 = vunpack.c.l.b16 %v7371
        %v7976 = vunpack.c.l.b16 %v7372
        %v7977 = vunpack.c.l.b16 %v7373
        %v7978 = vunpack.c.l.b16 %v7374
        %v7979 = vunpack.c.l.b16 %v7375
        %v7980 = vunpack.c.l.b16 %v7376
        %v7981 = vunpack.c.l.b16 %v7377
        %v7982 = vunpack.c.l.b16 %v7378
        %v7983 = vunpack.c.l.b16 %v7379
        %v7984 = vunpack.c.l.b16 %v7380
        %v7985 = vunpack.c.l.b16 %v7381
        %v7986 = vunpack.c.l.b16 %v7382
        %v7987 = vunpack.c.l.b16 %v7383
        %v7988 = vunpack.c.l.b16 %v7384
        %v7989 = vunpack.c.l.b16 %v7385
        %v7990 = vunpack.c.l.b16 %v7386
        %v7991 = vunpack.c.l.b16 %v7387
        %v7992 = vunpack.c.l.b16 %v7388
        %v7993 = vunpack.c.l.b16 %v7389
        %v7994 = vunpack.c.l.b16 %v7390
        %v7995 = vunpack.c.l.b16 %v7391
        %v7996 = vunpack.c.l.b16 %v7392
        %v7997 = vunpack.c.l.b16 %v7393
        %v7998 = vunpack.c.l.b16 %v7394
        %v7999 = vunpack.c.l.b16 %v7395
        %v8000 = vunpack.c.l.b16 %v7396
        %v8001 = vunpack.c.l.b16 %v7397
        %v8002 = vunpack.c.l.b16 %v7398
        %v8003 = vunpack.c.l.b16 %v7399
        %v8004 = vunpack.c.l.b16 %v7400
        %v8005 = vunpack.c.l.b16 %v7401
        %v8006 = vunpack.c.l.b16 %v7402
        %v8007 = vunpack.c.l.b16 %v7403
        %v8008 = vunpack.c.l.b16 %v7404
        %v8009 = vunpack.c.l.b16 %v7405
        %v8010 = vunpack.c.l.b16 %v7406
        %v8011 = vunpack.c.l.b16 %v7407
        %v8012 = vunpack.c.l.b16 %v7408
        %v8013 = vunpack.c.l.b16 %v7409
        %v8014 = vunpack.c.l.b16 %v7410
        %v8015 = vunpack.c.l.b16 %v7411
        %v8016 = vunpack.c.l.b16 %v7412
        %v8017 = vunpack.c.l.b16 %v7413
        %v8018 = vunpack.c.l.b16 %v7414
        %v8019 = vunpack.c.l.b16 %v7415
        %v8020 = vunpack.c.l.b16 %v7416
        %v8021 = vunpack.c.l.b16 %v7417
        %v8022 = vunpack.c.l.b16 %v7418
        %v8023 = vunpack.c.l.b16 %v7419
        %v8024 = vunpack.c.l.b16 %v7420
        %v8025 = vunpack.c.l.b16 %v7421
        %v8026 = vunpack.c.l.b16 %v7422
        %v8027 = vunpack.c.l.b16 %v7423
        %v8028 = vunpack.c.l.b16 %v7424
        %v8029 = vunpack.c.l.b16 %v7425
        %v8030 = vunpack.c.l.b16 %v7426
        %v8031 = vunpack.c.l.b16 %v7427
        %v8032 = vunpack.c.l.b16 %v7428
        %v8033 = vunpack.c.l.b16 %v7429
        %v8034 = vunpack.c.l.b16 %v7430
        %v8035 = vunpack.c.l.b16 %v7431
        %v8036 = vunpack.c.l.b16 %v7432
        %v8037 = vunpack.c.l.b16 %v7433
        %v8038 = vunpack.c.l.b16 %v7434
        %v8039 = vunpack.c.l.b16 %v7435
        %v8040 = vunpack.c.l.b16 %v7436
        %v8041 = vunpack.c.l.b16 %v7437
        %v8042 = vunpack.c.l.b16 %v7438
        %v8043 = vunpack.c.l.b16 %v7439
        %v8044 = vunpack.c.l.b16 %v7440
        %v8045 = vunpack.c.l.b16 %v7441
        %v8046 = vunpack.c.l.b16 %v7442
        %v8047 = vunpack.c.l.b16 %v7443
        %v8048 = vunpack.c.l.b16 %v7444
        %v8049 = vunpack.c.l.b16 %v7445
        %v8050 = vunpack.c.l.b16 %v7446
        %v8051 = vunpack.c.l.b16 %v7447
        %v8052 = vunpack.c.l.b16 %v7448
        %v8053 = vunpack.c.l.b16 %v7449
        %v8054 = vunpack.c.l.b16 %v7450
        %v8055 = vunpack.c.l.b16 %v7451
        %v8056 = vunpack.c.l.b16 %v7452
        %v8057 = vunpack.c.l.b16 %v7453
        %v8058 = vunpack.c.l.b16 %v7454
        %v8059 = vunpack.c.l.b16 %v7455
        %v8060 = vunpack.c.l.b16 %v7456
        %v8061 = vunpack.c.l.b16 %v7457
        %v8062 = vunpack.c.l.b16 %v7458
        %v8063 = vunpack.c.l.b16 %v7459
        %v8064 = vunpack.c.l.b16 %v7460
        %v8065 = vunpack.c.l.b16 %v7461
        %v8066 = vunpack.c.l.b16 %v7462
        %v8067 = vunpack.c.l.b16 %v7463
        %v8068 = vunpack.c.l.b16 %v7464
        %v8069 = vunpack.c.l.b16 %v7465
        %v8070 = vunpack.c.l.b16 %v7466
        %v8071 = vunpack.c.l.b16 %v7467
        %v8072 = vunpack.c.l.b16 %v7468
        %v8073 = vunpack.c.l.b16 %v7469
        %v8074 = vunpack.c.l.b16 %v7470
        %v8075 = vunpack.c.l.b16 %v7471
        %v8076 = vunpack.c.l.b16 %v7472
        %v8077 = vunpack.c.l.b16 %v7473
        %v8078 = vunpack.c.l.b16 %v7474
        %v8079 = vunpack.c.l.b16 %v7475
        %v8080 = vunpack.c.l.b16 %v7476
        %v8081 = vunpack.c.l.b16 %v7477
        %v8082 = vunpack.c.l.b16 %v7478
        %v8083 = vunpack.c.l.b16 %v7479
        %v8084 = vunpack.c.l.b16 %v7480
        %v8085 = vunpack.c.l.b16 %v7481
        %v8086 = vunpack.c.l.b16 %v7482
        %v8087 = vunpack.c.l.b16 %v7483
        %v8088 = vunpack.c.l.b16 %v7484
        %v8089 = vunpack.c.l.b16 %v7485
        %v8090 = vunpack.c.l.b16 %v7486
        %v8091 = vunpack.c.l.b16 %v7487
        %v8092 = vunpack.c.l.b16 %v7488
        %v8093 = vunpack.c.l.b16 %v7489
        %v8094 = vunpack.c.l.b16 %v7490
        %v8095 = vunpack.c.l.b16 %v7491
        %v8096 = vunpack.c.l.b16 %v7492
        %v8097 = vunpack.c.l.b16 %v7493
        %v8098 = vunpack.c.l.b16 %v7494
        %v8099 = vunpack.c.l.b16 %v7495
        %v8100 = vunpack.c.l.b16 %v7496
        %v8101 = vunpack.c.l.b16 %v7497
        %v8102 = vunpack.c.l.b16 %v7498
        %v8103 = vunpack.c.l.b16 %v7499
        %v8104 = vunpack.c.l.b16 %v7500
        %v8105 = vunpack.c.l.b16 %v7501
        %v8106 = vunpack.c.l.b16 %v7502
        %v8107 = vunpack.c.l.b16 %v7503
        %v8108 = vunpack.c.l.b16 %v7504
        %v8109 = vunpack.c.l.b16 %v7505
        %v8110 = vunpack.c.l.b16 %v7506
        %v8111 = vunpack.c.l.b16 %v7507
        %v8112 = vunpack.c.l.b16 %v7508
        %v8113 = vunpack.c.l.b16 %v7509
        %v8114 = vunpack.c.l.b16 %v7510
        %v8115 = vunpack.c.l.b16 %v7511
        %v8116 = vunpack.c.l.b16 %v7512
        %v8117 = vunpack.c.l.b16 %v7513
        %v8118 = vunpack.c.l.b16 %v7514
        %v8119 = vunpack.c.l.b16 %v7515
        %v8120 = vunpack.c.l.b16 %v7516
        %v8121 = vunpack.c.l.b16 %v7517
        %v8122 = vunpack.c.l.b16 %v7518
        %v8123 = vunpack.c.l.b16 %v7519
        %v8124 = vunpack.c.l.b16 %v7520
        %v8125 = vunpack.c.l.b16 %v7521
        %v8126 = vunpack.c.l.b16 %v7522
        %v8127 = vunpack.c.l.b16 %v7523
        %v8128 = vunpack.c.l.b16 %v7524
        %v8129 = vunpack.c.l.b16 %v7525
        %v8130 = vunpack.c.l.b16 %v7526
        %v8131 = vunpack.c.l.b16 %v7527
        %v8132 = vunpack.c.l.b16 %v7528
        %v8133 = vunpack.c.l.b16 %v7529
        %v8134 = vunpack.c.l.b16 %v7530
        %v8135 = vunpack.c.l.b16 %v7531
        %v8136 = vunpack.c.l.b16 %v7532
        %v8137 = vunpack.c.l.b16 %v7533
        %v8138 = vunpack.c.l.b16 %v7534
        %v8139 = vunpack.c.l.b16 %v7535
        %v8140 = vunpack.c.l.b16 %v7536
        %v8141 = vunpack.c.l.b16 %v7537
        %v8142 = vunpack.c.l.b16 %v7538
        %v8143 = vunpack.c.l.b16 %v7539
        %v8144 = vunpack.c.l.b16 %v7540
        %v8145 = vunpack.c.l.b16 %v7541
        %v8146 = vunpack.c.l.b16 %v7542
        %v8147 = vunpack.c.l.b16 %v7543
        %v8148 = vunpack.c.l.b16 %v7544
        %v8149 = vunpack.c.l.b16 %v7545
        %v8150 = vunpack.c.l.b16 %v7546
        %v8151 = vunpack.c.l.b16 %v7547
        %v8152 = vunpack.c.l.b16 %v7548
        %v8153 = vunpack.c.l.b16 %v7549
        %v8154 = vunpack.c.l.b16 %v7550
        %v8155 = vunpack.c.l.b16 %v7551
        %v8156 = vunpack.c.l.b16 %v7552
        %v8157 = vunpack.c.l.b16 %v7553
        %v8158 = vunpack.c.l.b16 %v7554
        %v8159 = vunpack.c.l.b16 %v7555
        %v8160 = vunpack.c.l.b16 %v7556
        %v8161 = vunpack.c.l.b16 %v7557
        %v8162 = vunpack.c.l.b16 %v7558
        %v8163 = vunpack.c.l.b16 %v7559
        %v8164 = vunpack.c.l.b16 %v7560
        %v8165 = vunpack.c.l.b16 %v7561
        %v8166 = vunpack.c.l.b16 %v7562
        %v8167 = vunpack.c.l.b16 %v7563
        %v8168 = vunpack.c.l.b16 %v7564
        %v8169 = vunpack.c.l.b16 %v7565
        %v8170 = vunpack.c.l.b16 %v7566
        %v8171 = vunpack.c.l.b16 %v7567
        %v8172 = vunpack.c.l.b16 %v7568
        %v8173 = vunpack.c.l.b16 %v7569
        %v8174 = vunpack.c.l.b16 %v7570
        %v8175 = vunpack.c.l.b16 %v7571
        %v8176 = vunpack.c.l.b16 %v7572
        %v8177 = vunpack.c.l.b16 %v7573
        %v8178 = vunpack.c.l.b16 %v7574
        %v8179 = vunpack.c.l.b16 %v7575
        %v8180 = vunpack.c.l.b16 %v7576
        %v8181 = vunpack.c.l.b16 %v7577
        %v8182 = vunpack.c.l.b16 %v7578
        %v8183 = vunpack.c.l.b16 %v7579
        %v8184 = vunpack.c.l.b16 %v7580
        %v8185 = vunpack.c.l.b16 %v7581
        %v8186 = vunpack.c.l.b16 %v7582
        %v8187 = vunpack.c.l.b16 %v7583
        %v8188 = vunpack.c.l.b16 %v7584
        %v8189 = vunpack.c.l.b16 %v7585
        %v8190 = vunpack.c.l.b16 %v7586
        %v8191 = vunpack.c.l.b16 %v7587
        %v8192 = vunpack.c.l.b16 %v7588
        %v8193 = vunpack.c.l.b16 %v7589
        %v8194 = vunpack.c.l.b16 %v7590
        %v8195 = vunpack.c.l.b16 %v7591
        %v8196 = vunpack.c.l.b16 %v7592
        %v8197 = vunpack.c.l.b16 %v7593
        %v8198 = vunpack.c.l.b16 %v7594
        %v8199 = vunpack.c.l.b16 %v7595
        %v8200 = vunpack.c.l.b16 %v7596
        %v8201 = vunpack.c.l.b16 %v7597
        %v8202 = vunpack.c.l.b16 %v7598
        %v8203 = vunpack.c.l.b16 %v7599
        %v8204 = vpack.c.b16 %v7949, %v7948
        %v8205 = vpack.c.b16 %v7951, %v7950
        %v8206 = vpack.c.b16 %v7953, %v7952
        %v8207 = vpack.c.b16 %v7955, %v7954
        %v8208 = vpack.c.b16 %v7957, %v7956
        %v8209 = vpack.c.b16 %v7959, %v7958
        %v8210 = vpack.c.b16 %v7961, %v7960
        %v8211 = vpack.c.b16 %v7963, %v7962
        %v8212 = vpack.c.b16 %v7965, %v7964
        %v8213 = vpack.c.b16 %v7967, %v7966
        %v8214 = vpack.c.b16 %v7969, %v7968
        %v8215 = vpack.c.b16 %v7971, %v7970
        %v8216 = vpack.c.b16 %v7973, %v7972
        %v8217 = vpack.c.b16 %v7975, %v7974
        %v8218 = vpack.c.b16 %v7977, %v7976
        %v8219 = vpack.c.b16 %v7979, %v7978
        %v8220 = vpack.c.b16 %v7981, %v7980
        %v8221 = vpack.c.b16 %v7983, %v7982
        %v8222 = vpack.c.b16 %v7985, %v7984
        %v8223 = vpack.c.b16 %v7987, %v7986
        %v8224 = vpack.c.b16 %v7989, %v7988
        %v8225 = vpack.c.b16 %v7991, %v7990
        %v8226 = vpack.c.b16 %v7993, %v7992
        %v8227 = vpack.c.b16 %v7995, %v7994
        %v8228 = vpack.c.b16 %v7997, %v7996
        %v8229 = vpack.c.b16 %v7999, %v7998
        %v8230 = vpack.c.b16 %v8001, %v8000
        %v8231 = vpack.c.b16 %v8003, %v8002
        %v8232 = vpack.c.b16 %v8005, %v8004
        %v8233 = vpack.c.b16 %v8007, %v8006
        %v8234 = vpack.c.b16 %v8009, %v8008
        %v8235 = vpack.c.b16 %v8011, %v8010
        %v8236 = vpack.c.b16 %v8013, %v8012
        %v8237 = vpack.c.b16 %v8015, %v8014
        %v8238 = vpack.c.b16 %v8017, %v8016
        %v8239 = vpack.c.b16 %v8019, %v8018
        %v8240 = vpack.c.b16 %v8021, %v8020
        %v8241 = vpack.c.b16 %v8023, %v8022
        %v8242 = vpack.c.b16 %v8025, %v8024
        %v8243 = vpack.c.b16 %v8027, %v8026
        %v8244 = vpack.c.b16 %v8029, %v8028
        %v8245 = vpack.c.b16 %v8031, %v8030
        %v8246 = vpack.c.b16 %v8033, %v8032
        %v8247 = vpack.c.b16 %v8035, %v8034
        %v8248 = vpack.c.b16 %v8037, %v8036
        %v8249 = vpack.c.b16 %v8039, %v8038
        %v8250 = vpack.c.b16 %v8041, %v8040
        %v8251 = vpack.c.b16 %v8043, %v8042
        %v8252 = vpack.c.b16 %v8045, %v8044
        %v8253 = vpack.c.b16 %v8047, %v8046
        %v8254 = vpack.c.b16 %v8049, %v8048
        %v8255 = vpack.c.b16 %v8051, %v8050
        %v8256 = vpack.c.b16 %v8053, %v8052
        %v8257 = vpack.c.b16 %v8055, %v8054
        %v8258 = vpack.c.b16 %v8057, %v8056
        %v8259 = vpack.c.b16 %v8059, %v8058
        %v8260 = vpack.c.b16 %v8061, %v8060
        %v8261 = vpack.c.b16 %v8063, %v8062
        %v8262 = vpack.c.b16 %v8065, %v8064
        %v8263 = vpack.c.b16 %v8067, %v8066
        %v8264 = vpack.c.b16 %v8069, %v8068
        %v8265 = vpack.c.b16 %v8071, %v8070
        %v8266 = vpack.c.b16 %v8073, %v8072
        %v8267 = vpack.c.b16 %v8075, %v8074
        %v8268 = vpack.c.b16 %v8077, %v8076
        %v8269 = vpack.c.b16 %v8079, %v8078
        %v8270 = vpack.c.b16 %v8081, %v8080
        %v8271 = vpack.c.b16 %v8083, %v8082
        %v8272 = vpack.c.b16 %v8085, %v8084
        %v8273 = vpack.c.b16 %v8087, %v8086
        %v8274 = vpack.c.b16 %v8089, %v8088
        %v8275 = vpack.c.b16 %v8091, %v8090
        %v8276 = vpack.c.b16 %v8093, %v8092
        %v8277 = vpack.c.b16 %v8095, %v8094
        %v8278 = vpack.c.b16 %v8097, %v8096
        %v8279 = vpack.c.b16 %v8099, %v8098
        %v8280 = vpack.c.b16 %v8101, %v8100
        %v8281 = vpack.c.b16 %v8103, %v8102
        %v8282 = vpack.c.b16 %v8105, %v8104
        %v8283 = vpack.c.b16 %v8107, %v8106
        %v8284 = vpack.c.b16 %v8109, %v8108
        %v8285 = vpack.c.b16 %v8111, %v8110
        %v8286 = vpack.c.b16 %v8113, %v8112
        %v8287 = vpack.c.b16 %v8115, %v8114
        %v8288 = vpack.c.b16 %v8117, %v8116
        %v8289 = vpack.c.b16 %v8119, %v8118
        %v8290 = vpack.c.b16 %v8121, %v8120
        %v8291 = vpack.c.b16 %v8123, %v8122
        %v8292 = vpack.c.b16 %v8125, %v8124
        %v8293 = vpack.c.b16 %v8127, %v8126
        %v8294 = vpack.c.b16 %v8129, %v8128
        %v8295 = vpack.c.b16 %v8131, %v8130
        %v8296 = vpack.c.b16 %v8133, %v8132
        %v8297 = vpack.c.b16 %v8135, %v8134
        %v8298 = vpack.c.b16 %v8137, %v8136
        %v8299 = vpack.c.b16 %v8139, %v8138
        %v8300 = vpack.c.b16 %v8141, %v8140
        %v8301 = vpack.c.b16 %v8143, %v8142
        %v8302 = vpack.c.b16 %v8145, %v8144
        %v8303 = vpack.c.b16 %v8147, %v8146
        %v8304 = vpack.c.b16 %v8149, %v8148
        %v8305 = vpack.c.b16 %v8151, %v8150
        %v8306 = vpack.c.b16 %v8153, %v8152
        %v8307 = vpack.c.b16 %v8155, %v8154
        %v8308 = vpack.c.b16 %v8157, %v8156
        %v8309 = vpack.c.b16 %v8159, %v8158
        %v8310 = vpack.c.b16 %v8161, %v8160
        %v8311 = vpack.c.b16 %v8163, %v8162
        %v8312 = vpack.c.b16 %v8165, %v8164
        %v8313 = vpack.c.b16 %v8167, %v8166
        %v8314 = vpack.c.b16 %v8169, %v8168
        %v8315 = vpack.c.b16 %v8171, %v8170
        %v8316 = vpack.c.b16 %v8173, %v8172
        %v8317 = vpack.c.b16 %v8175, %v8174
        %v8318 = vpack.c.b16 %v8177, %v8176
        %v8319 = vpack.c.b16 %v8179, %v8178
        %v8320 = vpack.c.b16 %v8181, %v8180
        %v8321 = vpack.c.b16 %v8183, %v8182
        %v8322 = vpack.c.b16 %v8185, %v8184
        %v8323 = vpack.c.b16 %v8187, %v8186
        %v8324 = vpack.c.b16 %v8189, %v8188
        %v8325 = vpack.c.b16 %v8191, %v8190
        %v8326 = vpack.c.b16 %v8193, %v8192
        %v8327 = vpack.c.b16 %v8195, %v8194
        %v8328 = vpack.c.b16 %v8197, %v8196
        %v8329 = vpack.c.b16 %v8199, %v8198
        %v8330 = vpack.c.b16 %v8201, %v8200
        %v8331 = vpack.c.b16 %v8203, %v8202
        %8460 = vmatprep.subr.bf16.mxu0 0
        %8461 = vmatpush1.bf16.msra.mxu0 %v8204
        %8462 = vmatprep.subr.bf16.mxu0 0
        %8463 = vmatpush1.bf16.msra.mxu0 %v8205
        %8464 = vmatprep.subr.bf16.mxu0 0
        %8465 = vmatpush1.bf16.msra.mxu0 %v8206
        %8466 = vmatprep.subr.bf16.mxu0 0
        %8467 = vmatpush1.bf16.msra.mxu0 %v8207
        %8468 = vmatprep.subr.bf16.mxu0 0
        %8469 = vmatpush1.bf16.msra.mxu0 %v8208
        %8470 = vmatprep.subr.bf16.mxu0 0
        %8471 = vmatpush1.bf16.msra.mxu0 %v8209
        %8472 = vmatprep.subr.bf16.mxu0 0
        %8473 = vmatpush1.bf16.msra.mxu0 %v8210
        %8474 = vmatprep.subr.bf16.mxu0 0
        %8475 = vmatpush1.bf16.msra.mxu0 %v8211
        %8476 = vmatprep.subr.bf16.mxu0 0
        %8477 = vmatpush1.bf16.msra.mxu0 %v8212
        %8478 = vmatprep.subr.bf16.mxu0 0
        %8479 = vmatpush1.bf16.msra.mxu0 %v8213
        %8480 = vmatprep.subr.bf16.mxu0 0
        %8481 = vmatpush1.bf16.msra.mxu0 %v8214
        %8482 = vmatprep.subr.bf16.mxu0 0
        %8483 = vmatpush1.bf16.msra.mxu0 %v8215
        %8484 = vmatprep.subr.bf16.mxu0 0
        %8485 = vmatpush1.bf16.msra.mxu0 %v8216
        %8486 = vmatprep.subr.bf16.mxu0 0
        %8487 = vmatpush1.bf16.msra.mxu0 %v8217
        %8488 = vmatprep.subr.bf16.mxu0 0
        %8489 = vmatpush1.bf16.msra.mxu0 %v8218
        %8490 = vmatprep.subr.bf16.mxu0 0
        %8491 = vmatpush1.bf16.msra.mxu0 %v8219
        %8492 = vmatprep.mubr.bf16.mxu0 %v7328
        %8493 = vmatmul.mubr.bf16.gmra.mrb[0].mxu0 %v7327
        %v8494 = vpop.f32.mrb[0].mxu0
        %v8495 = vadd.f32 %v7684, %v8494
        %v8496 = vpop.f32.mrb[0].mxu0
        %v8497 = vpop.f32.mrb[0].mxu0
        %v8498 = vadd.f32 %v7689, %v8497
        %v8499 = vpop.f32.mrb[0].mxu0
        %8500 = vdwg.mxu0
        %8501 = vmatprep.subr.bf16.mxu0 0
        %8502 = vmatpush1.bf16.msra.mxu0 %v8220
        %8503 = vmatprep.subr.bf16.mxu0 0
        %8504 = vmatpush1.bf16.msra.mxu0 %v8221
        %8505 = vmatprep.subr.bf16.mxu0 0
        %8506 = vmatpush1.bf16.msra.mxu0 %v8222
        %8507 = vmatprep.subr.bf16.mxu0 0
        %8508 = vmatpush1.bf16.msra.mxu0 %v8223
        %8509 = vmatprep.subr.bf16.mxu0 0
        %8510 = vmatpush1.bf16.msra.mxu0 %v8224
        %8511 = vmatprep.subr.bf16.mxu0 0
        %8512 = vmatpush1.bf16.msra.mxu0 %v8225
        %8513 = vmatprep.subr.bf16.mxu0 0
        %8514 = vmatpush1.bf16.msra.mxu0 %v8226
        %8515 = vmatprep.subr.bf16.mxu0 0
        %8516 = vmatpush1.bf16.msra.mxu0 %v8227
        %8517 = vmatprep.subr.bf16.mxu0 0
        %8518 = vmatpush1.bf16.msra.mxu0 %v8228
        %8519 = vmatprep.subr.bf16.mxu0 0
        %8520 = vmatpush1.bf16.msra.mxu0 %v8229
        %8521 = vmatprep.subr.bf16.mxu0 0
        %8522 = vmatpush1.bf16.msra.mxu0 %v8230
        %8523 = vmatprep.subr.bf16.mxu0 0
        %8524 = vmatpush1.bf16.msra.mxu0 %v8231
        %8525 = vmatprep.subr.bf16.mxu0 0
        %8526 = vmatpush1.bf16.msra.mxu0 %v8232
        %8527 = vmatprep.subr.bf16.mxu0 0
        %8528 = vmatpush1.bf16.msra.mxu0 %v8233
        %8529 = vmatprep.subr.bf16.mxu0 0
        %8530 = vmatpush1.bf16.msra.mxu0 %v8234
        %8531 = vmatprep.subr.bf16.mxu0 0
        %8532 = vmatpush1.bf16.msra.mxu0 %v8235
        %8533 = vmatprep.mubr.bf16.mxu0 %v7330
        %8534 = vmatmul.mubr.bf16.gmra.mrb[0].mxu0 %v7329
        %v8535 = vpop.f32.mrb[0].mxu0
        %v8536 = vadd.f32 %v8495, %v8535
        %v8537 = vpop.f32.mrb[0].mxu0
        %v8538 = vpop.f32.mrb[0].mxu0
        %v8539 = vadd.f32 %v8498, %v8538
        %v8540 = vpop.f32.mrb[0].mxu0
        %8541 = vdwg.mxu0
        %8542 = vmatprep.subr.bf16.mxu0 0
        %8543 = vmatpush1.bf16.msra.mxu0 %v8236
        %8544 = vmatprep.subr.bf16.mxu0 0
        %8545 = vmatpush1.bf16.msra.mxu0 %v8237
        %8546 = vmatprep.subr.bf16.mxu0 0
        %8547 = vmatpush1.bf16.msra.mxu0 %v8238
        %8548 = vmatprep.subr.bf16.mxu0 0
        %8549 = vmatpush1.bf16.msra.mxu0 %v8239
        %8550 = vmatprep.subr.bf16.mxu0 0
        %8551 = vmatpush1.bf16.msra.mxu0 %v8240
        %8552 = vmatprep.subr.bf16.mxu0 0
        %8553 = vmatpush1.bf16.msra.mxu0 %v8241
        %8554 = vmatprep.subr.bf16.mxu0 0
        %8555 = vmatpush1.bf16.msra.mxu0 %v8242
        %8556 = vmatprep.subr.bf16.mxu0 0
        %8557 = vmatpush1.bf16.msra.mxu0 %v8243
        %8558 = vmatprep.subr.bf16.mxu0 0
        %8559 = vmatpush1.bf16.msra.mxu0 %v8244
        %8560 = vmatprep.subr.bf16.mxu0 0
        %8561 = vmatpush1.bf16.msra.mxu0 %v8245
        %8562 = vmatprep.subr.bf16.mxu0 0
        %8563 = vmatpush1.bf16.msra.mxu0 %v8246
        %8564 = vmatprep.subr.bf16.mxu0 0
        %8565 = vmatpush1.bf16.msra.mxu0 %v8247
        %8566 = vmatprep.subr.bf16.mxu0 0
        %8567 = vmatpush1.bf16.msra.mxu0 %v8248
        %8568 = vmatprep.subr.bf16.mxu0 0
        %8569 = vmatpush1.bf16.msra.mxu0 %v8249
        %8570 = vmatprep.subr.bf16.mxu0 0
        %8571 = vmatpush1.bf16.msra.mxu0 %v8250
        %8572 = vmatprep.subr.bf16.mxu0 0
        %8573 = vmatpush1.bf16.msra.mxu0 %v8251
        %8574 = vmatprep.mubr.bf16.mxu0 %v7332
        %8575 = vmatmul.mubr.bf16.gmra.mrb[0].mxu0 %v7331
        %v8576 = vpop.f32.mrb[0].mxu0
        %v8577 = vadd.f32 %v8536, %v8576
        %v8578 = vpop.f32.mrb[0].mxu0
        %v8579 = vpop.f32.mrb[0].mxu0
        %v8580 = vadd.f32 %v8539, %v8579
        %v8581 = vpop.f32.mrb[0].mxu0
        %8582 = vdwg.mxu0
        %8583 = vmatprep.subr.bf16.mxu0 0
        %8584 = vmatpush1.bf16.msra.mxu0 %v8252
        %8585 = vmatprep.subr.bf16.mxu0 0
        %8586 = vmatpush1.bf16.msra.mxu0 %v8253
        %8587 = vmatprep.subr.bf16.mxu0 0
        %8588 = vmatpush1.bf16.msra.mxu0 %v8254
        %8589 = vmatprep.subr.bf16.mxu0 0
        %8590 = vmatpush1.bf16.msra.mxu0 %v8255
        %8591 = vmatprep.subr.bf16.mxu0 0
        %8592 = vmatpush1.bf16.msra.mxu0 %v8256
        %8593 = vmatprep.subr.bf16.mxu0 0
        %8594 = vmatpush1.bf16.msra.mxu0 %v8257
        %8595 = vmatprep.subr.bf16.mxu0 0
        %8596 = vmatpush1.bf16.msra.mxu0 %v8258
        %8597 = vmatprep.subr.bf16.mxu0 0
        %8598 = vmatpush1.bf16.msra.mxu0 %v8259
        %8599 = vmatprep.subr.bf16.mxu0 0
        %8600 = vmatpush1.bf16.msra.mxu0 %v8260
        %8601 = vmatprep.subr.bf16.mxu0 0
        %8602 = vmatpush1.bf16.msra.mxu0 %v8261
        %8603 = vmatprep.subr.bf16.mxu0 0
        %8604 = vmatpush1.bf16.msra.mxu0 %v8262
        %8605 = vmatprep.subr.bf16.mxu0 0
        %8606 = vmatpush1.bf16.msra.mxu0 %v8263
        %8607 = vmatprep.subr.bf16.mxu0 0
        %8608 = vmatpush1.bf16.msra.mxu0 %v8264
        %8609 = vmatprep.subr.bf16.mxu0 0
        %8610 = vmatpush1.bf16.msra.mxu0 %v8265
        %8611 = vmatprep.subr.bf16.mxu0 0
        %8612 = vmatpush1.bf16.msra.mxu0 %v8266
        %8613 = vmatprep.subr.bf16.mxu0 0
        %8614 = vmatpush1.bf16.msra.mxu0 %v8267
        %8615 = vmatprep.mubr.bf16.mxu0 %v7334
        %8616 = vmatmul.mubr.bf16.gmra.mrb[0].mxu0 %v7333
        %v8617 = vpop.f32.mrb[0].mxu0
        %v8618 = vadd.f32 %v8577, %v8617
        %v8619 = vpop.f32.mrb[0].mxu0
        %v8620 = vpop.f32.mrb[0].mxu0
        %v8621 = vadd.f32 %v8580, %v8620
        %v8622 = vpop.f32.mrb[0].mxu0
        %8623 = vdwg.mxu0
        %8624 = vmatprep.subr.bf16.mxu0 0
        %8625 = vmatpush1.bf16.msra.mxu0 %v8268
        %8626 = vmatprep.subr.bf16.mxu0 0
        %8627 = vmatpush1.bf16.msra.mxu0 %v8269
        %8628 = vmatprep.subr.bf16.mxu0 0
        %8629 = vmatpush1.bf16.msra.mxu0 %v8270
        %8630 = vmatprep.subr.bf16.mxu0 0
        %8631 = vmatpush1.bf16.msra.mxu0 %v8271
        %8632 = vmatprep.subr.bf16.mxu0 0
        %8633 = vmatpush1.bf16.msra.mxu0 %v8272
        %8634 = vmatprep.subr.bf16.mxu0 0
        %8635 = vmatpush1.bf16.msra.mxu0 %v8273
        %8636 = vmatprep.subr.bf16.mxu0 0
        %8637 = vmatpush1.bf16.msra.mxu0 %v8274
        %8638 = vmatprep.subr.bf16.mxu0 0
        %8639 = vmatpush1.bf16.msra.mxu0 %v8275
        %8640 = vmatprep.subr.bf16.mxu0 0
        %8641 = vmatpush1.bf16.msra.mxu0 %v8276
        %8642 = vmatprep.subr.bf16.mxu0 0
        %8643 = vmatpush1.bf16.msra.mxu0 %v8277
        %8644 = vmatprep.subr.bf16.mxu0 0
        %8645 = vmatpush1.bf16.msra.mxu0 %v8278
        %8646 = vmatprep.subr.bf16.mxu0 0
        %8647 = vmatpush1.bf16.msra.mxu0 %v8279
        %8648 = vmatprep.subr.bf16.mxu0 0
        %8649 = vmatpush1.bf16.msra.mxu0 %v8280
        %8650 = vmatprep.subr.bf16.mxu0 0
        %8651 = vmatpush1.bf16.msra.mxu0 %v8281
        %8652 = vmatprep.subr.bf16.mxu0 0
        %8653 = vmatpush1.bf16.msra.mxu0 %v8282
        %8654 = vmatprep.subr.bf16.mxu0 0
        %8655 = vmatpush1.bf16.msra.mxu0 %v8283
        %8656 = vmatprep.mubr.bf16.mxu0 %v7336
        %8657 = vmatmul.mubr.bf16.gmra.mrb[0].mxu0 %v7335
        %v8658 = vpop.f32.mrb[0].mxu0
        %v8659 = vadd.f32 %v8618, %v8658
        %v8660 = vpop.f32.mrb[0].mxu0
        %v8661 = vpop.f32.mrb[0].mxu0
        %v8662 = vadd.f32 %v8621, %v8661
        %v8663 = vpop.f32.mrb[0].mxu0
        %8664 = vdwg.mxu0
        %8665 = vmatprep.subr.bf16.mxu0 0
        %8666 = vmatpush1.bf16.msra.mxu0 %v8284
        %8667 = vmatprep.subr.bf16.mxu0 0
        %8668 = vmatpush1.bf16.msra.mxu0 %v8285
        %8669 = vmatprep.subr.bf16.mxu0 0
        %8670 = vmatpush1.bf16.msra.mxu0 %v8286
        %8671 = vmatprep.subr.bf16.mxu0 0
        %8672 = vmatpush1.bf16.msra.mxu0 %v8287
        %8673 = vmatprep.subr.bf16.mxu0 0
        %8674 = vmatpush1.bf16.msra.mxu0 %v8288
        %8675 = vmatprep.subr.bf16.mxu0 0
        %8676 = vmatpush1.bf16.msra.mxu0 %v8289
        %8677 = vmatprep.subr.bf16.mxu0 0
        %8678 = vmatpush1.bf16.msra.mxu0 %v8290
        %8679 = vmatprep.subr.bf16.mxu0 0
        %8680 = vmatpush1.bf16.msra.mxu0 %v8291
        %8681 = vmatprep.subr.bf16.mxu0 0
        %8682 = vmatpush1.bf16.msra.mxu0 %v8292
        %8683 = vmatprep.subr.bf16.mxu0 0
        %8684 = vmatpush1.bf16.msra.mxu0 %v8293
        %8685 = vmatprep.subr.bf16.mxu0 0
        %8686 = vmatpush1.bf16.msra.mxu0 %v8294
        %8687 = vmatprep.subr.bf16.mxu0 0
        %8688 = vmatpush1.bf16.msra.mxu0 %v8295
        %8689 = vmatprep.subr.bf16.mxu0 0
        %8690 = vmatpush1.bf16.msra.mxu0 %v8296
        %8691 = vmatprep.subr.bf16.mxu0 0
        %8692 = vmatpush1.bf16.msra.mxu0 %v8297
        %8693 = vmatprep.subr.bf16.mxu0 0
        %8694 = vmatpush1.bf16.msra.mxu0 %v8298
        %8695 = vmatprep.subr.bf16.mxu0 0
        %8696 = vmatpush1.bf16.msra.mxu0 %v8299
        %8697 = vmatprep.mubr.bf16.mxu0 %v7338
        %8698 = vmatmul.mubr.bf16.gmra.mrb[0].mxu0 %v7337
        %v8699 = vpop.f32.mrb[0].mxu0
        %v8700 = vadd.f32 %v8659, %v8699
        %v8701 = vpop.f32.mrb[0].mxu0
        %v8702 = vpop.f32.mrb[0].mxu0
        %v8703 = vadd.f32 %v8662, %v8702
        %v8704 = vpop.f32.mrb[0].mxu0
        %8705 = vdwg.mxu0
        %8706 = vmatprep.subr.bf16.mxu0 0
        %8707 = vmatpush1.bf16.msra.mxu0 %v8300
        %8708 = vmatprep.subr.bf16.mxu0 0
        %8709 = vmatpush1.bf16.msra.mxu0 %v8301
        %8710 = vmatprep.subr.bf16.mxu0 0
        %8711 = vmatpush1.bf16.msra.mxu0 %v8302
        %8712 = vmatprep.subr.bf16.mxu0 0
        %8713 = vmatpush1.bf16.msra.mxu0 %v8303
        %8714 = vmatprep.subr.bf16.mxu0 0
        %8715 = vmatpush1.bf16.msra.mxu0 %v8304
        %8716 = vmatprep.subr.bf16.mxu0 0
        %8717 = vmatpush1.bf16.msra.mxu0 %v8305
        %8718 = vmatprep.subr.bf16.mxu0 0
        %8719 = vmatpush1.bf16.msra.mxu0 %v8306
        %8720 = vmatprep.subr.bf16.mxu0 0
        %8721 = vmatpush1.bf16.msra.mxu0 %v8307
        %8722 = vmatprep.subr.bf16.mxu0 0
        %8723 = vmatpush1.bf16.msra.mxu0 %v8308
        %8724 = vmatprep.subr.bf16.mxu0 0
        %8725 = vmatpush1.bf16.msra.mxu0 %v8309
        %8726 = vmatprep.subr.bf16.mxu0 0
        %8727 = vmatpush1.bf16.msra.mxu0 %v8310
        %8728 = vmatprep.subr.bf16.mxu0 0
        %8729 = vmatpush1.bf16.msra.mxu0 %v8311
        %8730 = vmatprep.subr.bf16.mxu0 0
        %8731 = vmatpush1.bf16.msra.mxu0 %v8312
        %8732 = vmatprep.subr.bf16.mxu0 0
        %8733 = vmatpush1.bf16.msra.mxu0 %v8313
        %8734 = vmatprep.subr.bf16.mxu0 0
        %8735 = vmatpush1.bf16.msra.mxu0 %v8314
        %8736 = vmatprep.subr.bf16.mxu0 0
        %8737 = vmatpush1.bf16.msra.mxu0 %v8315
        %8738 = vmatprep.mubr.bf16.mxu0 %v7340
        %8739 = vmatmul.mubr.bf16.gmra.mrb[0].mxu0 %v7339
        %v8740 = vpop.f32.mrb[0].mxu0
        %v8741 = vadd.f32 %v8700, %v8740
        %v8742 = vpop.f32.mrb[0].mxu0
        %v8743 = vpop.f32.mrb[0].mxu0
        %v8744 = vadd.f32 %v8703, %v8743
        %v8745 = vpop.f32.mrb[0].mxu0
        %8746 = vdwg.mxu0
        %8747 = vmatprep.subr.bf16.mxu0 0
        %8748 = vmatpush1.bf16.msra.mxu0 %v8316
        %8749 = vmatprep.subr.bf16.mxu0 0
        %8750 = vmatpush1.bf16.msra.mxu0 %v8317
        %8751 = vmatprep.subr.bf16.mxu0 0
        %8752 = vmatpush1.bf16.msra.mxu0 %v8318
        %8753 = vmatprep.subr.bf16.mxu0 0
        %8754 = vmatpush1.bf16.msra.mxu0 %v8319
        %8755 = vmatprep.subr.bf16.mxu0 0
        %8756 = vmatpush1.bf16.msra.mxu0 %v8320
        %8757 = vmatprep.subr.bf16.mxu0 0
        %8758 = vmatpush1.bf16.msra.mxu0 %v8321
        %8759 = vmatprep.subr.bf16.mxu0 0
        %8760 = vmatpush1.bf16.msra.mxu0 %v8322
        %8761 = vmatprep.subr.bf16.mxu0 0
        %8762 = vmatpush1.bf16.msra.mxu0 %v8323
        %8763 = vmatprep.subr.bf16.mxu0 0
        %8764 = vmatpush1.bf16.msra.mxu0 %v8324
        %8765 = vmatprep.subr.bf16.mxu0 0
        %8766 = vmatpush1.bf16.msra.mxu0 %v8325
        %8767 = vmatprep.subr.bf16.mxu0 0
        %8768 = vmatpush1.bf16.msra.mxu0 %v8326
        %8769 = vmatprep.subr.bf16.mxu0 0
        %8770 = vmatpush1.bf16.msra.mxu0 %v8327
        %8771 = vmatprep.subr.bf16.mxu0 0
        %8772 = vmatpush1.bf16.msra.mxu0 %v8328
        %8773 = vmatprep.subr.bf16.mxu0 0
        %8774 = vmatpush1.bf16.msra.mxu0 %v8329
        %8775 = vmatprep.subr.bf16.mxu0 0
        %8776 = vmatpush1.bf16.msra.mxu0 %v8330
        %8777 = vmatprep.subr.bf16.mxu0 0
        %8778 = vmatpush1.bf16.msra.mxu0 %v8331
        %8779 = vmatprep.mubr.bf16.mxu0 %v7342
        %8780 = vmatmul.mubr.bf16.gmra.mrb[0].mxu0 %v7341
        %v8781 = vpop.f32.mrb[0].mxu0
        %v8782 = vadd.f32 %v8741, %v8781
        %v8783 = vpop.f32.mrb[0].mxu0
        %v8784 = vpop.f32.mrb[0].mxu0
        %v8785 = vadd.f32 %v8744, %v8784
        %v8786 = vpop.f32.mrb[0].mxu0
        %8787 = vdwg.mxu0
        %v8788 = vadd.f32 %v5768, %v8782
        %v8789 = vadd.f32 %v5769, %v8785
        %v8790 = vld [vmem:[%s15] sm:$0x1]
        %v8791 = vld [vmem:[#allocation16] sm:$0x1]
        %8792 = vadd.xlane.f32.xlu0 %v8788
        %v8793 = vpop.xlane.xlu0 %8792
        %8794 = vadd.xlane.f32.xlu0 %v8789
        %v8795 = vpop.xlane.xlu0 %8794
        %v8796 = vmul.f32 %v8793, %v894
        %v8797 = vmul.f32 %v8795, %v894
        %v8798 = vsub.f32 %v8788, %v8796
        %v8799 = vsub.f32 %v8789, %v8797
        %v8800 = vmul.f32 %v8798, %v8798
        %v8801 = vmul.f32 %v8799, %v8799
        %8802 = vadd.xlane.f32.xlu0 %v8800
        %v8803 = vpop.xlane.xlu0 %8802
        %8804 = vadd.xlane.f32.xlu0 %v8801
        %v8805 = vpop.xlane.xlu0 %8804
        %v8806 = vmul.f32 %v8803, %v894
        %v8807 = vmul.f32 %v8805, %v894
        %v8808 = vadd.f32 %v8806, 1e-05
        %v8809 = vadd.f32 %v8807, 1e-05
        %v8810 = vrsqrt.pop %v8808
        %v8811 = vrsqrt.pop %v8809
        %v8812 = vmul.f32 %v8798, %v8810
        %v8813 = vmul.f32 %v8799, %v8811
        %v8815 = vlaneseq
        %v8816 = vshrl.u32 %v8815, 7
        %v8817 = vsub.s32 0, %v8816
        %v8818 = vrot.slane %v8790, %v8817
        %v8820 = vmul.f32 %v8812, %v8818
        %v8821 = vmul.f32 %v8813, %v8818
        %v8823 = vlaneseq
        %v8824 = vshrl.u32 %v8823, 7
        %v8825 = vsub.s32 0, %v8824
        %v8826 = vrot.slane %v8791, %v8825
        %v8828 = vadd.f32 %v8820, %v8826
        %v8829 = vadd.f32 %v8821, %v8826
        %v8830 = vpack.c.bf16 %v8829, %v8828
        %v8831 = vld [vmem:[#allocation17] sm:$0xf]
        %v8832 = vld [vmem:[#allocation17 + $0x4] sm:$0xf]
        %v8833 = vld [vmem:[#allocation17 + $0x8] sm:$0xf]
        %v8834 = vld [vmem:[#allocation17 + $0xc] sm:$0xf]
        %v8835 = vld [vmem:[#allocation17 + $0x10] sm:$0xf]
        %v8836 = vld [vmem:[#allocation17 + $0x14] sm:$0xf]
        %v8837 = vld [vmem:[#allocation17 + $0x18] sm:$0xf]
        %v8838 = vld [vmem:[#allocation17 + $0x1c] sm:$0xf]
        %v8839 = vld [vmem:[#allocation17 + $0x20] sm:$0xf]
        %v8840 = vld [vmem:[#allocation17 + $0x24] sm:$0xf]
        %v8841 = vld [vmem:[#allocation17 + $0x28] sm:$0xf]
        %v8842 = vld [vmem:[#allocation17 + $0x2c] sm:$0xf]
        %v8843 = vld [vmem:[#allocation17 + $0x30] sm:$0xf]
        %v8844 = vld [vmem:[#allocation17 + $0x34] sm:$0xf]
        %v8845 = vld [vmem:[#allocation17 + $0x38] sm:$0xf]
        %v8846 = vld [vmem:[#allocation17 + $0x3c] sm:$0xf]
        %v8847 = vld [vmem:[#allocation19] sm:$0x1]
        %v8849 = vlaneseq
        %v8850 = vshrl.u32 %v8849, 7
        %v8851 = vsub.s32 0, %v8850
        %v8852 = vrot.slane %v8847, %v8851
        %v8870 = vunpack.c.l.b16 %v8831
        %v8871 = vunpack.c.l.b16 %v8832
        %v8872 = vunpack.c.l.b16 %v8833
        %v8873 = vunpack.c.l.b16 %v8834
        %v8874 = vunpack.c.l.b16 %v8835
        %v8875 = vunpack.c.l.b16 %v8836
        %v8876 = vunpack.c.l.b16 %v8837
        %v8877 = vunpack.c.l.b16 %v8838
        %v8878 = vunpack.c.l.b16 %v8839
        %v8879 = vunpack.c.l.b16 %v8840
        %v8880 = vunpack.c.l.b16 %v8841
        %v8881 = vunpack.c.l.b16 %v8842
        %v8882 = vunpack.c.l.b16 %v8843
        %v8883 = vunpack.c.l.b16 %v8844
        %v8884 = vunpack.c.l.b16 %v8845
        %v8885 = vunpack.c.l.b16 %v8846
        %v8886 = vpack.c.b16 %v8871, %v8870
        %v8887 = vpack.c.b16 %v8873, %v8872
        %v8888 = vpack.c.b16 %v8875, %v8874
        %v8889 = vpack.c.b16 %v8877, %v8876
        %v8890 = vpack.c.b16 %v8879, %v8878
        %v8891 = vpack.c.b16 %v8881, %v8880
        %v8892 = vpack.c.b16 %v8883, %v8882
        %v8893 = vpack.c.b16 %v8885, %v8884
        %8902 = vmatprep.subr.bf16.mxu0 0
        %8903 = vmatpush1.bf16.msra.mxu0 %v8886
        %8904 = vmatprep.subr.bf16.mxu0 0
        %8905 = vmatpush1.bf16.msra.mxu0 %v8887
        %8906 = vmatprep.subr.bf16.mxu0 0
        %8907 = vmatpush1.bf16.msra.mxu0 %v8888
        %8908 = vmatprep.subr.bf16.mxu0 0
        %8909 = vmatpush1.bf16.msra.mxu0 %v8889
        %8910 = vmatprep.subr.bf16.mxu0 0
        %8911 = vmatpush1.bf16.msra.mxu0 %v8890
        %8912 = vmatprep.subr.bf16.mxu0 0
        %8913 = vmatpush1.bf16.msra.mxu0 %v8891
        %8914 = vmatprep.subr.bf16.mxu0 0
        %8915 = vmatpush1.bf16.msra.mxu0 %v8892
        %8916 = vmatprep.subr.bf16.mxu0 0
        %8917 = vmatpush1.bf16.msra.mxu0 %v8893
        %8918 = vmatprep.subr.bf16.mxu0 0
        %8919 = vmatpush1.bf16.msra.mxu0 0
        %8920 = vmatprep.subr.bf16.mxu0 0
        %8921 = vmatpush1.bf16.msra.mxu0 0
        %8922 = vmatprep.subr.bf16.mxu0 0
        %8923 = vmatpush1.bf16.msra.mxu0 0
        %8924 = vmatprep.subr.bf16.mxu0 0
        %8925 = vmatpush1.bf16.msra.mxu0 0
        %8926 = vmatprep.subr.bf16.mxu0 0
        %8927 = vmatpush1.bf16.msra.mxu0 0
        %8928 = vmatprep.subr.bf16.mxu0 0
        %8929 = vmatpush1.bf16.msra.mxu0 0
        %8930 = vmatprep.subr.bf16.mxu0 0
        %8931 = vmatpush1.bf16.msra.mxu0 0
        %8932 = vmatprep.subr.bf16.mxu0 0
        %8933 = vmatpush1.bf16.msra.mxu0 0
        %8934 = vmatprep.mubr.bf16.mxu0 0
        %8935 = vmatmul.mubr.bf16.gmra.mrb[0].mxu0 %v8830
        %v8936 = vpop.f32.mrb[0].mxu0
        %v8937 = vadd.f32 %v8852, %v8936
        %v8938 = vpop.f32.mrb[0].mxu0
        %v8939 = vpop.f32.mrb[0].mxu0
        %v8940 = vadd.f32 %v8852, %v8939
        %v8941 = vpop.f32.mrb[0].mxu0
        %8942 = vdwg.mxu0
        %8943 = vst [vmem:[%s752] sm:$0xff] %v8937
        %8944 = vst [vmem:[%s752 + $0x8] sm:$0xff] %v8940
        %s8945 = sand.u32 %s451, 1
        %s8946 = scalar_lea.sflag [#allocation4], %s8945
        %s8947 = sand.u32 %s451, 1
        %s8948 = smul.addr %s8947, 16
        %s8949 = scalar_lea.vmem [#allocation20], %s8948
        // Predicated region
        $region141: #{forward.1} parent=95 // pred_check
          %p8950 = pneg %p461
        $region142: #{forward.1} parent=95 // pred_check_branch
          %8952 = sbr.rel (%p8950) target = $region144
        $region143: #{forward.1} parent=95 // pred_region
          %s8953 = smul.u32 2, %s39
          %s8955 = ssub.s32 256, 256
          %8956 = vsyncadd %s8946, %s8955
          %s8957 = smul.addr %s8953, 128
          %s8958 = scalar_lea.hbm %s19, %s8957
          %s8959 = sshll.u32 %s8949, 4
          %s8960 = int_to_ptr.vmem [resolvable:$true] %s8959
          %8965 = dma.vmem_to_hbm [thread:$0]  %s8960, 256, %s8958, %s8946, 128, 128, 8
        $region144: #{forward.1} parent=95 // pred_fallthru
          _
      $region96: #{forward.1} parent=5 // pred_fallthru
        _
      %p8966 = scmp.le.s32.totalorder 2, %s34
      // Predicated region
      $region145: #{forward.1} parent=5 // pred_check
        %p8967 = pneg %p8966
      $region146: #{forward.1} parent=5 // pred_check_branch
        %8969 = sbr.rel (%p8967) target = $region148
      $region147: #{forward.1} parent=5 // pred_region
        %s8970 = ssub.s32 %s34, 2
        // Predicated region
        $region149: #{forward.1} parent=147 // pred_check
          %p8971 = pneg %p467
        $region150: #{forward.1} parent=147 // pred_check_branch
          %8973 = sbr.rel (%p8971) target = $region152
        $region151: #{forward.1} parent=147 // pred_region
          %s8974 = sand.u32 %s452, 1
          %s8975 = scalar_lea.sflag [#allocation4], %s8974
          %s8976 = sand.u32 %s452, 1
          %s8977 = smul.addr %s8976, 16
          %s8978 = scalar_lea.vmem [#allocation20], %s8977
          %8979 = dma.done %s8975, 256
        $region152: #{forward.1} parent=147 // pred_fallthru
          _
      $region148: #{forward.1} parent=5 // pred_fallthru
        _
    $region6: #{forward.1} parent=1 // loop_footer
      %s38 = sadd.s32 1, %s34
    $region7: #{forward.1} parent=1 // loop_footer_branch
      %33 = sbr.rel target = $region3
    $region8: #{forward.1} parent=1 // loop_exit
      _
    %8980 = vsyncpa [#allocation3], 1
    %s8981 = scalar_lea.sflag [#allocation3], 1
    %8982 = vsyncpa %s8981, 1
    %8983 = vsyncpa [#allocation6], 1
    %8984 = vsyncpa [#allocation9], 1
    %8985 = vsyncpa [#allocation12], 1
    %8986 = vsyncpa [#allocation15], 1
    %8987 = vsyncpa [#allocation18], 1
    %8988 = vsyncpa [#allocation4], 1
    %s8989 = scalar_lea.sflag [#allocation4], 1
    %8990 = vsyncpa %s8989, 1

</llo_original>
